<compile_context>
chip_gen: v7x
topology: tpu7x:2x2x1
jax: 0.10.0
libtpu: 0.0.40
codegen_flags: <defaults>
</compile_context>

<pallas_src>
import jax
import jax.numpy as jnp
import numpy as np
from jax import lax
from jax.experimental import pallas as pl
from jax.experimental.pallas import tpu as pltpu


_COMPILER_PARAMS = pltpu.CompilerParams(
    dimension_semantics=("parallel",),
    # Explicit (v5e scoped default is 16 MiB); all blocks below stay well under
    # this on every generation (v7x physical VMEM is 64 MiB).
    vmem_limit_bytes=32 * 1024 * 1024,
)


def _row_tile(m, cap=1024):
    """Row tile: >=2 grid steps when possible (feeds both v7x TensorCores),
    multiple of 16 (free bf16 sublane collapse), capped for VMEM residency."""
    t = min(cap, ((pl.cdiv(m, 2) + 15) // 16) * 16)
    return max(16, min(m, t))


# ----------------------------------------------------------------------------
# Pallas kernels
# ----------------------------------------------------------------------------
def _conv_relu_pool_kernel(p_ref, w_ref, b_ref, o_ref):
    """Fused conv-as-matmul + bias + ReLU + 2x2 max pool.

    p_ref: [4, tm, K] bf16  (leading axis = the 4 members of each 2x2 window)
    w_ref: [K, N]  bf16,  b_ref: [1, N] f32,  o_ref: [tm, N] bf16
    """
    g, tm, k = p_ref.shape
    # One contiguous MXU stream over all 4 pool members, accumulate in f32.
    acc = jnp.dot(p_ref[...].reshape(g * tm, k), w_ref[...],
                  preferred_element_type=jnp.float32)        # [4*tm, N]
    pooled = jnp.max(acc.reshape(g, tm, -1), axis=0)          # [tm, N]
    o_ref[...] = jnp.maximum(pooled + b_ref[...], 0.0).astype(o_ref.dtype)


def _fc_fused_kernel(x_ref, w1_ref, b1_ref, w2_ref, b2_ref, o_ref):
    """relu(x @ w1 + b1) @ w2 + b2 for one batch-row tile (weights resident)."""
    h = jnp.dot(x_ref[...], w1_ref[...], preferred_element_type=jnp.float32)
    h = jnp.maximum(h + b1_ref[...], 0.0)
    o_ref[...] = jnp.dot(h.astype(jnp.bfloat16), w2_ref[...],
                         preferred_element_type=jnp.float32) + b2_ref[...]


# ----------------------------------------------------------------------------
# Pallas wrappers
# ----------------------------------------------------------------------------
def conv3x3_relu_pool(x_nhwc, w_oihw, b):
    """Fused 3x3 SAME conv + bias + ReLU + 2x2/stride-2 max pool.

    x_nhwc: [B, H, W, Cin] (f32 or bf16)  ->  [B, H//2, W//2, Cout] bf16
    """
    B, H, W, Cin = x_nhwc.shape
    Cout = w_oihw.shape[0]
    Ho, Wo = H // 2, W // 2
    K = 9 * Cin
    M = B * Ho * Wo

    # im2col in bf16 (XLA glue), grouped so the 4 members of every 2x2 pooling
    # window form a leading axis of size 4: patches[j, m, :] with j = py*2+px,
    # m = (b, ho, wo).  Patch column order is (dy, dx, cin), matching the
    # weight transpose below.
    x16 = x_nhwc.astype(jnp.bfloat16)
    xp = jnp.pad(x16, ((0, 0), (1, 1), (1, 1), (0, 0)))
    cols = [xp[:, dy:dy + H, dx:dx + W, :] for dy in range(3) for dx in range(3)]
    patches = jnp.concatenate(cols, axis=-1)                  # [B, H, W, 9*Cin]
    patches = patches.reshape(B, Ho, 2, Wo, 2, K)
    patches = jnp.transpose(patches, (2, 4, 0, 1, 3, 5)).reshape(4, M, K)

    # OIHW -> rows ordered (kh, kw, cin), columns = cout.
    wm = jnp.transpose(w_oihw, (2, 3, 1, 0)).reshape(K, Cout).astype(jnp.bfloat16)
    bm = b.reshape(1, Cout).astype(jnp.float32)

    tm = _row_tile(M)
    grid = (pl.cdiv(M, tm),)

    out = pl.pallas_call(
        _conv_relu_pool_kernel,
        out_shape=jax.ShapeDtypeStruct((M, Cout), jnp.bfloat16),
        grid=grid,
        in_specs=[
            pl.BlockSpec((4, tm, K), lambda i: (0, i, 0)),
            pl.BlockSpec((K, Cout), lambda i: (0, 0)),
            pl.BlockSpec((1, Cout), lambda i: (0, 0)),
        ],
        out_specs=pl.BlockSpec((tm, Cout), lambda i: (i, 0)),
        compiler_params=_COMPILER_PARAMS,
    )(patches, wm, bm)
    return out.reshape(B, Ho, Wo, Cout)


def fc1_relu_fc2(flat, fc1_w_cols, fc1_b, fc2_w, fc2_b):
    """Fused fc1 + ReLU + fc2, row-tiled over batch.

    flat:        [B, K1]  (feature order must match fc1_w_cols' columns)
    fc1_w_cols:  [N1, K1] fc1 weight with columns already in `flat`'s order
    """
    B, K1 = flat.shape
    N1 = fc1_w_cols.shape[0]
    N2 = fc2_w.shape[0]

    x = flat.astype(jnp.bfloat16)
    w1 = fc1_w_cols.T.astype(jnp.bfloat16)            # [K1, N1]
    w2 = fc2_w.T.astype(jnp.bfloat16)                 # [N1, N2]
    b1 = fc1_b.reshape(1, N1).astype(jnp.float32)
    b2 = fc2_b.reshape(1, N2).astype(jnp.float32)

    # Row tile: full batch when small, 512-row tiles otherwise (keeps the x
    # block + resident weights far under VMEM limits on all generations, and
    # gives the "parallel" axis real work at large batch).
    tb = B if B <= 512 else 512
    grid = (pl.cdiv(B, tb),)

    return pl.pallas_call(
        _fc_fused_kernel,
        out_shape=jax.ShapeDtypeStruct((B, N2), jnp.float32),
        grid=grid,
        in_specs=[
            pl.BlockSpec((tb, K1), lambda i: (i, 0)),
            pl.BlockSpec((K1, N1), lambda i: (0, 0)),
            pl.BlockSpec((1, N1), lambda i: (0, 0)),
            pl.BlockSpec((N1, N2), lambda i: (0, 0)),
            pl.BlockSpec((1, N2), lambda i: (0, 0)),
        ],
        out_specs=pl.BlockSpec((tb, N2), lambda i: (i, 0)),
        compiler_params=_COMPILER_PARAMS,
    )(x, w1, b1, w2, b2)


# ----------------------------------------------------------------------------
# Model glue
# ----------------------------------------------------------------------------
def simple_cnn_forward(x_nchw, params):
    """Pallas implementation of SimpleCNN.forward. x_nchw: [B, 3, 32, 32] f32."""
    conv1_w, conv1_b, conv2_w, conv2_b, fc1_w, fc1_b, fc2_w, fc2_b = params
    B = x_nchw.shape[0]

    x = jnp.transpose(x_nchw, (0, 2, 3, 1))           # NHWC [B, 32, 32, 3]
    y = conv3x3_relu_pool(x, conv1_w, conv1_b)        # [B, 16, 16, 32] bf16
    y = conv3x3_relu_pool(y, conv2_w, conv2_b)        # [B,  8,  8, 64] bf16

    # Flatten in (H, W, C) order -- a free reshape of the NHWC activation --
    # and permute fc1's weight columns from PyTorch's (C, H, W) flatten order
    # to match.  Trace-time weight shuffle; numerics identical.
    flat = y.reshape(B, 64 * 8 * 8)
    fc1_w_hwc = jnp.transpose(fc1_w.reshape(256, 64, 8, 8),
                              (0, 2, 3, 1)).reshape(256, 64 * 8 * 8)
    return fc1_relu_fc2(flat, fc1_w_hwc, fc1_b, fc2_w, fc2_b)   # [B, 10]


# ----------------------------------------------------------------------------
# Pure-JAX reference (faithful f32 PyTorch translation) for verification
# ----------------------------------------------------------------------------
def reference_forward(x_nchw, params):
    conv1_w, conv1_b, conv2_w, conv2_b, fc1_w, fc1_b, fc2_w, fc2_b = params
    B = x_nchw.shape[0]

    def conv(x, w, b):
        y = lax.conv_general_dilated(
            x, w, window_strides=(1, 1), padding="SAME",
            dimension_numbers=("NCHW", "OIHW", "NCHW"),
            precision=lax.Precision.HIGHEST,
        )
        return y + b[None, :, None, None]

    def pool(x):
        Bc, C, H, W = x.shape
        return x.reshape(Bc, C, H // 2, 2, W // 2, 2).max(axis=(3, 5))

    y = pool(jnp.maximum(conv(x_nchw, conv1_w, conv1_b), 0.0))
    y = pool(jnp.maximum(conv(y, conv2_w, conv2_b), 0.0))
    flat = y.reshape(B, -1)
    h = jnp.maximum(
        jnp.dot(flat, fc1_w.T, precision=lax.Precision.HIGHEST) + fc1_b, 0.0)
    return jnp.dot(h, fc2_w.T, precision=lax.Precision.HIGHEST) + fc2_b


# ----------------------------------------------------------------------------
# Main
# ----------------------------------------------------------------------------
if __name__ == "__main__":
    key = jax.random.PRNGKey(0)
    keys = jax.random.split(key, 9)

    # Deterministic synthetic parameters (shapes follow SimpleCNN.__init__).
    conv1_w = jax.random.normal(keys[0], (32, 3, 3, 3), jnp.float32) * 0.1
    conv1_b = jax.random.normal(keys[1], (32,), jnp.float32) * 0.1
    conv2_w = jax.random.normal(keys[2], (64, 32, 3, 3), jnp.float32) * 0.05
    conv2_b = jax.random.normal(keys[3], (64,), jnp.float32) * 0.05
    fc1_w = jax.random.normal(keys[4], (256, 64 * 8 * 8), jnp.float32) * 0.02
    fc1_b = jax.random.normal(keys[5], (256,), jnp.float32) * 0.02
    fc2_w = jax.random.normal(keys[6], (10, 256), jnp.float32) * 0.05
    fc2_b = jax.random.normal(keys[7], (10,), jnp.float32) * 0.05
    params = (conv1_w, conv1_b, conv2_w, conv2_b, fc1_w, fc1_b, fc2_w, fc2_b)

    # fc1 (64*8*8 inputs) pins spatial size to 32x32 and C_in=3; keep batch small.
    x = jax.random.normal(keys[8], (2, 3, 32, 32), jnp.float32)

    out = jax.block_until_ready(jax.jit(simple_cnn_forward)(x, params))
    ref = jax.block_until_ready(jax.jit(reference_forward)(x, params))

    assert out.shape == (2, 10), out.shape
    # Kernel uses single-pass bf16 MXU operands (and bf16 inter-stage
    # activations) with f32 accumulation; compare against the full-f32
    # reference with a bf16-appropriate tolerance.
    np.testing.assert_allclose(np.asarray(out), np.asarray(ref),
                               rtol=5e-2, atol=5e-2)
    print("KERNEL_OK")
</pallas_src>

<mosaic_0001>
module attributes {stable_mosaic.version = 11 : i64} {
  func.func @_conv_relu_pool_kernel(%arg0: i32, %arg1: memref<4x256x27xbf16, #tpu.memory_space<vmem>>, %arg2: memref<27x32xbf16, #tpu.memory_space<vmem>>, %arg3: memref<1x32xf32, #tpu.memory_space<vmem>>, %arg4: memref<256x32xbf16, #tpu.memory_space<vmem>>) attributes {dimension_semantics = [#tpu.dimension_semantics<parallel>], iteration_bounds = array<i64: 2>, scalar_prefetch = 0 : i64, scratch_operands = 0 : i64, tpu.core_type = #tpu.core_type<tc>, window_params = [{transform_indices = @transform_0, window_bounds = array<i64: 4, 256, 27>}, {pipeline_mode = #tpu.pipeline_mode<synchronous>, transform_indices = @transform_1, window_bounds = array<i64: 27, 32>}, {pipeline_mode = #tpu.pipeline_mode<synchronous>, transform_indices = @transform_2, window_bounds = array<i64: 1, 32>}, {transform_indices = @transform_3, window_bounds = array<i64: 256, 32>}]} {
    %c0 = arith.constant 0 : index
    %c0_0 = arith.constant 0 : index
    %c0_1 = arith.constant 0 : index
    %0 = vector.load %arg1[%c0, %c0_0, %c0_1] : memref<4x256x27xbf16, #tpu.memory_space<vmem>>, vector<4x256x27xbf16>
    %1 = vector.shape_cast %0 : vector<4x256x27xbf16> to vector<1024x27xbf16>
    %c0_2 = arith.constant 0 : index
    %c0_3 = arith.constant 0 : index
    %2 = vector.load %arg2[%c0_2, %c0_3] : memref<27x32xbf16, #tpu.memory_space<vmem>>, vector<27x32xbf16>
    %cst = arith.constant dense<0.000000e+00> : vector<1024x32xf32>
    %3 = tpu.matmul %1, %2, %cst {dimension_numbers = #tpu.dot_dimension_numbers<[1], [0], [0], [1], [0, 0, 1, 1], [], []>} : vector<1024x27xbf16>, vector<27x32xbf16>, vector<1024x32xf32> -> vector<1024x32xf32>
    %4 = vector.shape_cast %3 : vector<1024x32xf32> to vector<4x256x32xf32>
    %cst_4 = arith.constant dense<0xFF800000> : vector<256x32xf32>
    %5 = vector.multi_reduction <maximumf>, %4, %cst_4 [0] : vector<4x256x32xf32> to vector<256x32xf32>
    %c0_5 = arith.constant 0 : index
    %c0_6 = arith.constant 0 : index
    %6 = vector.load %arg3[%c0_5, %c0_6] : memref<1x32xf32, #tpu.memory_space<vmem>>, vector<1x32xf32>
    %7 = vector.broadcast %6 : vector<1x32xf32> to vector<256x32xf32>
    %8 = arith.addf %5, %7 : vector<256x32xf32>
    %cst_7 = arith.constant 0.000000e+00 : f32
    %9 = vector.broadcast %cst_7 : f32 to vector<256x32xf32>
    %10 = arith.maximumf %8, %9 : vector<256x32xf32>
    %11 = arith.truncf %10 : vector<256x32xf32> to vector<256x32xbf16>
    %c0_8 = arith.constant 0 : index
    %c0_9 = arith.constant 0 : index
    %12 = vector.load %arg4[%c0_8, %c0_9] : memref<256x32xbf16, #tpu.memory_space<vmem>>, vector<256x32xbf16>
    tpu.vector_store %arg4[%c0_8, %c0_9], %11 {strides = array<i32>} : memref<256x32xbf16, #tpu.memory_space<vmem>>, vector<256x32xbf16>,
    return
  }
  func.func @transform_0(%arg0: i32) -> (i32, i32, i32) {
    %c0_i32 = arith.constant 0 : i32
    %c0_i32_0 = arith.constant 0 : i32
    %c0_i32_1 = arith.constant 0 : i32
    return %c0_i32, %arg0, %c0_i32_0 : i32, i32, i32
  }
  func.func @transform_1(%arg0: i32) -> (i32, i32) {
    %c0_i32 = arith.constant 0 : i32
    %c0_i32_0 = arith.constant 0 : i32
    %c0_i32_1 = arith.constant 0 : i32
    return %c0_i32, %c0_i32_0 : i32, i32
  }
  func.func @transform_2(%arg0: i32) -> (i32, i32) {
    %c0_i32 = arith.constant 0 : i32
    %c0_i32_0 = arith.constant 0 : i32
    %c0_i32_1 = arith.constant 0 : i32
    return %c0_i32, %c0_i32_0 : i32, i32
  }
  func.func @transform_3(%arg0: i32) -> (i32, i32) {
    %c0_i32 = arith.constant 0 : i32
    %c0_i32_0 = arith.constant 0 : i32
    return %arg0, %c0_i32 : i32, i32
  }
}

module attributes {stable_mosaic.version = 11 : i64} {
  func.func @_conv_relu_pool_kernel(%arg0: i32, %arg1: memref<4x64x288xbf16, #tpu.memory_space<vmem>>, %arg2: memref<288x64xbf16, #tpu.memory_space<vmem>>, %arg3: memref<1x64xf32, #tpu.memory_space<vmem>>, %arg4: memref<64x64xbf16, #tpu.memory_space<vmem>>) attributes {dimension_semantics = [#tpu.dimension_semantics<parallel>], iteration_bounds = array<i64: 2>, scalar_prefetch = 0 : i64, scratch_operands = 0 : i64, tpu.core_type = #tpu.core_type<tc>, window_params = [{transform_indices = @transform_0, window_bounds = array<i64: 4, 64, 288>}, {pipeline_mode = #tpu.pipeline_mode<synchronous>, transform_indices = @transform_1, window_bounds = array<i64: 288, 64>}, {pipeline_mode = #tpu.pipeline_mode<synchronous>, transform_indices = @transform_2, window_bounds = array<i64: 1, 64>}, {transform_indices = @transform_3, window_bounds = array<i64: 64, 64>}]} {
    %c0 = arith.constant 0 : index
    %c0_0 = arith.constant 0 : index
    %c0_1 = arith.constant 0 : index
    %0 = vector.load %arg1[%c0, %c0_0, %c0_1] : memref<4x64x288xbf16, #tpu.memory_space<vmem>>, vector<4x64x288xbf16>
    %1 = vector.shape_cast %0 : vector<4x64x288xbf16> to vector<256x288xbf16>
    %c0_2 = arith.constant 0 : index
    %c0_3 = arith.constant 0 : index
    %2 = vector.load %arg2[%c0_2, %c0_3] : memref<288x64xbf16, #tpu.memory_space<vmem>>, vector<288x64xbf16>
    %cst = arith.constant dense<0.000000e+00> : vector<256x64xf32>
    %3 = tpu.matmul %1, %2, %cst {dimension_numbers = #tpu.dot_dimension_numbers<[1], [0], [0], [1], [0, 0, 1, 1], [], []>} : vector<256x288xbf16>, vector<288x64xbf16>, vector<256x64xf32> -> vector<256x64xf32>
    %4 = vector.shape_cast %3 : vector<256x64xf32> to vector<4x64x64xf32>
    %cst_4 = arith.constant dense<0xFF800000> : vector<64x64xf32>
    %5 = vector.multi_reduction <maximumf>, %4, %cst_4 [0] : vector<4x64x64xf32> to vector<64x64xf32>
    %c0_5 = arith.constant 0 : index
    %c0_6 = arith.constant 0 : index
    %6 = vector.load %arg3[%c0_5, %c0_6] : memref<1x64xf32, #tpu.memory_space<vmem>>, vector<1x64xf32>
    %7 = vector.broadcast %6 : vector<1x64xf32> to vector<64x64xf32>
    %8 = arith.addf %5, %7 : vector<64x64xf32>
    %cst_7 = arith.constant 0.000000e+00 : f32
    %9 = vector.broadcast %cst_7 : f32 to vector<64x64xf32>
    %10 = arith.maximumf %8, %9 : vector<64x64xf32>
    %11 = arith.truncf %10 : vector<64x64xf32> to vector<64x64xbf16>
    %c0_8 = arith.constant 0 : index
    %c0_9 = arith.constant 0 : index
    %12 = vector.load %arg4[%c0_8, %c0_9] : memref<64x64xbf16, #tpu.memory_space<vmem>>, vector<64x64xbf16>
    tpu.vector_store %arg4[%c0_8, %c0_9], %11 {strides = array<i32>} : memref<64x64xbf16, #tpu.memory_space<vmem>>, vector<64x64xbf16>,
    return
  }
  func.func @transform_0(%arg0: i32) -> (i32, i32, i32) {
    %c0_i32 = arith.constant 0 : i32
    %c0_i32_0 = arith.constant 0 : i32
    %c0_i32_1 = arith.constant 0 : i32
    return %c0_i32, %arg0, %c0_i32_0 : i32, i32, i32
  }
  func.func @transform_1(%arg0: i32) -> (i32, i32) {
    %c0_i32 = arith.constant 0 : i32
    %c0_i32_0 = arith.constant 0 : i32
    %c0_i32_1 = arith.constant 0 : i32
    return %c0_i32, %c0_i32_0 : i32, i32
  }
  func.func @transform_2(%arg0: i32) -> (i32, i32) {
    %c0_i32 = arith.constant 0 : i32
    %c0_i32_0 = arith.constant 0 : i32
    %c0_i32_1 = arith.constant 0 : i32
    return %c0_i32, %c0_i32_0 : i32, i32
  }
  func.func @transform_3(%arg0: i32) -> (i32, i32) {
    %c0_i32 = arith.constant 0 : i32
    %c0_i32_0 = arith.constant 0 : i32
    return %arg0, %c0_i32 : i32, i32
  }
}

module attributes {stable_mosaic.version = 11 : i64} {
  func.func @_fc_fused_kernel(%arg0: i32, %arg1: memref<2x4096xbf16, #tpu.memory_space<vmem>>, %arg2: memref<4096x256xbf16, #tpu.memory_space<vmem>>, %arg3: memref<1x256xf32, #tpu.memory_space<vmem>>, %arg4: memref<256x10xbf16, #tpu.memory_space<vmem>>, %arg5: memref<1x10xf32, #tpu.memory_space<vmem>>, %arg6: memref<2x10xf32, #tpu.memory_space<vmem>>) attributes {dimension_semantics = [#tpu.dimension_semantics<parallel>], iteration_bounds = array<i64: 1>, scalar_prefetch = 0 : i64, scratch_operands = 0 : i64, tpu.core_type = #tpu.core_type<tc>, window_params = [{transform_indices = @transform_0, window_bounds = array<i64: 2, 4096>}, {pipeline_mode = #tpu.pipeline_mode<synchronous>, transform_indices = @transform_1, window_bounds = array<i64: 4096, 256>}, {pipeline_mode = #tpu.pipeline_mode<synchronous>, transform_indices = @transform_2, window_bounds = array<i64: 1, 256>}, {pipeline_mode = #tpu.pipeline_mode<synchronous>, transform_indices = @transform_3, window_bounds = array<i64: 256, 10>}, {pipeline_mode = #tpu.pipeline_mode<synchronous>, transform_indices = @transform_4, window_bounds = array<i64: 1, 10>}, {transform_indices = @transform_5, window_bounds = array<i64: 2, 10>}]} {
    %c0 = arith.constant 0 : index
    %c0_0 = arith.constant 0 : index
    %0 = vector.load %arg1[%c0, %c0_0] : memref<2x4096xbf16, #tpu.memory_space<vmem>>, vector<2x4096xbf16>
    %c0_1 = arith.constant 0 : index
    %c0_2 = arith.constant 0 : index
    %1 = vector.load %arg2[%c0_1, %c0_2] : memref<4096x256xbf16, #tpu.memory_space<vmem>>, vector<4096x256xbf16>
    %cst = arith.constant dense<0.000000e+00> : vector<2x256xf32>
    %2 = tpu.matmul %0, %1, %cst {dimension_numbers = #tpu.dot_dimension_numbers<[1], [0], [0], [1], [0, 0, 1, 1], [], []>} : vector<2x4096xbf16>, vector<4096x256xbf16>, vector<2x256xf32> -> vector<2x256xf32>
    %c0_3 = arith.constant 0 : index
    %c0_4 = arith.constant 0 : index
    %3 = vector.load %arg3[%c0_3, %c0_4] : memref<1x256xf32, #tpu.memory_space<vmem>>, vector<1x256xf32>
    %4 = vector.broadcast %3 : vector<1x256xf32> to vector<2x256xf32>
    %5 = arith.addf %2, %4 : vector<2x256xf32>
    %cst_5 = arith.constant 0.000000e+00 : f32
    %6 = vector.broadcast %cst_5 : f32 to vector<2x256xf32>
    %7 = arith.maximumf %5, %6 : vector<2x256xf32>
    %8 = arith.truncf %7 : vector<2x256xf32> to vector<2x256xbf16>
    %c0_6 = arith.constant 0 : index
    %c0_7 = arith.constant 0 : index
    %9 = vector.load %arg4[%c0_6, %c0_7] : memref<256x10xbf16, #tpu.memory_space<vmem>>, vector<256x10xbf16>
    %cst_8 = arith.constant dense<0.000000e+00> : vector<2x10xf32>
    %10 = tpu.matmul %8, %9, %cst_8 {dimension_numbers = #tpu.dot_dimension_numbers<[1], [0], [0], [1], [0, 0, 1, 1], [], []>} : vector<2x256xbf16>, vector<256x10xbf16>, vector<2x10xf32> -> vector<2x10xf32>
    %c0_9 = arith.constant 0 : index
    %c0_10 = arith.constant 0 : index
    %11 = vector.load %arg5[%c0_9, %c0_10] : memref<1x10xf32, #tpu.memory_space<vmem>>, vector<1x10xf32>
    %12 = vector.broadcast %11 : vector<1x10xf32> to vector<2x10xf32>
    %13 = arith.addf %10, %12 : vector<2x10xf32>
    %c0_11 = arith.constant 0 : index
    %c0_12 = arith.constant 0 : index
    %14 = vector.load %arg6[%c0_11, %c0_12] : memref<2x10xf32, #tpu.memory_space<vmem>>, vector<2x10xf32>
    tpu.vector_store %arg6[%c0_11, %c0_12], %13 {strides = array<i32>} : memref<2x10xf32, #tpu.memory_space<vmem>>, vector<2x10xf32>,
    return
  }
  func.func @transform_0(%arg0: i32) -> (i32, i32) {
    %c0_i32 = arith.constant 0 : i32
    %c0_i32_0 = arith.constant 0 : i32
    return %arg0, %c0_i32 : i32, i32
  }
  func.func @transform_1(%arg0: i32) -> (i32, i32) {
    %c0_i32 = arith.constant 0 : i32
    %c0_i32_0 = arith.constant 0 : i32
    %c0_i32_1 = arith.constant 0 : i32
    return %c0_i32, %c0_i32_0 : i32, i32
  }
  func.func @transform_2(%arg0: i32) -> (i32, i32) {
    %c0_i32 = arith.constant 0 : i32
    %c0_i32_0 = arith.constant 0 : i32
    %c0_i32_1 = arith.constant 0 : i32
    return %c0_i32, %c0_i32_0 : i32, i32
  }
  func.func @transform_3(%arg0: i32) -> (i32, i32) {
    %c0_i32 = arith.constant 0 : i32
    %c0_i32_0 = arith.constant 0 : i32
    %c0_i32_1 = arith.constant 0 : i32
    return %c0_i32, %c0_i32_0 : i32, i32
  }
  func.func @transform_4(%arg0: i32) -> (i32, i32) {
    %c0_i32 = arith.constant 0 : i32
    %c0_i32_0 = arith.constant 0 : i32
    %c0_i32_1 = arith.constant 0 : i32
    return %c0_i32, %c0_i32_0 : i32, i32
  }
  func.func @transform_5(%arg0: i32) -> (i32, i32) {
    %c0_i32 = arith.constant 0 : i32
    %c0_i32_0 = arith.constant 0 : i32
    return %arg0, %c0_i32 : i32, i32
  }
}

</mosaic_0001>

<llo_original>
// kernel: simple_cnn_forward.3
$region0: #{simple_cnn_forward.3}
  #allocation0 [shape = 'u32[]', space=smem, size = 0x4, offset = 0x4, fixed_abs, tag = 'smem constant byte address 0x4 - core index']
  #allocation1 [shape = 'u32[144,128]{1,0:T(1,128)}', space=vmem, size = 0x12000, scoped, tag = 'internal scratch']
  %s0 = inlined_call_operand.vmem [shape: bf16[4,512,27], index: 0, kind: input, shape index: {}]
  %s1 = inlined_call_operand.vmem [shape: bf16[27,32], index: 1, kind: input, shape index: {}]
  %s2 = inlined_call_operand.vmem [shape: f32[1,32], index: 2, kind: input, shape index: {}]
  %s3 = inlined_call_operand.vmem [shape: bf16[512,32], index: 3, kind: output, shape index: {}]
  %s4 = sld [smem:[#allocation0]]
  $region86: #{simple_cnn_forward.3} parent=0
    _
  %s6 = ssub.s32 1, %s4
  %s7 = scalar_select 0, %s6, %s4
  $region1: #{simple_cnn_forward.3} parent=0
    #allocation2 [shape = 'u8[524288]{0}', space=vmem, size = 0x80000, scoped, tag = 'input window, operand 0']
    loop: start=0, step=1, limit=4
    $region2: #{simple_cnn_forward.3} parent=1 // loop_pre_header
      _
    $region3: #{simple_cnn_forward.3} parent=1 // loop_header
      %s9 = sphi 0, %s13
      %p10 = scmp.ge.s32.totalorder %s9, 4
      %s19 = sphi 0, %s21
      %s22 = sphi 0, %s19
      %s23 = sphi 0, %s22
      %s39 = sphi 0, %s23
      %s43 = sphi 0, %s43
      %s45 = sphi 0, %s43
      %s46 = sphi 0, %s45
      %s60 = sphi 0, %s46
      %s64 = sphi 0, %s64
      %s66 = sphi 0, %s64
      %s67 = sphi 0, %s66
      %s81 = sphi 0, %s67
      %s87 = sphi 0, %s89
      %s90 = sphi 0, %s87
      %s91 = sphi 0, %s90
      %s107 = sphi 0, %s91
    $region4: #{simple_cnn_forward.3} parent=1 // loop_header_branch
      %12 = sbr.rel (%p10) target = $region8
    $region5: #{simple_cnn_forward.3} parent=1 // loop_body
      %s14 = ssub.s32 %s9, 1
      %s15 = ssub.s32 %s9, 2
      %s16 = sadd.s32 %s9, 1
      %s17 = ssub.s32 %s9, %s16
      %p18 = scmp.eq.s32.totalorder %s17, 0
      %s20 = sadd.s32 %s19, 1
      %s21 = scalar_select %p18, %s19, %s20
      %p24 = pneg %p18
      %p25 = scmp.eq.s32.totalorder %s9, 1
      %p26 = por %p24, %p25
      %p27 = scmp.ne.s32.totalorder %s19, %s22
      %p28 = scmp.eq.s32.totalorder %s9, 0
      %p29 = por %p27, %p28
      %p30 = scmp.ne.s32.totalorder %s19, %s22
      %p31 = scmp.eq.s32.totalorder %s14, 1
      %p32 = por %p30, %p31
      %p33 = scmp.ne.s32.totalorder %s22, %s23
      %p34 = scmp.eq.s32.totalorder %s14, 0
      %p35 = por %p33, %p34
      %p36 = scmp.ne.s32.totalorder %s22, %s23
      %p37 = scmp.eq.s32.totalorder %s15, 1
      %p38 = por %p36, %p37
      %p40 = scmp.ne.s32.totalorder %s23, %s39
      %p41 = scmp.eq.s32.totalorder %s15, 0
      %p42 = por %p40, %p41
      %s44 = sadd.s32 %s43, 1
      %p47 = scmp.eq.s32.totalorder %s9, 1
      %p48 = scmp.ne.s32.totalorder %s43, %s45
      %p49 = scmp.eq.s32.totalorder %s9, 0
      %p50 = por %p48, %p49
      %p51 = scmp.ne.s32.totalorder %s43, %s45
      %p52 = scmp.eq.s32.totalorder %s14, 1
      %p53 = por %p51, %p52
      %p54 = scmp.ne.s32.totalorder %s45, %s46
      %p55 = scmp.eq.s32.totalorder %s14, 0
      %p56 = por %p54, %p55
      %p57 = scmp.ne.s32.totalorder %s45, %s46
      %p58 = scmp.eq.s32.totalorder %s15, 1
      %p59 = por %p57, %p58
      %p61 = scmp.ne.s32.totalorder %s46, %s60
      %p62 = scmp.eq.s32.totalorder %s15, 0
      %p63 = por %p61, %p62
      %s65 = sadd.s32 %s64, 1
      %p68 = scmp.eq.s32.totalorder %s9, 1
      %p69 = scmp.ne.s32.totalorder %s64, %s66
      %p70 = scmp.eq.s32.totalorder %s9, 0
      %p71 = por %p69, %p70
      %p72 = scmp.ne.s32.totalorder %s64, %s66
      %p73 = scmp.eq.s32.totalorder %s14, 1
      %p74 = por %p72, %p73
      %p75 = scmp.ne.s32.totalorder %s66, %s67
      %p76 = scmp.eq.s32.totalorder %s14, 0
      %p77 = por %p75, %p76
      %p78 = scmp.ne.s32.totalorder %s66, %s67
      %p79 = scmp.eq.s32.totalorder %s15, 1
      %p80 = por %p78, %p79
      %p82 = scmp.ne.s32.totalorder %s67, %s81
      %p83 = scmp.eq.s32.totalorder %s15, 0
      %p84 = por %p82, %p83
      %s85 = ssub.s32 %s9, %s16
      %p86 = scmp.eq.s32.totalorder %s85, 0
      %s88 = sadd.s32 %s87, 1
      %s89 = scalar_select %p86, %s87, %s88
      %p92 = pneg %p86
      %p93 = scmp.eq.s32.totalorder %s9, 1
      %p94 = por %p92, %p93
      %p95 = scmp.ne.s32.totalorder %s87, %s90
      %p96 = scmp.eq.s32.totalorder %s9, 0
      %p97 = por %p95, %p96
      %p98 = scmp.ne.s32.totalorder %s87, %s90
      %p99 = scmp.eq.s32.totalorder %s14, 1
      %p100 = por %p98, %p99
      %p101 = scmp.ne.s32.totalorder %s90, %s91
      %p102 = scmp.eq.s32.totalorder %s14, 0
      %p103 = por %p101, %p102
      %p104 = scmp.ne.s32.totalorder %s90, %s91
      %p105 = scmp.eq.s32.totalorder %s15, 1
      %p106 = por %p104, %p105
      %p108 = scmp.ne.s32.totalorder %s91, %s107
      %p109 = scmp.eq.s32.totalorder %s15, 0
      %p110 = por %p108, %p109
      %p111 = scmp.le.s32.totalorder 1, %s9
      %p112 = scmp.lt.s32.totalorder %s9, 3
      %p113 = pnand %p111, %p112
      %p114 = pneg %p113
      // Predicated region
      $region9: #{simple_cnn_forward.3} parent=5 // pred_check
        _
      $region10: #{simple_cnn_forward.3} parent=5 // pred_check_branch
        %116 = sbr.rel (%p113) target = $region12
      $region11: #{simple_cnn_forward.3} parent=5 // pred_region
        %s117 = ssub.s32 %s9, 1
        // Predicated region
        $region13: #{simple_cnn_forward.3} parent=11 // pred_check
          %p118 = pneg %p56
        $region14: #{simple_cnn_forward.3} parent=11 // pred_check_branch
          %120 = sbr.rel (%p118) target = $region16
        $region15: #{simple_cnn_forward.3} parent=11 // pred_region
          _
        $region16: #{simple_cnn_forward.3} parent=11 // pred_fallthru
          _
        // Predicated region
        $region17: #{simple_cnn_forward.3} parent=11 // pred_check
          %p121 = pneg %p77
        $region18: #{simple_cnn_forward.3} parent=11 // pred_check_branch
          %123 = sbr.rel (%p121) target = $region20
        $region19: #{simple_cnn_forward.3} parent=11 // pred_region
          _
        $region20: #{simple_cnn_forward.3} parent=11 // pred_fallthru
          _
      $region12: #{simple_cnn_forward.3} parent=5 // pred_fallthru
        _
      %p124 = scmp.lt.s32.totalorder %s9, 2
      // Predicated region
      $region21: #{simple_cnn_forward.3} parent=5 // pred_check
        %p125 = pneg %p124
      $region22: #{simple_cnn_forward.3} parent=5 // pred_check_branch
        %127 = sbr.rel (%p125) target = $region24
      $region23: #{simple_cnn_forward.3} parent=5 // pred_region
        // Predicated region
        $region25: #{simple_cnn_forward.3} parent=23 // pred_check
          %p128 = pneg %p29
        $region26: #{simple_cnn_forward.3} parent=23 // pred_check_branch
          %130 = sbr.rel (%p128) target = $region28
        $region27: #{simple_cnn_forward.3} parent=23 // pred_region
          %s131 = sand.u32 %s19, 1
          %s132 = sand.u32 %s19, 1
          %s133 = smul.addr %s132, 512
          %s134 = scalar_lea.vmem [#allocation2], %s133
          %s135 = smul.u32 32, %s9
          %s136 = smul.addr %s135, 4
          %s137 = scalar_lea.vmem %s0, %s136
          // Predicated region
          $region29: #{simple_cnn_forward.3} parent=27 // pred_check
            _
          $region30: #{simple_cnn_forward.3} parent=27 // pred_check_branch
            %139 = sbr.rel (0) target = $region32
          $region31: #{simple_cnn_forward.3} parent=27 // pred_region
            // Predicated region
            $region33: #{simple_cnn_forward.3} parent=31 // pred_check
              _
            $region34: #{simple_cnn_forward.3} parent=31 // pred_check_branch
              %141 = sbr.rel target = $region36
            $region35: #{simple_cnn_forward.3} parent=31 // pred_region
              // Predicated region
              $region48: #{simple_cnn_forward.3} parent=35 // pred_check
                _
              $region49: #{simple_cnn_forward.3} parent=35 // pred_check_branch
                %410 = sbr.rel (0) target = $region51
              $region50: #{simple_cnn_forward.3} parent=35 // pred_region
                loop: start=0, step=1, limit=1
                $region52: #{simple_cnn_forward.3} parent=50 // loop_pre_header
                  _
                $region53: #{simple_cnn_forward.3} parent=50 // loop_header
                  %s412 = sphi 0, %s416
                  %p413 = scmp.ge.s32.totalorder %s412, 1
                  %s417 = sphi %s137, %s137
                  %s418 = sphi %s134, %s134
                $region54: #{simple_cnn_forward.3} parent=50 // loop_header_branch
                  %415 = sbr.rel (%p413) target = $region58
                $region55: #{simple_cnn_forward.3} parent=50 // loop_body
                  _
                $region56: #{simple_cnn_forward.3} parent=50 // loop_footer
                  %s416 = sadd.s32 1, %s412
                $region57: #{simple_cnn_forward.3} parent=50 // loop_footer_branch
                  %411 = sbr.rel target = $region53
                $region58: #{simple_cnn_forward.3} parent=50 // loop_exit
                  _
                loop: start=0, step=1, limit=1
                $region59: #{simple_cnn_forward.3} parent=50 // loop_pre_header
                  _
                $region60: #{simple_cnn_forward.3} parent=50 // loop_header
                  %s421 = sphi 0, %s425
                  %p422 = scmp.ge.s32.totalorder %s421, 1
                  %s426 = sphi %s137, %s137
                  %s427 = sphi %s134, %s134
                $region61: #{simple_cnn_forward.3} parent=50 // loop_header_branch
                  %424 = sbr.rel (%p422) target = $region65
                $region62: #{simple_cnn_forward.3} parent=50 // loop_body
                  %v428 = vld [vmem:[%s426] sm:$0xf]
                  %429 = vst [vmem:[%s427] sm:$0xf] %v428
                  %v430 = vld [vmem:[%s426 + $0x4] sm:$0xf]
                  %431 = vst [vmem:[%s427 + $0x4] sm:$0xf] %v430
                  %v432 = vld [vmem:[%s426 + $0x8] sm:$0xf]
                  %433 = vst [vmem:[%s427 + $0x8] sm:$0xf] %v432
                  %v434 = vld [vmem:[%s426 + $0xc] sm:$0xf]
                  %435 = vst [vmem:[%s427 + $0xc] sm:$0xf] %v434
                  %v436 = vld [vmem:[%s426 + $0x10] sm:$0xf]
                  %437 = vst [vmem:[%s427 + $0x10] sm:$0xf] %v436
                  %v438 = vld [vmem:[%s426 + $0x14] sm:$0xf]
                  %439 = vst [vmem:[%s427 + $0x14] sm:$0xf] %v438
                  %v440 = vld [vmem:[%s426 + $0x18] sm:$0xf]
                  %441 = vst [vmem:[%s427 + $0x18] sm:$0xf] %v440
                  %v442 = vld [vmem:[%s426 + $0x1c] sm:$0xf]
                  %443 = vst [vmem:[%s427 + $0x1c] sm:$0xf] %v442
                  %v444 = vld [vmem:[%s426 + $0x20] sm:$0xf]
                  %445 = vst [vmem:[%s427 + $0x20] sm:$0xf] %v444
                  %v446 = vld [vmem:[%s426 + $0x24] sm:$0xf]
                  %447 = vst [vmem:[%s427 + $0x24] sm:$0xf] %v446
                  %v448 = vld [vmem:[%s426 + $0x28] sm:$0xf]
                  %449 = vst [vmem:[%s427 + $0x28] sm:$0xf] %v448
                  %v450 = vld [vmem:[%s426 + $0x2c] sm:$0xf]
                  %451 = vst [vmem:[%s427 + $0x2c] sm:$0xf] %v450
                  %v452 = vld [vmem:[%s426 + $0x30] sm:$0xf]
                  %453 = vst [vmem:[%s427 + $0x30] sm:$0xf] %v452
                  %v454 = vld [vmem:[%s426 + $0x34] sm:$0xf]
                  %455 = vst [vmem:[%s427 + $0x34] sm:$0xf] %v454
                  %v456 = vld [vmem:[%s426 + $0x38] sm:$0xf]
                  %457 = vst [vmem:[%s427 + $0x38] sm:$0xf] %v456
                  %v458 = vld [vmem:[%s426 + $0x3c] sm:$0xf]
                  %459 = vst [vmem:[%s427 + $0x3c] sm:$0xf] %v458
                  %v460 = vld [vmem:[%s426 + $0x40] sm:$0xf]
                  %461 = vst [vmem:[%s427 + $0x40] sm:$0xf] %v460
                  %v462 = vld [vmem:[%s426 + $0x44] sm:$0xf]
                  %463 = vst [vmem:[%s427 + $0x44] sm:$0xf] %v462
                  %v464 = vld [vmem:[%s426 + $0x48] sm:$0xf]
                  %465 = vst [vmem:[%s427 + $0x48] sm:$0xf] %v464
                  %v466 = vld [vmem:[%s426 + $0x4c] sm:$0xf]
                  %467 = vst [vmem:[%s427 + $0x4c] sm:$0xf] %v466
                  %v468 = vld [vmem:[%s426 + $0x50] sm:$0xf]
                  %469 = vst [vmem:[%s427 + $0x50] sm:$0xf] %v468
                  %v470 = vld [vmem:[%s426 + $0x54] sm:$0xf]
                  %471 = vst [vmem:[%s427 + $0x54] sm:$0xf] %v470
                  %v472 = vld [vmem:[%s426 + $0x58] sm:$0xf]
                  %473 = vst [vmem:[%s427 + $0x58] sm:$0xf] %v472
                  %v474 = vld [vmem:[%s426 + $0x5c] sm:$0xf]
                  %475 = vst [vmem:[%s427 + $0x5c] sm:$0xf] %v474
                  %v476 = vld [vmem:[%s426 + $0x60] sm:$0xf]
                  %477 = vst [vmem:[%s427 + $0x60] sm:$0xf] %v476
                  %v478 = vld [vmem:[%s426 + $0x64] sm:$0xf]
                  %479 = vst [vmem:[%s427 + $0x64] sm:$0xf] %v478
                  %v480 = vld [vmem:[%s426 + $0x68] sm:$0xf]
                  %481 = vst [vmem:[%s427 + $0x68] sm:$0xf] %v480
                  %v482 = vld [vmem:[%s426 + $0x6c] sm:$0xf]
                  %483 = vst [vmem:[%s427 + $0x6c] sm:$0xf] %v482
                  %v484 = vld [vmem:[%s426 + $0x70] sm:$0xf]
                  %485 = vst [vmem:[%s427 + $0x70] sm:$0xf] %v484
                  %v486 = vld [vmem:[%s426 + $0x74] sm:$0xf]
                  %487 = vst [vmem:[%s427 + $0x74] sm:$0xf] %v486
                  %v488 = vld [vmem:[%s426 + $0x78] sm:$0xf]
                  %489 = vst [vmem:[%s427 + $0x78] sm:$0xf] %v488
                  %v490 = vld [vmem:[%s426 + $0x7c] sm:$0xf]
                  %491 = vst [vmem:[%s427 + $0x7c] sm:$0xf] %v490
                  %v492 = vld [vmem:[%s426 + $0x100] sm:$0xf]
                  %493 = vst [vmem:[%s427 + $0x80] sm:$0xf] %v492
                  %v494 = vld [vmem:[%s426 + $0x104] sm:$0xf]
                  %495 = vst [vmem:[%s427 + $0x84] sm:$0xf] %v494
                  %v496 = vld [vmem:[%s426 + $0x108] sm:$0xf]
                  %497 = vst [vmem:[%s427 + $0x88] sm:$0xf] %v496
                  %v498 = vld [vmem:[%s426 + $0x10c] sm:$0xf]
                  %499 = vst [vmem:[%s427 + $0x8c] sm:$0xf] %v498
                  %v500 = vld [vmem:[%s426 + $0x110] sm:$0xf]
                  %501 = vst [vmem:[%s427 + $0x90] sm:$0xf] %v500
                  %v502 = vld [vmem:[%s426 + $0x114] sm:$0xf]
                  %503 = vst [vmem:[%s427 + $0x94] sm:$0xf] %v502
                  %v504 = vld [vmem:[%s426 + $0x118] sm:$0xf]
                  %505 = vst [vmem:[%s427 + $0x98] sm:$0xf] %v504
                  %v506 = vld [vmem:[%s426 + $0x11c] sm:$0xf]
                  %507 = vst [vmem:[%s427 + $0x9c] sm:$0xf] %v506
                  %v508 = vld [vmem:[%s426 + $0x120] sm:$0xf]
                  %509 = vst [vmem:[%s427 + $0xa0] sm:$0xf] %v508
                  %v510 = vld [vmem:[%s426 + $0x124] sm:$0xf]
                  %511 = vst [vmem:[%s427 + $0xa4] sm:$0xf] %v510
                  %v512 = vld [vmem:[%s426 + $0x128] sm:$0xf]
                  %513 = vst [vmem:[%s427 + $0xa8] sm:$0xf] %v512
                  %v514 = vld [vmem:[%s426 + $0x12c] sm:$0xf]
                  %515 = vst [vmem:[%s427 + $0xac] sm:$0xf] %v514
                  %v516 = vld [vmem:[%s426 + $0x130] sm:$0xf]
                  %517 = vst [vmem:[%s427 + $0xb0] sm:$0xf] %v516
                  %v518 = vld [vmem:[%s426 + $0x134] sm:$0xf]
                  %519 = vst [vmem:[%s427 + $0xb4] sm:$0xf] %v518
                  %v520 = vld [vmem:[%s426 + $0x138] sm:$0xf]
                  %521 = vst [vmem:[%s427 + $0xb8] sm:$0xf] %v520
                  %v522 = vld [vmem:[%s426 + $0x13c] sm:$0xf]
                  %523 = vst [vmem:[%s427 + $0xbc] sm:$0xf] %v522
                  %v524 = vld [vmem:[%s426 + $0x140] sm:$0xf]
                  %525 = vst [vmem:[%s427 + $0xc0] sm:$0xf] %v524
                  %v526 = vld [vmem:[%s426 + $0x144] sm:$0xf]
                  %527 = vst [vmem:[%s427 + $0xc4] sm:$0xf] %v526
                  %v528 = vld [vmem:[%s426 + $0x148] sm:$0xf]
                  %529 = vst [vmem:[%s427 + $0xc8] sm:$0xf] %v528
                  %v530 = vld [vmem:[%s426 + $0x14c] sm:$0xf]
                  %531 = vst [vmem:[%s427 + $0xcc] sm:$0xf] %v530
                  %v532 = vld [vmem:[%s426 + $0x150] sm:$0xf]
                  %533 = vst [vmem:[%s427 + $0xd0] sm:$0xf] %v532
                  %v534 = vld [vmem:[%s426 + $0x154] sm:$0xf]
                  %535 = vst [vmem:[%s427 + $0xd4] sm:$0xf] %v534
                  %v536 = vld [vmem:[%s426 + $0x158] sm:$0xf]
                  %537 = vst [vmem:[%s427 + $0xd8] sm:$0xf] %v536
                  %v538 = vld [vmem:[%s426 + $0x15c] sm:$0xf]
                  %539 = vst [vmem:[%s427 + $0xdc] sm:$0xf] %v538
                  %v540 = vld [vmem:[%s426 + $0x160] sm:$0xf]
                  %541 = vst [vmem:[%s427 + $0xe0] sm:$0xf] %v540
                  %v542 = vld [vmem:[%s426 + $0x164] sm:$0xf]
                  %543 = vst [vmem:[%s427 + $0xe4] sm:$0xf] %v542
                  %v544 = vld [vmem:[%s426 + $0x168] sm:$0xf]
                  %545 = vst [vmem:[%s427 + $0xe8] sm:$0xf] %v544
                  %v546 = vld [vmem:[%s426 + $0x16c] sm:$0xf]
                  %547 = vst [vmem:[%s427 + $0xec] sm:$0xf] %v546
                  %v548 = vld [vmem:[%s426 + $0x170] sm:$0xf]
                  %549 = vst [vmem:[%s427 + $0xf0] sm:$0xf] %v548
                  %v550 = vld [vmem:[%s426 + $0x174] sm:$0xf]
                  %551 = vst [vmem:[%s427 + $0xf4] sm:$0xf] %v550
                  %v552 = vld [vmem:[%s426 + $0x178] sm:$0xf]
                  %553 = vst [vmem:[%s427 + $0xf8] sm:$0xf] %v552
                  %v554 = vld [vmem:[%s426 + $0x17c] sm:$0xf]
                  %555 = vst [vmem:[%s427 + $0xfc] sm:$0xf] %v554
                  %v556 = vld [vmem:[%s426 + $0x200] sm:$0xf]
                  %557 = vst [vmem:[%s427 + $0x100] sm:$0xf] %v556
                  %v558 = vld [vmem:[%s426 + $0x204] sm:$0xf]
                  %559 = vst [vmem:[%s427 + $0x104] sm:$0xf] %v558
                  %v560 = vld [vmem:[%s426 + $0x208] sm:$0xf]
                  %561 = vst [vmem:[%s427 + $0x108] sm:$0xf] %v560
                  %v562 = vld [vmem:[%s426 + $0x20c] sm:$0xf]
                  %563 = vst [vmem:[%s427 + $0x10c] sm:$0xf] %v562
                  %v564 = vld [vmem:[%s426 + $0x210] sm:$0xf]
                  %565 = vst [vmem:[%s427 + $0x110] sm:$0xf] %v564
                  %v566 = vld [vmem:[%s426 + $0x214] sm:$0xf]
                  %567 = vst [vmem:[%s427 + $0x114] sm:$0xf] %v566
                  %v568 = vld [vmem:[%s426 + $0x218] sm:$0xf]
                  %569 = vst [vmem:[%s427 + $0x118] sm:$0xf] %v568
                  %v570 = vld [vmem:[%s426 + $0x21c] sm:$0xf]
                  %571 = vst [vmem:[%s427 + $0x11c] sm:$0xf] %v570
                  %v572 = vld [vmem:[%s426 + $0x220] sm:$0xf]
                  %573 = vst [vmem:[%s427 + $0x120] sm:$0xf] %v572
                  %v574 = vld [vmem:[%s426 + $0x224] sm:$0xf]
                  %575 = vst [vmem:[%s427 + $0x124] sm:$0xf] %v574
                  %v576 = vld [vmem:[%s426 + $0x228] sm:$0xf]
                  %577 = vst [vmem:[%s427 + $0x128] sm:$0xf] %v576
                  %v578 = vld [vmem:[%s426 + $0x22c] sm:$0xf]
                  %579 = vst [vmem:[%s427 + $0x12c] sm:$0xf] %v578
                  %v580 = vld [vmem:[%s426 + $0x230] sm:$0xf]
                  %581 = vst [vmem:[%s427 + $0x130] sm:$0xf] %v580
                  %v582 = vld [vmem:[%s426 + $0x234] sm:$0xf]
                  %583 = vst [vmem:[%s427 + $0x134] sm:$0xf] %v582
                  %v584 = vld [vmem:[%s426 + $0x238] sm:$0xf]
                  %585 = vst [vmem:[%s427 + $0x138] sm:$0xf] %v584
                  %v586 = vld [vmem:[%s426 + $0x23c] sm:$0xf]
                  %587 = vst [vmem:[%s427 + $0x13c] sm:$0xf] %v586
                  %v588 = vld [vmem:[%s426 + $0x240] sm:$0xf]
                  %589 = vst [vmem:[%s427 + $0x140] sm:$0xf] %v588
                  %v590 = vld [vmem:[%s426 + $0x244] sm:$0xf]
                  %591 = vst [vmem:[%s427 + $0x144] sm:$0xf] %v590
                  %v592 = vld [vmem:[%s426 + $0x248] sm:$0xf]
                  %593 = vst [vmem:[%s427 + $0x148] sm:$0xf] %v592
                  %v594 = vld [vmem:[%s426 + $0x24c] sm:$0xf]
                  %595 = vst [vmem:[%s427 + $0x14c] sm:$0xf] %v594
                  %v596 = vld [vmem:[%s426 + $0x250] sm:$0xf]
                  %597 = vst [vmem:[%s427 + $0x150] sm:$0xf] %v596
                  %v598 = vld [vmem:[%s426 + $0x254] sm:$0xf]
                  %599 = vst [vmem:[%s427 + $0x154] sm:$0xf] %v598
                  %v600 = vld [vmem:[%s426 + $0x258] sm:$0xf]
                  %601 = vst [vmem:[%s427 + $0x158] sm:$0xf] %v600
                  %v602 = vld [vmem:[%s426 + $0x25c] sm:$0xf]
                  %603 = vst [vmem:[%s427 + $0x15c] sm:$0xf] %v602
                  %v604 = vld [vmem:[%s426 + $0x260] sm:$0xf]
                  %605 = vst [vmem:[%s427 + $0x160] sm:$0xf] %v604
                  %v606 = vld [vmem:[%s426 + $0x264] sm:$0xf]
                  %607 = vst [vmem:[%s427 + $0x164] sm:$0xf] %v606
                  %v608 = vld [vmem:[%s426 + $0x268] sm:$0xf]
                  %609 = vst [vmem:[%s427 + $0x168] sm:$0xf] %v608
                  %v610 = vld [vmem:[%s426 + $0x26c] sm:$0xf]
                  %611 = vst [vmem:[%s427 + $0x16c] sm:$0xf] %v610
                  %v612 = vld [vmem:[%s426 + $0x270] sm:$0xf]
                  %613 = vst [vmem:[%s427 + $0x170] sm:$0xf] %v612
                  %v614 = vld [vmem:[%s426 + $0x274] sm:$0xf]
                  %615 = vst [vmem:[%s427 + $0x174] sm:$0xf] %v614
                  %v616 = vld [vmem:[%s426 + $0x278] sm:$0xf]
                  %617 = vst [vmem:[%s427 + $0x178] sm:$0xf] %v616
                  %v618 = vld [vmem:[%s426 + $0x27c] sm:$0xf]
                  %619 = vst [vmem:[%s427 + $0x17c] sm:$0xf] %v618
                  %v620 = vld [vmem:[%s426 + $0x300] sm:$0xf]
                  %621 = vst [vmem:[%s427 + $0x180] sm:$0xf] %v620
                  %v622 = vld [vmem:[%s426 + $0x304] sm:$0xf]
                  %623 = vst [vmem:[%s427 + $0x184] sm:$0xf] %v622
                  %v624 = vld [vmem:[%s426 + $0x308] sm:$0xf]
                  %625 = vst [vmem:[%s427 + $0x188] sm:$0xf] %v624
                  %v626 = vld [vmem:[%s426 + $0x30c] sm:$0xf]
                  %627 = vst [vmem:[%s427 + $0x18c] sm:$0xf] %v626
                  %v628 = vld [vmem:[%s426 + $0x310] sm:$0xf]
                  %629 = vst [vmem:[%s427 + $0x190] sm:$0xf] %v628
                  %v630 = vld [vmem:[%s426 + $0x314] sm:$0xf]
                  %631 = vst [vmem:[%s427 + $0x194] sm:$0xf] %v630
                  %v632 = vld [vmem:[%s426 + $0x318] sm:$0xf]
                  %633 = vst [vmem:[%s427 + $0x198] sm:$0xf] %v632
                  %v634 = vld [vmem:[%s426 + $0x31c] sm:$0xf]
                  %635 = vst [vmem:[%s427 + $0x19c] sm:$0xf] %v634
                  %v636 = vld [vmem:[%s426 + $0x320] sm:$0xf]
                  %637 = vst [vmem:[%s427 + $0x1a0] sm:$0xf] %v636
                  %v638 = vld [vmem:[%s426 + $0x324] sm:$0xf]
                  %639 = vst [vmem:[%s427 + $0x1a4] sm:$0xf] %v638
                  %v640 = vld [vmem:[%s426 + $0x328] sm:$0xf]
                  %641 = vst [vmem:[%s427 + $0x1a8] sm:$0xf] %v640
                  %v642 = vld [vmem:[%s426 + $0x32c] sm:$0xf]
                  %643 = vst [vmem:[%s427 + $0x1ac] sm:$0xf] %v642
                  %v644 = vld [vmem:[%s426 + $0x330] sm:$0xf]
                  %645 = vst [vmem:[%s427 + $0x1b0] sm:$0xf] %v644
                  %v646 = vld [vmem:[%s426 + $0x334] sm:$0xf]
                  %647 = vst [vmem:[%s427 + $0x1b4] sm:$0xf] %v646
                  %v648 = vld [vmem:[%s426 + $0x338] sm:$0xf]
                  %649 = vst [vmem:[%s427 + $0x1b8] sm:$0xf] %v648
                  %v650 = vld [vmem:[%s426 + $0x33c] sm:$0xf]
                  %651 = vst [vmem:[%s427 + $0x1bc] sm:$0xf] %v650
                  %v652 = vld [vmem:[%s426 + $0x340] sm:$0xf]
                  %653 = vst [vmem:[%s427 + $0x1c0] sm:$0xf] %v652
                  %v654 = vld [vmem:[%s426 + $0x344] sm:$0xf]
                  %655 = vst [vmem:[%s427 + $0x1c4] sm:$0xf] %v654
                  %v656 = vld [vmem:[%s426 + $0x348] sm:$0xf]
                  %657 = vst [vmem:[%s427 + $0x1c8] sm:$0xf] %v656
                  %v658 = vld [vmem:[%s426 + $0x34c] sm:$0xf]
                  %659 = vst [vmem:[%s427 + $0x1cc] sm:$0xf] %v658
                  %v660 = vld [vmem:[%s426 + $0x350] sm:$0xf]
                  %661 = vst [vmem:[%s427 + $0x1d0] sm:$0xf] %v660
                  %v662 = vld [vmem:[%s426 + $0x354] sm:$0xf]
                  %663 = vst [vmem:[%s427 + $0x1d4] sm:$0xf] %v662
                  %v664 = vld [vmem:[%s426 + $0x358] sm:$0xf]
                  %665 = vst [vmem:[%s427 + $0x1d8] sm:$0xf] %v664
                  %v666 = vld [vmem:[%s426 + $0x35c] sm:$0xf]
                  %667 = vst [vmem:[%s427 + $0x1dc] sm:$0xf] %v666
                  %v668 = vld [vmem:[%s426 + $0x360] sm:$0xf]
                  %669 = vst [vmem:[%s427 + $0x1e0] sm:$0xf] %v668
                  %v670 = vld [vmem:[%s426 + $0x364] sm:$0xf]
                  %671 = vst [vmem:[%s427 + $0x1e4] sm:$0xf] %v670
                  %v672 = vld [vmem:[%s426 + $0x368] sm:$0xf]
                  %673 = vst [vmem:[%s427 + $0x1e8] sm:$0xf] %v672
                  %v674 = vld [vmem:[%s426 + $0x36c] sm:$0xf]
                  %675 = vst [vmem:[%s427 + $0x1ec] sm:$0xf] %v674
                  %v676 = vld [vmem:[%s426 + $0x370] sm:$0xf]
                  %677 = vst [vmem:[%s427 + $0x1f0] sm:$0xf] %v676
                  %v678 = vld [vmem:[%s426 + $0x374] sm:$0xf]
                  %679 = vst [vmem:[%s427 + $0x1f4] sm:$0xf] %v678
                  %v680 = vld [vmem:[%s426 + $0x378] sm:$0xf]
                  %681 = vst [vmem:[%s427 + $0x1f8] sm:$0xf] %v680
                  %v682 = vld [vmem:[%s426 + $0x37c] sm:$0xf]
                  %683 = vst [vmem:[%s427 + $0x1fc] sm:$0xf] %v682
                $region63: #{simple_cnn_forward.3} parent=50 // loop_footer
                  %s425 = sadd.s32 1, %s421
                $region64: #{simple_cnn_forward.3} parent=50 // loop_footer_branch
                  %420 = sbr.rel target = $region60
                $region65: #{simple_cnn_forward.3} parent=50 // loop_exit
                  _
              $region51: #{simple_cnn_forward.3} parent=35 // pred_fallthru
                _
            $region36: #{simple_cnn_forward.3} parent=31 // pred_fallthru
              _
            // Predicated region
            $region37: #{simple_cnn_forward.3} parent=31 // pred_check
              _
            $region38: #{simple_cnn_forward.3} parent=31 // pred_check_branch
              %143 = sbr.rel (0) target = $region40
            $region39: #{simple_cnn_forward.3} parent=31 // pred_region
              loop: start=0, step=1, limit=1
              $region41: #{simple_cnn_forward.3} parent=39 // loop_pre_header
                _
              $region42: #{simple_cnn_forward.3} parent=39 // loop_header
                %s146 = sphi 0, %s150
                %p147 = scmp.ge.s32.totalorder %s146, 1
                %s151 = sphi %s137, %s137
                %s152 = sphi %s134, %s134
              $region43: #{simple_cnn_forward.3} parent=39 // loop_header_branch
                %149 = sbr.rel (%p147) target = $region47
              $region44: #{simple_cnn_forward.3} parent=39 // loop_body
                %v153 = vld [vmem:[%s151] sm:$0xf]
                %154 = vst [vmem:[%s152] sm:$0xf] %v153
                %v155 = vld [vmem:[%s151 + $0x4] sm:$0xf]
                %156 = vst [vmem:[%s152 + $0x4] sm:$0xf] %v155
                %v157 = vld [vmem:[%s151 + $0x8] sm:$0xf]
                %158 = vst [vmem:[%s152 + $0x8] sm:$0xf] %v157
                %v159 = vld [vmem:[%s151 + $0xc] sm:$0xf]
                %160 = vst [vmem:[%s152 + $0xc] sm:$0xf] %v159
                %v161 = vld [vmem:[%s151 + $0x10] sm:$0xf]
                %162 = vst [vmem:[%s152 + $0x10] sm:$0xf] %v161
                %v163 = vld [vmem:[%s151 + $0x14] sm:$0xf]
                %164 = vst [vmem:[%s152 + $0x14] sm:$0xf] %v163
                %v165 = vld [vmem:[%s151 + $0x18] sm:$0xf]
                %166 = vst [vmem:[%s152 + $0x18] sm:$0xf] %v165
                %v167 = vld [vmem:[%s151 + $0x1c] sm:$0xf]
                %168 = vst [vmem:[%s152 + $0x1c] sm:$0xf] %v167
                %v169 = vld [vmem:[%s151 + $0x20] sm:$0xf]
                %170 = vst [vmem:[%s152 + $0x20] sm:$0xf] %v169
                %v171 = vld [vmem:[%s151 + $0x24] sm:$0xf]
                %172 = vst [vmem:[%s152 + $0x24] sm:$0xf] %v171
                %v173 = vld [vmem:[%s151 + $0x28] sm:$0xf]
                %174 = vst [vmem:[%s152 + $0x28] sm:$0xf] %v173
                %v175 = vld [vmem:[%s151 + $0x2c] sm:$0xf]
                %176 = vst [vmem:[%s152 + $0x2c] sm:$0xf] %v175
                %v177 = vld [vmem:[%s151 + $0x30] sm:$0xf]
                %178 = vst [vmem:[%s152 + $0x30] sm:$0xf] %v177
                %v179 = vld [vmem:[%s151 + $0x34] sm:$0xf]
                %180 = vst [vmem:[%s152 + $0x34] sm:$0xf] %v179
                %v181 = vld [vmem:[%s151 + $0x38] sm:$0xf]
                %182 = vst [vmem:[%s152 + $0x38] sm:$0xf] %v181
                %v183 = vld [vmem:[%s151 + $0x3c] sm:$0xf]
                %184 = vst [vmem:[%s152 + $0x3c] sm:$0xf] %v183
                %v185 = vld [vmem:[%s151 + $0x40] sm:$0xf]
                %186 = vst [vmem:[%s152 + $0x40] sm:$0xf] %v185
                %v187 = vld [vmem:[%s151 + $0x44] sm:$0xf]
                %188 = vst [vmem:[%s152 + $0x44] sm:$0xf] %v187
                %v189 = vld [vmem:[%s151 + $0x48] sm:$0xf]
                %190 = vst [vmem:[%s152 + $0x48] sm:$0xf] %v189
                %v191 = vld [vmem:[%s151 + $0x4c] sm:$0xf]
                %192 = vst [vmem:[%s152 + $0x4c] sm:$0xf] %v191
                %v193 = vld [vmem:[%s151 + $0x50] sm:$0xf]
                %194 = vst [vmem:[%s152 + $0x50] sm:$0xf] %v193
                %v195 = vld [vmem:[%s151 + $0x54] sm:$0xf]
                %196 = vst [vmem:[%s152 + $0x54] sm:$0xf] %v195
                %v197 = vld [vmem:[%s151 + $0x58] sm:$0xf]
                %198 = vst [vmem:[%s152 + $0x58] sm:$0xf] %v197
                %v199 = vld [vmem:[%s151 + $0x5c] sm:$0xf]
                %200 = vst [vmem:[%s152 + $0x5c] sm:$0xf] %v199
                %v201 = vld [vmem:[%s151 + $0x60] sm:$0xf]
                %202 = vst [vmem:[%s152 + $0x60] sm:$0xf] %v201
                %v203 = vld [vmem:[%s151 + $0x64] sm:$0xf]
                %204 = vst [vmem:[%s152 + $0x64] sm:$0xf] %v203
                %v205 = vld [vmem:[%s151 + $0x68] sm:$0xf]
                %206 = vst [vmem:[%s152 + $0x68] sm:$0xf] %v205
                %v207 = vld [vmem:[%s151 + $0x6c] sm:$0xf]
                %208 = vst [vmem:[%s152 + $0x6c] sm:$0xf] %v207
                %v209 = vld [vmem:[%s151 + $0x70] sm:$0xf]
                %210 = vst [vmem:[%s152 + $0x70] sm:$0xf] %v209
                %v211 = vld [vmem:[%s151 + $0x74] sm:$0xf]
                %212 = vst [vmem:[%s152 + $0x74] sm:$0xf] %v211
                %v213 = vld [vmem:[%s151 + $0x78] sm:$0xf]
                %214 = vst [vmem:[%s152 + $0x78] sm:$0xf] %v213
                %v215 = vld [vmem:[%s151 + $0x7c] sm:$0xf]
                %216 = vst [vmem:[%s152 + $0x7c] sm:$0xf] %v215
                %v217 = vld [vmem:[%s151 + $0x100] sm:$0xf]
                %218 = vst [vmem:[%s152 + $0x80] sm:$0xf] %v217
                %v219 = vld [vmem:[%s151 + $0x104] sm:$0xf]
                %220 = vst [vmem:[%s152 + $0x84] sm:$0xf] %v219
                %v221 = vld [vmem:[%s151 + $0x108] sm:$0xf]
                %222 = vst [vmem:[%s152 + $0x88] sm:$0xf] %v221
                %v223 = vld [vmem:[%s151 + $0x10c] sm:$0xf]
                %224 = vst [vmem:[%s152 + $0x8c] sm:$0xf] %v223
                %v225 = vld [vmem:[%s151 + $0x110] sm:$0xf]
                %226 = vst [vmem:[%s152 + $0x90] sm:$0xf] %v225
                %v227 = vld [vmem:[%s151 + $0x114] sm:$0xf]
                %228 = vst [vmem:[%s152 + $0x94] sm:$0xf] %v227
                %v229 = vld [vmem:[%s151 + $0x118] sm:$0xf]
                %230 = vst [vmem:[%s152 + $0x98] sm:$0xf] %v229
                %v231 = vld [vmem:[%s151 + $0x11c] sm:$0xf]
                %232 = vst [vmem:[%s152 + $0x9c] sm:$0xf] %v231
                %v233 = vld [vmem:[%s151 + $0x120] sm:$0xf]
                %234 = vst [vmem:[%s152 + $0xa0] sm:$0xf] %v233
                %v235 = vld [vmem:[%s151 + $0x124] sm:$0xf]
                %236 = vst [vmem:[%s152 + $0xa4] sm:$0xf] %v235
                %v237 = vld [vmem:[%s151 + $0x128] sm:$0xf]
                %238 = vst [vmem:[%s152 + $0xa8] sm:$0xf] %v237
                %v239 = vld [vmem:[%s151 + $0x12c] sm:$0xf]
                %240 = vst [vmem:[%s152 + $0xac] sm:$0xf] %v239
                %v241 = vld [vmem:[%s151 + $0x130] sm:$0xf]
                %242 = vst [vmem:[%s152 + $0xb0] sm:$0xf] %v241
                %v243 = vld [vmem:[%s151 + $0x134] sm:$0xf]
                %244 = vst [vmem:[%s152 + $0xb4] sm:$0xf] %v243
                %v245 = vld [vmem:[%s151 + $0x138] sm:$0xf]
                %246 = vst [vmem:[%s152 + $0xb8] sm:$0xf] %v245
                %v247 = vld [vmem:[%s151 + $0x13c] sm:$0xf]
                %248 = vst [vmem:[%s152 + $0xbc] sm:$0xf] %v247
                %v249 = vld [vmem:[%s151 + $0x140] sm:$0xf]
                %250 = vst [vmem:[%s152 + $0xc0] sm:$0xf] %v249
                %v251 = vld [vmem:[%s151 + $0x144] sm:$0xf]
                %252 = vst [vmem:[%s152 + $0xc4] sm:$0xf] %v251
                %v253 = vld [vmem:[%s151 + $0x148] sm:$0xf]
                %254 = vst [vmem:[%s152 + $0xc8] sm:$0xf] %v253
                %v255 = vld [vmem:[%s151 + $0x14c] sm:$0xf]
                %256 = vst [vmem:[%s152 + $0xcc] sm:$0xf] %v255
                %v257 = vld [vmem:[%s151 + $0x150] sm:$0xf]
                %258 = vst [vmem:[%s152 + $0xd0] sm:$0xf] %v257
                %v259 = vld [vmem:[%s151 + $0x154] sm:$0xf]
                %260 = vst [vmem:[%s152 + $0xd4] sm:$0xf] %v259
                %v261 = vld [vmem:[%s151 + $0x158] sm:$0xf]
                %262 = vst [vmem:[%s152 + $0xd8] sm:$0xf] %v261
                %v263 = vld [vmem:[%s151 + $0x15c] sm:$0xf]
                %264 = vst [vmem:[%s152 + $0xdc] sm:$0xf] %v263
                %v265 = vld [vmem:[%s151 + $0x160] sm:$0xf]
                %266 = vst [vmem:[%s152 + $0xe0] sm:$0xf] %v265
                %v267 = vld [vmem:[%s151 + $0x164] sm:$0xf]
                %268 = vst [vmem:[%s152 + $0xe4] sm:$0xf] %v267
                %v269 = vld [vmem:[%s151 + $0x168] sm:$0xf]
                %270 = vst [vmem:[%s152 + $0xe8] sm:$0xf] %v269
                %v271 = vld [vmem:[%s151 + $0x16c] sm:$0xf]
                %272 = vst [vmem:[%s152 + $0xec] sm:$0xf] %v271
                %v273 = vld [vmem:[%s151 + $0x170] sm:$0xf]
                %274 = vst [vmem:[%s152 + $0xf0] sm:$0xf] %v273
                %v275 = vld [vmem:[%s151 + $0x174] sm:$0xf]
                %276 = vst [vmem:[%s152 + $0xf4] sm:$0xf] %v275
                %v277 = vld [vmem:[%s151 + $0x178] sm:$0xf]
                %278 = vst [vmem:[%s152 + $0xf8] sm:$0xf] %v277
                %v279 = vld [vmem:[%s151 + $0x17c] sm:$0xf]
                %280 = vst [vmem:[%s152 + $0xfc] sm:$0xf] %v279
                %v281 = vld [vmem:[%s151 + $0x200] sm:$0xf]
                %282 = vst [vmem:[%s152 + $0x100] sm:$0xf] %v281
                %v283 = vld [vmem:[%s151 + $0x204] sm:$0xf]
                %284 = vst [vmem:[%s152 + $0x104] sm:$0xf] %v283
                %v285 = vld [vmem:[%s151 + $0x208] sm:$0xf]
                %286 = vst [vmem:[%s152 + $0x108] sm:$0xf] %v285
                %v287 = vld [vmem:[%s151 + $0x20c] sm:$0xf]
                %288 = vst [vmem:[%s152 + $0x10c] sm:$0xf] %v287
                %v289 = vld [vmem:[%s151 + $0x210] sm:$0xf]
                %290 = vst [vmem:[%s152 + $0x110] sm:$0xf] %v289
                %v291 = vld [vmem:[%s151 + $0x214] sm:$0xf]
                %292 = vst [vmem:[%s152 + $0x114] sm:$0xf] %v291
                %v293 = vld [vmem:[%s151 + $0x218] sm:$0xf]
                %294 = vst [vmem:[%s152 + $0x118] sm:$0xf] %v293
                %v295 = vld [vmem:[%s151 + $0x21c] sm:$0xf]
                %296 = vst [vmem:[%s152 + $0x11c] sm:$0xf] %v295
                %v297 = vld [vmem:[%s151 + $0x220] sm:$0xf]
                %298 = vst [vmem:[%s152 + $0x120] sm:$0xf] %v297
                %v299 = vld [vmem:[%s151 + $0x224] sm:$0xf]
                %300 = vst [vmem:[%s152 + $0x124] sm:$0xf] %v299
                %v301 = vld [vmem:[%s151 + $0x228] sm:$0xf]
                %302 = vst [vmem:[%s152 + $0x128] sm:$0xf] %v301
                %v303 = vld [vmem:[%s151 + $0x22c] sm:$0xf]
                %304 = vst [vmem:[%s152 + $0x12c] sm:$0xf] %v303
                %v305 = vld [vmem:[%s151 + $0x230] sm:$0xf]
                %306 = vst [vmem:[%s152 + $0x130] sm:$0xf] %v305
                %v307 = vld [vmem:[%s151 + $0x234] sm:$0xf]
                %308 = vst [vmem:[%s152 + $0x134] sm:$0xf] %v307
                %v309 = vld [vmem:[%s151 + $0x238] sm:$0xf]
                %310 = vst [vmem:[%s152 + $0x138] sm:$0xf] %v309
                %v311 = vld [vmem:[%s151 + $0x23c] sm:$0xf]
                %312 = vst [vmem:[%s152 + $0x13c] sm:$0xf] %v311
                %v313 = vld [vmem:[%s151 + $0x240] sm:$0xf]
                %314 = vst [vmem:[%s152 + $0x140] sm:$0xf] %v313
                %v315 = vld [vmem:[%s151 + $0x244] sm:$0xf]
                %316 = vst [vmem:[%s152 + $0x144] sm:$0xf] %v315
                %v317 = vld [vmem:[%s151 + $0x248] sm:$0xf]
                %318 = vst [vmem:[%s152 + $0x148] sm:$0xf] %v317
                %v319 = vld [vmem:[%s151 + $0x24c] sm:$0xf]
                %320 = vst [vmem:[%s152 + $0x14c] sm:$0xf] %v319
                %v321 = vld [vmem:[%s151 + $0x250] sm:$0xf]
                %322 = vst [vmem:[%s152 + $0x150] sm:$0xf] %v321
                %v323 = vld [vmem:[%s151 + $0x254] sm:$0xf]
                %324 = vst [vmem:[%s152 + $0x154] sm:$0xf] %v323
                %v325 = vld [vmem:[%s151 + $0x258] sm:$0xf]
                %326 = vst [vmem:[%s152 + $0x158] sm:$0xf] %v325
                %v327 = vld [vmem:[%s151 + $0x25c] sm:$0xf]
                %328 = vst [vmem:[%s152 + $0x15c] sm:$0xf] %v327
                %v329 = vld [vmem:[%s151 + $0x260] sm:$0xf]
                %330 = vst [vmem:[%s152 + $0x160] sm:$0xf] %v329
                %v331 = vld [vmem:[%s151 + $0x264] sm:$0xf]
                %332 = vst [vmem:[%s152 + $0x164] sm:$0xf] %v331
                %v333 = vld [vmem:[%s151 + $0x268] sm:$0xf]
                %334 = vst [vmem:[%s152 + $0x168] sm:$0xf] %v333
                %v335 = vld [vmem:[%s151 + $0x26c] sm:$0xf]
                %336 = vst [vmem:[%s152 + $0x16c] sm:$0xf] %v335
                %v337 = vld [vmem:[%s151 + $0x270] sm:$0xf]
                %338 = vst [vmem:[%s152 + $0x170] sm:$0xf] %v337
                %v339 = vld [vmem:[%s151 + $0x274] sm:$0xf]
                %340 = vst [vmem:[%s152 + $0x174] sm:$0xf] %v339
                %v341 = vld [vmem:[%s151 + $0x278] sm:$0xf]
                %342 = vst [vmem:[%s152 + $0x178] sm:$0xf] %v341
                %v343 = vld [vmem:[%s151 + $0x27c] sm:$0xf]
                %344 = vst [vmem:[%s152 + $0x17c] sm:$0xf] %v343
                %v345 = vld [vmem:[%s151 + $0x300] sm:$0xf]
                %346 = vst [vmem:[%s152 + $0x180] sm:$0xf] %v345
                %v347 = vld [vmem:[%s151 + $0x304] sm:$0xf]
                %348 = vst [vmem:[%s152 + $0x184] sm:$0xf] %v347
                %v349 = vld [vmem:[%s151 + $0x308] sm:$0xf]
                %350 = vst [vmem:[%s152 + $0x188] sm:$0xf] %v349
                %v351 = vld [vmem:[%s151 + $0x30c] sm:$0xf]
                %352 = vst [vmem:[%s152 + $0x18c] sm:$0xf] %v351
                %v353 = vld [vmem:[%s151 + $0x310] sm:$0xf]
                %354 = vst [vmem:[%s152 + $0x190] sm:$0xf] %v353
                %v355 = vld [vmem:[%s151 + $0x314] sm:$0xf]
                %356 = vst [vmem:[%s152 + $0x194] sm:$0xf] %v355
                %v357 = vld [vmem:[%s151 + $0x318] sm:$0xf]
                %358 = vst [vmem:[%s152 + $0x198] sm:$0xf] %v357
                %v359 = vld [vmem:[%s151 + $0x31c] sm:$0xf]
                %360 = vst [vmem:[%s152 + $0x19c] sm:$0xf] %v359
                %v361 = vld [vmem:[%s151 + $0x320] sm:$0xf]
                %362 = vst [vmem:[%s152 + $0x1a0] sm:$0xf] %v361
                %v363 = vld [vmem:[%s151 + $0x324] sm:$0xf]
                %364 = vst [vmem:[%s152 + $0x1a4] sm:$0xf] %v363
                %v365 = vld [vmem:[%s151 + $0x328] sm:$0xf]
                %366 = vst [vmem:[%s152 + $0x1a8] sm:$0xf] %v365
                %v367 = vld [vmem:[%s151 + $0x32c] sm:$0xf]
                %368 = vst [vmem:[%s152 + $0x1ac] sm:$0xf] %v367
                %v369 = vld [vmem:[%s151 + $0x330] sm:$0xf]
                %370 = vst [vmem:[%s152 + $0x1b0] sm:$0xf] %v369
                %v371 = vld [vmem:[%s151 + $0x334] sm:$0xf]
                %372 = vst [vmem:[%s152 + $0x1b4] sm:$0xf] %v371
                %v373 = vld [vmem:[%s151 + $0x338] sm:$0xf]
                %374 = vst [vmem:[%s152 + $0x1b8] sm:$0xf] %v373
                %v375 = vld [vmem:[%s151 + $0x33c] sm:$0xf]
                %376 = vst [vmem:[%s152 + $0x1bc] sm:$0xf] %v375
                %v377 = vld [vmem:[%s151 + $0x340] sm:$0xf]
                %378 = vst [vmem:[%s152 + $0x1c0] sm:$0xf] %v377
                %v379 = vld [vmem:[%s151 + $0x344] sm:$0xf]
                %380 = vst [vmem:[%s152 + $0x1c4] sm:$0xf] %v379
                %v381 = vld [vmem:[%s151 + $0x348] sm:$0xf]
                %382 = vst [vmem:[%s152 + $0x1c8] sm:$0xf] %v381
                %v383 = vld [vmem:[%s151 + $0x34c] sm:$0xf]
                %384 = vst [vmem:[%s152 + $0x1cc] sm:$0xf] %v383
                %v385 = vld [vmem:[%s151 + $0x350] sm:$0xf]
                %386 = vst [vmem:[%s152 + $0x1d0] sm:$0xf] %v385
                %v387 = vld [vmem:[%s151 + $0x354] sm:$0xf]
                %388 = vst [vmem:[%s152 + $0x1d4] sm:$0xf] %v387
                %v389 = vld [vmem:[%s151 + $0x358] sm:$0xf]
                %390 = vst [vmem:[%s152 + $0x1d8] sm:$0xf] %v389
                %v391 = vld [vmem:[%s151 + $0x35c] sm:$0xf]
                %392 = vst [vmem:[%s152 + $0x1dc] sm:$0xf] %v391
                %v393 = vld [vmem:[%s151 + $0x360] sm:$0xf]
                %394 = vst [vmem:[%s152 + $0x1e0] sm:$0xf] %v393
                %v395 = vld [vmem:[%s151 + $0x364] sm:$0xf]
                %396 = vst [vmem:[%s152 + $0x1e4] sm:$0xf] %v395
                %v397 = vld [vmem:[%s151 + $0x368] sm:$0xf]
                %398 = vst [vmem:[%s152 + $0x1e8] sm:$0xf] %v397
                %v399 = vld [vmem:[%s151 + $0x36c] sm:$0xf]
                %400 = vst [vmem:[%s152 + $0x1ec] sm:$0xf] %v399
                %v401 = vld [vmem:[%s151 + $0x370] sm:$0xf]
                %402 = vst [vmem:[%s152 + $0x1f0] sm:$0xf] %v401
                %v403 = vld [vmem:[%s151 + $0x374] sm:$0xf]
                %404 = vst [vmem:[%s152 + $0x1f4] sm:$0xf] %v403
                %v405 = vld [vmem:[%s151 + $0x378] sm:$0xf]
                %406 = vst [vmem:[%s152 + $0x1f8] sm:$0xf] %v405
                %v407 = vld [vmem:[%s151 + $0x37c] sm:$0xf]
                %408 = vst [vmem:[%s152 + $0x1fc] sm:$0xf] %v407
              $region45: #{simple_cnn_forward.3} parent=39 // loop_footer
                %s150 = sadd.s32 1, %s146
              $region46: #{simple_cnn_forward.3} parent=39 // loop_footer_branch
                %145 = sbr.rel target = $region42
              $region47: #{simple_cnn_forward.3} parent=39 // loop_exit
                _
            $region40: #{simple_cnn_forward.3} parent=31 // pred_fallthru
              _
          $region32: #{simple_cnn_forward.3} parent=27 // pred_fallthru
            _
          %684 = vnop
        $region28: #{simple_cnn_forward.3} parent=23 // pred_fallthru
          _
      $region24: #{simple_cnn_forward.3} parent=5 // pred_fallthru
        _
      %p685 = scmp.le.s32.totalorder 1, %s9
      %p686 = scmp.lt.s32.totalorder %s9, 3
      %p687 = pnand %p685, %p686
      %p688 = pneg %p687
      // Predicated region
      $region66: #{simple_cnn_forward.3} parent=5 // pred_check
        _
      $region67: #{simple_cnn_forward.3} parent=5 // pred_check_branch
        %690 = sbr.rel (%p687) target = $region69
      $region68: #{simple_cnn_forward.3} parent=5 // pred_region
        %s691 = ssub.s32 %s9, 1
        %s692 = sand.u32 %s22, 1
        %s693 = sand.u32 %s22, 1
        %s694 = smul.addr %s693, 512
        %s695 = scalar_lea.vmem [#allocation2], %s694
        // Predicated region
        $region70: #{simple_cnn_forward.3} parent=68 // pred_check
          %p696 = pneg %p35
        $region71: #{simple_cnn_forward.3} parent=68 // pred_check_branch
          %698 = sbr.rel (%p696) target = $region73
        $region72: #{simple_cnn_forward.3} parent=68 // pred_region
          _
        $region73: #{simple_cnn_forward.3} parent=68 // pred_fallthru
          _
        %s699 = sand.u32 %s22, 1
        %s700 = sand.u32 %s22, 1
        %s701 = smul.addr %s700, 512
        %s702 = scalar_lea.vmem [#allocation2], %s701
        %p703 = pneg %p35
        %p704 = pneg %p32
        %p705 = pneg %p56
        %p706 = pneg %p53
        %p707 = pneg %p77
        %p708 = pneg %p74
        %p709 = pneg %p103
        %p710 = pneg %p100
        %s711 = smul.u32 32, %s14
        %p712 = scmp.lt.s32.totalorder %s711, 63
        %s713 = scalar_select %p712, %s711, 63
        %s714 = smul.addr %s713, 4
        %s715 = scalar_lea.vmem %s3, %s714
        %s716 = smul.u32 32, %s14
        %s717 = smul.u32 32, %s14
        %p718 = scmp.lt.s32.totalorder %s717, 63
        %s719 = scalar_select %p718, %s717, 63
        %s720 = smul.addr %s719, 4
        %s721 = scalar_lea.vmem %s3, %s720
        %s722 = smul.u32 32, %s14
        %v724 = vld [vmem:[%s695] sm:$0xf]
        %v725 = vld [vmem:[%s695 + $0x4] sm:$0xf]
        %v726 = vld [vmem:[%s695 + $0x8] sm:$0xf]
        %v727 = vld [vmem:[%s695 + $0xc] sm:$0xf]
        %v728 = vld [vmem:[%s695 + $0x10] sm:$0xf]
        %v729 = vld [vmem:[%s695 + $0x14] sm:$0xf]
        %v730 = vld [vmem:[%s695 + $0x18] sm:$0xf]
        %v731 = vld [vmem:[%s695 + $0x1c] sm:$0xf]
        %v732 = vld [vmem:[%s695 + $0x20] sm:$0xf]
        %v733 = vld [vmem:[%s695 + $0x24] sm:$0xf]
        %v734 = vld [vmem:[%s695 + $0x28] sm:$0xf]
        %v735 = vld [vmem:[%s695 + $0x2c] sm:$0xf]
        %v736 = vld [vmem:[%s695 + $0x30] sm:$0xf]
        %v737 = vld [vmem:[%s695 + $0x34] sm:$0xf]
        %v738 = vld [vmem:[%s695 + $0x38] sm:$0xf]
        %v739 = vld [vmem:[%s695 + $0x3c] sm:$0xf]
        %v740 = vld [vmem:[%s695 + $0x40] sm:$0xf]
        %v741 = vld [vmem:[%s695 + $0x44] sm:$0xf]
        %v742 = vld [vmem:[%s695 + $0x48] sm:$0xf]
        %v743 = vld [vmem:[%s695 + $0x4c] sm:$0xf]
        %v744 = vld [vmem:[%s695 + $0x50] sm:$0xf]
        %v745 = vld [vmem:[%s695 + $0x54] sm:$0xf]
        %v746 = vld [vmem:[%s695 + $0x58] sm:$0xf]
        %v747 = vld [vmem:[%s695 + $0x5c] sm:$0xf]
        %v748 = vld [vmem:[%s695 + $0x60] sm:$0xf]
        %v749 = vld [vmem:[%s695 + $0x64] sm:$0xf]
        %v750 = vld [vmem:[%s695 + $0x68] sm:$0xf]
        %v751 = vld [vmem:[%s695 + $0x6c] sm:$0xf]
        %v752 = vld [vmem:[%s695 + $0x70] sm:$0xf]
        %v753 = vld [vmem:[%s695 + $0x74] sm:$0xf]
        %v754 = vld [vmem:[%s695 + $0x78] sm:$0xf]
        %v755 = vld [vmem:[%s695 + $0x7c] sm:$0xf]
        %v756 = vld [vmem:[%s695 + $0x80] sm:$0xf]
        %v757 = vld [vmem:[%s695 + $0x84] sm:$0xf]
        %v758 = vld [vmem:[%s695 + $0x88] sm:$0xf]
        %v759 = vld [vmem:[%s695 + $0x8c] sm:$0xf]
        %v760 = vld [vmem:[%s695 + $0x90] sm:$0xf]
        %v761 = vld [vmem:[%s695 + $0x94] sm:$0xf]
        %v762 = vld [vmem:[%s695 + $0x98] sm:$0xf]
        %v763 = vld [vmem:[%s695 + $0x9c] sm:$0xf]
        %v764 = vld [vmem:[%s695 + $0xa0] sm:$0xf]
        %v765 = vld [vmem:[%s695 + $0xa4] sm:$0xf]
        %v766 = vld [vmem:[%s695 + $0xa8] sm:$0xf]
        %v767 = vld [vmem:[%s695 + $0xac] sm:$0xf]
        %v768 = vld [vmem:[%s695 + $0xb0] sm:$0xf]
        %v769 = vld [vmem:[%s695 + $0xb4] sm:$0xf]
        %v770 = vld [vmem:[%s695 + $0xb8] sm:$0xf]
        %v771 = vld [vmem:[%s695 + $0xbc] sm:$0xf]
        %v772 = vld [vmem:[%s695 + $0xc0] sm:$0xf]
        %v773 = vld [vmem:[%s695 + $0xc4] sm:$0xf]
        %v774 = vld [vmem:[%s695 + $0xc8] sm:$0xf]
        %v775 = vld [vmem:[%s695 + $0xcc] sm:$0xf]
        %v776 = vld [vmem:[%s695 + $0xd0] sm:$0xf]
        %v777 = vld [vmem:[%s695 + $0xd4] sm:$0xf]
        %v778 = vld [vmem:[%s695 + $0xd8] sm:$0xf]
        %v779 = vld [vmem:[%s695 + $0xdc] sm:$0xf]
        %v780 = vld [vmem:[%s695 + $0xe0] sm:$0xf]
        %v781 = vld [vmem:[%s695 + $0xe4] sm:$0xf]
        %v782 = vld [vmem:[%s695 + $0xe8] sm:$0xf]
        %v783 = vld [vmem:[%s695 + $0xec] sm:$0xf]
        %v784 = vld [vmem:[%s695 + $0xf0] sm:$0xf]
        %v785 = vld [vmem:[%s695 + $0xf4] sm:$0xf]
        %v786 = vld [vmem:[%s695 + $0xf8] sm:$0xf]
        %v787 = vld [vmem:[%s695 + $0xfc] sm:$0xf]
        %v788 = vld [vmem:[%s695 + $0x100] sm:$0xf]
        %v789 = vld [vmem:[%s695 + $0x104] sm:$0xf]
        %v790 = vld [vmem:[%s695 + $0x108] sm:$0xf]
        %v791 = vld [vmem:[%s695 + $0x10c] sm:$0xf]
        %v792 = vld [vmem:[%s695 + $0x110] sm:$0xf]
        %v793 = vld [vmem:[%s695 + $0x114] sm:$0xf]
        %v794 = vld [vmem:[%s695 + $0x118] sm:$0xf]
        %v795 = vld [vmem:[%s695 + $0x11c] sm:$0xf]
        %v796 = vld [vmem:[%s695 + $0x120] sm:$0xf]
        %v797 = vld [vmem:[%s695 + $0x124] sm:$0xf]
        %v798 = vld [vmem:[%s695 + $0x128] sm:$0xf]
        %v799 = vld [vmem:[%s695 + $0x12c] sm:$0xf]
        %v800 = vld [vmem:[%s695 + $0x130] sm:$0xf]
        %v801 = vld [vmem:[%s695 + $0x134] sm:$0xf]
        %v802 = vld [vmem:[%s695 + $0x138] sm:$0xf]
        %v803 = vld [vmem:[%s695 + $0x13c] sm:$0xf]
        %v804 = vld [vmem:[%s695 + $0x140] sm:$0xf]
        %v805 = vld [vmem:[%s695 + $0x144] sm:$0xf]
        %v806 = vld [vmem:[%s695 + $0x148] sm:$0xf]
        %v807 = vld [vmem:[%s695 + $0x14c] sm:$0xf]
        %v808 = vld [vmem:[%s695 + $0x150] sm:$0xf]
        %v809 = vld [vmem:[%s695 + $0x154] sm:$0xf]
        %v810 = vld [vmem:[%s695 + $0x158] sm:$0xf]
        %v811 = vld [vmem:[%s695 + $0x15c] sm:$0xf]
        %v812 = vld [vmem:[%s695 + $0x160] sm:$0xf]
        %v813 = vld [vmem:[%s695 + $0x164] sm:$0xf]
        %v814 = vld [vmem:[%s695 + $0x168] sm:$0xf]
        %v815 = vld [vmem:[%s695 + $0x16c] sm:$0xf]
        %v816 = vld [vmem:[%s695 + $0x170] sm:$0xf]
        %v817 = vld [vmem:[%s695 + $0x174] sm:$0xf]
        %v818 = vld [vmem:[%s695 + $0x178] sm:$0xf]
        %v819 = vld [vmem:[%s695 + $0x17c] sm:$0xf]
        %v820 = vld [vmem:[%s695 + $0x180] sm:$0xf]
        %v821 = vld [vmem:[%s695 + $0x184] sm:$0xf]
        %v822 = vld [vmem:[%s695 + $0x188] sm:$0xf]
        %v823 = vld [vmem:[%s695 + $0x18c] sm:$0xf]
        %v824 = vld [vmem:[%s695 + $0x190] sm:$0xf]
        %v825 = vld [vmem:[%s695 + $0x194] sm:$0xf]
        %v826 = vld [vmem:[%s695 + $0x198] sm:$0xf]
        %v827 = vld [vmem:[%s695 + $0x19c] sm:$0xf]
        %v828 = vld [vmem:[%s695 + $0x1a0] sm:$0xf]
        %v829 = vld [vmem:[%s695 + $0x1a4] sm:$0xf]
        %v830 = vld [vmem:[%s695 + $0x1a8] sm:$0xf]
        %v831 = vld [vmem:[%s695 + $0x1ac] sm:$0xf]
        %v832 = vld [vmem:[%s695 + $0x1b0] sm:$0xf]
        %v833 = vld [vmem:[%s695 + $0x1b4] sm:$0xf]
        %v834 = vld [vmem:[%s695 + $0x1b8] sm:$0xf]
        %v835 = vld [vmem:[%s695 + $0x1bc] sm:$0xf]
        %v836 = vld [vmem:[%s695 + $0x1c0] sm:$0xf]
        %v837 = vld [vmem:[%s695 + $0x1c4] sm:$0xf]
        %v838 = vld [vmem:[%s695 + $0x1c8] sm:$0xf]
        %v839 = vld [vmem:[%s695 + $0x1cc] sm:$0xf]
        %v840 = vld [vmem:[%s695 + $0x1d0] sm:$0xf]
        %v841 = vld [vmem:[%s695 + $0x1d4] sm:$0xf]
        %v842 = vld [vmem:[%s695 + $0x1d8] sm:$0xf]
        %v843 = vld [vmem:[%s695 + $0x1dc] sm:$0xf]
        %v844 = vld [vmem:[%s695 + $0x1e0] sm:$0xf]
        %v845 = vld [vmem:[%s695 + $0x1e4] sm:$0xf]
        %v846 = vld [vmem:[%s695 + $0x1e8] sm:$0xf]
        %v847 = vld [vmem:[%s695 + $0x1ec] sm:$0xf]
        %v848 = vld [vmem:[%s695 + $0x1f0] sm:$0xf]
        %v849 = vld [vmem:[%s695 + $0x1f4] sm:$0xf]
        %v850 = vld [vmem:[%s695 + $0x1f8] sm:$0xf]
        %v851 = vld [vmem:[%s695 + $0x1fc] sm:$0xf]
        %v852 = vld [vmem:[%s1] sm:$0xf]
        %v853 = vld [vmem:[%s1 + $0x4] sm:$0xf]
        %v854 = vld [vmem:[%s1 + $0x8] sm:$0xf]
        %v855 = vld [vmem:[%s1 + $0xc] sm:$0x3]
        %v984 = vunpack.c.l.b16 %v724
        %v985 = vunpack.c.l.b16 %v725
        %v986 = vunpack.c.l.b16 %v726
        %v987 = vunpack.c.l.b16 %v727
        %v988 = vunpack.c.l.b16 %v728
        %v989 = vunpack.c.l.b16 %v729
        %v990 = vunpack.c.l.b16 %v730
        %v991 = vunpack.c.l.b16 %v731
        %v992 = vunpack.c.l.b16 %v732
        %v993 = vunpack.c.l.b16 %v733
        %v994 = vunpack.c.l.b16 %v734
        %v995 = vunpack.c.l.b16 %v735
        %v996 = vunpack.c.l.b16 %v736
        %v997 = vunpack.c.l.b16 %v737
        %v998 = vunpack.c.l.b16 %v738
        %v999 = vunpack.c.l.b16 %v739
        %v1000 = vunpack.c.l.b16 %v740
        %v1001 = vunpack.c.l.b16 %v741
        %v1002 = vunpack.c.l.b16 %v742
        %v1003 = vunpack.c.l.b16 %v743
        %v1004 = vunpack.c.l.b16 %v744
        %v1005 = vunpack.c.l.b16 %v745
        %v1006 = vunpack.c.l.b16 %v746
        %v1007 = vunpack.c.l.b16 %v747
        %v1008 = vunpack.c.l.b16 %v748
        %v1009 = vunpack.c.l.b16 %v749
        %v1010 = vunpack.c.l.b16 %v750
        %v1011 = vunpack.c.l.b16 %v751
        %v1012 = vunpack.c.l.b16 %v752
        %v1013 = vunpack.c.l.b16 %v753
        %v1014 = vunpack.c.l.b16 %v754
        %v1015 = vunpack.c.l.b16 %v755
        %v1016 = vunpack.c.l.b16 %v756
        %v1017 = vunpack.c.l.b16 %v757
        %v1018 = vunpack.c.l.b16 %v758
        %v1019 = vunpack.c.l.b16 %v759
        %v1020 = vunpack.c.l.b16 %v760
        %v1021 = vunpack.c.l.b16 %v761
        %v1022 = vunpack.c.l.b16 %v762
        %v1023 = vunpack.c.l.b16 %v763
        %v1024 = vunpack.c.l.b16 %v764
        %v1025 = vunpack.c.l.b16 %v765
        %v1026 = vunpack.c.l.b16 %v766
        %v1027 = vunpack.c.l.b16 %v767
        %v1028 = vunpack.c.l.b16 %v768
        %v1029 = vunpack.c.l.b16 %v769
        %v1030 = vunpack.c.l.b16 %v770
        %v1031 = vunpack.c.l.b16 %v771
        %v1032 = vunpack.c.l.b16 %v772
        %v1033 = vunpack.c.l.b16 %v773
        %v1034 = vunpack.c.l.b16 %v774
        %v1035 = vunpack.c.l.b16 %v775
        %v1036 = vunpack.c.l.b16 %v776
        %v1037 = vunpack.c.l.b16 %v777
        %v1038 = vunpack.c.l.b16 %v778
        %v1039 = vunpack.c.l.b16 %v779
        %v1040 = vunpack.c.l.b16 %v780
        %v1041 = vunpack.c.l.b16 %v781
        %v1042 = vunpack.c.l.b16 %v782
        %v1043 = vunpack.c.l.b16 %v783
        %v1044 = vunpack.c.l.b16 %v784
        %v1045 = vunpack.c.l.b16 %v785
        %v1046 = vunpack.c.l.b16 %v786
        %v1047 = vunpack.c.l.b16 %v787
        %v1048 = vunpack.c.l.b16 %v788
        %v1049 = vunpack.c.l.b16 %v789
        %v1050 = vunpack.c.l.b16 %v790
        %v1051 = vunpack.c.l.b16 %v791
        %v1052 = vunpack.c.l.b16 %v792
        %v1053 = vunpack.c.l.b16 %v793
        %v1054 = vunpack.c.l.b16 %v794
        %v1055 = vunpack.c.l.b16 %v795
        %v1056 = vunpack.c.l.b16 %v796
        %v1057 = vunpack.c.l.b16 %v797
        %v1058 = vunpack.c.l.b16 %v798
        %v1059 = vunpack.c.l.b16 %v799
        %v1060 = vunpack.c.l.b16 %v800
        %v1061 = vunpack.c.l.b16 %v801
        %v1062 = vunpack.c.l.b16 %v802
        %v1063 = vunpack.c.l.b16 %v803
        %v1064 = vunpack.c.l.b16 %v804
        %v1065 = vunpack.c.l.b16 %v805
        %v1066 = vunpack.c.l.b16 %v806
        %v1067 = vunpack.c.l.b16 %v807
        %v1068 = vunpack.c.l.b16 %v808
        %v1069 = vunpack.c.l.b16 %v809
        %v1070 = vunpack.c.l.b16 %v810
        %v1071 = vunpack.c.l.b16 %v811
        %v1072 = vunpack.c.l.b16 %v812
        %v1073 = vunpack.c.l.b16 %v813
        %v1074 = vunpack.c.l.b16 %v814
        %v1075 = vunpack.c.l.b16 %v815
        %v1076 = vunpack.c.l.b16 %v816
        %v1077 = vunpack.c.l.b16 %v817
        %v1078 = vunpack.c.l.b16 %v818
        %v1079 = vunpack.c.l.b16 %v819
        %v1080 = vunpack.c.l.b16 %v820
        %v1081 = vunpack.c.l.b16 %v821
        %v1082 = vunpack.c.l.b16 %v822
        %v1083 = vunpack.c.l.b16 %v823
        %v1084 = vunpack.c.l.b16 %v824
        %v1085 = vunpack.c.l.b16 %v825
        %v1086 = vunpack.c.l.b16 %v826
        %v1087 = vunpack.c.l.b16 %v827
        %v1088 = vunpack.c.l.b16 %v828
        %v1089 = vunpack.c.l.b16 %v829
        %v1090 = vunpack.c.l.b16 %v830
        %v1091 = vunpack.c.l.b16 %v831
        %v1092 = vunpack.c.l.b16 %v832
        %v1093 = vunpack.c.l.b16 %v833
        %v1094 = vunpack.c.l.b16 %v834
        %v1095 = vunpack.c.l.b16 %v835
        %v1096 = vunpack.c.l.b16 %v836
        %v1097 = vunpack.c.l.b16 %v837
        %v1098 = vunpack.c.l.b16 %v838
        %v1099 = vunpack.c.l.b16 %v839
        %v1100 = vunpack.c.l.b16 %v840
        %v1101 = vunpack.c.l.b16 %v841
        %v1102 = vunpack.c.l.b16 %v842
        %v1103 = vunpack.c.l.b16 %v843
        %v1104 = vunpack.c.l.b16 %v844
        %v1105 = vunpack.c.l.b16 %v845
        %v1106 = vunpack.c.l.b16 %v846
        %v1107 = vunpack.c.l.b16 %v847
        %v1108 = vunpack.c.l.b16 %v848
        %v1109 = vunpack.c.l.b16 %v849
        %v1110 = vunpack.c.l.b16 %v850
        %v1111 = vunpack.c.l.b16 %v851
        %v1112 = vpack.c.b16 %v985, %v984
        %v1113 = vpack.c.b16 %v987, %v986
        %v1114 = vpack.c.b16 %v989, %v988
        %v1115 = vpack.c.b16 %v991, %v990
        %v1116 = vpack.c.b16 %v993, %v992
        %v1117 = vpack.c.b16 %v995, %v994
        %v1118 = vpack.c.b16 %v997, %v996
        %v1119 = vpack.c.b16 %v999, %v998
        %v1120 = vpack.c.b16 %v1001, %v1000
        %v1121 = vpack.c.b16 %v1003, %v1002
        %v1122 = vpack.c.b16 %v1005, %v1004
        %v1123 = vpack.c.b16 %v1007, %v1006
        %v1124 = vpack.c.b16 %v1009, %v1008
        %v1125 = vpack.c.b16 %v1011, %v1010
        %v1126 = vpack.c.b16 %v1013, %v1012
        %v1127 = vpack.c.b16 %v1015, %v1014
        %v1128 = vpack.c.b16 %v1017, %v1016
        %v1129 = vpack.c.b16 %v1019, %v1018
        %v1130 = vpack.c.b16 %v1021, %v1020
        %v1131 = vpack.c.b16 %v1023, %v1022
        %v1132 = vpack.c.b16 %v1025, %v1024
        %v1133 = vpack.c.b16 %v1027, %v1026
        %v1134 = vpack.c.b16 %v1029, %v1028
        %v1135 = vpack.c.b16 %v1031, %v1030
        %v1136 = vpack.c.b16 %v1033, %v1032
        %v1137 = vpack.c.b16 %v1035, %v1034
        %v1138 = vpack.c.b16 %v1037, %v1036
        %v1139 = vpack.c.b16 %v1039, %v1038
        %v1140 = vpack.c.b16 %v1041, %v1040
        %v1141 = vpack.c.b16 %v1043, %v1042
        %v1142 = vpack.c.b16 %v1045, %v1044
        %v1143 = vpack.c.b16 %v1047, %v1046
        %v1144 = vpack.c.b16 %v1049, %v1048
        %v1145 = vpack.c.b16 %v1051, %v1050
        %v1146 = vpack.c.b16 %v1053, %v1052
        %v1147 = vpack.c.b16 %v1055, %v1054
        %v1148 = vpack.c.b16 %v1057, %v1056
        %v1149 = vpack.c.b16 %v1059, %v1058
        %v1150 = vpack.c.b16 %v1061, %v1060
        %v1151 = vpack.c.b16 %v1063, %v1062
        %v1152 = vpack.c.b16 %v1065, %v1064
        %v1153 = vpack.c.b16 %v1067, %v1066
        %v1154 = vpack.c.b16 %v1069, %v1068
        %v1155 = vpack.c.b16 %v1071, %v1070
        %v1156 = vpack.c.b16 %v1073, %v1072
        %v1157 = vpack.c.b16 %v1075, %v1074
        %v1158 = vpack.c.b16 %v1077, %v1076
        %v1159 = vpack.c.b16 %v1079, %v1078
        %v1160 = vpack.c.b16 %v1081, %v1080
        %v1161 = vpack.c.b16 %v1083, %v1082
        %v1162 = vpack.c.b16 %v1085, %v1084
        %v1163 = vpack.c.b16 %v1087, %v1086
        %v1164 = vpack.c.b16 %v1089, %v1088
        %v1165 = vpack.c.b16 %v1091, %v1090
        %v1166 = vpack.c.b16 %v1093, %v1092
        %v1167 = vpack.c.b16 %v1095, %v1094
        %v1168 = vpack.c.b16 %v1097, %v1096
        %v1169 = vpack.c.b16 %v1099, %v1098
        %v1170 = vpack.c.b16 %v1101, %v1100
        %v1171 = vpack.c.b16 %v1103, %v1102
        %v1172 = vpack.c.b16 %v1105, %v1104
        %v1173 = vpack.c.b16 %v1107, %v1106
        %v1174 = vpack.c.b16 %v1109, %v1108
        %v1175 = vpack.c.b16 %v1111, %v1110
        %v1180 = vunpack.c.l.b16 %v852
        %v1181 = vunpack.c.l.b16 %v853
        %v1182 = vunpack.c.l.b16 %v854
        %v1183 = vunpack.c.l.b16 %v855
        %v1184 = vpack.c.b16 %v1181, %v1180
        %v1185 = vpack.c.b16 %v1183, %v1182
        %vm1187 = vcmask 220160
        %v1189 = vsel %vm1187, %v1112, 0
        %v1192 = vsel %vm1187, %v1113, 0
        %v1195 = vsel %vm1187, %v1114, 0
        %v1198 = vsel %vm1187, %v1115, 0
        %v1201 = vsel %vm1187, %v1116, 0
        %v1204 = vsel %vm1187, %v1117, 0
        %v1207 = vsel %vm1187, %v1118, 0
        %v1210 = vsel %vm1187, %v1119, 0
        %v1213 = vsel %vm1187, %v1120, 0
        %v1216 = vsel %vm1187, %v1121, 0
        %v1219 = vsel %vm1187, %v1122, 0
        %v1222 = vsel %vm1187, %v1123, 0
        %v1225 = vsel %vm1187, %v1124, 0
        %v1228 = vsel %vm1187, %v1125, 0
        %v1231 = vsel %vm1187, %v1126, 0
        %v1234 = vsel %vm1187, %v1127, 0
        %v1237 = vsel %vm1187, %v1128, 0
        %v1240 = vsel %vm1187, %v1129, 0
        %v1243 = vsel %vm1187, %v1130, 0
        %v1246 = vsel %vm1187, %v1131, 0
        %v1249 = vsel %vm1187, %v1132, 0
        %v1252 = vsel %vm1187, %v1133, 0
        %v1255 = vsel %vm1187, %v1134, 0
        %v1258 = vsel %vm1187, %v1135, 0
        %v1261 = vsel %vm1187, %v1136, 0
        %v1264 = vsel %vm1187, %v1137, 0
        %v1267 = vsel %vm1187, %v1138, 0
        %v1270 = vsel %vm1187, %v1139, 0
        %v1273 = vsel %vm1187, %v1140, 0
        %v1276 = vsel %vm1187, %v1141, 0
        %v1279 = vsel %vm1187, %v1142, 0
        %v1282 = vsel %vm1187, %v1143, 0
        %v1285 = vsel %vm1187, %v1144, 0
        %v1288 = vsel %vm1187, %v1145, 0
        %v1291 = vsel %vm1187, %v1146, 0
        %v1294 = vsel %vm1187, %v1147, 0
        %v1297 = vsel %vm1187, %v1148, 0
        %v1300 = vsel %vm1187, %v1149, 0
        %v1303 = vsel %vm1187, %v1150, 0
        %v1306 = vsel %vm1187, %v1151, 0
        %v1309 = vsel %vm1187, %v1152, 0
        %v1312 = vsel %vm1187, %v1153, 0
        %v1315 = vsel %vm1187, %v1154, 0
        %v1318 = vsel %vm1187, %v1155, 0
        %v1321 = vsel %vm1187, %v1156, 0
        %v1324 = vsel %vm1187, %v1157, 0
        %v1327 = vsel %vm1187, %v1158, 0
        %v1330 = vsel %vm1187, %v1159, 0
        %v1333 = vsel %vm1187, %v1160, 0
        %v1336 = vsel %vm1187, %v1161, 0
        %v1339 = vsel %vm1187, %v1162, 0
        %v1342 = vsel %vm1187, %v1163, 0
        %v1345 = vsel %vm1187, %v1164, 0
        %v1348 = vsel %vm1187, %v1165, 0
        %v1351 = vsel %vm1187, %v1166, 0
        %v1354 = vsel %vm1187, %v1167, 0
        %v1357 = vsel %vm1187, %v1168, 0
        %v1360 = vsel %vm1187, %v1169, 0
        %v1363 = vsel %vm1187, %v1170, 0
        %v1366 = vsel %vm1187, %v1171, 0
        %v1369 = vsel %vm1187, %v1172, 0
        %v1372 = vsel %vm1187, %v1173, 0
        %v1375 = vsel %vm1187, %v1174, 0
        %v1378 = vsel %vm1187, %v1175, 0
        %vm1380 = vcmask 1044480
        %vm1381 = vcmask 1045504
        %v1382 = vsel %vm1380, 4294967295, 65535
        %v1383 = vsel %vm1381, %v1382, 0
        %v1385 = vand.u32 %v1185, %v1383
        %1387 = vmatprep.subr.bf16.mxu0 0
        %1388 = vmatpush1.bf16.msra.mxu0 %v1184
        %1389 = vmatprep.subr.bf16.mxu0 0
        %1390 = vmatpush1.bf16.msra.mxu0 %v1385
        %1391 = vmatprep.subr.bf16.mxu0 0
        %1392 = vmatpush1.bf16.msra.mxu0 0
        %1393 = vmatprep.subr.bf16.mxu0 0
        %1394 = vmatpush1.bf16.msra.mxu0 0
        %1395 = vmatprep.subr.bf16.mxu0 0
        %1396 = vmatpush1.bf16.msra.mxu0 0
        %1397 = vmatprep.subr.bf16.mxu0 0
        %1398 = vmatpush1.bf16.msra.mxu0 0
        %1399 = vmatprep.subr.bf16.mxu0 0
        %1400 = vmatpush1.bf16.msra.mxu0 0
        %1401 = vmatprep.subr.bf16.mxu0 0
        %1402 = vmatpush1.bf16.msra.mxu0 0
        %1403 = vmatprep.subr.bf16.mxu0 0
        %1404 = vmatpush1.bf16.msra.mxu0 0
        %1405 = vmatprep.subr.bf16.mxu0 0
        %1406 = vmatpush1.bf16.msra.mxu0 0
        %1407 = vmatprep.subr.bf16.mxu0 0
        %1408 = vmatpush1.bf16.msra.mxu0 0
        %1409 = vmatprep.subr.bf16.mxu0 0
        %1410 = vmatpush1.bf16.msra.mxu0 0
        %1411 = vmatprep.subr.bf16.mxu0 0
        %1412 = vmatpush1.bf16.msra.mxu0 0
        %1413 = vmatprep.subr.bf16.mxu0 0
        %1414 = vmatpush1.bf16.msra.mxu0 0
        %1415 = vmatprep.subr.bf16.mxu0 0
        %1416 = vmatpush1.bf16.msra.mxu0 0
        %1417 = vmatprep.subr.bf16.mxu0 0
        %1418 = vmatpush1.bf16.msra.mxu0 0
        %1419 = vmatprep.mubr.bf16.mxu0 0
        %1420 = vmatmul.mubr.bf16.gmra.mrb[0].mxu0 %v1189
        %v1421 = vpop.f32.mrb[0].mxu0
        %v1422 = vadd.f32 0.0, %v1421
        %v1423 = vpop.f32.mrb[0].mxu0
        %v1424 = vpop.f32.mrb[0].mxu0
        %v1425 = vadd.f32 0.0, %v1424
        %v1426 = vpop.f32.mrb[0].mxu0
        %1427 = vmatprep.mubr.bf16.mxu0 0
        %1428 = vmatmul.mubr.bf16.gmra.mrb[0].mxu0 %v1192
        %v1429 = vpop.f32.mrb[0].mxu0
        %v1430 = vadd.f32 0.0, %v1429
        %v1431 = vpop.f32.mrb[0].mxu0
        %v1432 = vpop.f32.mrb[0].mxu0
        %v1433 = vadd.f32 0.0, %v1432
        %v1434 = vpop.f32.mrb[0].mxu0
        %1435 = vmatprep.mubr.bf16.mxu0 0
        %1436 = vmatmul.mubr.bf16.gmra.mrb[0].mxu0 %v1195
        %v1437 = vpop.f32.mrb[0].mxu0
        %v1438 = vadd.f32 0.0, %v1437
        %v1439 = vpop.f32.mrb[0].mxu0
        %v1440 = vpop.f32.mrb[0].mxu0
        %v1441 = vadd.f32 0.0, %v1440
        %v1442 = vpop.f32.mrb[0].mxu0
        %1443 = vmatprep.mubr.bf16.mxu0 0
        %1444 = vmatmul.mubr.bf16.gmra.mrb[0].mxu0 %v1198
        %v1445 = vpop.f32.mrb[0].mxu0
        %v1446 = vadd.f32 0.0, %v1445
        %v1447 = vpop.f32.mrb[0].mxu0
        %v1448 = vpop.f32.mrb[0].mxu0
        %v1449 = vadd.f32 0.0, %v1448
        %v1450 = vpop.f32.mrb[0].mxu0
        %1451 = vmatprep.mubr.bf16.mxu0 0
        %1452 = vmatmul.mubr.bf16.gmra.mrb[0].mxu0 %v1201
        %v1453 = vpop.f32.mrb[0].mxu0
        %v1454 = vadd.f32 0.0, %v1453
        %v1455 = vpop.f32.mrb[0].mxu0
        %v1456 = vpop.f32.mrb[0].mxu0
        %v1457 = vadd.f32 0.0, %v1456
        %v1458 = vpop.f32.mrb[0].mxu0
        %1459 = vmatprep.mubr.bf16.mxu0 0
        %1460 = vmatmul.mubr.bf16.gmra.mrb[0].mxu0 %v1204
        %v1461 = vpop.f32.mrb[0].mxu0
        %v1462 = vadd.f32 0.0, %v1461
        %v1463 = vpop.f32.mrb[0].mxu0
        %v1464 = vpop.f32.mrb[0].mxu0
        %v1465 = vadd.f32 0.0, %v1464
        %v1466 = vpop.f32.mrb[0].mxu0
        %1467 = vmatprep.mubr.bf16.mxu0 0
        %1468 = vmatmul.mubr.bf16.gmra.mrb[0].mxu0 %v1207
        %v1469 = vpop.f32.mrb[0].mxu0
        %v1470 = vadd.f32 0.0, %v1469
        %v1471 = vpop.f32.mrb[0].mxu0
        %v1472 = vpop.f32.mrb[0].mxu0
        %v1473 = vadd.f32 0.0, %v1472
        %v1474 = vpop.f32.mrb[0].mxu0
        %1475 = vmatprep.mubr.bf16.mxu0 0
        %1476 = vmatmul.mubr.bf16.gmra.mrb[0].mxu0 %v1210
        %v1477 = vpop.f32.mrb[0].mxu0
        %v1478 = vadd.f32 0.0, %v1477
        %v1479 = vpop.f32.mrb[0].mxu0
        %v1480 = vpop.f32.mrb[0].mxu0
        %v1481 = vadd.f32 0.0, %v1480
        %v1482 = vpop.f32.mrb[0].mxu0
        %1483 = vmatprep.mubr.bf16.mxu0 0
        %1484 = vmatmul.mubr.bf16.gmra.mrb[0].mxu0 %v1213
        %v1485 = vpop.f32.mrb[0].mxu0
        %v1486 = vadd.f32 0.0, %v1485
        %v1487 = vpop.f32.mrb[0].mxu0
        %v1488 = vpop.f32.mrb[0].mxu0
        %v1489 = vadd.f32 0.0, %v1488
        %v1490 = vpop.f32.mrb[0].mxu0
        %1491 = vmatprep.mubr.bf16.mxu0 0
        %1492 = vmatmul.mubr.bf16.gmra.mrb[0].mxu0 %v1216
        %v1493 = vpop.f32.mrb[0].mxu0
        %v1494 = vadd.f32 0.0, %v1493
        %v1495 = vpop.f32.mrb[0].mxu0
        %v1496 = vpop.f32.mrb[0].mxu0
        %v1497 = vadd.f32 0.0, %v1496
        %v1498 = vpop.f32.mrb[0].mxu0
        %1499 = vmatprep.mubr.bf16.mxu0 0
        %1500 = vmatmul.mubr.bf16.gmra.mrb[0].mxu0 %v1219
        %v1501 = vpop.f32.mrb[0].mxu0
        %v1502 = vadd.f32 0.0, %v1501
        %v1503 = vpop.f32.mrb[0].mxu0
        %v1504 = vpop.f32.mrb[0].mxu0
        %v1505 = vadd.f32 0.0, %v1504
        %v1506 = vpop.f32.mrb[0].mxu0
        %1507 = vmatprep.mubr.bf16.mxu0 0
        %1508 = vmatmul.mubr.bf16.gmra.mrb[0].mxu0 %v1222
        %v1509 = vpop.f32.mrb[0].mxu0
        %v1510 = vadd.f32 0.0, %v1509
        %v1511 = vpop.f32.mrb[0].mxu0
        %v1512 = vpop.f32.mrb[0].mxu0
        %v1513 = vadd.f32 0.0, %v1512
        %v1514 = vpop.f32.mrb[0].mxu0
        %1515 = vmatprep.mubr.bf16.mxu0 0
        %1516 = vmatmul.mubr.bf16.gmra.mrb[0].mxu0 %v1225
        %v1517 = vpop.f32.mrb[0].mxu0
        %v1518 = vadd.f32 0.0, %v1517
        %v1519 = vpop.f32.mrb[0].mxu0
        %v1520 = vpop.f32.mrb[0].mxu0
        %v1521 = vadd.f32 0.0, %v1520
        %v1522 = vpop.f32.mrb[0].mxu0
        %1523 = vmatprep.mubr.bf16.mxu0 0
        %1524 = vmatmul.mubr.bf16.gmra.mrb[0].mxu0 %v1228
        %v1525 = vpop.f32.mrb[0].mxu0
        %v1526 = vadd.f32 0.0, %v1525
        %v1527 = vpop.f32.mrb[0].mxu0
        %v1528 = vpop.f32.mrb[0].mxu0
        %v1529 = vadd.f32 0.0, %v1528
        %v1530 = vpop.f32.mrb[0].mxu0
        %1531 = vmatprep.mubr.bf16.mxu0 0
        %1532 = vmatmul.mubr.bf16.gmra.mrb[0].mxu0 %v1231
        %v1533 = vpop.f32.mrb[0].mxu0
        %v1534 = vadd.f32 0.0, %v1533
        %v1535 = vpop.f32.mrb[0].mxu0
        %v1536 = vpop.f32.mrb[0].mxu0
        %v1537 = vadd.f32 0.0, %v1536
        %v1538 = vpop.f32.mrb[0].mxu0
        %1539 = vmatprep.mubr.bf16.mxu0 0
        %1540 = vmatmul.mubr.bf16.gmra.mrb[0].mxu0 %v1234
        %v1541 = vpop.f32.mrb[0].mxu0
        %v1542 = vadd.f32 0.0, %v1541
        %v1543 = vpop.f32.mrb[0].mxu0
        %v1544 = vpop.f32.mrb[0].mxu0
        %v1545 = vadd.f32 0.0, %v1544
        %v1546 = vpop.f32.mrb[0].mxu0
        %1547 = vmatprep.mubr.bf16.mxu0 0
        %1548 = vmatmul.mubr.bf16.gmra.mrb[0].mxu0 %v1237
        %v1549 = vpop.f32.mrb[0].mxu0
        %v1550 = vadd.f32 0.0, %v1549
        %v1551 = vpop.f32.mrb[0].mxu0
        %v1552 = vpop.f32.mrb[0].mxu0
        %v1553 = vadd.f32 0.0, %v1552
        %v1554 = vpop.f32.mrb[0].mxu0
        %1555 = vmatprep.mubr.bf16.mxu0 0
        %1556 = vmatmul.mubr.bf16.gmra.mrb[0].mxu0 %v1240
        %v1557 = vpop.f32.mrb[0].mxu0
        %v1558 = vadd.f32 0.0, %v1557
        %v1559 = vpop.f32.mrb[0].mxu0
        %v1560 = vpop.f32.mrb[0].mxu0
        %v1561 = vadd.f32 0.0, %v1560
        %v1562 = vpop.f32.mrb[0].mxu0
        %1563 = vmatprep.mubr.bf16.mxu0 0
        %1564 = vmatmul.mubr.bf16.gmra.mrb[0].mxu0 %v1243
        %v1565 = vpop.f32.mrb[0].mxu0
        %v1566 = vadd.f32 0.0, %v1565
        %v1567 = vpop.f32.mrb[0].mxu0
        %v1568 = vpop.f32.mrb[0].mxu0
        %v1569 = vadd.f32 0.0, %v1568
        %v1570 = vpop.f32.mrb[0].mxu0
        %1571 = vmatprep.mubr.bf16.mxu0 0
        %1572 = vmatmul.mubr.bf16.gmra.mrb[0].mxu0 %v1246
        %v1573 = vpop.f32.mrb[0].mxu0
        %v1574 = vadd.f32 0.0, %v1573
        %v1575 = vpop.f32.mrb[0].mxu0
        %v1576 = vpop.f32.mrb[0].mxu0
        %v1577 = vadd.f32 0.0, %v1576
        %v1578 = vpop.f32.mrb[0].mxu0
        %1579 = vmatprep.mubr.bf16.mxu0 0
        %1580 = vmatmul.mubr.bf16.gmra.mrb[0].mxu0 %v1249
        %v1581 = vpop.f32.mrb[0].mxu0
        %v1582 = vadd.f32 0.0, %v1581
        %v1583 = vpop.f32.mrb[0].mxu0
        %v1584 = vpop.f32.mrb[0].mxu0
        %v1585 = vadd.f32 0.0, %v1584
        %v1586 = vpop.f32.mrb[0].mxu0
        %1587 = vmatprep.mubr.bf16.mxu0 0
        %1588 = vmatmul.mubr.bf16.gmra.mrb[0].mxu0 %v1252
        %v1589 = vpop.f32.mrb[0].mxu0
        %v1590 = vadd.f32 0.0, %v1589
        %v1591 = vpop.f32.mrb[0].mxu0
        %v1592 = vpop.f32.mrb[0].mxu0
        %v1593 = vadd.f32 0.0, %v1592
        %v1594 = vpop.f32.mrb[0].mxu0
        %1595 = vmatprep.mubr.bf16.mxu0 0
        %1596 = vmatmul.mubr.bf16.gmra.mrb[0].mxu0 %v1255
        %v1597 = vpop.f32.mrb[0].mxu0
        %v1598 = vadd.f32 0.0, %v1597
        %v1599 = vpop.f32.mrb[0].mxu0
        %v1600 = vpop.f32.mrb[0].mxu0
        %v1601 = vadd.f32 0.0, %v1600
        %v1602 = vpop.f32.mrb[0].mxu0
        %1603 = vmatprep.mubr.bf16.mxu0 0
        %1604 = vmatmul.mubr.bf16.gmra.mrb[0].mxu0 %v1258
        %v1605 = vpop.f32.mrb[0].mxu0
        %v1606 = vadd.f32 0.0, %v1605
        %v1607 = vpop.f32.mrb[0].mxu0
        %v1608 = vpop.f32.mrb[0].mxu0
        %v1609 = vadd.f32 0.0, %v1608
        %v1610 = vpop.f32.mrb[0].mxu0
        %1611 = vmatprep.mubr.bf16.mxu0 0
        %1612 = vmatmul.mubr.bf16.gmra.mrb[0].mxu0 %v1261
        %v1613 = vpop.f32.mrb[0].mxu0
        %v1614 = vadd.f32 0.0, %v1613
        %v1615 = vpop.f32.mrb[0].mxu0
        %v1616 = vpop.f32.mrb[0].mxu0
        %v1617 = vadd.f32 0.0, %v1616
        %v1618 = vpop.f32.mrb[0].mxu0
        %1619 = vmatprep.mubr.bf16.mxu0 0
        %1620 = vmatmul.mubr.bf16.gmra.mrb[0].mxu0 %v1264
        %v1621 = vpop.f32.mrb[0].mxu0
        %v1622 = vadd.f32 0.0, %v1621
        %v1623 = vpop.f32.mrb[0].mxu0
        %v1624 = vpop.f32.mrb[0].mxu0
        %v1625 = vadd.f32 0.0, %v1624
        %v1626 = vpop.f32.mrb[0].mxu0
        %1627 = vmatprep.mubr.bf16.mxu0 0
        %1628 = vmatmul.mubr.bf16.gmra.mrb[0].mxu0 %v1267
        %v1629 = vpop.f32.mrb[0].mxu0
        %v1630 = vadd.f32 0.0, %v1629
        %v1631 = vpop.f32.mrb[0].mxu0
        %v1632 = vpop.f32.mrb[0].mxu0
        %v1633 = vadd.f32 0.0, %v1632
        %v1634 = vpop.f32.mrb[0].mxu0
        %1635 = vmatprep.mubr.bf16.mxu0 0
        %1636 = vmatmul.mubr.bf16.gmra.mrb[0].mxu0 %v1270
        %v1637 = vpop.f32.mrb[0].mxu0
        %v1638 = vadd.f32 0.0, %v1637
        %v1639 = vpop.f32.mrb[0].mxu0
        %v1640 = vpop.f32.mrb[0].mxu0
        %v1641 = vadd.f32 0.0, %v1640
        %v1642 = vpop.f32.mrb[0].mxu0
        %1643 = vmatprep.mubr.bf16.mxu0 0
        %1644 = vmatmul.mubr.bf16.gmra.mrb[0].mxu0 %v1273
        %v1645 = vpop.f32.mrb[0].mxu0
        %v1646 = vadd.f32 0.0, %v1645
        %v1647 = vpop.f32.mrb[0].mxu0
        %v1648 = vpop.f32.mrb[0].mxu0
        %v1649 = vadd.f32 0.0, %v1648
        %v1650 = vpop.f32.mrb[0].mxu0
        %1651 = vmatprep.mubr.bf16.mxu0 0
        %1652 = vmatmul.mubr.bf16.gmra.mrb[0].mxu0 %v1276
        %v1653 = vpop.f32.mrb[0].mxu0
        %v1654 = vadd.f32 0.0, %v1653
        %v1655 = vpop.f32.mrb[0].mxu0
        %v1656 = vpop.f32.mrb[0].mxu0
        %v1657 = vadd.f32 0.0, %v1656
        %v1658 = vpop.f32.mrb[0].mxu0
        %1659 = vmatprep.mubr.bf16.mxu0 0
        %1660 = vmatmul.mubr.bf16.gmra.mrb[0].mxu0 %v1279
        %v1661 = vpop.f32.mrb[0].mxu0
        %v1662 = vadd.f32 0.0, %v1661
        %v1663 = vpop.f32.mrb[0].mxu0
        %v1664 = vpop.f32.mrb[0].mxu0
        %v1665 = vadd.f32 0.0, %v1664
        %v1666 = vpop.f32.mrb[0].mxu0
        %1667 = vmatprep.mubr.bf16.mxu0 0
        %1668 = vmatmul.mubr.bf16.gmra.mrb[0].mxu0 %v1282
        %v1669 = vpop.f32.mrb[0].mxu0
        %v1670 = vadd.f32 0.0, %v1669
        %v1671 = vpop.f32.mrb[0].mxu0
        %v1672 = vpop.f32.mrb[0].mxu0
        %v1673 = vadd.f32 0.0, %v1672
        %v1674 = vpop.f32.mrb[0].mxu0
        %1675 = vmatprep.mubr.bf16.mxu0 0
        %1676 = vmatmul.mubr.bf16.gmra.mrb[0].mxu0 %v1285
        %v1677 = vpop.f32.mrb[0].mxu0
        %v1678 = vadd.f32 0.0, %v1677
        %v1679 = vpop.f32.mrb[0].mxu0
        %v1680 = vpop.f32.mrb[0].mxu0
        %v1681 = vadd.f32 0.0, %v1680
        %v1682 = vpop.f32.mrb[0].mxu0
        %1683 = vmatprep.mubr.bf16.mxu0 0
        %1684 = vmatmul.mubr.bf16.gmra.mrb[0].mxu0 %v1288
        %v1685 = vpop.f32.mrb[0].mxu0
        %v1686 = vadd.f32 0.0, %v1685
        %v1687 = vpop.f32.mrb[0].mxu0
        %v1688 = vpop.f32.mrb[0].mxu0
        %v1689 = vadd.f32 0.0, %v1688
        %v1690 = vpop.f32.mrb[0].mxu0
        %1691 = vmatprep.mubr.bf16.mxu0 0
        %1692 = vmatmul.mubr.bf16.gmra.mrb[0].mxu0 %v1291
        %v1693 = vpop.f32.mrb[0].mxu0
        %v1694 = vadd.f32 0.0, %v1693
        %v1695 = vpop.f32.mrb[0].mxu0
        %v1696 = vpop.f32.mrb[0].mxu0
        %v1697 = vadd.f32 0.0, %v1696
        %v1698 = vpop.f32.mrb[0].mxu0
        %1699 = vmatprep.mubr.bf16.mxu0 0
        %1700 = vmatmul.mubr.bf16.gmra.mrb[0].mxu0 %v1294
        %v1701 = vpop.f32.mrb[0].mxu0
        %v1702 = vadd.f32 0.0, %v1701
        %v1703 = vpop.f32.mrb[0].mxu0
        %v1704 = vpop.f32.mrb[0].mxu0
        %v1705 = vadd.f32 0.0, %v1704
        %v1706 = vpop.f32.mrb[0].mxu0
        %1707 = vmatprep.mubr.bf16.mxu0 0
        %1708 = vmatmul.mubr.bf16.gmra.mrb[0].mxu0 %v1297
        %v1709 = vpop.f32.mrb[0].mxu0
        %v1710 = vadd.f32 0.0, %v1709
        %v1711 = vpop.f32.mrb[0].mxu0
        %v1712 = vpop.f32.mrb[0].mxu0
        %v1713 = vadd.f32 0.0, %v1712
        %v1714 = vpop.f32.mrb[0].mxu0
        %1715 = vmatprep.mubr.bf16.mxu0 0
        %1716 = vmatmul.mubr.bf16.gmra.mrb[0].mxu0 %v1300
        %v1717 = vpop.f32.mrb[0].mxu0
        %v1718 = vadd.f32 0.0, %v1717
        %v1719 = vpop.f32.mrb[0].mxu0
        %v1720 = vpop.f32.mrb[0].mxu0
        %v1721 = vadd.f32 0.0, %v1720
        %v1722 = vpop.f32.mrb[0].mxu0
        %1723 = vmatprep.mubr.bf16.mxu0 0
        %1724 = vmatmul.mubr.bf16.gmra.mrb[0].mxu0 %v1303
        %v1725 = vpop.f32.mrb[0].mxu0
        %v1726 = vadd.f32 0.0, %v1725
        %v1727 = vpop.f32.mrb[0].mxu0
        %v1728 = vpop.f32.mrb[0].mxu0
        %v1729 = vadd.f32 0.0, %v1728
        %v1730 = vpop.f32.mrb[0].mxu0
        %1731 = vmatprep.mubr.bf16.mxu0 0
        %1732 = vmatmul.mubr.bf16.gmra.mrb[0].mxu0 %v1306
        %v1733 = vpop.f32.mrb[0].mxu0
        %v1734 = vadd.f32 0.0, %v1733
        %v1735 = vpop.f32.mrb[0].mxu0
        %v1736 = vpop.f32.mrb[0].mxu0
        %v1737 = vadd.f32 0.0, %v1736
        %v1738 = vpop.f32.mrb[0].mxu0
        %1739 = vmatprep.mubr.bf16.mxu0 0
        %1740 = vmatmul.mubr.bf16.gmra.mrb[0].mxu0 %v1309
        %v1741 = vpop.f32.mrb[0].mxu0
        %v1742 = vadd.f32 0.0, %v1741
        %v1743 = vpop.f32.mrb[0].mxu0
        %v1744 = vpop.f32.mrb[0].mxu0
        %v1745 = vadd.f32 0.0, %v1744
        %v1746 = vpop.f32.mrb[0].mxu0
        %1747 = vmatprep.mubr.bf16.mxu0 0
        %1748 = vmatmul.mubr.bf16.gmra.mrb[0].mxu0 %v1312
        %v1749 = vpop.f32.mrb[0].mxu0
        %v1750 = vadd.f32 0.0, %v1749
        %v1751 = vpop.f32.mrb[0].mxu0
        %v1752 = vpop.f32.mrb[0].mxu0
        %v1753 = vadd.f32 0.0, %v1752
        %v1754 = vpop.f32.mrb[0].mxu0
        %1755 = vmatprep.mubr.bf16.mxu0 0
        %1756 = vmatmul.mubr.bf16.gmra.mrb[0].mxu0 %v1315
        %v1757 = vpop.f32.mrb[0].mxu0
        %v1758 = vadd.f32 0.0, %v1757
        %v1759 = vpop.f32.mrb[0].mxu0
        %v1760 = vpop.f32.mrb[0].mxu0
        %v1761 = vadd.f32 0.0, %v1760
        %v1762 = vpop.f32.mrb[0].mxu0
        %1763 = vmatprep.mubr.bf16.mxu0 0
        %1764 = vmatmul.mubr.bf16.gmra.mrb[0].mxu0 %v1318
        %v1765 = vpop.f32.mrb[0].mxu0
        %v1766 = vadd.f32 0.0, %v1765
        %v1767 = vpop.f32.mrb[0].mxu0
        %v1768 = vpop.f32.mrb[0].mxu0
        %v1769 = vadd.f32 0.0, %v1768
        %v1770 = vpop.f32.mrb[0].mxu0
        %1771 = vmatprep.mubr.bf16.mxu0 0
        %1772 = vmatmul.mubr.bf16.gmra.mrb[0].mxu0 %v1321
        %v1773 = vpop.f32.mrb[0].mxu0
        %v1774 = vadd.f32 0.0, %v1773
        %v1775 = vpop.f32.mrb[0].mxu0
        %v1776 = vpop.f32.mrb[0].mxu0
        %v1777 = vadd.f32 0.0, %v1776
        %v1778 = vpop.f32.mrb[0].mxu0
        %1779 = vmatprep.mubr.bf16.mxu0 0
        %1780 = vmatmul.mubr.bf16.gmra.mrb[0].mxu0 %v1324
        %v1781 = vpop.f32.mrb[0].mxu0
        %v1782 = vadd.f32 0.0, %v1781
        %v1783 = vpop.f32.mrb[0].mxu0
        %v1784 = vpop.f32.mrb[0].mxu0
        %v1785 = vadd.f32 0.0, %v1784
        %v1786 = vpop.f32.mrb[0].mxu0
        %1787 = vmatprep.mubr.bf16.mxu0 0
        %1788 = vmatmul.mubr.bf16.gmra.mrb[0].mxu0 %v1327
        %v1789 = vpop.f32.mrb[0].mxu0
        %v1790 = vadd.f32 0.0, %v1789
        %v1791 = vpop.f32.mrb[0].mxu0
        %v1792 = vpop.f32.mrb[0].mxu0
        %v1793 = vadd.f32 0.0, %v1792
        %v1794 = vpop.f32.mrb[0].mxu0
        %1795 = vmatprep.mubr.bf16.mxu0 0
        %1796 = vmatmul.mubr.bf16.gmra.mrb[0].mxu0 %v1330
        %v1797 = vpop.f32.mrb[0].mxu0
        %v1798 = vadd.f32 0.0, %v1797
        %v1799 = vpop.f32.mrb[0].mxu0
        %v1800 = vpop.f32.mrb[0].mxu0
        %v1801 = vadd.f32 0.0, %v1800
        %v1802 = vpop.f32.mrb[0].mxu0
        %1803 = vmatprep.mubr.bf16.mxu0 0
        %1804 = vmatmul.mubr.bf16.gmra.mrb[0].mxu0 %v1333
        %v1805 = vpop.f32.mrb[0].mxu0
        %v1806 = vadd.f32 0.0, %v1805
        %v1807 = vpop.f32.mrb[0].mxu0
        %v1808 = vpop.f32.mrb[0].mxu0
        %v1809 = vadd.f32 0.0, %v1808
        %v1810 = vpop.f32.mrb[0].mxu0
        %1811 = vmatprep.mubr.bf16.mxu0 0
        %1812 = vmatmul.mubr.bf16.gmra.mrb[0].mxu0 %v1336
        %v1813 = vpop.f32.mrb[0].mxu0
        %v1814 = vadd.f32 0.0, %v1813
        %v1815 = vpop.f32.mrb[0].mxu0
        %v1816 = vpop.f32.mrb[0].mxu0
        %v1817 = vadd.f32 0.0, %v1816
        %v1818 = vpop.f32.mrb[0].mxu0
        %1819 = vmatprep.mubr.bf16.mxu0 0
        %1820 = vmatmul.mubr.bf16.gmra.mrb[0].mxu0 %v1339
        %v1821 = vpop.f32.mrb[0].mxu0
        %v1822 = vadd.f32 0.0, %v1821
        %v1823 = vpop.f32.mrb[0].mxu0
        %v1824 = vpop.f32.mrb[0].mxu0
        %v1825 = vadd.f32 0.0, %v1824
        %v1826 = vpop.f32.mrb[0].mxu0
        %1827 = vmatprep.mubr.bf16.mxu0 0
        %1828 = vmatmul.mubr.bf16.gmra.mrb[0].mxu0 %v1342
        %v1829 = vpop.f32.mrb[0].mxu0
        %v1830 = vadd.f32 0.0, %v1829
        %v1831 = vpop.f32.mrb[0].mxu0
        %v1832 = vpop.f32.mrb[0].mxu0
        %v1833 = vadd.f32 0.0, %v1832
        %v1834 = vpop.f32.mrb[0].mxu0
        %1835 = vmatprep.mubr.bf16.mxu0 0
        %1836 = vmatmul.mubr.bf16.gmra.mrb[0].mxu0 %v1345
        %v1837 = vpop.f32.mrb[0].mxu0
        %v1838 = vadd.f32 0.0, %v1837
        %v1839 = vpop.f32.mrb[0].mxu0
        %v1840 = vpop.f32.mrb[0].mxu0
        %v1841 = vadd.f32 0.0, %v1840
        %v1842 = vpop.f32.mrb[0].mxu0
        %1843 = vmatprep.mubr.bf16.mxu0 0
        %1844 = vmatmul.mubr.bf16.gmra.mrb[0].mxu0 %v1348
        %v1845 = vpop.f32.mrb[0].mxu0
        %v1846 = vadd.f32 0.0, %v1845
        %v1847 = vpop.f32.mrb[0].mxu0
        %v1848 = vpop.f32.mrb[0].mxu0
        %v1849 = vadd.f32 0.0, %v1848
        %v1850 = vpop.f32.mrb[0].mxu0
        %1851 = vmatprep.mubr.bf16.mxu0 0
        %1852 = vmatmul.mubr.bf16.gmra.mrb[0].mxu0 %v1351
        %v1853 = vpop.f32.mrb[0].mxu0
        %v1854 = vadd.f32 0.0, %v1853
        %v1855 = vpop.f32.mrb[0].mxu0
        %v1856 = vpop.f32.mrb[0].mxu0
        %v1857 = vadd.f32 0.0, %v1856
        %v1858 = vpop.f32.mrb[0].mxu0
        %1859 = vmatprep.mubr.bf16.mxu0 0
        %1860 = vmatmul.mubr.bf16.gmra.mrb[0].mxu0 %v1354
        %v1861 = vpop.f32.mrb[0].mxu0
        %v1862 = vadd.f32 0.0, %v1861
        %v1863 = vpop.f32.mrb[0].mxu0
        %v1864 = vpop.f32.mrb[0].mxu0
        %v1865 = vadd.f32 0.0, %v1864
        %v1866 = vpop.f32.mrb[0].mxu0
        %1867 = vmatprep.mubr.bf16.mxu0 0
        %1868 = vmatmul.mubr.bf16.gmra.mrb[0].mxu0 %v1357
        %v1869 = vpop.f32.mrb[0].mxu0
        %v1870 = vadd.f32 0.0, %v1869
        %v1871 = vpop.f32.mrb[0].mxu0
        %v1872 = vpop.f32.mrb[0].mxu0
        %v1873 = vadd.f32 0.0, %v1872
        %v1874 = vpop.f32.mrb[0].mxu0
        %1875 = vmatprep.mubr.bf16.mxu0 0
        %1876 = vmatmul.mubr.bf16.gmra.mrb[0].mxu0 %v1360
        %v1877 = vpop.f32.mrb[0].mxu0
        %v1878 = vadd.f32 0.0, %v1877
        %v1879 = vpop.f32.mrb[0].mxu0
        %v1880 = vpop.f32.mrb[0].mxu0
        %v1881 = vadd.f32 0.0, %v1880
        %v1882 = vpop.f32.mrb[0].mxu0
        %1883 = vmatprep.mubr.bf16.mxu0 0
        %1884 = vmatmul.mubr.bf16.gmra.mrb[0].mxu0 %v1363
        %v1885 = vpop.f32.mrb[0].mxu0
        %v1886 = vadd.f32 0.0, %v1885
        %v1887 = vpop.f32.mrb[0].mxu0
        %v1888 = vpop.f32.mrb[0].mxu0
        %v1889 = vadd.f32 0.0, %v1888
        %v1890 = vpop.f32.mrb[0].mxu0
        %1891 = vmatprep.mubr.bf16.mxu0 0
        %1892 = vmatmul.mubr.bf16.gmra.mrb[0].mxu0 %v1366
        %v1893 = vpop.f32.mrb[0].mxu0
        %v1894 = vadd.f32 0.0, %v1893
        %v1895 = vpop.f32.mrb[0].mxu0
        %v1896 = vpop.f32.mrb[0].mxu0
        %v1897 = vadd.f32 0.0, %v1896
        %v1898 = vpop.f32.mrb[0].mxu0
        %1899 = vmatprep.mubr.bf16.mxu0 0
        %1900 = vmatmul.mubr.bf16.gmra.mrb[0].mxu0 %v1369
        %v1901 = vpop.f32.mrb[0].mxu0
        %v1902 = vadd.f32 0.0, %v1901
        %v1903 = vpop.f32.mrb[0].mxu0
        %v1904 = vpop.f32.mrb[0].mxu0
        %v1905 = vadd.f32 0.0, %v1904
        %v1906 = vpop.f32.mrb[0].mxu0
        %1907 = vmatprep.mubr.bf16.mxu0 0
        %1908 = vmatmul.mubr.bf16.gmra.mrb[0].mxu0 %v1372
        %v1909 = vpop.f32.mrb[0].mxu0
        %v1910 = vadd.f32 0.0, %v1909
        %v1911 = vpop.f32.mrb[0].mxu0
        %v1912 = vpop.f32.mrb[0].mxu0
        %v1913 = vadd.f32 0.0, %v1912
        %v1914 = vpop.f32.mrb[0].mxu0
        %1915 = vmatprep.mubr.bf16.mxu0 0
        %1916 = vmatmul.mubr.bf16.gmra.mrb[0].mxu0 %v1375
        %v1917 = vpop.f32.mrb[0].mxu0
        %v1918 = vadd.f32 0.0, %v1917
        %v1919 = vpop.f32.mrb[0].mxu0
        %v1920 = vpop.f32.mrb[0].mxu0
        %v1921 = vadd.f32 0.0, %v1920
        %v1922 = vpop.f32.mrb[0].mxu0
        %1923 = vmatprep.mubr.bf16.mxu0 0
        %1924 = vmatmul.mubr.bf16.gmra.mrb[0].mxu0 %v1378
        %v1925 = vpop.f32.mrb[0].mxu0
        %v1926 = vadd.f32 0.0, %v1925
        %v1927 = vpop.f32.mrb[0].mxu0
        %v1928 = vpop.f32.mrb[0].mxu0
        %v1929 = vadd.f32 0.0, %v1928
        %v1930 = vpop.f32.mrb[0].mxu0
        %1931 = vdwg.mxu0
        %vm1932 = vcmask 261120
        %v1933 = vsel %vm1932, %v1422, -inf
        %v1934 = vsel %vm1932, %v1550, -inf
        %v1935 = vmax.f32 %v1933, %v1934
        %v1936 = vsel %vm1932, %v1678, -inf
        %v1937 = vmax.f32 %v1935, %v1936
        %v1938 = vsel %vm1932, %v1806, -inf
        %v1939 = vmax.f32 %v1937, %v1938
        %v1940 = vsel %vm1932, %v1425, -inf
        %v1941 = vsel %vm1932, %v1553, -inf
        %v1942 = vmax.f32 %v1940, %v1941
        %v1943 = vsel %vm1932, %v1681, -inf
        %v1944 = vmax.f32 %v1942, %v1943
        %v1945 = vsel %vm1932, %v1809, -inf
        %v1946 = vmax.f32 %v1944, %v1945
        %v1947 = vsel %vm1932, %v1430, -inf
        %v1948 = vsel %vm1932, %v1558, -inf
        %v1949 = vmax.f32 %v1947, %v1948
        %v1950 = vsel %vm1932, %v1686, -inf
        %v1951 = vmax.f32 %v1949, %v1950
        %v1952 = vsel %vm1932, %v1814, -inf
        %v1953 = vmax.f32 %v1951, %v1952
        %v1954 = vsel %vm1932, %v1433, -inf
        %v1955 = vsel %vm1932, %v1561, -inf
        %v1956 = vmax.f32 %v1954, %v1955
        %v1957 = vsel %vm1932, %v1689, -inf
        %v1958 = vmax.f32 %v1956, %v1957
        %v1959 = vsel %vm1932, %v1817, -inf
        %v1960 = vmax.f32 %v1958, %v1959
        %v1961 = vsel %vm1932, %v1438, -inf
        %v1962 = vsel %vm1932, %v1566, -inf
        %v1963 = vmax.f32 %v1961, %v1962
        %v1964 = vsel %vm1932, %v1694, -inf
        %v1965 = vmax.f32 %v1963, %v1964
        %v1966 = vsel %vm1932, %v1822, -inf
        %v1967 = vmax.f32 %v1965, %v1966
        %v1968 = vsel %vm1932, %v1441, -inf
        %v1969 = vsel %vm1932, %v1569, -inf
        %v1970 = vmax.f32 %v1968, %v1969
        %v1971 = vsel %vm1932, %v1697, -inf
        %v1972 = vmax.f32 %v1970, %v1971
        %v1973 = vsel %vm1932, %v1825, -inf
        %v1974 = vmax.f32 %v1972, %v1973
        %v1975 = vsel %vm1932, %v1446, -inf
        %v1976 = vsel %vm1932, %v1574, -inf
        %v1977 = vmax.f32 %v1975, %v1976
        %v1978 = vsel %vm1932, %v1702, -inf
        %v1979 = vmax.f32 %v1977, %v1978
        %v1980 = vsel %vm1932, %v1830, -inf
        %v1981 = vmax.f32 %v1979, %v1980
        %v1982 = vsel %vm1932, %v1449, -inf
        %v1983 = vsel %vm1932, %v1577, -inf
        %v1984 = vmax.f32 %v1982, %v1983
        %v1985 = vsel %vm1932, %v1705, -inf
        %v1986 = vmax.f32 %v1984, %v1985
        %v1987 = vsel %vm1932, %v1833, -inf
        %v1988 = vmax.f32 %v1986, %v1987
        %v1989 = vsel %vm1932, %v1454, -inf
        %v1990 = vsel %vm1932, %v1582, -inf
        %v1991 = vmax.f32 %v1989, %v1990
        %v1992 = vsel %vm1932, %v1710, -inf
        %v1993 = vmax.f32 %v1991, %v1992
        %v1994 = vsel %vm1932, %v1838, -inf
        %v1995 = vmax.f32 %v1993, %v1994
        %v1996 = vsel %vm1932, %v1457, -inf
        %v1997 = vsel %vm1932, %v1585, -inf
        %v1998 = vmax.f32 %v1996, %v1997
        %v1999 = vsel %vm1932, %v1713, -inf
        %v2000 = vmax.f32 %v1998, %v1999
        %v2001 = vsel %vm1932, %v1841, -inf
        %v2002 = vmax.f32 %v2000, %v2001
        %v2003 = vsel %vm1932, %v1462, -inf
        %v2004 = vsel %vm1932, %v1590, -inf
        %v2005 = vmax.f32 %v2003, %v2004
        %v2006 = vsel %vm1932, %v1718, -inf
        %v2007 = vmax.f32 %v2005, %v2006
        %v2008 = vsel %vm1932, %v1846, -inf
        %v2009 = vmax.f32 %v2007, %v2008
        %v2010 = vsel %vm1932, %v1465, -inf
        %v2011 = vsel %vm1932, %v1593, -inf
        %v2012 = vmax.f32 %v2010, %v2011
        %v2013 = vsel %vm1932, %v1721, -inf
        %v2014 = vmax.f32 %v2012, %v2013
        %v2015 = vsel %vm1932, %v1849, -inf
        %v2016 = vmax.f32 %v2014, %v2015
        %v2017 = vsel %vm1932, %v1470, -inf
        %v2018 = vsel %vm1932, %v1598, -inf
        %v2019 = vmax.f32 %v2017, %v2018
        %v2020 = vsel %vm1932, %v1726, -inf
        %v2021 = vmax.f32 %v2019, %v2020
        %v2022 = vsel %vm1932, %v1854, -inf
        %v2023 = vmax.f32 %v2021, %v2022
        %v2024 = vsel %vm1932, %v1473, -inf
        %v2025 = vsel %vm1932, %v1601, -inf
        %v2026 = vmax.f32 %v2024, %v2025
        %v2027 = vsel %vm1932, %v1729, -inf
        %v2028 = vmax.f32 %v2026, %v2027
        %v2029 = vsel %vm1932, %v1857, -inf
        %v2030 = vmax.f32 %v2028, %v2029
        %v2031 = vsel %vm1932, %v1478, -inf
        %v2032 = vsel %vm1932, %v1606, -inf
        %v2033 = vmax.f32 %v2031, %v2032
        %v2034 = vsel %vm1932, %v1734, -inf
        %v2035 = vmax.f32 %v2033, %v2034
        %v2036 = vsel %vm1932, %v1862, -inf
        %v2037 = vmax.f32 %v2035, %v2036
        %v2038 = vsel %vm1932, %v1481, -inf
        %v2039 = vsel %vm1932, %v1609, -inf
        %v2040 = vmax.f32 %v2038, %v2039
        %v2041 = vsel %vm1932, %v1737, -inf
        %v2042 = vmax.f32 %v2040, %v2041
        %v2043 = vsel %vm1932, %v1865, -inf
        %v2044 = vmax.f32 %v2042, %v2043
        %v2045 = vsel %vm1932, %v1486, -inf
        %v2046 = vsel %vm1932, %v1614, -inf
        %v2047 = vmax.f32 %v2045, %v2046
        %v2048 = vsel %vm1932, %v1742, -inf
        %v2049 = vmax.f32 %v2047, %v2048
        %v2050 = vsel %vm1932, %v1870, -inf
        %v2051 = vmax.f32 %v2049, %v2050
        %v2052 = vsel %vm1932, %v1489, -inf
        %v2053 = vsel %vm1932, %v1617, -inf
        %v2054 = vmax.f32 %v2052, %v2053
        %v2055 = vsel %vm1932, %v1745, -inf
        %v2056 = vmax.f32 %v2054, %v2055
        %v2057 = vsel %vm1932, %v1873, -inf
        %v2058 = vmax.f32 %v2056, %v2057
        %v2059 = vsel %vm1932, %v1494, -inf
        %v2060 = vsel %vm1932, %v1622, -inf
        %v2061 = vmax.f32 %v2059, %v2060
        %v2062 = vsel %vm1932, %v1750, -inf
        %v2063 = vmax.f32 %v2061, %v2062
        %v2064 = vsel %vm1932, %v1878, -inf
        %v2065 = vmax.f32 %v2063, %v2064
        %v2066 = vsel %vm1932, %v1497, -inf
        %v2067 = vsel %vm1932, %v1625, -inf
        %v2068 = vmax.f32 %v2066, %v2067
        %v2069 = vsel %vm1932, %v1753, -inf
        %v2070 = vmax.f32 %v2068, %v2069
        %v2071 = vsel %vm1932, %v1881, -inf
        %v2072 = vmax.f32 %v2070, %v2071
        %v2073 = vsel %vm1932, %v1502, -inf
        %v2074 = vsel %vm1932, %v1630, -inf
        %v2075 = vmax.f32 %v2073, %v2074
        %v2076 = vsel %vm1932, %v1758, -inf
        %v2077 = vmax.f32 %v2075, %v2076
        %v2078 = vsel %vm1932, %v1886, -inf
        %v2079 = vmax.f32 %v2077, %v2078
        %v2080 = vsel %vm1932, %v1505, -inf
        %v2081 = vsel %vm1932, %v1633, -inf
        %v2082 = vmax.f32 %v2080, %v2081
        %v2083 = vsel %vm1932, %v1761, -inf
        %v2084 = vmax.f32 %v2082, %v2083
        %v2085 = vsel %vm1932, %v1889, -inf
        %v2086 = vmax.f32 %v2084, %v2085
        %v2087 = vsel %vm1932, %v1510, -inf
        %v2088 = vsel %vm1932, %v1638, -inf
        %v2089 = vmax.f32 %v2087, %v2088
        %v2090 = vsel %vm1932, %v1766, -inf
        %v2091 = vmax.f32 %v2089, %v2090
        %v2092 = vsel %vm1932, %v1894, -inf
        %v2093 = vmax.f32 %v2091, %v2092
        %v2094 = vsel %vm1932, %v1513, -inf
        %v2095 = vsel %vm1932, %v1641, -inf
        %v2096 = vmax.f32 %v2094, %v2095
        %v2097 = vsel %vm1932, %v1769, -inf
        %v2098 = vmax.f32 %v2096, %v2097
        %v2099 = vsel %vm1932, %v1897, -inf
        %v2100 = vmax.f32 %v2098, %v2099
        %v2101 = vsel %vm1932, %v1518, -inf
        %v2102 = vsel %vm1932, %v1646, -inf
        %v2103 = vmax.f32 %v2101, %v2102
        %v2104 = vsel %vm1932, %v1774, -inf
        %v2105 = vmax.f32 %v2103, %v2104
        %v2106 = vsel %vm1932, %v1902, -inf
        %v2107 = vmax.f32 %v2105, %v2106
        %v2108 = vsel %vm1932, %v1521, -inf
        %v2109 = vsel %vm1932, %v1649, -inf
        %v2110 = vmax.f32 %v2108, %v2109
        %v2111 = vsel %vm1932, %v1777, -inf
        %v2112 = vmax.f32 %v2110, %v2111
        %v2113 = vsel %vm1932, %v1905, -inf
        %v2114 = vmax.f32 %v2112, %v2113
        %v2115 = vsel %vm1932, %v1526, -inf
        %v2116 = vsel %vm1932, %v1654, -inf
        %v2117 = vmax.f32 %v2115, %v2116
        %v2118 = vsel %vm1932, %v1782, -inf
        %v2119 = vmax.f32 %v2117, %v2118
        %v2120 = vsel %vm1932, %v1910, -inf
        %v2121 = vmax.f32 %v2119, %v2120
        %v2122 = vsel %vm1932, %v1529, -inf
        %v2123 = vsel %vm1932, %v1657, -inf
        %v2124 = vmax.f32 %v2122, %v2123
        %v2125 = vsel %vm1932, %v1785, -inf
        %v2126 = vmax.f32 %v2124, %v2125
        %v2127 = vsel %vm1932, %v1913, -inf
        %v2128 = vmax.f32 %v2126, %v2127
        %v2129 = vsel %vm1932, %v1534, -inf
        %v2130 = vsel %vm1932, %v1662, -inf
        %v2131 = vmax.f32 %v2129, %v2130
        %v2132 = vsel %vm1932, %v1790, -inf
        %v2133 = vmax.f32 %v2131, %v2132
        %v2134 = vsel %vm1932, %v1918, -inf
        %v2135 = vmax.f32 %v2133, %v2134
        %v2136 = vsel %vm1932, %v1537, -inf
        %v2137 = vsel %vm1932, %v1665, -inf
        %v2138 = vmax.f32 %v2136, %v2137
        %v2139 = vsel %vm1932, %v1793, -inf
        %v2140 = vmax.f32 %v2138, %v2139
        %v2141 = vsel %vm1932, %v1921, -inf
        %v2142 = vmax.f32 %v2140, %v2141
        %v2143 = vsel %vm1932, %v1542, -inf
        %v2144 = vsel %vm1932, %v1670, -inf
        %v2145 = vmax.f32 %v2143, %v2144
        %v2146 = vsel %vm1932, %v1798, -inf
        %v2147 = vmax.f32 %v2145, %v2146
        %v2148 = vsel %vm1932, %v1926, -inf
        %v2149 = vmax.f32 %v2147, %v2148
        %v2150 = vsel %vm1932, %v1545, -inf
        %v2151 = vsel %vm1932, %v1673, -inf
        %v2152 = vmax.f32 %v2150, %v2151
        %v2153 = vsel %vm1932, %v1801, -inf
        %v2154 = vmax.f32 %v2152, %v2153
        %v2155 = vsel %vm1932, %v1929, -inf
        %v2156 = vmax.f32 %v2154, %v2155
        %v2157 = vld [vmem:[%s2] sm:$0x1]
        %v2159 = vlaneseq
        %v2160 = vshrl.u32 %v2159, 7
        %v2161 = vsub.s32 0, %v2160
        %v2162 = vrot.slane %v2157, %v2161
        %v2164 = vadd.f32 %v1939, %v2162
        %v2165 = vadd.f32 %v1946, %v2162
        %v2166 = vadd.f32 %v1953, %v2162
        %v2167 = vadd.f32 %v1960, %v2162
        %v2168 = vadd.f32 %v1967, %v2162
        %v2169 = vadd.f32 %v1974, %v2162
        %v2170 = vadd.f32 %v1981, %v2162
        %v2171 = vadd.f32 %v1988, %v2162
        %v2172 = vadd.f32 %v1995, %v2162
        %v2173 = vadd.f32 %v2002, %v2162
        %v2174 = vadd.f32 %v2009, %v2162
        %v2175 = vadd.f32 %v2016, %v2162
        %v2176 = vadd.f32 %v2023, %v2162
        %v2177 = vadd.f32 %v2030, %v2162
        %v2178 = vadd.f32 %v2037, %v2162
        %v2179 = vadd.f32 %v2044, %v2162
        %v2180 = vadd.f32 %v2051, %v2162
        %v2181 = vadd.f32 %v2058, %v2162
        %v2182 = vadd.f32 %v2065, %v2162
        %v2183 = vadd.f32 %v2072, %v2162
        %v2184 = vadd.f32 %v2079, %v2162
        %v2185 = vadd.f32 %v2086, %v2162
        %v2186 = vadd.f32 %v2093, %v2162
        %v2187 = vadd.f32 %v2100, %v2162
        %v2188 = vadd.f32 %v2107, %v2162
        %v2189 = vadd.f32 %v2114, %v2162
        %v2190 = vadd.f32 %v2121, %v2162
        %v2191 = vadd.f32 %v2128, %v2162
        %v2192 = vadd.f32 %v2135, %v2162
        %v2193 = vadd.f32 %v2142, %v2162
        %v2194 = vadd.f32 %v2149, %v2162
        %v2195 = vadd.f32 %v2156, %v2162
        %v2196 = vmax.f32 %v2164, 0.0
        %v2197 = vmax.f32 %v2165, 0.0
        %v2198 = vmax.f32 %v2166, 0.0
        %v2199 = vmax.f32 %v2167, 0.0
        %v2200 = vmax.f32 %v2168, 0.0
        %v2201 = vmax.f32 %v2169, 0.0
        %v2202 = vmax.f32 %v2170, 0.0
        %v2203 = vmax.f32 %v2171, 0.0
        %v2204 = vmax.f32 %v2172, 0.0
        %v2205 = vmax.f32 %v2173, 0.0
        %v2206 = vmax.f32 %v2174, 0.0
        %v2207 = vmax.f32 %v2175, 0.0
        %v2208 = vmax.f32 %v2176, 0.0
        %v2209 = vmax.f32 %v2177, 0.0
        %v2210 = vmax.f32 %v2178, 0.0
        %v2211 = vmax.f32 %v2179, 0.0
        %v2212 = vmax.f32 %v2180, 0.0
        %v2213 = vmax.f32 %v2181, 0.0
        %v2214 = vmax.f32 %v2182, 0.0
        %v2215 = vmax.f32 %v2183, 0.0
        %v2216 = vmax.f32 %v2184, 0.0
        %v2217 = vmax.f32 %v2185, 0.0
        %v2218 = vmax.f32 %v2186, 0.0
        %v2219 = vmax.f32 %v2187, 0.0
        %v2220 = vmax.f32 %v2188, 0.0
        %v2221 = vmax.f32 %v2189, 0.0
        %v2222 = vmax.f32 %v2190, 0.0
        %v2223 = vmax.f32 %v2191, 0.0
        %v2224 = vmax.f32 %v2192, 0.0
        %v2225 = vmax.f32 %v2193, 0.0
        %v2226 = vmax.f32 %v2194, 0.0
        %v2227 = vmax.f32 %v2195, 0.0
        %v2228 = vpack.c.bf16 %v2197, %v2196
        %v2229 = vpack.c.bf16 %v2199, %v2198
        %v2230 = vpack.c.bf16 %v2201, %v2200
        %v2231 = vpack.c.bf16 %v2203, %v2202
        %v2232 = vpack.c.bf16 %v2205, %v2204
        %v2233 = vpack.c.bf16 %v2207, %v2206
        %v2234 = vpack.c.bf16 %v2209, %v2208
        %v2235 = vpack.c.bf16 %v2211, %v2210
        %v2236 = vpack.c.bf16 %v2213, %v2212
        %v2237 = vpack.c.bf16 %v2215, %v2214
        %v2238 = vpack.c.bf16 %v2217, %v2216
        %v2239 = vpack.c.bf16 %v2219, %v2218
        %v2240 = vpack.c.bf16 %v2221, %v2220
        %v2241 = vpack.c.bf16 %v2223, %v2222
        %v2242 = vpack.c.bf16 %v2225, %v2224
        %v2243 = vpack.c.bf16 %v2227, %v2226
        %v2260 = vunpack.c.l.b16 %v2228
        %v2261 = vunpack.c.h.b16 %v2228
        %v2262 = vunpack.c.l.b16 %v2229
        %v2263 = vunpack.c.h.b16 %v2229
        %v2264 = vunpack.c.l.b16 %v2230
        %v2265 = vunpack.c.h.b16 %v2230
        %v2266 = vunpack.c.l.b16 %v2231
        %v2267 = vunpack.c.h.b16 %v2231
        %v2268 = vunpack.c.l.b16 %v2232
        %v2269 = vunpack.c.h.b16 %v2232
        %v2270 = vunpack.c.l.b16 %v2233
        %v2271 = vunpack.c.h.b16 %v2233
        %v2272 = vunpack.c.l.b16 %v2234
        %v2273 = vunpack.c.h.b16 %v2234
        %v2274 = vunpack.c.l.b16 %v2235
        %v2275 = vunpack.c.h.b16 %v2235
        %v2276 = vunpack.c.l.b16 %v2236
        %v2277 = vunpack.c.h.b16 %v2236
        %v2278 = vunpack.c.l.b16 %v2237
        %v2279 = vunpack.c.h.b16 %v2237
        %v2280 = vunpack.c.l.b16 %v2238
        %v2281 = vunpack.c.h.b16 %v2238
        %v2282 = vunpack.c.l.b16 %v2239
        %v2283 = vunpack.c.h.b16 %v2239
        %v2284 = vunpack.c.l.b16 %v2240
        %v2285 = vunpack.c.h.b16 %v2240
        %v2286 = vunpack.c.l.b16 %v2241
        %v2287 = vunpack.c.h.b16 %v2241
        %v2288 = vunpack.c.l.b16 %v2242
        %v2289 = vunpack.c.h.b16 %v2242
        %v2290 = vunpack.c.l.b16 %v2243
        %v2291 = vunpack.c.h.b16 %v2243
        %v2292 = vpack.c.b16 %v2260, %v2260
        %v2293 = vpack.c.b16 %v2261, %v2261
        %v2294 = vpack.c.b16 %v2262, %v2262
        %v2295 = vpack.c.b16 %v2263, %v2263
        %v2296 = vpack.c.b16 %v2264, %v2264
        %v2297 = vpack.c.b16 %v2265, %v2265
        %v2298 = vpack.c.b16 %v2266, %v2266
        %v2299 = vpack.c.b16 %v2267, %v2267
        %v2300 = vpack.c.b16 %v2268, %v2268
        %v2301 = vpack.c.b16 %v2269, %v2269
        %v2302 = vpack.c.b16 %v2270, %v2270
        %v2303 = vpack.c.b16 %v2271, %v2271
        %v2304 = vpack.c.b16 %v2272, %v2272
        %v2305 = vpack.c.b16 %v2273, %v2273
        %v2306 = vpack.c.b16 %v2274, %v2274
        %v2307 = vpack.c.b16 %v2275, %v2275
        %v2308 = vpack.c.b16 %v2276, %v2276
        %v2309 = vpack.c.b16 %v2277, %v2277
        %v2310 = vpack.c.b16 %v2278, %v2278
        %v2311 = vpack.c.b16 %v2279, %v2279
        %v2312 = vpack.c.b16 %v2280, %v2280
        %v2313 = vpack.c.b16 %v2281, %v2281
        %v2314 = vpack.c.b16 %v2282, %v2282
        %v2315 = vpack.c.b16 %v2283, %v2283
        %v2316 = vpack.c.b16 %v2284, %v2284
        %v2317 = vpack.c.b16 %v2285, %v2285
        %v2318 = vpack.c.b16 %v2286, %v2286
        %v2319 = vpack.c.b16 %v2287, %v2287
        %v2320 = vpack.c.b16 %v2288, %v2288
        %v2321 = vpack.c.b16 %v2289, %v2289
        %v2322 = vpack.c.b16 %v2290, %v2290
        %v2323 = vpack.c.b16 %v2291, %v2291
        %vm2356 = vcmask 257024
        %2357 = vst.msk [vmem:[%s721] sm:$0xf] %vm2356, %v2292
        %2358 = vst.msk [vmem:[%s721 + $0x4] sm:$0xf] %vm2356, %v2293
        %2359 = vst.msk [vmem:[%s721 + $0x8] sm:$0xf] %vm2356, %v2294
        %2360 = vst.msk [vmem:[%s721 + $0xc] sm:$0xf] %vm2356, %v2295
        %2361 = vst.msk [vmem:[%s721 + $0x10] sm:$0xf] %vm2356, %v2296
        %2362 = vst.msk [vmem:[%s721 + $0x14] sm:$0xf] %vm2356, %v2297
        %2363 = vst.msk [vmem:[%s721 + $0x18] sm:$0xf] %vm2356, %v2298
        %2364 = vst.msk [vmem:[%s721 + $0x1c] sm:$0xf] %vm2356, %v2299
        %2365 = vst.msk [vmem:[%s721 + $0x20] sm:$0xf] %vm2356, %v2300
        %2366 = vst.msk [vmem:[%s721 + $0x24] sm:$0xf] %vm2356, %v2301
        %2367 = vst.msk [vmem:[%s721 + $0x28] sm:$0xf] %vm2356, %v2302
        %2368 = vst.msk [vmem:[%s721 + $0x2c] sm:$0xf] %vm2356, %v2303
        %2369 = vst.msk [vmem:[%s721 + $0x30] sm:$0xf] %vm2356, %v2304
        %2370 = vst.msk [vmem:[%s721 + $0x34] sm:$0xf] %vm2356, %v2305
        %2371 = vst.msk [vmem:[%s721 + $0x38] sm:$0xf] %vm2356, %v2306
        %2372 = vst.msk [vmem:[%s721 + $0x3c] sm:$0xf] %vm2356, %v2307
        %2373 = vst.msk [vmem:[%s721 + $0x40] sm:$0xf] %vm2356, %v2308
        %2374 = vst.msk [vmem:[%s721 + $0x44] sm:$0xf] %vm2356, %v2309
        %2375 = vst.msk [vmem:[%s721 + $0x48] sm:$0xf] %vm2356, %v2310
        %2376 = vst.msk [vmem:[%s721 + $0x4c] sm:$0xf] %vm2356, %v2311
        %2377 = vst.msk [vmem:[%s721 + $0x50] sm:$0xf] %vm2356, %v2312
        %2378 = vst.msk [vmem:[%s721 + $0x54] sm:$0xf] %vm2356, %v2313
        %2379 = vst.msk [vmem:[%s721 + $0x58] sm:$0xf] %vm2356, %v2314
        %2380 = vst.msk [vmem:[%s721 + $0x5c] sm:$0xf] %vm2356, %v2315
        %2381 = vst.msk [vmem:[%s721 + $0x60] sm:$0xf] %vm2356, %v2316
        %2382 = vst.msk [vmem:[%s721 + $0x64] sm:$0xf] %vm2356, %v2317
        %2383 = vst.msk [vmem:[%s721 + $0x68] sm:$0xf] %vm2356, %v2318
        %2384 = vst.msk [vmem:[%s721 + $0x6c] sm:$0xf] %vm2356, %v2319
        %2385 = vst.msk [vmem:[%s721 + $0x70] sm:$0xf] %vm2356, %v2320
        %2386 = vst.msk [vmem:[%s721 + $0x74] sm:$0xf] %vm2356, %v2321
        %2387 = vst.msk [vmem:[%s721 + $0x78] sm:$0xf] %vm2356, %v2322
        %2388 = vst.msk [vmem:[%s721 + $0x7c] sm:$0xf] %vm2356, %v2323
        %s2389 = smul.u32 32, %s14
        %p2390 = scmp.lt.s32.totalorder %s2389, 63
        %s2391 = scalar_select %p2390, %s2389, 63
        %s2392 = smul.addr %s2391, 4
        %s2393 = scalar_lea.vmem %s3, %s2392
        // Predicated region
        $region74: #{simple_cnn_forward.3} parent=68 // pred_check
          %p2394 = pneg %p100
        $region75: #{simple_cnn_forward.3} parent=68 // pred_check_branch
          %2396 = sbr.rel (%p2394) target = $region77
        $region76: #{simple_cnn_forward.3} parent=68 // pred_region
          %s2397 = smul.u32 32, %s14
        $region77: #{simple_cnn_forward.3} parent=68 // pred_fallthru
          _
      $region69: #{simple_cnn_forward.3} parent=5 // pred_fallthru
        _
      %p2398 = scmp.le.s32.totalorder 2, %s9
      // Predicated region
      $region78: #{simple_cnn_forward.3} parent=5 // pred_check
        %p2399 = pneg %p2398
      $region79: #{simple_cnn_forward.3} parent=5 // pred_check_branch
        %2401 = sbr.rel (%p2399) target = $region81
      $region80: #{simple_cnn_forward.3} parent=5 // pred_region
        %s2402 = ssub.s32 %s9, 2
        // Predicated region
        $region82: #{simple_cnn_forward.3} parent=80 // pred_check
          %p2403 = pneg %p106
        $region83: #{simple_cnn_forward.3} parent=80 // pred_check_branch
          %2405 = sbr.rel (%p2403) target = $region85
        $region84: #{simple_cnn_forward.3} parent=80 // pred_region
          %s2406 = smul.u32 32, %s15
          %p2407 = scmp.lt.s32.totalorder %s2406, 63
          %s2408 = scalar_select %p2407, %s2406, 63
          %s2409 = smul.addr %s2408, 4
          %s2410 = scalar_lea.vmem %s3, %s2409
        $region85: #{simple_cnn_forward.3} parent=80 // pred_fallthru
          _
      $region81: #{simple_cnn_forward.3} parent=5 // pred_fallthru
        _
    $region6: #{simple_cnn_forward.3} parent=1 // loop_footer
      %s13 = sadd.s32 1, %s9
    $region7: #{simple_cnn_forward.3} parent=1 // loop_footer_branch
      %8 = sbr.rel target = $region3
    $region8: #{simple_cnn_forward.3} parent=1 // loop_exit
      _

// kernel: simple_cnn_forward.4
$region0: #{simple_cnn_forward.4}
  #allocation0 [shape = 'u32[]', space=smem, size = 0x4, offset = 0x4, fixed_abs, tag = 'smem constant byte address 0x4 - core index']
  #allocation1 [shape = 'u32[144,128]{1,0:T(1,128)}', space=vmem, size = 0x12000, scoped, tag = 'internal scratch']
  %s0 = inlined_call_operand.vmem [shape: bf16[4,128,288], index: 0, kind: input, shape index: {}]
  %s1 = inlined_call_operand.vmem [shape: bf16[288,64], index: 1, kind: input, shape index: {}]
  %s2 = inlined_call_operand.vmem [shape: f32[1,64], index: 2, kind: input, shape index: {}]
  %s3 = inlined_call_operand.vmem [shape: bf16[128,64], index: 3, kind: output, shape index: {}]
  %s4 = sld [smem:[#allocation0]]
  $region71: #{simple_cnn_forward.4} parent=0
    _
  %s6 = ssub.s32 1, %s4
  %s7 = scalar_select 0, %s6, %s4
  $region1: #{simple_cnn_forward.4} parent=0
    #allocation2 [shape = 'u8[393216]{0}', space=vmem, size = 0x60000, scoped, tag = 'input window, operand 0']
    loop: start=0, step=1, limit=4
    $region2: #{simple_cnn_forward.4} parent=1 // loop_pre_header
      _
    $region3: #{simple_cnn_forward.4} parent=1 // loop_header
      %s9 = sphi 0, %s13
      %p10 = scmp.ge.s32.totalorder %s9, 4
      %s19 = sphi 0, %s21
      %s22 = sphi 0, %s19
      %s23 = sphi 0, %s22
      %s39 = sphi 0, %s23
      %s43 = sphi 0, %s43
      %s45 = sphi 0, %s43
      %s46 = sphi 0, %s45
      %s60 = sphi 0, %s46
      %s64 = sphi 0, %s64
      %s66 = sphi 0, %s64
      %s67 = sphi 0, %s66
      %s81 = sphi 0, %s67
      %s87 = sphi 0, %s89
      %s90 = sphi 0, %s87
      %s91 = sphi 0, %s90
      %s107 = sphi 0, %s91
    $region4: #{simple_cnn_forward.4} parent=1 // loop_header_branch
      %12 = sbr.rel (%p10) target = $region8
    $region5: #{simple_cnn_forward.4} parent=1 // loop_body
      %s14 = ssub.s32 %s9, 1
      %s15 = ssub.s32 %s9, 2
      %s16 = sadd.s32 %s9, 1
      %s17 = ssub.s32 %s9, %s16
      %p18 = scmp.eq.s32.totalorder %s17, 0
      %s20 = sadd.s32 %s19, 1
      %s21 = scalar_select %p18, %s19, %s20
      %p24 = pneg %p18
      %p25 = scmp.eq.s32.totalorder %s9, 1
      %p26 = por %p24, %p25
      %p27 = scmp.ne.s32.totalorder %s19, %s22
      %p28 = scmp.eq.s32.totalorder %s9, 0
      %p29 = por %p27, %p28
      %p30 = scmp.ne.s32.totalorder %s19, %s22
      %p31 = scmp.eq.s32.totalorder %s14, 1
      %p32 = por %p30, %p31
      %p33 = scmp.ne.s32.totalorder %s22, %s23
      %p34 = scmp.eq.s32.totalorder %s14, 0
      %p35 = por %p33, %p34
      %p36 = scmp.ne.s32.totalorder %s22, %s23
      %p37 = scmp.eq.s32.totalorder %s15, 1
      %p38 = por %p36, %p37
      %p40 = scmp.ne.s32.totalorder %s23, %s39
      %p41 = scmp.eq.s32.totalorder %s15, 0
      %p42 = por %p40, %p41
      %s44 = sadd.s32 %s43, 1
      %p47 = scmp.eq.s32.totalorder %s9, 1
      %p48 = scmp.ne.s32.totalorder %s43, %s45
      %p49 = scmp.eq.s32.totalorder %s9, 0
      %p50 = por %p48, %p49
      %p51 = scmp.ne.s32.totalorder %s43, %s45
      %p52 = scmp.eq.s32.totalorder %s14, 1
      %p53 = por %p51, %p52
      %p54 = scmp.ne.s32.totalorder %s45, %s46
      %p55 = scmp.eq.s32.totalorder %s14, 0
      %p56 = por %p54, %p55
      %p57 = scmp.ne.s32.totalorder %s45, %s46
      %p58 = scmp.eq.s32.totalorder %s15, 1
      %p59 = por %p57, %p58
      %p61 = scmp.ne.s32.totalorder %s46, %s60
      %p62 = scmp.eq.s32.totalorder %s15, 0
      %p63 = por %p61, %p62
      %s65 = sadd.s32 %s64, 1
      %p68 = scmp.eq.s32.totalorder %s9, 1
      %p69 = scmp.ne.s32.totalorder %s64, %s66
      %p70 = scmp.eq.s32.totalorder %s9, 0
      %p71 = por %p69, %p70
      %p72 = scmp.ne.s32.totalorder %s64, %s66
      %p73 = scmp.eq.s32.totalorder %s14, 1
      %p74 = por %p72, %p73
      %p75 = scmp.ne.s32.totalorder %s66, %s67
      %p76 = scmp.eq.s32.totalorder %s14, 0
      %p77 = por %p75, %p76
      %p78 = scmp.ne.s32.totalorder %s66, %s67
      %p79 = scmp.eq.s32.totalorder %s15, 1
      %p80 = por %p78, %p79
      %p82 = scmp.ne.s32.totalorder %s67, %s81
      %p83 = scmp.eq.s32.totalorder %s15, 0
      %p84 = por %p82, %p83
      %s85 = ssub.s32 %s9, %s16
      %p86 = scmp.eq.s32.totalorder %s85, 0
      %s88 = sadd.s32 %s87, 1
      %s89 = scalar_select %p86, %s87, %s88
      %p92 = pneg %p86
      %p93 = scmp.eq.s32.totalorder %s9, 1
      %p94 = por %p92, %p93
      %p95 = scmp.ne.s32.totalorder %s87, %s90
      %p96 = scmp.eq.s32.totalorder %s9, 0
      %p97 = por %p95, %p96
      %p98 = scmp.ne.s32.totalorder %s87, %s90
      %p99 = scmp.eq.s32.totalorder %s14, 1
      %p100 = por %p98, %p99
      %p101 = scmp.ne.s32.totalorder %s90, %s91
      %p102 = scmp.eq.s32.totalorder %s14, 0
      %p103 = por %p101, %p102
      %p104 = scmp.ne.s32.totalorder %s90, %s91
      %p105 = scmp.eq.s32.totalorder %s15, 1
      %p106 = por %p104, %p105
      %p108 = scmp.ne.s32.totalorder %s91, %s107
      %p109 = scmp.eq.s32.totalorder %s15, 0
      %p110 = por %p108, %p109
      %p111 = scmp.le.s32.totalorder 1, %s9
      %p112 = scmp.lt.s32.totalorder %s9, 3
      %p113 = pnand %p111, %p112
      %p114 = pneg %p113
      // Predicated region
      $region9: #{simple_cnn_forward.4} parent=5 // pred_check
        _
      $region10: #{simple_cnn_forward.4} parent=5 // pred_check_branch
        %116 = sbr.rel (%p113) target = $region12
      $region11: #{simple_cnn_forward.4} parent=5 // pred_region
        %s117 = ssub.s32 %s9, 1
        // Predicated region
        $region13: #{simple_cnn_forward.4} parent=11 // pred_check
          %p118 = pneg %p56
        $region14: #{simple_cnn_forward.4} parent=11 // pred_check_branch
          %120 = sbr.rel (%p118) target = $region16
        $region15: #{simple_cnn_forward.4} parent=11 // pred_region
          _
        $region16: #{simple_cnn_forward.4} parent=11 // pred_fallthru
          _
        // Predicated region
        $region17: #{simple_cnn_forward.4} parent=11 // pred_check
          %p121 = pneg %p77
        $region18: #{simple_cnn_forward.4} parent=11 // pred_check_branch
          %123 = sbr.rel (%p121) target = $region20
        $region19: #{simple_cnn_forward.4} parent=11 // pred_region
          _
        $region20: #{simple_cnn_forward.4} parent=11 // pred_fallthru
          _
      $region12: #{simple_cnn_forward.4} parent=5 // pred_fallthru
        _
      %p124 = scmp.lt.s32.totalorder %s9, 2
      // Predicated region
      $region21: #{simple_cnn_forward.4} parent=5 // pred_check
        %p125 = pneg %p124
      $region22: #{simple_cnn_forward.4} parent=5 // pred_check_branch
        %127 = sbr.rel (%p125) target = $region24
      $region23: #{simple_cnn_forward.4} parent=5 // pred_region
        // Predicated region
        $region25: #{simple_cnn_forward.4} parent=23 // pred_check
          %p128 = pneg %p29
        $region26: #{simple_cnn_forward.4} parent=23 // pred_check_branch
          %130 = sbr.rel (%p128) target = $region28
        $region27: #{simple_cnn_forward.4} parent=23 // pred_region
          %s131 = sand.u32 %s19, 1
          %s132 = sand.u32 %s19, 1
          %s133 = smul.addr %s132, 384
          %s134 = scalar_lea.vmem [#allocation2], %s133
          %s135 = smul.u32 8, %s9
          %s136 = smul.addr %s135, 3
          %s137 = smul.addr %s136, 4
          %s138 = scalar_lea.vmem %s0, %s137
          // Predicated region
          $region29: #{simple_cnn_forward.4} parent=27 // pred_check
            _
          $region30: #{simple_cnn_forward.4} parent=27 // pred_check_branch
            %140 = sbr.rel (0) target = $region32
          $region31: #{simple_cnn_forward.4} parent=27 // pred_region
            // Predicated region
            $region33: #{simple_cnn_forward.4} parent=31 // pred_check
              _
            $region34: #{simple_cnn_forward.4} parent=31 // pred_check_branch
              %142 = sbr.rel (0) target = $region36
            $region35: #{simple_cnn_forward.4} parent=31 // pred_region
              %s143 = scalar_lea.vmem %s138, 8
              %s144 = scalar_lea.vmem %s134, 8 [#allocation2]
              loop: start=0, step=1, limit=1
              $region37: #{simple_cnn_forward.4} parent=35 // loop_pre_header
                _
              $region38: #{simple_cnn_forward.4} parent=35 // loop_header
                %s146 = sphi 0, %s150
                %p147 = scmp.ge.s32.totalorder %s146, 1
                %s151 = sphi %s138, %s138
                %s152 = sphi %s134, %s134
              $region39: #{simple_cnn_forward.4} parent=35 // loop_header_branch
                %149 = sbr.rel (%p147) target = $region43
              $region40: #{simple_cnn_forward.4} parent=35 // loop_body
                %v153 = vld [vmem:[%s151] sm:$0xff]
                %154 = vst [vmem:[%s152] sm:$0xff] %v153
                %v155 = vld [vmem:[%s151 + $0xc] sm:$0xff]
                %156 = vst [vmem:[%s152 + $0xc] sm:$0xff] %v155
                %v157 = vld [vmem:[%s151 + $0x18] sm:$0xff]
                %158 = vst [vmem:[%s152 + $0x18] sm:$0xff] %v157
                %v159 = vld [vmem:[%s151 + $0x24] sm:$0xff]
                %160 = vst [vmem:[%s152 + $0x24] sm:$0xff] %v159
                %v161 = vld [vmem:[%s151 + $0x30] sm:$0xff]
                %162 = vst [vmem:[%s152 + $0x30] sm:$0xff] %v161
                %v163 = vld [vmem:[%s151 + $0x3c] sm:$0xff]
                %164 = vst [vmem:[%s152 + $0x3c] sm:$0xff] %v163
                %v165 = vld [vmem:[%s151 + $0x48] sm:$0xff]
                %166 = vst [vmem:[%s152 + $0x48] sm:$0xff] %v165
                %v167 = vld [vmem:[%s151 + $0x54] sm:$0xff]
                %168 = vst [vmem:[%s152 + $0x54] sm:$0xff] %v167
                %v169 = vld [vmem:[%s151 + $0xc0] sm:$0xff]
                %170 = vst [vmem:[%s152 + $0x60] sm:$0xff] %v169
                %v171 = vld [vmem:[%s151 + $0xcc] sm:$0xff]
                %172 = vst [vmem:[%s152 + $0x6c] sm:$0xff] %v171
                %v173 = vld [vmem:[%s151 + $0xd8] sm:$0xff]
                %174 = vst [vmem:[%s152 + $0x78] sm:$0xff] %v173
                %v175 = vld [vmem:[%s151 + $0xe4] sm:$0xff]
                %176 = vst [vmem:[%s152 + $0x84] sm:$0xff] %v175
                %v177 = vld [vmem:[%s151 + $0xf0] sm:$0xff]
                %178 = vst [vmem:[%s152 + $0x90] sm:$0xff] %v177
                %v179 = vld [vmem:[%s151 + $0xfc] sm:$0xff]
                %180 = vst [vmem:[%s152 + $0x9c] sm:$0xff] %v179
                %v181 = vld [vmem:[%s151 + $0x108] sm:$0xff]
                %182 = vst [vmem:[%s152 + $0xa8] sm:$0xff] %v181
                %v183 = vld [vmem:[%s151 + $0x114] sm:$0xff]
                %184 = vst [vmem:[%s152 + $0xb4] sm:$0xff] %v183
                %v185 = vld [vmem:[%s151 + $0x180] sm:$0xff]
                %186 = vst [vmem:[%s152 + $0xc0] sm:$0xff] %v185
                %v187 = vld [vmem:[%s151 + $0x18c] sm:$0xff]
                %188 = vst [vmem:[%s152 + $0xcc] sm:$0xff] %v187
                %v189 = vld [vmem:[%s151 + $0x198] sm:$0xff]
                %190 = vst [vmem:[%s152 + $0xd8] sm:$0xff] %v189
                %v191 = vld [vmem:[%s151 + $0x1a4] sm:$0xff]
                %192 = vst [vmem:[%s152 + $0xe4] sm:$0xff] %v191
                %v193 = vld [vmem:[%s151 + $0x1b0] sm:$0xff]
                %194 = vst [vmem:[%s152 + $0xf0] sm:$0xff] %v193
                %v195 = vld [vmem:[%s151 + $0x1bc] sm:$0xff]
                %196 = vst [vmem:[%s152 + $0xfc] sm:$0xff] %v195
                %v197 = vld [vmem:[%s151 + $0x1c8] sm:$0xff]
                %198 = vst [vmem:[%s152 + $0x108] sm:$0xff] %v197
                %v199 = vld [vmem:[%s151 + $0x1d4] sm:$0xff]
                %200 = vst [vmem:[%s152 + $0x114] sm:$0xff] %v199
                %v201 = vld [vmem:[%s151 + $0x240] sm:$0xff]
                %202 = vst [vmem:[%s152 + $0x120] sm:$0xff] %v201
                %v203 = vld [vmem:[%s151 + $0x24c] sm:$0xff]
                %204 = vst [vmem:[%s152 + $0x12c] sm:$0xff] %v203
                %v205 = vld [vmem:[%s151 + $0x258] sm:$0xff]
                %206 = vst [vmem:[%s152 + $0x138] sm:$0xff] %v205
                %v207 = vld [vmem:[%s151 + $0x264] sm:$0xff]
                %208 = vst [vmem:[%s152 + $0x144] sm:$0xff] %v207
                %v209 = vld [vmem:[%s151 + $0x270] sm:$0xff]
                %210 = vst [vmem:[%s152 + $0x150] sm:$0xff] %v209
                %v211 = vld [vmem:[%s151 + $0x27c] sm:$0xff]
                %212 = vst [vmem:[%s152 + $0x15c] sm:$0xff] %v211
                %v213 = vld [vmem:[%s151 + $0x288] sm:$0xff]
                %214 = vst [vmem:[%s152 + $0x168] sm:$0xff] %v213
                %v215 = vld [vmem:[%s151 + $0x294] sm:$0xff]
                %216 = vst [vmem:[%s152 + $0x174] sm:$0xff] %v215
              $region41: #{simple_cnn_forward.4} parent=35 // loop_footer
                %s150 = sadd.s32 1, %s146
              $region42: #{simple_cnn_forward.4} parent=35 // loop_footer_branch
                %145 = sbr.rel target = $region38
              $region43: #{simple_cnn_forward.4} parent=35 // loop_exit
                _
              loop: start=0, step=1, limit=1
              $region44: #{simple_cnn_forward.4} parent=35 // loop_pre_header
                _
              $region45: #{simple_cnn_forward.4} parent=35 // loop_header
                %s219 = sphi 0, %s223
                %p220 = scmp.ge.s32.totalorder %s219, 1
                %s224 = sphi %s143, %s143
                %s225 = sphi %s144, %s144
              $region46: #{simple_cnn_forward.4} parent=35 // loop_header_branch
                %222 = sbr.rel (%p220) target = $region50
              $region47: #{simple_cnn_forward.4} parent=35 // loop_body
                %v226 = vld [vmem:[%s224] sm:$0xf]
                %227 = vst [vmem:[%s225] sm:$0xf] %v226
                %v228 = vld [vmem:[%s224 + $0xc] sm:$0xf]
                %229 = vst [vmem:[%s225 + $0xc] sm:$0xf] %v228
                %v230 = vld [vmem:[%s224 + $0x18] sm:$0xf]
                %231 = vst [vmem:[%s225 + $0x18] sm:$0xf] %v230
                %v232 = vld [vmem:[%s224 + $0x24] sm:$0xf]
                %233 = vst [vmem:[%s225 + $0x24] sm:$0xf] %v232
                %v234 = vld [vmem:[%s224 + $0x30] sm:$0xf]
                %235 = vst [vmem:[%s225 + $0x30] sm:$0xf] %v234
                %v236 = vld [vmem:[%s224 + $0x3c] sm:$0xf]
                %237 = vst [vmem:[%s225 + $0x3c] sm:$0xf] %v236
                %v238 = vld [vmem:[%s224 + $0x48] sm:$0xf]
                %239 = vst [vmem:[%s225 + $0x48] sm:$0xf] %v238
                %v240 = vld [vmem:[%s224 + $0x54] sm:$0xf]
                %241 = vst [vmem:[%s225 + $0x54] sm:$0xf] %v240
                %v242 = vld [vmem:[%s224 + $0xc0] sm:$0xf]
                %243 = vst [vmem:[%s225 + $0x60] sm:$0xf] %v242
                %v244 = vld [vmem:[%s224 + $0xcc] sm:$0xf]
                %245 = vst [vmem:[%s225 + $0x6c] sm:$0xf] %v244
                %v246 = vld [vmem:[%s224 + $0xd8] sm:$0xf]
                %247 = vst [vmem:[%s225 + $0x78] sm:$0xf] %v246
                %v248 = vld [vmem:[%s224 + $0xe4] sm:$0xf]
                %249 = vst [vmem:[%s225 + $0x84] sm:$0xf] %v248
                %v250 = vld [vmem:[%s224 + $0xf0] sm:$0xf]
                %251 = vst [vmem:[%s225 + $0x90] sm:$0xf] %v250
                %v252 = vld [vmem:[%s224 + $0xfc] sm:$0xf]
                %253 = vst [vmem:[%s225 + $0x9c] sm:$0xf] %v252
                %v254 = vld [vmem:[%s224 + $0x108] sm:$0xf]
                %255 = vst [vmem:[%s225 + $0xa8] sm:$0xf] %v254
                %v256 = vld [vmem:[%s224 + $0x114] sm:$0xf]
                %257 = vst [vmem:[%s225 + $0xb4] sm:$0xf] %v256
                %v258 = vld [vmem:[%s224 + $0x180] sm:$0xf]
                %259 = vst [vmem:[%s225 + $0xc0] sm:$0xf] %v258
                %v260 = vld [vmem:[%s224 + $0x18c] sm:$0xf]
                %261 = vst [vmem:[%s225 + $0xcc] sm:$0xf] %v260
                %v262 = vld [vmem:[%s224 + $0x198] sm:$0xf]
                %263 = vst [vmem:[%s225 + $0xd8] sm:$0xf] %v262
                %v264 = vld [vmem:[%s224 + $0x1a4] sm:$0xf]
                %265 = vst [vmem:[%s225 + $0xe4] sm:$0xf] %v264
                %v266 = vld [vmem:[%s224 + $0x1b0] sm:$0xf]
                %267 = vst [vmem:[%s225 + $0xf0] sm:$0xf] %v266
                %v268 = vld [vmem:[%s224 + $0x1bc] sm:$0xf]
                %269 = vst [vmem:[%s225 + $0xfc] sm:$0xf] %v268
                %v270 = vld [vmem:[%s224 + $0x1c8] sm:$0xf]
                %271 = vst [vmem:[%s225 + $0x108] sm:$0xf] %v270
                %v272 = vld [vmem:[%s224 + $0x1d4] sm:$0xf]
                %273 = vst [vmem:[%s225 + $0x114] sm:$0xf] %v272
                %v274 = vld [vmem:[%s224 + $0x240] sm:$0xf]
                %275 = vst [vmem:[%s225 + $0x120] sm:$0xf] %v274
                %v276 = vld [vmem:[%s224 + $0x24c] sm:$0xf]
                %277 = vst [vmem:[%s225 + $0x12c] sm:$0xf] %v276
                %v278 = vld [vmem:[%s224 + $0x258] sm:$0xf]
                %279 = vst [vmem:[%s225 + $0x138] sm:$0xf] %v278
                %v280 = vld [vmem:[%s224 + $0x264] sm:$0xf]
                %281 = vst [vmem:[%s225 + $0x144] sm:$0xf] %v280
                %v282 = vld [vmem:[%s224 + $0x270] sm:$0xf]
                %283 = vst [vmem:[%s225 + $0x150] sm:$0xf] %v282
                %v284 = vld [vmem:[%s224 + $0x27c] sm:$0xf]
                %285 = vst [vmem:[%s225 + $0x15c] sm:$0xf] %v284
                %v286 = vld [vmem:[%s224 + $0x288] sm:$0xf]
                %287 = vst [vmem:[%s225 + $0x168] sm:$0xf] %v286
                %v288 = vld [vmem:[%s224 + $0x294] sm:$0xf]
                %289 = vst [vmem:[%s225 + $0x174] sm:$0xf] %v288
              $region48: #{simple_cnn_forward.4} parent=35 // loop_footer
                %s223 = sadd.s32 1, %s219
              $region49: #{simple_cnn_forward.4} parent=35 // loop_footer_branch
                %218 = sbr.rel target = $region45
              $region50: #{simple_cnn_forward.4} parent=35 // loop_exit
                _
            $region36: #{simple_cnn_forward.4} parent=31 // pred_fallthru
              _
          $region32: #{simple_cnn_forward.4} parent=27 // pred_fallthru
            _
          %290 = vnop
        $region28: #{simple_cnn_forward.4} parent=23 // pred_fallthru
          _
      $region24: #{simple_cnn_forward.4} parent=5 // pred_fallthru
        _
      %p291 = scmp.le.s32.totalorder 1, %s9
      %p292 = scmp.lt.s32.totalorder %s9, 3
      %p293 = pnand %p291, %p292
      %p294 = pneg %p293
      // Predicated region
      $region51: #{simple_cnn_forward.4} parent=5 // pred_check
        _
      $region52: #{simple_cnn_forward.4} parent=5 // pred_check_branch
        %296 = sbr.rel (%p293) target = $region54
      $region53: #{simple_cnn_forward.4} parent=5 // pred_region
        %s297 = ssub.s32 %s9, 1
        %s298 = sand.u32 %s22, 1
        %s299 = sand.u32 %s22, 1
        %s300 = smul.addr %s299, 384
        %s301 = scalar_lea.vmem [#allocation2], %s300
        // Predicated region
        $region55: #{simple_cnn_forward.4} parent=53 // pred_check
          %p302 = pneg %p35
        $region56: #{simple_cnn_forward.4} parent=53 // pred_check_branch
          %304 = sbr.rel (%p302) target = $region58
        $region57: #{simple_cnn_forward.4} parent=53 // pred_region
          _
        $region58: #{simple_cnn_forward.4} parent=53 // pred_fallthru
          _
        %s305 = sand.u32 %s22, 1
        %s306 = sand.u32 %s22, 1
        %s307 = smul.addr %s306, 384
        %s308 = scalar_lea.vmem [#allocation2], %s307
        %p309 = pneg %p35
        %p310 = pneg %p32
        %p311 = pneg %p56
        %p312 = pneg %p53
        %p313 = pneg %p77
        %p314 = pneg %p74
        %p315 = pneg %p103
        %p316 = pneg %p100
        %s317 = smul.u32 8, %s14
        %p318 = scmp.lt.s32.totalorder %s317, 15
        %s319 = scalar_select %p318, %s317, 15
        %s320 = smul.addr %s319, 4
        %s321 = scalar_lea.vmem %s3, %s320
        %s322 = smul.u32 8, %s14
        %s323 = smul.u32 8, %s14
        %p324 = scmp.lt.s32.totalorder %s323, 15
        %s325 = scalar_select %p324, %s323, 15
        %s326 = smul.addr %s325, 4
        %s327 = scalar_lea.vmem %s3, %s326
        %s328 = smul.u32 8, %s14
        %v330 = vld [vmem:[%s301] sm:$0xff]
        %v331 = vld [vmem:[%s301 + $0x8] sm:$0xf]
        %v332 = vld [vmem:[%s301 + $0xc] sm:$0xff]
        %v333 = vld [vmem:[%s301 + $0x14] sm:$0xf]
        %v334 = vld [vmem:[%s301 + $0x18] sm:$0xff]
        %v335 = vld [vmem:[%s301 + $0x20] sm:$0xf]
        %v336 = vld [vmem:[%s301 + $0x24] sm:$0xff]
        %v337 = vld [vmem:[%s301 + $0x2c] sm:$0xf]
        %v338 = vld [vmem:[%s301 + $0x30] sm:$0xff]
        %v339 = vld [vmem:[%s301 + $0x38] sm:$0xf]
        %v340 = vld [vmem:[%s301 + $0x3c] sm:$0xff]
        %v341 = vld [vmem:[%s301 + $0x44] sm:$0xf]
        %v342 = vld [vmem:[%s301 + $0x48] sm:$0xff]
        %v343 = vld [vmem:[%s301 + $0x50] sm:$0xf]
        %v344 = vld [vmem:[%s301 + $0x54] sm:$0xff]
        %v345 = vld [vmem:[%s301 + $0x5c] sm:$0xf]
        %v346 = vld [vmem:[%s301 + $0x60] sm:$0xff]
        %v347 = vld [vmem:[%s301 + $0x68] sm:$0xf]
        %v348 = vld [vmem:[%s301 + $0x6c] sm:$0xff]
        %v349 = vld [vmem:[%s301 + $0x74] sm:$0xf]
        %v350 = vld [vmem:[%s301 + $0x78] sm:$0xff]
        %v351 = vld [vmem:[%s301 + $0x80] sm:$0xf]
        %v352 = vld [vmem:[%s301 + $0x84] sm:$0xff]
        %v353 = vld [vmem:[%s301 + $0x8c] sm:$0xf]
        %v354 = vld [vmem:[%s301 + $0x90] sm:$0xff]
        %v355 = vld [vmem:[%s301 + $0x98] sm:$0xf]
        %v356 = vld [vmem:[%s301 + $0x9c] sm:$0xff]
        %v357 = vld [vmem:[%s301 + $0xa4] sm:$0xf]
        %v358 = vld [vmem:[%s301 + $0xa8] sm:$0xff]
        %v359 = vld [vmem:[%s301 + $0xb0] sm:$0xf]
        %v360 = vld [vmem:[%s301 + $0xb4] sm:$0xff]
        %v361 = vld [vmem:[%s301 + $0xbc] sm:$0xf]
        %v362 = vld [vmem:[%s301 + $0xc0] sm:$0xff]
        %v363 = vld [vmem:[%s301 + $0xc8] sm:$0xf]
        %v364 = vld [vmem:[%s301 + $0xcc] sm:$0xff]
        %v365 = vld [vmem:[%s301 + $0xd4] sm:$0xf]
        %v366 = vld [vmem:[%s301 + $0xd8] sm:$0xff]
        %v367 = vld [vmem:[%s301 + $0xe0] sm:$0xf]
        %v368 = vld [vmem:[%s301 + $0xe4] sm:$0xff]
        %v369 = vld [vmem:[%s301 + $0xec] sm:$0xf]
        %v370 = vld [vmem:[%s301 + $0xf0] sm:$0xff]
        %v371 = vld [vmem:[%s301 + $0xf8] sm:$0xf]
        %v372 = vld [vmem:[%s301 + $0xfc] sm:$0xff]
        %v373 = vld [vmem:[%s301 + $0x104] sm:$0xf]
        %v374 = vld [vmem:[%s301 + $0x108] sm:$0xff]
        %v375 = vld [vmem:[%s301 + $0x110] sm:$0xf]
        %v376 = vld [vmem:[%s301 + $0x114] sm:$0xff]
        %v377 = vld [vmem:[%s301 + $0x11c] sm:$0xf]
        %v378 = vld [vmem:[%s301 + $0x120] sm:$0xff]
        %v379 = vld [vmem:[%s301 + $0x128] sm:$0xf]
        %v380 = vld [vmem:[%s301 + $0x12c] sm:$0xff]
        %v381 = vld [vmem:[%s301 + $0x134] sm:$0xf]
        %v382 = vld [vmem:[%s301 + $0x138] sm:$0xff]
        %v383 = vld [vmem:[%s301 + $0x140] sm:$0xf]
        %v384 = vld [vmem:[%s301 + $0x144] sm:$0xff]
        %v385 = vld [vmem:[%s301 + $0x14c] sm:$0xf]
        %v386 = vld [vmem:[%s301 + $0x150] sm:$0xff]
        %v387 = vld [vmem:[%s301 + $0x158] sm:$0xf]
        %v388 = vld [vmem:[%s301 + $0x15c] sm:$0xff]
        %v389 = vld [vmem:[%s301 + $0x164] sm:$0xf]
        %v390 = vld [vmem:[%s301 + $0x168] sm:$0xff]
        %v391 = vld [vmem:[%s301 + $0x170] sm:$0xf]
        %v392 = vld [vmem:[%s301 + $0x174] sm:$0xff]
        %v393 = vld [vmem:[%s301 + $0x17c] sm:$0xf]
        %v394 = vld [vmem:[%s1] sm:$0xf]
        %v395 = vld [vmem:[%s1 + $0x4] sm:$0xf]
        %v396 = vld [vmem:[%s1 + $0x8] sm:$0xf]
        %v397 = vld [vmem:[%s1 + $0xc] sm:$0xf]
        %v398 = vld [vmem:[%s1 + $0x10] sm:$0xf]
        %v399 = vld [vmem:[%s1 + $0x14] sm:$0xf]
        %v400 = vld [vmem:[%s1 + $0x18] sm:$0xf]
        %v401 = vld [vmem:[%s1 + $0x1c] sm:$0xf]
        %v402 = vld [vmem:[%s1 + $0x20] sm:$0xf]
        %v403 = vld [vmem:[%s1 + $0x24] sm:$0xf]
        %v404 = vld [vmem:[%s1 + $0x28] sm:$0xf]
        %v405 = vld [vmem:[%s1 + $0x2c] sm:$0xf]
        %v406 = vld [vmem:[%s1 + $0x30] sm:$0xf]
        %v407 = vld [vmem:[%s1 + $0x34] sm:$0xf]
        %v408 = vld [vmem:[%s1 + $0x38] sm:$0xf]
        %v409 = vld [vmem:[%s1 + $0x3c] sm:$0xf]
        %v410 = vld [vmem:[%s1 + $0x40] sm:$0xf]
        %v411 = vld [vmem:[%s1 + $0x44] sm:$0xf]
        %v412 = vld [vmem:[%s1 + $0x48] sm:$0xf]
        %v413 = vld [vmem:[%s1 + $0x4c] sm:$0xf]
        %v414 = vld [vmem:[%s1 + $0x50] sm:$0xf]
        %v415 = vld [vmem:[%s1 + $0x54] sm:$0xf]
        %v416 = vld [vmem:[%s1 + $0x58] sm:$0xf]
        %v417 = vld [vmem:[%s1 + $0x5c] sm:$0xf]
        %v418 = vld [vmem:[%s1 + $0x60] sm:$0xf]
        %v419 = vld [vmem:[%s1 + $0x64] sm:$0xf]
        %v420 = vld [vmem:[%s1 + $0x68] sm:$0xf]
        %v421 = vld [vmem:[%s1 + $0x6c] sm:$0xf]
        %v422 = vld [vmem:[%s1 + $0x70] sm:$0xf]
        %v423 = vld [vmem:[%s1 + $0x74] sm:$0xf]
        %v424 = vld [vmem:[%s1 + $0x78] sm:$0xf]
        %v425 = vld [vmem:[%s1 + $0x7c] sm:$0xf]
        %v426 = vld [vmem:[%s1 + $0x80] sm:$0xf]
        %v427 = vld [vmem:[%s1 + $0x84] sm:$0xf]
        %v428 = vld [vmem:[%s1 + $0x88] sm:$0xf]
        %v429 = vld [vmem:[%s1 + $0x8c] sm:$0xf]
        %v494 = vunpack.c.l.b16 %v330
        %v495 = vunpack.c.h.b16 %v330
        %v496 = vunpack.c.l.b16 %v331
        %v497 = vunpack.c.l.b16 %v332
        %v498 = vunpack.c.h.b16 %v332
        %v499 = vunpack.c.l.b16 %v333
        %v500 = vunpack.c.l.b16 %v334
        %v501 = vunpack.c.h.b16 %v334
        %v502 = vunpack.c.l.b16 %v335
        %v503 = vunpack.c.l.b16 %v336
        %v504 = vunpack.c.h.b16 %v336
        %v505 = vunpack.c.l.b16 %v337
        %v506 = vunpack.c.l.b16 %v338
        %v507 = vunpack.c.h.b16 %v338
        %v508 = vunpack.c.l.b16 %v339
        %v509 = vunpack.c.l.b16 %v340
        %v510 = vunpack.c.h.b16 %v340
        %v511 = vunpack.c.l.b16 %v341
        %v512 = vunpack.c.l.b16 %v342
        %v513 = vunpack.c.h.b16 %v342
        %v514 = vunpack.c.l.b16 %v343
        %v515 = vunpack.c.l.b16 %v344
        %v516 = vunpack.c.h.b16 %v344
        %v517 = vunpack.c.l.b16 %v345
        %v518 = vunpack.c.l.b16 %v346
        %v519 = vunpack.c.h.b16 %v346
        %v520 = vunpack.c.l.b16 %v347
        %v521 = vunpack.c.l.b16 %v348
        %v522 = vunpack.c.h.b16 %v348
        %v523 = vunpack.c.l.b16 %v349
        %v524 = vunpack.c.l.b16 %v350
        %v525 = vunpack.c.h.b16 %v350
        %v526 = vunpack.c.l.b16 %v351
        %v527 = vunpack.c.l.b16 %v352
        %v528 = vunpack.c.h.b16 %v352
        %v529 = vunpack.c.l.b16 %v353
        %v530 = vunpack.c.l.b16 %v354
        %v531 = vunpack.c.h.b16 %v354
        %v532 = vunpack.c.l.b16 %v355
        %v533 = vunpack.c.l.b16 %v356
        %v534 = vunpack.c.h.b16 %v356
        %v535 = vunpack.c.l.b16 %v357
        %v536 = vunpack.c.l.b16 %v358
        %v537 = vunpack.c.h.b16 %v358
        %v538 = vunpack.c.l.b16 %v359
        %v539 = vunpack.c.l.b16 %v360
        %v540 = vunpack.c.h.b16 %v360
        %v541 = vunpack.c.l.b16 %v361
        %v542 = vunpack.c.l.b16 %v362
        %v543 = vunpack.c.h.b16 %v362
        %v544 = vunpack.c.l.b16 %v363
        %v545 = vunpack.c.l.b16 %v364
        %v546 = vunpack.c.h.b16 %v364
        %v547 = vunpack.c.l.b16 %v365
        %v548 = vunpack.c.l.b16 %v366
        %v549 = vunpack.c.h.b16 %v366
        %v550 = vunpack.c.l.b16 %v367
        %v551 = vunpack.c.l.b16 %v368
        %v552 = vunpack.c.h.b16 %v368
        %v553 = vunpack.c.l.b16 %v369
        %v554 = vunpack.c.l.b16 %v370
        %v555 = vunpack.c.h.b16 %v370
        %v556 = vunpack.c.l.b16 %v371
        %v557 = vunpack.c.l.b16 %v372
        %v558 = vunpack.c.h.b16 %v372
        %v559 = vunpack.c.l.b16 %v373
        %v560 = vunpack.c.l.b16 %v374
        %v561 = vunpack.c.h.b16 %v374
        %v562 = vunpack.c.l.b16 %v375
        %v563 = vunpack.c.l.b16 %v376
        %v564 = vunpack.c.h.b16 %v376
        %v565 = vunpack.c.l.b16 %v377
        %v566 = vunpack.c.l.b16 %v378
        %v567 = vunpack.c.h.b16 %v378
        %v568 = vunpack.c.l.b16 %v379
        %v569 = vunpack.c.l.b16 %v380
        %v570 = vunpack.c.h.b16 %v380
        %v571 = vunpack.c.l.b16 %v381
        %v572 = vunpack.c.l.b16 %v382
        %v573 = vunpack.c.h.b16 %v382
        %v574 = vunpack.c.l.b16 %v383
        %v575 = vunpack.c.l.b16 %v384
        %v576 = vunpack.c.h.b16 %v384
        %v577 = vunpack.c.l.b16 %v385
        %v578 = vunpack.c.l.b16 %v386
        %v579 = vunpack.c.h.b16 %v386
        %v580 = vunpack.c.l.b16 %v387
        %v581 = vunpack.c.l.b16 %v388
        %v582 = vunpack.c.h.b16 %v388
        %v583 = vunpack.c.l.b16 %v389
        %v584 = vunpack.c.l.b16 %v390
        %v585 = vunpack.c.h.b16 %v390
        %v586 = vunpack.c.l.b16 %v391
        %v587 = vunpack.c.l.b16 %v392
        %v588 = vunpack.c.h.b16 %v392
        %v589 = vunpack.c.l.b16 %v393
        %v590 = vpack.c.b16 %v497, %v494
        %v591 = vpack.c.b16 %v498, %v495
        %v592 = vpack.c.b16 %v499, %v496
        %v593 = vpack.c.b16 %v503, %v500
        %v594 = vpack.c.b16 %v504, %v501
        %v595 = vpack.c.b16 %v505, %v502
        %v596 = vpack.c.b16 %v509, %v506
        %v597 = vpack.c.b16 %v510, %v507
        %v598 = vpack.c.b16 %v511, %v508
        %v599 = vpack.c.b16 %v515, %v512
        %v600 = vpack.c.b16 %v516, %v513
        %v601 = vpack.c.b16 %v517, %v514
        %v602 = vpack.c.b16 %v521, %v518
        %v603 = vpack.c.b16 %v522, %v519
        %v604 = vpack.c.b16 %v523, %v520
        %v605 = vpack.c.b16 %v527, %v524
        %v606 = vpack.c.b16 %v528, %v525
        %v607 = vpack.c.b16 %v529, %v526
        %v608 = vpack.c.b16 %v533, %v530
        %v609 = vpack.c.b16 %v534, %v531
        %v610 = vpack.c.b16 %v535, %v532
        %v611 = vpack.c.b16 %v539, %v536
        %v612 = vpack.c.b16 %v540, %v537
        %v613 = vpack.c.b16 %v541, %v538
        %v614 = vpack.c.b16 %v545, %v542
        %v615 = vpack.c.b16 %v546, %v543
        %v616 = vpack.c.b16 %v547, %v544
        %v617 = vpack.c.b16 %v551, %v548
        %v618 = vpack.c.b16 %v552, %v549
        %v619 = vpack.c.b16 %v553, %v550
        %v620 = vpack.c.b16 %v557, %v554
        %v621 = vpack.c.b16 %v558, %v555
        %v622 = vpack.c.b16 %v559, %v556
        %v623 = vpack.c.b16 %v563, %v560
        %v624 = vpack.c.b16 %v564, %v561
        %v625 = vpack.c.b16 %v565, %v562
        %v626 = vpack.c.b16 %v569, %v566
        %v627 = vpack.c.b16 %v570, %v567
        %v628 = vpack.c.b16 %v571, %v568
        %v629 = vpack.c.b16 %v575, %v572
        %v630 = vpack.c.b16 %v576, %v573
        %v631 = vpack.c.b16 %v577, %v574
        %v632 = vpack.c.b16 %v581, %v578
        %v633 = vpack.c.b16 %v582, %v579
        %v634 = vpack.c.b16 %v583, %v580
        %v635 = vpack.c.b16 %v587, %v584
        %v636 = vpack.c.b16 %v588, %v585
        %v637 = vpack.c.b16 %v589, %v586
        %v706 = vunpack.c.l.b16 %v394
        %v707 = vunpack.c.l.b16 %v395
        %v708 = vunpack.c.l.b16 %v396
        %v709 = vunpack.c.l.b16 %v397
        %v710 = vunpack.c.l.b16 %v398
        %v711 = vunpack.c.l.b16 %v399
        %v712 = vunpack.c.l.b16 %v400
        %v713 = vunpack.c.l.b16 %v401
        %v714 = vunpack.c.l.b16 %v402
        %v715 = vunpack.c.l.b16 %v403
        %v716 = vunpack.c.l.b16 %v404
        %v717 = vunpack.c.l.b16 %v405
        %v718 = vunpack.c.l.b16 %v406
        %v719 = vunpack.c.l.b16 %v407
        %v720 = vunpack.c.l.b16 %v408
        %v721 = vunpack.c.l.b16 %v409
        %v722 = vunpack.c.l.b16 %v410
        %v723 = vunpack.c.l.b16 %v411
        %v724 = vunpack.c.l.b16 %v412
        %v725 = vunpack.c.l.b16 %v413
        %v726 = vunpack.c.l.b16 %v414
        %v727 = vunpack.c.l.b16 %v415
        %v728 = vunpack.c.l.b16 %v416
        %v729 = vunpack.c.l.b16 %v417
        %v730 = vunpack.c.l.b16 %v418
        %v731 = vunpack.c.l.b16 %v419
        %v732 = vunpack.c.l.b16 %v420
        %v733 = vunpack.c.l.b16 %v421
        %v734 = vunpack.c.l.b16 %v422
        %v735 = vunpack.c.l.b16 %v423
        %v736 = vunpack.c.l.b16 %v424
        %v737 = vunpack.c.l.b16 %v425
        %v738 = vunpack.c.l.b16 %v426
        %v739 = vunpack.c.l.b16 %v427
        %v740 = vunpack.c.l.b16 %v428
        %v741 = vunpack.c.l.b16 %v429
        %v742 = vpack.c.b16 %v707, %v706
        %v743 = vpack.c.b16 %v709, %v708
        %v744 = vpack.c.b16 %v711, %v710
        %v745 = vpack.c.b16 %v713, %v712
        %v746 = vpack.c.b16 %v715, %v714
        %v747 = vpack.c.b16 %v717, %v716
        %v748 = vpack.c.b16 %v719, %v718
        %v749 = vpack.c.b16 %v721, %v720
        %v750 = vpack.c.b16 %v723, %v722
        %v751 = vpack.c.b16 %v725, %v724
        %v752 = vpack.c.b16 %v727, %v726
        %v753 = vpack.c.b16 %v729, %v728
        %v754 = vpack.c.b16 %v731, %v730
        %v755 = vpack.c.b16 %v733, %v732
        %v756 = vpack.c.b16 %v735, %v734
        %v757 = vpack.c.b16 %v737, %v736
        %v758 = vpack.c.b16 %v739, %v738
        %v759 = vpack.c.b16 %v741, %v740
        %vm778 = vcmask 261120
        %v780 = vsel %vm778, %v592, 0
        %v783 = vsel %vm778, %v595, 0
        %v786 = vsel %vm778, %v598, 0
        %v789 = vsel %vm778, %v601, 0
        %v792 = vsel %vm778, %v604, 0
        %v795 = vsel %vm778, %v607, 0
        %v798 = vsel %vm778, %v610, 0
        %v801 = vsel %vm778, %v613, 0
        %v804 = vsel %vm778, %v616, 0
        %v807 = vsel %vm778, %v619, 0
        %v810 = vsel %vm778, %v622, 0
        %v813 = vsel %vm778, %v625, 0
        %v816 = vsel %vm778, %v628, 0
        %v819 = vsel %vm778, %v631, 0
        %v822 = vsel %vm778, %v634, 0
        %v825 = vsel %vm778, %v637, 0
        %827 = vmatprep.subr.bf16.mxu0 0
        %828 = vmatpush1.bf16.msra.mxu0 %v742
        %829 = vmatprep.subr.bf16.mxu0 0
        %830 = vmatpush1.bf16.msra.mxu0 %v743
        %831 = vmatprep.subr.bf16.mxu0 0
        %832 = vmatpush1.bf16.msra.mxu0 %v744
        %833 = vmatprep.subr.bf16.mxu0 0
        %834 = vmatpush1.bf16.msra.mxu0 %v745
        %835 = vmatprep.subr.bf16.mxu0 0
        %836 = vmatpush1.bf16.msra.mxu0 %v746
        %837 = vmatprep.subr.bf16.mxu0 0
        %838 = vmatpush1.bf16.msra.mxu0 %v747
        %839 = vmatprep.subr.bf16.mxu0 0
        %840 = vmatpush1.bf16.msra.mxu0 %v748
        %841 = vmatprep.subr.bf16.mxu0 0
        %842 = vmatpush1.bf16.msra.mxu0 %v749
        %843 = vmatprep.subr.bf16.mxu0 0
        %844 = vmatpush1.bf16.msra.mxu0 %v750
        %845 = vmatprep.subr.bf16.mxu0 0
        %846 = vmatpush1.bf16.msra.mxu0 %v751
        %847 = vmatprep.subr.bf16.mxu0 0
        %848 = vmatpush1.bf16.msra.mxu0 %v752
        %849 = vmatprep.subr.bf16.mxu0 0
        %850 = vmatpush1.bf16.msra.mxu0 %v753
        %851 = vmatprep.subr.bf16.mxu0 0
        %852 = vmatpush1.bf16.msra.mxu0 %v754
        %853 = vmatprep.subr.bf16.mxu0 0
        %854 = vmatpush1.bf16.msra.mxu0 %v755
        %855 = vmatprep.subr.bf16.mxu0 0
        %856 = vmatpush1.bf16.msra.mxu0 %v756
        %857 = vmatprep.subr.bf16.mxu0 0
        %858 = vmatpush1.bf16.msra.mxu0 %v757
        %859 = vmatprep.mubr.bf16.mxu0 %v591
        %860 = vmatmul.mubr.bf16.gmra.mrb[0].mxu0 %v590
        %v861 = vpop.f32.mrb[0].mxu0
        %v862 = vadd.f32 0.0, %v861
        %v863 = vpop.f32.mrb[0].mxu0
        %v864 = vpop.f32.mrb[0].mxu0
        %v865 = vadd.f32 0.0, %v864
        %v866 = vpop.f32.mrb[0].mxu0
        %867 = vmatprep.mubr.bf16.mxu0 %v594
        %868 = vmatmul.mubr.bf16.gmra.mrb[0].mxu0 %v593
        %v869 = vpop.f32.mrb[0].mxu0
        %v870 = vadd.f32 0.0, %v869
        %v871 = vpop.f32.mrb[0].mxu0
        %v872 = vpop.f32.mrb[0].mxu0
        %v873 = vadd.f32 0.0, %v872
        %v874 = vpop.f32.mrb[0].mxu0
        %875 = vmatprep.mubr.bf16.mxu0 %v597
        %876 = vmatmul.mubr.bf16.gmra.mrb[0].mxu0 %v596
        %v877 = vpop.f32.mrb[0].mxu0
        %v878 = vadd.f32 0.0, %v877
        %v879 = vpop.f32.mrb[0].mxu0
        %v880 = vpop.f32.mrb[0].mxu0
        %v881 = vadd.f32 0.0, %v880
        %v882 = vpop.f32.mrb[0].mxu0
        %883 = vmatprep.mubr.bf16.mxu0 %v600
        %884 = vmatmul.mubr.bf16.gmra.mrb[0].mxu0 %v599
        %v885 = vpop.f32.mrb[0].mxu0
        %v886 = vadd.f32 0.0, %v885
        %v887 = vpop.f32.mrb[0].mxu0
        %v888 = vpop.f32.mrb[0].mxu0
        %v889 = vadd.f32 0.0, %v888
        %v890 = vpop.f32.mrb[0].mxu0
        %891 = vmatprep.mubr.bf16.mxu0 %v603
        %892 = vmatmul.mubr.bf16.gmra.mrb[0].mxu0 %v602
        %v893 = vpop.f32.mrb[0].mxu0
        %v894 = vadd.f32 0.0, %v893
        %v895 = vpop.f32.mrb[0].mxu0
        %v896 = vpop.f32.mrb[0].mxu0
        %v897 = vadd.f32 0.0, %v896
        %v898 = vpop.f32.mrb[0].mxu0
        %899 = vmatprep.mubr.bf16.mxu0 %v606
        %900 = vmatmul.mubr.bf16.gmra.mrb[0].mxu0 %v605
        %v901 = vpop.f32.mrb[0].mxu0
        %v902 = vadd.f32 0.0, %v901
        %v903 = vpop.f32.mrb[0].mxu0
        %v904 = vpop.f32.mrb[0].mxu0
        %v905 = vadd.f32 0.0, %v904
        %v906 = vpop.f32.mrb[0].mxu0
        %907 = vmatprep.mubr.bf16.mxu0 %v609
        %908 = vmatmul.mubr.bf16.gmra.mrb[0].mxu0 %v608
        %v909 = vpop.f32.mrb[0].mxu0
        %v910 = vadd.f32 0.0, %v909
        %v911 = vpop.f32.mrb[0].mxu0
        %v912 = vpop.f32.mrb[0].mxu0
        %v913 = vadd.f32 0.0, %v912
        %v914 = vpop.f32.mrb[0].mxu0
        %915 = vmatprep.mubr.bf16.mxu0 %v612
        %916 = vmatmul.mubr.bf16.gmra.mrb[0].mxu0 %v611
        %v917 = vpop.f32.mrb[0].mxu0
        %v918 = vadd.f32 0.0, %v917
        %v919 = vpop.f32.mrb[0].mxu0
        %v920 = vpop.f32.mrb[0].mxu0
        %v921 = vadd.f32 0.0, %v920
        %v922 = vpop.f32.mrb[0].mxu0
        %923 = vmatprep.mubr.bf16.mxu0 %v615
        %924 = vmatmul.mubr.bf16.gmra.mrb[0].mxu0 %v614
        %v925 = vpop.f32.mrb[0].mxu0
        %v926 = vadd.f32 0.0, %v925
        %v927 = vpop.f32.mrb[0].mxu0
        %v928 = vpop.f32.mrb[0].mxu0
        %v929 = vadd.f32 0.0, %v928
        %v930 = vpop.f32.mrb[0].mxu0
        %931 = vmatprep.mubr.bf16.mxu0 %v618
        %932 = vmatmul.mubr.bf16.gmra.mrb[0].mxu0 %v617
        %v933 = vpop.f32.mrb[0].mxu0
        %v934 = vadd.f32 0.0, %v933
        %v935 = vpop.f32.mrb[0].mxu0
        %v936 = vpop.f32.mrb[0].mxu0
        %v937 = vadd.f32 0.0, %v936
        %v938 = vpop.f32.mrb[0].mxu0
        %939 = vmatprep.mubr.bf16.mxu0 %v621
        %940 = vmatmul.mubr.bf16.gmra.mrb[0].mxu0 %v620
        %v941 = vpop.f32.mrb[0].mxu0
        %v942 = vadd.f32 0.0, %v941
        %v943 = vpop.f32.mrb[0].mxu0
        %v944 = vpop.f32.mrb[0].mxu0
        %v945 = vadd.f32 0.0, %v944
        %v946 = vpop.f32.mrb[0].mxu0
        %947 = vmatprep.mubr.bf16.mxu0 %v624
        %948 = vmatmul.mubr.bf16.gmra.mrb[0].mxu0 %v623
        %v949 = vpop.f32.mrb[0].mxu0
        %v950 = vadd.f32 0.0, %v949
        %v951 = vpop.f32.mrb[0].mxu0
        %v952 = vpop.f32.mrb[0].mxu0
        %v953 = vadd.f32 0.0, %v952
        %v954 = vpop.f32.mrb[0].mxu0
        %955 = vmatprep.mubr.bf16.mxu0 %v627
        %956 = vmatmul.mubr.bf16.gmra.mrb[0].mxu0 %v626
        %v957 = vpop.f32.mrb[0].mxu0
        %v958 = vadd.f32 0.0, %v957
        %v959 = vpop.f32.mrb[0].mxu0
        %v960 = vpop.f32.mrb[0].mxu0
        %v961 = vadd.f32 0.0, %v960
        %v962 = vpop.f32.mrb[0].mxu0
        %963 = vmatprep.mubr.bf16.mxu0 %v630
        %964 = vmatmul.mubr.bf16.gmra.mrb[0].mxu0 %v629
        %v965 = vpop.f32.mrb[0].mxu0
        %v966 = vadd.f32 0.0, %v965
        %v967 = vpop.f32.mrb[0].mxu0
        %v968 = vpop.f32.mrb[0].mxu0
        %v969 = vadd.f32 0.0, %v968
        %v970 = vpop.f32.mrb[0].mxu0
        %971 = vmatprep.mubr.bf16.mxu0 %v633
        %972 = vmatmul.mubr.bf16.gmra.mrb[0].mxu0 %v632
        %v973 = vpop.f32.mrb[0].mxu0
        %v974 = vadd.f32 0.0, %v973
        %v975 = vpop.f32.mrb[0].mxu0
        %v976 = vpop.f32.mrb[0].mxu0
        %v977 = vadd.f32 0.0, %v976
        %v978 = vpop.f32.mrb[0].mxu0
        %979 = vmatprep.mubr.bf16.mxu0 %v636
        %980 = vmatmul.mubr.bf16.gmra.mrb[0].mxu0 %v635
        %v981 = vpop.f32.mrb[0].mxu0
        %v982 = vadd.f32 0.0, %v981
        %v983 = vpop.f32.mrb[0].mxu0
        %v984 = vpop.f32.mrb[0].mxu0
        %v985 = vadd.f32 0.0, %v984
        %v986 = vpop.f32.mrb[0].mxu0
        %987 = vdwg.mxu0
        %988 = vmatprep.subr.bf16.mxu0 0
        %989 = vmatpush1.bf16.msra.mxu0 %v758
        %990 = vmatprep.subr.bf16.mxu0 0
        %991 = vmatpush1.bf16.msra.mxu0 %v759
        %992 = vmatprep.subr.bf16.mxu0 0
        %993 = vmatpush1.bf16.msra.mxu0 0
        %994 = vmatprep.subr.bf16.mxu0 0
        %995 = vmatpush1.bf16.msra.mxu0 0
        %996 = vmatprep.subr.bf16.mxu0 0
        %997 = vmatpush1.bf16.msra.mxu0 0
        %998 = vmatprep.subr.bf16.mxu0 0
        %999 = vmatpush1.bf16.msra.mxu0 0
        %1000 = vmatprep.subr.bf16.mxu0 0
        %1001 = vmatpush1.bf16.msra.mxu0 0
        %1002 = vmatprep.subr.bf16.mxu0 0
        %1003 = vmatpush1.bf16.msra.mxu0 0
        %1004 = vmatprep.subr.bf16.mxu0 0
        %1005 = vmatpush1.bf16.msra.mxu0 0
        %1006 = vmatprep.subr.bf16.mxu0 0
        %1007 = vmatpush1.bf16.msra.mxu0 0
        %1008 = vmatprep.subr.bf16.mxu0 0
        %1009 = vmatpush1.bf16.msra.mxu0 0
        %1010 = vmatprep.subr.bf16.mxu0 0
        %1011 = vmatpush1.bf16.msra.mxu0 0
        %1012 = vmatprep.subr.bf16.mxu0 0
        %1013 = vmatpush1.bf16.msra.mxu0 0
        %1014 = vmatprep.subr.bf16.mxu0 0
        %1015 = vmatpush1.bf16.msra.mxu0 0
        %1016 = vmatprep.subr.bf16.mxu0 0
        %1017 = vmatpush1.bf16.msra.mxu0 0
        %1018 = vmatprep.subr.bf16.mxu0 0
        %1019 = vmatpush1.bf16.msra.mxu0 0
        %1020 = vmatprep.mubr.bf16.mxu0 0
        %1021 = vmatmul.mubr.bf16.gmra.mrb[0].mxu0 %v780
        %v1022 = vpop.f32.mrb[0].mxu0
        %v1023 = vadd.f32 %v862, %v1022
        %v1024 = vpop.f32.mrb[0].mxu0
        %v1025 = vpop.f32.mrb[0].mxu0
        %v1026 = vadd.f32 %v865, %v1025
        %v1027 = vpop.f32.mrb[0].mxu0
        %1028 = vmatprep.mubr.bf16.mxu0 0
        %1029 = vmatmul.mubr.bf16.gmra.mrb[0].mxu0 %v783
        %v1030 = vpop.f32.mrb[0].mxu0
        %v1031 = vadd.f32 %v870, %v1030
        %v1032 = vpop.f32.mrb[0].mxu0
        %v1033 = vpop.f32.mrb[0].mxu0
        %v1034 = vadd.f32 %v873, %v1033
        %v1035 = vpop.f32.mrb[0].mxu0
        %1036 = vmatprep.mubr.bf16.mxu0 0
        %1037 = vmatmul.mubr.bf16.gmra.mrb[0].mxu0 %v786
        %v1038 = vpop.f32.mrb[0].mxu0
        %v1039 = vadd.f32 %v878, %v1038
        %v1040 = vpop.f32.mrb[0].mxu0
        %v1041 = vpop.f32.mrb[0].mxu0
        %v1042 = vadd.f32 %v881, %v1041
        %v1043 = vpop.f32.mrb[0].mxu0
        %1044 = vmatprep.mubr.bf16.mxu0 0
        %1045 = vmatmul.mubr.bf16.gmra.mrb[0].mxu0 %v789
        %v1046 = vpop.f32.mrb[0].mxu0
        %v1047 = vadd.f32 %v886, %v1046
        %v1048 = vpop.f32.mrb[0].mxu0
        %v1049 = vpop.f32.mrb[0].mxu0
        %v1050 = vadd.f32 %v889, %v1049
        %v1051 = vpop.f32.mrb[0].mxu0
        %1052 = vmatprep.mubr.bf16.mxu0 0
        %1053 = vmatmul.mubr.bf16.gmra.mrb[0].mxu0 %v792
        %v1054 = vpop.f32.mrb[0].mxu0
        %v1055 = vadd.f32 %v894, %v1054
        %v1056 = vpop.f32.mrb[0].mxu0
        %v1057 = vpop.f32.mrb[0].mxu0
        %v1058 = vadd.f32 %v897, %v1057
        %v1059 = vpop.f32.mrb[0].mxu0
        %1060 = vmatprep.mubr.bf16.mxu0 0
        %1061 = vmatmul.mubr.bf16.gmra.mrb[0].mxu0 %v795
        %v1062 = vpop.f32.mrb[0].mxu0
        %v1063 = vadd.f32 %v902, %v1062
        %v1064 = vpop.f32.mrb[0].mxu0
        %v1065 = vpop.f32.mrb[0].mxu0
        %v1066 = vadd.f32 %v905, %v1065
        %v1067 = vpop.f32.mrb[0].mxu0
        %1068 = vmatprep.mubr.bf16.mxu0 0
        %1069 = vmatmul.mubr.bf16.gmra.mrb[0].mxu0 %v798
        %v1070 = vpop.f32.mrb[0].mxu0
        %v1071 = vadd.f32 %v910, %v1070
        %v1072 = vpop.f32.mrb[0].mxu0
        %v1073 = vpop.f32.mrb[0].mxu0
        %v1074 = vadd.f32 %v913, %v1073
        %v1075 = vpop.f32.mrb[0].mxu0
        %1076 = vmatprep.mubr.bf16.mxu0 0
        %1077 = vmatmul.mubr.bf16.gmra.mrb[0].mxu0 %v801
        %v1078 = vpop.f32.mrb[0].mxu0
        %v1079 = vadd.f32 %v918, %v1078
        %v1080 = vpop.f32.mrb[0].mxu0
        %v1081 = vpop.f32.mrb[0].mxu0
        %v1082 = vadd.f32 %v921, %v1081
        %v1083 = vpop.f32.mrb[0].mxu0
        %1084 = vmatprep.mubr.bf16.mxu0 0
        %1085 = vmatmul.mubr.bf16.gmra.mrb[0].mxu0 %v804
        %v1086 = vpop.f32.mrb[0].mxu0
        %v1087 = vadd.f32 %v926, %v1086
        %v1088 = vpop.f32.mrb[0].mxu0
        %v1089 = vpop.f32.mrb[0].mxu0
        %v1090 = vadd.f32 %v929, %v1089
        %v1091 = vpop.f32.mrb[0].mxu0
        %1092 = vmatprep.mubr.bf16.mxu0 0
        %1093 = vmatmul.mubr.bf16.gmra.mrb[0].mxu0 %v807
        %v1094 = vpop.f32.mrb[0].mxu0
        %v1095 = vadd.f32 %v934, %v1094
        %v1096 = vpop.f32.mrb[0].mxu0
        %v1097 = vpop.f32.mrb[0].mxu0
        %v1098 = vadd.f32 %v937, %v1097
        %v1099 = vpop.f32.mrb[0].mxu0
        %1100 = vmatprep.mubr.bf16.mxu0 0
        %1101 = vmatmul.mubr.bf16.gmra.mrb[0].mxu0 %v810
        %v1102 = vpop.f32.mrb[0].mxu0
        %v1103 = vadd.f32 %v942, %v1102
        %v1104 = vpop.f32.mrb[0].mxu0
        %v1105 = vpop.f32.mrb[0].mxu0
        %v1106 = vadd.f32 %v945, %v1105
        %v1107 = vpop.f32.mrb[0].mxu0
        %1108 = vmatprep.mubr.bf16.mxu0 0
        %1109 = vmatmul.mubr.bf16.gmra.mrb[0].mxu0 %v813
        %v1110 = vpop.f32.mrb[0].mxu0
        %v1111 = vadd.f32 %v950, %v1110
        %v1112 = vpop.f32.mrb[0].mxu0
        %v1113 = vpop.f32.mrb[0].mxu0
        %v1114 = vadd.f32 %v953, %v1113
        %v1115 = vpop.f32.mrb[0].mxu0
        %1116 = vmatprep.mubr.bf16.mxu0 0
        %1117 = vmatmul.mubr.bf16.gmra.mrb[0].mxu0 %v816
        %v1118 = vpop.f32.mrb[0].mxu0
        %v1119 = vadd.f32 %v958, %v1118
        %v1120 = vpop.f32.mrb[0].mxu0
        %v1121 = vpop.f32.mrb[0].mxu0
        %v1122 = vadd.f32 %v961, %v1121
        %v1123 = vpop.f32.mrb[0].mxu0
        %1124 = vmatprep.mubr.bf16.mxu0 0
        %1125 = vmatmul.mubr.bf16.gmra.mrb[0].mxu0 %v819
        %v1126 = vpop.f32.mrb[0].mxu0
        %v1127 = vadd.f32 %v966, %v1126
        %v1128 = vpop.f32.mrb[0].mxu0
        %v1129 = vpop.f32.mrb[0].mxu0
        %v1130 = vadd.f32 %v969, %v1129
        %v1131 = vpop.f32.mrb[0].mxu0
        %1132 = vmatprep.mubr.bf16.mxu0 0
        %1133 = vmatmul.mubr.bf16.gmra.mrb[0].mxu0 %v822
        %v1134 = vpop.f32.mrb[0].mxu0
        %v1135 = vadd.f32 %v974, %v1134
        %v1136 = vpop.f32.mrb[0].mxu0
        %v1137 = vpop.f32.mrb[0].mxu0
        %v1138 = vadd.f32 %v977, %v1137
        %v1139 = vpop.f32.mrb[0].mxu0
        %1140 = vmatprep.mubr.bf16.mxu0 0
        %1141 = vmatmul.mubr.bf16.gmra.mrb[0].mxu0 %v825
        %v1142 = vpop.f32.mrb[0].mxu0
        %v1143 = vadd.f32 %v982, %v1142
        %v1144 = vpop.f32.mrb[0].mxu0
        %v1145 = vpop.f32.mrb[0].mxu0
        %v1146 = vadd.f32 %v985, %v1145
        %v1147 = vpop.f32.mrb[0].mxu0
        %1148 = vdwg.mxu0
        %vm1149 = vcmask 523264
        %v1150 = vsel %vm1149, %v1023, -inf
        %v1151 = vsel %vm1149, %v1055, -inf
        %v1152 = vmax.f32 %v1150, %v1151
        %v1153 = vsel %vm1149, %v1087, -inf
        %v1154 = vmax.f32 %v1152, %v1153
        %v1155 = vsel %vm1149, %v1119, -inf
        %v1156 = vmax.f32 %v1154, %v1155
        %v1157 = vsel %vm1149, %v1026, -inf
        %v1158 = vsel %vm1149, %v1058, -inf
        %v1159 = vmax.f32 %v1157, %v1158
        %v1160 = vsel %vm1149, %v1090, -inf
        %v1161 = vmax.f32 %v1159, %v1160
        %v1162 = vsel %vm1149, %v1122, -inf
        %v1163 = vmax.f32 %v1161, %v1162
        %v1164 = vsel %vm1149, %v1031, -inf
        %v1165 = vsel %vm1149, %v1063, -inf
        %v1166 = vmax.f32 %v1164, %v1165
        %v1167 = vsel %vm1149, %v1095, -inf
        %v1168 = vmax.f32 %v1166, %v1167
        %v1169 = vsel %vm1149, %v1127, -inf
        %v1170 = vmax.f32 %v1168, %v1169
        %v1171 = vsel %vm1149, %v1034, -inf
        %v1172 = vsel %vm1149, %v1066, -inf
        %v1173 = vmax.f32 %v1171, %v1172
        %v1174 = vsel %vm1149, %v1098, -inf
        %v1175 = vmax.f32 %v1173, %v1174
        %v1176 = vsel %vm1149, %v1130, -inf
        %v1177 = vmax.f32 %v1175, %v1176
        %v1178 = vsel %vm1149, %v1039, -inf
        %v1179 = vsel %vm1149, %v1071, -inf
        %v1180 = vmax.f32 %v1178, %v1179
        %v1181 = vsel %vm1149, %v1103, -inf
        %v1182 = vmax.f32 %v1180, %v1181
        %v1183 = vsel %vm1149, %v1135, -inf
        %v1184 = vmax.f32 %v1182, %v1183
        %v1185 = vsel %vm1149, %v1042, -inf
        %v1186 = vsel %vm1149, %v1074, -inf
        %v1187 = vmax.f32 %v1185, %v1186
        %v1188 = vsel %vm1149, %v1106, -inf
        %v1189 = vmax.f32 %v1187, %v1188
        %v1190 = vsel %vm1149, %v1138, -inf
        %v1191 = vmax.f32 %v1189, %v1190
        %v1192 = vsel %vm1149, %v1047, -inf
        %v1193 = vsel %vm1149, %v1079, -inf
        %v1194 = vmax.f32 %v1192, %v1193
        %v1195 = vsel %vm1149, %v1111, -inf
        %v1196 = vmax.f32 %v1194, %v1195
        %v1197 = vsel %vm1149, %v1143, -inf
        %v1198 = vmax.f32 %v1196, %v1197
        %v1199 = vsel %vm1149, %v1050, -inf
        %v1200 = vsel %vm1149, %v1082, -inf
        %v1201 = vmax.f32 %v1199, %v1200
        %v1202 = vsel %vm1149, %v1114, -inf
        %v1203 = vmax.f32 %v1201, %v1202
        %v1204 = vsel %vm1149, %v1146, -inf
        %v1205 = vmax.f32 %v1203, %v1204
        %v1206 = vld [vmem:[%s2] sm:$0x1]
        %v1208 = vlaneseq
        %v1209 = vshrl.u32 %v1208, 7
        %v1210 = vsub.s32 0, %v1209
        %v1211 = vrot.slane %v1206, %v1210
        %v1213 = vadd.f32 %v1156, %v1211
        %v1214 = vadd.f32 %v1163, %v1211
        %v1215 = vadd.f32 %v1170, %v1211
        %v1216 = vadd.f32 %v1177, %v1211
        %v1217 = vadd.f32 %v1184, %v1211
        %v1218 = vadd.f32 %v1191, %v1211
        %v1219 = vadd.f32 %v1198, %v1211
        %v1220 = vadd.f32 %v1205, %v1211
        %v1221 = vmax.f32 %v1213, 0.0
        %v1222 = vmax.f32 %v1214, 0.0
        %v1223 = vmax.f32 %v1215, 0.0
        %v1224 = vmax.f32 %v1216, 0.0
        %v1225 = vmax.f32 %v1217, 0.0
        %v1226 = vmax.f32 %v1218, 0.0
        %v1227 = vmax.f32 %v1219, 0.0
        %v1228 = vmax.f32 %v1220, 0.0
        %v1229 = vpack.c.bf16 %v1222, %v1221
        %v1230 = vpack.c.bf16 %v1224, %v1223
        %v1231 = vpack.c.bf16 %v1226, %v1225
        %v1232 = vpack.c.bf16 %v1228, %v1227
        %v1237 = vunpack.c.l.b16 %v1229
        %v1238 = vunpack.c.h.b16 %v1229
        %v1239 = vunpack.c.l.b16 %v1230
        %v1240 = vunpack.c.h.b16 %v1230
        %v1241 = vunpack.c.l.b16 %v1231
        %v1242 = vunpack.c.h.b16 %v1231
        %v1243 = vunpack.c.l.b16 %v1232
        %v1244 = vunpack.c.h.b16 %v1232
        %v1245 = vpack.c.b16 %v1237, %v1237
        %v1246 = vpack.c.b16 %v1238, %v1238
        %v1247 = vpack.c.b16 %v1239, %v1239
        %v1248 = vpack.c.b16 %v1240, %v1240
        %v1249 = vpack.c.b16 %v1241, %v1241
        %v1250 = vpack.c.b16 %v1242, %v1242
        %v1251 = vpack.c.b16 %v1243, %v1243
        %v1252 = vpack.c.b16 %v1244, %v1244
        %vm1261 = vcmask 519168
        %1262 = vst.msk [vmem:[%s327] sm:$0xf] %vm1261, %v1245
        %1263 = vst.msk [vmem:[%s327 + $0x4] sm:$0xf] %vm1261, %v1246
        %1264 = vst.msk [vmem:[%s327 + $0x8] sm:$0xf] %vm1261, %v1247
        %1265 = vst.msk [vmem:[%s327 + $0xc] sm:$0xf] %vm1261, %v1248
        %1266 = vst.msk [vmem:[%s327 + $0x10] sm:$0xf] %vm1261, %v1249
        %1267 = vst.msk [vmem:[%s327 + $0x14] sm:$0xf] %vm1261, %v1250
        %1268 = vst.msk [vmem:[%s327 + $0x18] sm:$0xf] %vm1261, %v1251
        %1269 = vst.msk [vmem:[%s327 + $0x1c] sm:$0xf] %vm1261, %v1252
        %s1270 = smul.u32 8, %s14
        %p1271 = scmp.lt.s32.totalorder %s1270, 15
        %s1272 = scalar_select %p1271, %s1270, 15
        %s1273 = smul.addr %s1272, 4
        %s1274 = scalar_lea.vmem %s3, %s1273
        // Predicated region
        $region59: #{simple_cnn_forward.4} parent=53 // pred_check
          %p1275 = pneg %p100
        $region60: #{simple_cnn_forward.4} parent=53 // pred_check_branch
          %1277 = sbr.rel (%p1275) target = $region62
        $region61: #{simple_cnn_forward.4} parent=53 // pred_region
          %s1278 = smul.u32 8, %s14
        $region62: #{simple_cnn_forward.4} parent=53 // pred_fallthru
          _
      $region54: #{simple_cnn_forward.4} parent=5 // pred_fallthru
        _
      %p1279 = scmp.le.s32.totalorder 2, %s9
      // Predicated region
      $region63: #{simple_cnn_forward.4} parent=5 // pred_check
        %p1280 = pneg %p1279
      $region64: #{simple_cnn_forward.4} parent=5 // pred_check_branch
        %1282 = sbr.rel (%p1280) target = $region66
      $region65: #{simple_cnn_forward.4} parent=5 // pred_region
        %s1283 = ssub.s32 %s9, 2
        // Predicated region
        $region67: #{simple_cnn_forward.4} parent=65 // pred_check
          %p1284 = pneg %p106
        $region68: #{simple_cnn_forward.4} parent=65 // pred_check_branch
          %1286 = sbr.rel (%p1284) target = $region70
        $region69: #{simple_cnn_forward.4} parent=65 // pred_region
          %s1287 = smul.u32 8, %s15
          %p1288 = scmp.lt.s32.totalorder %s1287, 15
          %s1289 = scalar_select %p1288, %s1287, 15
          %s1290 = smul.addr %s1289, 4
          %s1291 = scalar_lea.vmem %s3, %s1290
        $region70: #{simple_cnn_forward.4} parent=65 // pred_fallthru
          _
      $region66: #{simple_cnn_forward.4} parent=5 // pred_fallthru
        _
    $region6: #{simple_cnn_forward.4} parent=1 // loop_footer
      %s13 = sadd.s32 1, %s9
    $region7: #{simple_cnn_forward.4} parent=1 // loop_footer_branch
      %8 = sbr.rel target = $region3
    $region8: #{simple_cnn_forward.4} parent=1 // loop_exit
      _

// kernel: simple_cnn_forward.5
$region0: #{simple_cnn_forward.5}
  #allocation0 [shape = 'u32[]', space=smem, size = 0x4, offset = 0x4, fixed_abs, tag = 'smem constant byte address 0x4 - core index']
  #allocation1 [shape = 'u32[144,128]{1,0:T(1,128)}', space=vmem, size = 0x12000, scoped, tag = 'internal scratch']
  %s0 = inlined_call_operand.vmem [shape: bf16[2,4096], index: 0, kind: input, shape index: {}]
  %s1 = inlined_call_operand.vmem [shape: bf16[4096,256], index: 1, kind: input, shape index: {}]
  %s2 = inlined_call_operand.vmem [shape: f32[1,256], index: 2, kind: input, shape index: {}]
  %s3 = inlined_call_operand.vmem [shape: bf16[256,10], index: 3, kind: input, shape index: {}]
  %s4 = inlined_call_operand.vmem [shape: f32[1,10], index: 4, kind: input, shape index: {}]
  %s5 = inlined_call_operand.hbm [shape: f32[2,10], index: 5, kind: output, shape index: {}]
  %s6 = sld [smem:[#allocation0]]
  $region30: #{simple_cnn_forward.5} parent=0
    _
  %s8 = ssub.s32 1, %s6
  %s9 = scalar_select 0, %s8, %s6
  $region1: #{simple_cnn_forward.5} parent=0
    #allocation2 [shape = 'u8[1024]{0}', space=vmem, size = 0x400, scoped, tag = 'output window, operand 0, single buffered']
    #allocation3 [shape = 's32[1]{0}', space=sflag, size = 0x4, scoped, tag = 'scoped memory for simple_cnn_forward.5']
    %10 = vsyncpa [#allocation3], 0
    // Predicated region
    $region2: #{simple_cnn_forward.5} parent=1 // pred_check
      _
    $region3: #{simple_cnn_forward.5} parent=1 // pred_check_branch
      %12 = sbr.rel (0) target = $region5
    $region4: #{simple_cnn_forward.5} parent=1 // pred_region
      _
    $region5: #{simple_cnn_forward.5} parent=1 // pred_fallthru
      _
    // Predicated region
    $region6: #{simple_cnn_forward.5} parent=1 // pred_check
      _
    $region7: #{simple_cnn_forward.5} parent=1 // pred_check_branch
      %14 = sbr.rel (0) target = $region9
    $region8: #{simple_cnn_forward.5} parent=1 // pred_region
      _
    $region9: #{simple_cnn_forward.5} parent=1 // pred_fallthru
      _
    // Predicated region
    $region10: #{simple_cnn_forward.5} parent=1 // pred_check
      _
    $region11: #{simple_cnn_forward.5} parent=1 // pred_check_branch
      %16 = sbr.rel (0) target = $region13
    $region12: #{simple_cnn_forward.5} parent=1 // pred_region
      _
    $region13: #{simple_cnn_forward.5} parent=1 // pred_fallthru
      _
    // Predicated region
    $region14: #{simple_cnn_forward.5} parent=1 // pred_check
      _
    $region15: #{simple_cnn_forward.5} parent=1 // pred_check_branch
      %18 = sbr.rel (0) target = $region17
    $region16: #{simple_cnn_forward.5} parent=1 // pred_region
      _
    $region17: #{simple_cnn_forward.5} parent=1 // pred_fallthru
      _
    // Predicated region
    $region18: #{simple_cnn_forward.5} parent=1 // pred_check
      _
    $region19: #{simple_cnn_forward.5} parent=1 // pred_check_branch
      %20 = sbr.rel (0) target = $region21
    $region20: #{simple_cnn_forward.5} parent=1 // pred_region
      _
    $region21: #{simple_cnn_forward.5} parent=1 // pred_fallthru
      _
    %v22 = vld [vmem:[%s0] sm:$0xff]
    %v23 = vld [vmem:[%s0 + $0x8] sm:$0xff]
    %v24 = vld [vmem:[%s0 + $0x10] sm:$0xff]
    %v25 = vld [vmem:[%s0 + $0x18] sm:$0xff]
    %v26 = vld [vmem:[%s1] sm:$0xff]
    %v27 = vld [vmem:[%s1 + $0x8] sm:$0xff]
    %v28 = vld [vmem:[%s1 + $0x10] sm:$0xff]
    %v29 = vld [vmem:[%s1 + $0x18] sm:$0xff]
    %v30 = vld [vmem:[%s1 + $0x20] sm:$0xff]
    %v31 = vld [vmem:[%s1 + $0x28] sm:$0xff]
    %v32 = vld [vmem:[%s1 + $0x30] sm:$0xff]
    %v33 = vld [vmem:[%s1 + $0x38] sm:$0xff]
    %v34 = vld [vmem:[%s1 + $0x40] sm:$0xff]
    %v35 = vld [vmem:[%s1 + $0x48] sm:$0xff]
    %v36 = vld [vmem:[%s1 + $0x50] sm:$0xff]
    %v37 = vld [vmem:[%s1 + $0x58] sm:$0xff]
    %v38 = vld [vmem:[%s1 + $0x60] sm:$0xff]
    %v39 = vld [vmem:[%s1 + $0x68] sm:$0xff]
    %v40 = vld [vmem:[%s1 + $0x70] sm:$0xff]
    %v41 = vld [vmem:[%s1 + $0x78] sm:$0xff]
    %v42 = vld [vmem:[%s1 + $0x80] sm:$0xff]
    %v43 = vld [vmem:[%s1 + $0x88] sm:$0xff]
    %v44 = vld [vmem:[%s1 + $0x90] sm:$0xff]
    %v45 = vld [vmem:[%s1 + $0x98] sm:$0xff]
    %v46 = vld [vmem:[%s1 + $0xa0] sm:$0xff]
    %v47 = vld [vmem:[%s1 + $0xa8] sm:$0xff]
    %v48 = vld [vmem:[%s1 + $0xb0] sm:$0xff]
    %v49 = vld [vmem:[%s1 + $0xb8] sm:$0xff]
    %v50 = vld [vmem:[%s1 + $0xc0] sm:$0xff]
    %v51 = vld [vmem:[%s1 + $0xc8] sm:$0xff]
    %v52 = vld [vmem:[%s1 + $0xd0] sm:$0xff]
    %v53 = vld [vmem:[%s1 + $0xd8] sm:$0xff]
    %v54 = vld [vmem:[%s1 + $0xe0] sm:$0xff]
    %v55 = vld [vmem:[%s1 + $0xe8] sm:$0xff]
    %v56 = vld [vmem:[%s1 + $0xf0] sm:$0xff]
    %v57 = vld [vmem:[%s1 + $0xf8] sm:$0xff]
    %v58 = vld [vmem:[%s1 + $0x100] sm:$0xff]
    %v59 = vld [vmem:[%s1 + $0x108] sm:$0xff]
    %v60 = vld [vmem:[%s1 + $0x110] sm:$0xff]
    %v61 = vld [vmem:[%s1 + $0x118] sm:$0xff]
    %v62 = vld [vmem:[%s1 + $0x120] sm:$0xff]
    %v63 = vld [vmem:[%s1 + $0x128] sm:$0xff]
    %v64 = vld [vmem:[%s1 + $0x130] sm:$0xff]
    %v65 = vld [vmem:[%s1 + $0x138] sm:$0xff]
    %v66 = vld [vmem:[%s1 + $0x140] sm:$0xff]
    %v67 = vld [vmem:[%s1 + $0x148] sm:$0xff]
    %v68 = vld [vmem:[%s1 + $0x150] sm:$0xff]
    %v69 = vld [vmem:[%s1 + $0x158] sm:$0xff]
    %v70 = vld [vmem:[%s1 + $0x160] sm:$0xff]
    %v71 = vld [vmem:[%s1 + $0x168] sm:$0xff]
    %v72 = vld [vmem:[%s1 + $0x170] sm:$0xff]
    %v73 = vld [vmem:[%s1 + $0x178] sm:$0xff]
    %v74 = vld [vmem:[%s1 + $0x180] sm:$0xff]
    %v75 = vld [vmem:[%s1 + $0x188] sm:$0xff]
    %v76 = vld [vmem:[%s1 + $0x190] sm:$0xff]
    %v77 = vld [vmem:[%s1 + $0x198] sm:$0xff]
    %v78 = vld [vmem:[%s1 + $0x1a0] sm:$0xff]
    %v79 = vld [vmem:[%s1 + $0x1a8] sm:$0xff]
    %v80 = vld [vmem:[%s1 + $0x1b0] sm:$0xff]
    %v81 = vld [vmem:[%s1 + $0x1b8] sm:$0xff]
    %v82 = vld [vmem:[%s1 + $0x1c0] sm:$0xff]
    %v83 = vld [vmem:[%s1 + $0x1c8] sm:$0xff]
    %v84 = vld [vmem:[%s1 + $0x1d0] sm:$0xff]
    %v85 = vld [vmem:[%s1 + $0x1d8] sm:$0xff]
    %v86 = vld [vmem:[%s1 + $0x1e0] sm:$0xff]
    %v87 = vld [vmem:[%s1 + $0x1e8] sm:$0xff]
    %v88 = vld [vmem:[%s1 + $0x1f0] sm:$0xff]
    %v89 = vld [vmem:[%s1 + $0x1f8] sm:$0xff]
    %v90 = vld [vmem:[%s1 + $0x200] sm:$0xff]
    %v91 = vld [vmem:[%s1 + $0x208] sm:$0xff]
    %v92 = vld [vmem:[%s1 + $0x210] sm:$0xff]
    %v93 = vld [vmem:[%s1 + $0x218] sm:$0xff]
    %v94 = vld [vmem:[%s1 + $0x220] sm:$0xff]
    %v95 = vld [vmem:[%s1 + $0x228] sm:$0xff]
    %v96 = vld [vmem:[%s1 + $0x230] sm:$0xff]
    %v97 = vld [vmem:[%s1 + $0x238] sm:$0xff]
    %v98 = vld [vmem:[%s1 + $0x240] sm:$0xff]
    %v99 = vld [vmem:[%s1 + $0x248] sm:$0xff]
    %v100 = vld [vmem:[%s1 + $0x250] sm:$0xff]
    %v101 = vld [vmem:[%s1 + $0x258] sm:$0xff]
    %v102 = vld [vmem:[%s1 + $0x260] sm:$0xff]
    %v103 = vld [vmem:[%s1 + $0x268] sm:$0xff]
    %v104 = vld [vmem:[%s1 + $0x270] sm:$0xff]
    %v105 = vld [vmem:[%s1 + $0x278] sm:$0xff]
    %v106 = vld [vmem:[%s1 + $0x280] sm:$0xff]
    %v107 = vld [vmem:[%s1 + $0x288] sm:$0xff]
    %v108 = vld [vmem:[%s1 + $0x290] sm:$0xff]
    %v109 = vld [vmem:[%s1 + $0x298] sm:$0xff]
    %v110 = vld [vmem:[%s1 + $0x2a0] sm:$0xff]
    %v111 = vld [vmem:[%s1 + $0x2a8] sm:$0xff]
    %v112 = vld [vmem:[%s1 + $0x2b0] sm:$0xff]
    %v113 = vld [vmem:[%s1 + $0x2b8] sm:$0xff]
    %v114 = vld [vmem:[%s1 + $0x2c0] sm:$0xff]
    %v115 = vld [vmem:[%s1 + $0x2c8] sm:$0xff]
    %v116 = vld [vmem:[%s1 + $0x2d0] sm:$0xff]
    %v117 = vld [vmem:[%s1 + $0x2d8] sm:$0xff]
    %v118 = vld [vmem:[%s1 + $0x2e0] sm:$0xff]
    %v119 = vld [vmem:[%s1 + $0x2e8] sm:$0xff]
    %v120 = vld [vmem:[%s1 + $0x2f0] sm:$0xff]
    %v121 = vld [vmem:[%s1 + $0x2f8] sm:$0xff]
    %v122 = vld [vmem:[%s1 + $0x300] sm:$0xff]
    %v123 = vld [vmem:[%s1 + $0x308] sm:$0xff]
    %v124 = vld [vmem:[%s1 + $0x310] sm:$0xff]
    %v125 = vld [vmem:[%s1 + $0x318] sm:$0xff]
    %v126 = vld [vmem:[%s1 + $0x320] sm:$0xff]
    %v127 = vld [vmem:[%s1 + $0x328] sm:$0xff]
    %v128 = vld [vmem:[%s1 + $0x330] sm:$0xff]
    %v129 = vld [vmem:[%s1 + $0x338] sm:$0xff]
    %v130 = vld [vmem:[%s1 + $0x340] sm:$0xff]
    %v131 = vld [vmem:[%s1 + $0x348] sm:$0xff]
    %v132 = vld [vmem:[%s1 + $0x350] sm:$0xff]
    %v133 = vld [vmem:[%s1 + $0x358] sm:$0xff]
    %v134 = vld [vmem:[%s1 + $0x360] sm:$0xff]
    %v135 = vld [vmem:[%s1 + $0x368] sm:$0xff]
    %v136 = vld [vmem:[%s1 + $0x370] sm:$0xff]
    %v137 = vld [vmem:[%s1 + $0x378] sm:$0xff]
    %v138 = vld [vmem:[%s1 + $0x380] sm:$0xff]
    %v139 = vld [vmem:[%s1 + $0x388] sm:$0xff]
    %v140 = vld [vmem:[%s1 + $0x390] sm:$0xff]
    %v141 = vld [vmem:[%s1 + $0x398] sm:$0xff]
    %v142 = vld [vmem:[%s1 + $0x3a0] sm:$0xff]
    %v143 = vld [vmem:[%s1 + $0x3a8] sm:$0xff]
    %v144 = vld [vmem:[%s1 + $0x3b0] sm:$0xff]
    %v145 = vld [vmem:[%s1 + $0x3b8] sm:$0xff]
    %v146 = vld [vmem:[%s1 + $0x3c0] sm:$0xff]
    %v147 = vld [vmem:[%s1 + $0x3c8] sm:$0xff]
    %v148 = vld [vmem:[%s1 + $0x3d0] sm:$0xff]
    %v149 = vld [vmem:[%s1 + $0x3d8] sm:$0xff]
    %v150 = vld [vmem:[%s1 + $0x3e0] sm:$0xff]
    %v151 = vld [vmem:[%s1 + $0x3e8] sm:$0xff]
    %v152 = vld [vmem:[%s1 + $0x3f0] sm:$0xff]
    %v153 = vld [vmem:[%s1 + $0x3f8] sm:$0xff]
    %v154 = vld [vmem:[%s1 + $0x400] sm:$0xff]
    %v155 = vld [vmem:[%s1 + $0x408] sm:$0xff]
    %v156 = vld [vmem:[%s1 + $0x410] sm:$0xff]
    %v157 = vld [vmem:[%s1 + $0x418] sm:$0xff]
    %v158 = vld [vmem:[%s1 + $0x420] sm:$0xff]
    %v159 = vld [vmem:[%s1 + $0x428] sm:$0xff]
    %v160 = vld [vmem:[%s1 + $0x430] sm:$0xff]
    %v161 = vld [vmem:[%s1 + $0x438] sm:$0xff]
    %v162 = vld [vmem:[%s1 + $0x440] sm:$0xff]
    %v163 = vld [vmem:[%s1 + $0x448] sm:$0xff]
    %v164 = vld [vmem:[%s1 + $0x450] sm:$0xff]
    %v165 = vld [vmem:[%s1 + $0x458] sm:$0xff]
    %v166 = vld [vmem:[%s1 + $0x460] sm:$0xff]
    %v167 = vld [vmem:[%s1 + $0x468] sm:$0xff]
    %v168 = vld [vmem:[%s1 + $0x470] sm:$0xff]
    %v169 = vld [vmem:[%s1 + $0x478] sm:$0xff]
    %v170 = vld [vmem:[%s1 + $0x480] sm:$0xff]
    %v171 = vld [vmem:[%s1 + $0x488] sm:$0xff]
    %v172 = vld [vmem:[%s1 + $0x490] sm:$0xff]
    %v173 = vld [vmem:[%s1 + $0x498] sm:$0xff]
    %v174 = vld [vmem:[%s1 + $0x4a0] sm:$0xff]
    %v175 = vld [vmem:[%s1 + $0x4a8] sm:$0xff]
    %v176 = vld [vmem:[%s1 + $0x4b0] sm:$0xff]
    %v177 = vld [vmem:[%s1 + $0x4b8] sm:$0xff]
    %v178 = vld [vmem:[%s1 + $0x4c0] sm:$0xff]
    %v179 = vld [vmem:[%s1 + $0x4c8] sm:$0xff]
    %v180 = vld [vmem:[%s1 + $0x4d0] sm:$0xff]
    %v181 = vld [vmem:[%s1 + $0x4d8] sm:$0xff]
    %v182 = vld [vmem:[%s1 + $0x4e0] sm:$0xff]
    %v183 = vld [vmem:[%s1 + $0x4e8] sm:$0xff]
    %v184 = vld [vmem:[%s1 + $0x4f0] sm:$0xff]
    %v185 = vld [vmem:[%s1 + $0x4f8] sm:$0xff]
    %v186 = vld [vmem:[%s1 + $0x500] sm:$0xff]
    %v187 = vld [vmem:[%s1 + $0x508] sm:$0xff]
    %v188 = vld [vmem:[%s1 + $0x510] sm:$0xff]
    %v189 = vld [vmem:[%s1 + $0x518] sm:$0xff]
    %v190 = vld [vmem:[%s1 + $0x520] sm:$0xff]
    %v191 = vld [vmem:[%s1 + $0x528] sm:$0xff]
    %v192 = vld [vmem:[%s1 + $0x530] sm:$0xff]
    %v193 = vld [vmem:[%s1 + $0x538] sm:$0xff]
    %v194 = vld [vmem:[%s1 + $0x540] sm:$0xff]
    %v195 = vld [vmem:[%s1 + $0x548] sm:$0xff]
    %v196 = vld [vmem:[%s1 + $0x550] sm:$0xff]
    %v197 = vld [vmem:[%s1 + $0x558] sm:$0xff]
    %v198 = vld [vmem:[%s1 + $0x560] sm:$0xff]
    %v199 = vld [vmem:[%s1 + $0x568] sm:$0xff]
    %v200 = vld [vmem:[%s1 + $0x570] sm:$0xff]
    %v201 = vld [vmem:[%s1 + $0x578] sm:$0xff]
    %v202 = vld [vmem:[%s1 + $0x580] sm:$0xff]
    %v203 = vld [vmem:[%s1 + $0x588] sm:$0xff]
    %v204 = vld [vmem:[%s1 + $0x590] sm:$0xff]
    %v205 = vld [vmem:[%s1 + $0x598] sm:$0xff]
    %v206 = vld [vmem:[%s1 + $0x5a0] sm:$0xff]
    %v207 = vld [vmem:[%s1 + $0x5a8] sm:$0xff]
    %v208 = vld [vmem:[%s1 + $0x5b0] sm:$0xff]
    %v209 = vld [vmem:[%s1 + $0x5b8] sm:$0xff]
    %v210 = vld [vmem:[%s1 + $0x5c0] sm:$0xff]
    %v211 = vld [vmem:[%s1 + $0x5c8] sm:$0xff]
    %v212 = vld [vmem:[%s1 + $0x5d0] sm:$0xff]
    %v213 = vld [vmem:[%s1 + $0x5d8] sm:$0xff]
    %v214 = vld [vmem:[%s1 + $0x5e0] sm:$0xff]
    %v215 = vld [vmem:[%s1 + $0x5e8] sm:$0xff]
    %v216 = vld [vmem:[%s1 + $0x5f0] sm:$0xff]
    %v217 = vld [vmem:[%s1 + $0x5f8] sm:$0xff]
    %v218 = vld [vmem:[%s1 + $0x600] sm:$0xff]
    %v219 = vld [vmem:[%s1 + $0x608] sm:$0xff]
    %v220 = vld [vmem:[%s1 + $0x610] sm:$0xff]
    %v221 = vld [vmem:[%s1 + $0x618] sm:$0xff]
    %v222 = vld [vmem:[%s1 + $0x620] sm:$0xff]
    %v223 = vld [vmem:[%s1 + $0x628] sm:$0xff]
    %v224 = vld [vmem:[%s1 + $0x630] sm:$0xff]
    %v225 = vld [vmem:[%s1 + $0x638] sm:$0xff]
    %v226 = vld [vmem:[%s1 + $0x640] sm:$0xff]
    %v227 = vld [vmem:[%s1 + $0x648] sm:$0xff]
    %v228 = vld [vmem:[%s1 + $0x650] sm:$0xff]
    %v229 = vld [vmem:[%s1 + $0x658] sm:$0xff]
    %v230 = vld [vmem:[%s1 + $0x660] sm:$0xff]
    %v231 = vld [vmem:[%s1 + $0x668] sm:$0xff]
    %v232 = vld [vmem:[%s1 + $0x670] sm:$0xff]
    %v233 = vld [vmem:[%s1 + $0x678] sm:$0xff]
    %v234 = vld [vmem:[%s1 + $0x680] sm:$0xff]
    %v235 = vld [vmem:[%s1 + $0x688] sm:$0xff]
    %v236 = vld [vmem:[%s1 + $0x690] sm:$0xff]
    %v237 = vld [vmem:[%s1 + $0x698] sm:$0xff]
    %v238 = vld [vmem:[%s1 + $0x6a0] sm:$0xff]
    %v239 = vld [vmem:[%s1 + $0x6a8] sm:$0xff]
    %v240 = vld [vmem:[%s1 + $0x6b0] sm:$0xff]
    %v241 = vld [vmem:[%s1 + $0x6b8] sm:$0xff]
    %v242 = vld [vmem:[%s1 + $0x6c0] sm:$0xff]
    %v243 = vld [vmem:[%s1 + $0x6c8] sm:$0xff]
    %v244 = vld [vmem:[%s1 + $0x6d0] sm:$0xff]
    %v245 = vld [vmem:[%s1 + $0x6d8] sm:$0xff]
    %v246 = vld [vmem:[%s1 + $0x6e0] sm:$0xff]
    %v247 = vld [vmem:[%s1 + $0x6e8] sm:$0xff]
    %v248 = vld [vmem:[%s1 + $0x6f0] sm:$0xff]
    %v249 = vld [vmem:[%s1 + $0x6f8] sm:$0xff]
    %v250 = vld [vmem:[%s1 + $0x700] sm:$0xff]
    %v251 = vld [vmem:[%s1 + $0x708] sm:$0xff]
    %v252 = vld [vmem:[%s1 + $0x710] sm:$0xff]
    %v253 = vld [vmem:[%s1 + $0x718] sm:$0xff]
    %v254 = vld [vmem:[%s1 + $0x720] sm:$0xff]
    %v255 = vld [vmem:[%s1 + $0x728] sm:$0xff]
    %v256 = vld [vmem:[%s1 + $0x730] sm:$0xff]
    %v257 = vld [vmem:[%s1 + $0x738] sm:$0xff]
    %v258 = vld [vmem:[%s1 + $0x740] sm:$0xff]
    %v259 = vld [vmem:[%s1 + $0x748] sm:$0xff]
    %v260 = vld [vmem:[%s1 + $0x750] sm:$0xff]
    %v261 = vld [vmem:[%s1 + $0x758] sm:$0xff]
    %v262 = vld [vmem:[%s1 + $0x760] sm:$0xff]
    %v263 = vld [vmem:[%s1 + $0x768] sm:$0xff]
    %v264 = vld [vmem:[%s1 + $0x770] sm:$0xff]
    %v265 = vld [vmem:[%s1 + $0x778] sm:$0xff]
    %v266 = vld [vmem:[%s1 + $0x780] sm:$0xff]
    %v267 = vld [vmem:[%s1 + $0x788] sm:$0xff]
    %v268 = vld [vmem:[%s1 + $0x790] sm:$0xff]
    %v269 = vld [vmem:[%s1 + $0x798] sm:$0xff]
    %v270 = vld [vmem:[%s1 + $0x7a0] sm:$0xff]
    %v271 = vld [vmem:[%s1 + $0x7a8] sm:$0xff]
    %v272 = vld [vmem:[%s1 + $0x7b0] sm:$0xff]
    %v273 = vld [vmem:[%s1 + $0x7b8] sm:$0xff]
    %v274 = vld [vmem:[%s1 + $0x7c0] sm:$0xff]
    %v275 = vld [vmem:[%s1 + $0x7c8] sm:$0xff]
    %v276 = vld [vmem:[%s1 + $0x7d0] sm:$0xff]
    %v277 = vld [vmem:[%s1 + $0x7d8] sm:$0xff]
    %v278 = vld [vmem:[%s1 + $0x7e0] sm:$0xff]
    %v279 = vld [vmem:[%s1 + $0x7e8] sm:$0xff]
    %v280 = vld [vmem:[%s1 + $0x7f0] sm:$0xff]
    %v281 = vld [vmem:[%s1 + $0x7f8] sm:$0xff]
    %v282 = vld [vmem:[%s1 + $0x800] sm:$0xff]
    %v283 = vld [vmem:[%s1 + $0x808] sm:$0xff]
    %v284 = vld [vmem:[%s1 + $0x810] sm:$0xff]
    %v285 = vld [vmem:[%s1 + $0x818] sm:$0xff]
    %v286 = vld [vmem:[%s1 + $0x820] sm:$0xff]
    %v287 = vld [vmem:[%s1 + $0x828] sm:$0xff]
    %v288 = vld [vmem:[%s1 + $0x830] sm:$0xff]
    %v289 = vld [vmem:[%s1 + $0x838] sm:$0xff]
    %v290 = vld [vmem:[%s1 + $0x840] sm:$0xff]
    %v291 = vld [vmem:[%s1 + $0x848] sm:$0xff]
    %v292 = vld [vmem:[%s1 + $0x850] sm:$0xff]
    %v293 = vld [vmem:[%s1 + $0x858] sm:$0xff]
    %v294 = vld [vmem:[%s1 + $0x860] sm:$0xff]
    %v295 = vld [vmem:[%s1 + $0x868] sm:$0xff]
    %v296 = vld [vmem:[%s1 + $0x870] sm:$0xff]
    %v297 = vld [vmem:[%s1 + $0x878] sm:$0xff]
    %v298 = vld [vmem:[%s1 + $0x880] sm:$0xff]
    %v299 = vld [vmem:[%s1 + $0x888] sm:$0xff]
    %v300 = vld [vmem:[%s1 + $0x890] sm:$0xff]
    %v301 = vld [vmem:[%s1 + $0x898] sm:$0xff]
    %v302 = vld [vmem:[%s1 + $0x8a0] sm:$0xff]
    %v303 = vld [vmem:[%s1 + $0x8a8] sm:$0xff]
    %v304 = vld [vmem:[%s1 + $0x8b0] sm:$0xff]
    %v305 = vld [vmem:[%s1 + $0x8b8] sm:$0xff]
    %v306 = vld [vmem:[%s1 + $0x8c0] sm:$0xff]
    %v307 = vld [vmem:[%s1 + $0x8c8] sm:$0xff]
    %v308 = vld [vmem:[%s1 + $0x8d0] sm:$0xff]
    %v309 = vld [vmem:[%s1 + $0x8d8] sm:$0xff]
    %v310 = vld [vmem:[%s1 + $0x8e0] sm:$0xff]
    %v311 = vld [vmem:[%s1 + $0x8e8] sm:$0xff]
    %v312 = vld [vmem:[%s1 + $0x8f0] sm:$0xff]
    %v313 = vld [vmem:[%s1 + $0x8f8] sm:$0xff]
    %v314 = vld [vmem:[%s1 + $0x900] sm:$0xff]
    %v315 = vld [vmem:[%s1 + $0x908] sm:$0xff]
    %v316 = vld [vmem:[%s1 + $0x910] sm:$0xff]
    %v317 = vld [vmem:[%s1 + $0x918] sm:$0xff]
    %v318 = vld [vmem:[%s1 + $0x920] sm:$0xff]
    %v319 = vld [vmem:[%s1 + $0x928] sm:$0xff]
    %v320 = vld [vmem:[%s1 + $0x930] sm:$0xff]
    %v321 = vld [vmem:[%s1 + $0x938] sm:$0xff]
    %v322 = vld [vmem:[%s1 + $0x940] sm:$0xff]
    %v323 = vld [vmem:[%s1 + $0x948] sm:$0xff]
    %v324 = vld [vmem:[%s1 + $0x950] sm:$0xff]
    %v325 = vld [vmem:[%s1 + $0x958] sm:$0xff]
    %v326 = vld [vmem:[%s1 + $0x960] sm:$0xff]
    %v327 = vld [vmem:[%s1 + $0x968] sm:$0xff]
    %v328 = vld [vmem:[%s1 + $0x970] sm:$0xff]
    %v329 = vld [vmem:[%s1 + $0x978] sm:$0xff]
    %v330 = vld [vmem:[%s1 + $0x980] sm:$0xff]
    %v331 = vld [vmem:[%s1 + $0x988] sm:$0xff]
    %v332 = vld [vmem:[%s1 + $0x990] sm:$0xff]
    %v333 = vld [vmem:[%s1 + $0x998] sm:$0xff]
    %v334 = vld [vmem:[%s1 + $0x9a0] sm:$0xff]
    %v335 = vld [vmem:[%s1 + $0x9a8] sm:$0xff]
    %v336 = vld [vmem:[%s1 + $0x9b0] sm:$0xff]
    %v337 = vld [vmem:[%s1 + $0x9b8] sm:$0xff]
    %v338 = vld [vmem:[%s1 + $0x9c0] sm:$0xff]
    %v339 = vld [vmem:[%s1 + $0x9c8] sm:$0xff]
    %v340 = vld [vmem:[%s1 + $0x9d0] sm:$0xff]
    %v341 = vld [vmem:[%s1 + $0x9d8] sm:$0xff]
    %v342 = vld [vmem:[%s1 + $0x9e0] sm:$0xff]
    %v343 = vld [vmem:[%s1 + $0x9e8] sm:$0xff]
    %v344 = vld [vmem:[%s1 + $0x9f0] sm:$0xff]
    %v345 = vld [vmem:[%s1 + $0x9f8] sm:$0xff]
    %v346 = vld [vmem:[%s1 + $0xa00] sm:$0xff]
    %v347 = vld [vmem:[%s1 + $0xa08] sm:$0xff]
    %v348 = vld [vmem:[%s1 + $0xa10] sm:$0xff]
    %v349 = vld [vmem:[%s1 + $0xa18] sm:$0xff]
    %v350 = vld [vmem:[%s1 + $0xa20] sm:$0xff]
    %v351 = vld [vmem:[%s1 + $0xa28] sm:$0xff]
    %v352 = vld [vmem:[%s1 + $0xa30] sm:$0xff]
    %v353 = vld [vmem:[%s1 + $0xa38] sm:$0xff]
    %v354 = vld [vmem:[%s1 + $0xa40] sm:$0xff]
    %v355 = vld [vmem:[%s1 + $0xa48] sm:$0xff]
    %v356 = vld [vmem:[%s1 + $0xa50] sm:$0xff]
    %v357 = vld [vmem:[%s1 + $0xa58] sm:$0xff]
    %v358 = vld [vmem:[%s1 + $0xa60] sm:$0xff]
    %v359 = vld [vmem:[%s1 + $0xa68] sm:$0xff]
    %v360 = vld [vmem:[%s1 + $0xa70] sm:$0xff]
    %v361 = vld [vmem:[%s1 + $0xa78] sm:$0xff]
    %v362 = vld [vmem:[%s1 + $0xa80] sm:$0xff]
    %v363 = vld [vmem:[%s1 + $0xa88] sm:$0xff]
    %v364 = vld [vmem:[%s1 + $0xa90] sm:$0xff]
    %v365 = vld [vmem:[%s1 + $0xa98] sm:$0xff]
    %v366 = vld [vmem:[%s1 + $0xaa0] sm:$0xff]
    %v367 = vld [vmem:[%s1 + $0xaa8] sm:$0xff]
    %v368 = vld [vmem:[%s1 + $0xab0] sm:$0xff]
    %v369 = vld [vmem:[%s1 + $0xab8] sm:$0xff]
    %v370 = vld [vmem:[%s1 + $0xac0] sm:$0xff]
    %v371 = vld [vmem:[%s1 + $0xac8] sm:$0xff]
    %v372 = vld [vmem:[%s1 + $0xad0] sm:$0xff]
    %v373 = vld [vmem:[%s1 + $0xad8] sm:$0xff]
    %v374 = vld [vmem:[%s1 + $0xae0] sm:$0xff]
    %v375 = vld [vmem:[%s1 + $0xae8] sm:$0xff]
    %v376 = vld [vmem:[%s1 + $0xaf0] sm:$0xff]
    %v377 = vld [vmem:[%s1 + $0xaf8] sm:$0xff]
    %v378 = vld [vmem:[%s1 + $0xb00] sm:$0xff]
    %v379 = vld [vmem:[%s1 + $0xb08] sm:$0xff]
    %v380 = vld [vmem:[%s1 + $0xb10] sm:$0xff]
    %v381 = vld [vmem:[%s1 + $0xb18] sm:$0xff]
    %v382 = vld [vmem:[%s1 + $0xb20] sm:$0xff]
    %v383 = vld [vmem:[%s1 + $0xb28] sm:$0xff]
    %v384 = vld [vmem:[%s1 + $0xb30] sm:$0xff]
    %v385 = vld [vmem:[%s1 + $0xb38] sm:$0xff]
    %v386 = vld [vmem:[%s1 + $0xb40] sm:$0xff]
    %v387 = vld [vmem:[%s1 + $0xb48] sm:$0xff]
    %v388 = vld [vmem:[%s1 + $0xb50] sm:$0xff]
    %v389 = vld [vmem:[%s1 + $0xb58] sm:$0xff]
    %v390 = vld [vmem:[%s1 + $0xb60] sm:$0xff]
    %v391 = vld [vmem:[%s1 + $0xb68] sm:$0xff]
    %v392 = vld [vmem:[%s1 + $0xb70] sm:$0xff]
    %v393 = vld [vmem:[%s1 + $0xb78] sm:$0xff]
    %v394 = vld [vmem:[%s1 + $0xb80] sm:$0xff]
    %v395 = vld [vmem:[%s1 + $0xb88] sm:$0xff]
    %v396 = vld [vmem:[%s1 + $0xb90] sm:$0xff]
    %v397 = vld [vmem:[%s1 + $0xb98] sm:$0xff]
    %v398 = vld [vmem:[%s1 + $0xba0] sm:$0xff]
    %v399 = vld [vmem:[%s1 + $0xba8] sm:$0xff]
    %v400 = vld [vmem:[%s1 + $0xbb0] sm:$0xff]
    %v401 = vld [vmem:[%s1 + $0xbb8] sm:$0xff]
    %v402 = vld [vmem:[%s1 + $0xbc0] sm:$0xff]
    %v403 = vld [vmem:[%s1 + $0xbc8] sm:$0xff]
    %v404 = vld [vmem:[%s1 + $0xbd0] sm:$0xff]
    %v405 = vld [vmem:[%s1 + $0xbd8] sm:$0xff]
    %v406 = vld [vmem:[%s1 + $0xbe0] sm:$0xff]
    %v407 = vld [vmem:[%s1 + $0xbe8] sm:$0xff]
    %v408 = vld [vmem:[%s1 + $0xbf0] sm:$0xff]
    %v409 = vld [vmem:[%s1 + $0xbf8] sm:$0xff]
    %v410 = vld [vmem:[%s1 + $0xc00] sm:$0xff]
    %v411 = vld [vmem:[%s1 + $0xc08] sm:$0xff]
    %v412 = vld [vmem:[%s1 + $0xc10] sm:$0xff]
    %v413 = vld [vmem:[%s1 + $0xc18] sm:$0xff]
    %v414 = vld [vmem:[%s1 + $0xc20] sm:$0xff]
    %v415 = vld [vmem:[%s1 + $0xc28] sm:$0xff]
    %v416 = vld [vmem:[%s1 + $0xc30] sm:$0xff]
    %v417 = vld [vmem:[%s1 + $0xc38] sm:$0xff]
    %v418 = vld [vmem:[%s1 + $0xc40] sm:$0xff]
    %v419 = vld [vmem:[%s1 + $0xc48] sm:$0xff]
    %v420 = vld [vmem:[%s1 + $0xc50] sm:$0xff]
    %v421 = vld [vmem:[%s1 + $0xc58] sm:$0xff]
    %v422 = vld [vmem:[%s1 + $0xc60] sm:$0xff]
    %v423 = vld [vmem:[%s1 + $0xc68] sm:$0xff]
    %v424 = vld [vmem:[%s1 + $0xc70] sm:$0xff]
    %v425 = vld [vmem:[%s1 + $0xc78] sm:$0xff]
    %v426 = vld [vmem:[%s1 + $0xc80] sm:$0xff]
    %v427 = vld [vmem:[%s1 + $0xc88] sm:$0xff]
    %v428 = vld [vmem:[%s1 + $0xc90] sm:$0xff]
    %v429 = vld [vmem:[%s1 + $0xc98] sm:$0xff]
    %v430 = vld [vmem:[%s1 + $0xca0] sm:$0xff]
    %v431 = vld [vmem:[%s1 + $0xca8] sm:$0xff]
    %v432 = vld [vmem:[%s1 + $0xcb0] sm:$0xff]
    %v433 = vld [vmem:[%s1 + $0xcb8] sm:$0xff]
    %v434 = vld [vmem:[%s1 + $0xcc0] sm:$0xff]
    %v435 = vld [vmem:[%s1 + $0xcc8] sm:$0xff]
    %v436 = vld [vmem:[%s1 + $0xcd0] sm:$0xff]
    %v437 = vld [vmem:[%s1 + $0xcd8] sm:$0xff]
    %v438 = vld [vmem:[%s1 + $0xce0] sm:$0xff]
    %v439 = vld [vmem:[%s1 + $0xce8] sm:$0xff]
    %v440 = vld [vmem:[%s1 + $0xcf0] sm:$0xff]
    %v441 = vld [vmem:[%s1 + $0xcf8] sm:$0xff]
    %v442 = vld [vmem:[%s1 + $0xd00] sm:$0xff]
    %v443 = vld [vmem:[%s1 + $0xd08] sm:$0xff]
    %v444 = vld [vmem:[%s1 + $0xd10] sm:$0xff]
    %v445 = vld [vmem:[%s1 + $0xd18] sm:$0xff]
    %v446 = vld [vmem:[%s1 + $0xd20] sm:$0xff]
    %v447 = vld [vmem:[%s1 + $0xd28] sm:$0xff]
    %v448 = vld [vmem:[%s1 + $0xd30] sm:$0xff]
    %v449 = vld [vmem:[%s1 + $0xd38] sm:$0xff]
    %v450 = vld [vmem:[%s1 + $0xd40] sm:$0xff]
    %v451 = vld [vmem:[%s1 + $0xd48] sm:$0xff]
    %v452 = vld [vmem:[%s1 + $0xd50] sm:$0xff]
    %v453 = vld [vmem:[%s1 + $0xd58] sm:$0xff]
    %v454 = vld [vmem:[%s1 + $0xd60] sm:$0xff]
    %v455 = vld [vmem:[%s1 + $0xd68] sm:$0xff]
    %v456 = vld [vmem:[%s1 + $0xd70] sm:$0xff]
    %v457 = vld [vmem:[%s1 + $0xd78] sm:$0xff]
    %v458 = vld [vmem:[%s1 + $0xd80] sm:$0xff]
    %v459 = vld [vmem:[%s1 + $0xd88] sm:$0xff]
    %v460 = vld [vmem:[%s1 + $0xd90] sm:$0xff]
    %v461 = vld [vmem:[%s1 + $0xd98] sm:$0xff]
    %v462 = vld [vmem:[%s1 + $0xda0] sm:$0xff]
    %v463 = vld [vmem:[%s1 + $0xda8] sm:$0xff]
    %v464 = vld [vmem:[%s1 + $0xdb0] sm:$0xff]
    %v465 = vld [vmem:[%s1 + $0xdb8] sm:$0xff]
    %v466 = vld [vmem:[%s1 + $0xdc0] sm:$0xff]
    %v467 = vld [vmem:[%s1 + $0xdc8] sm:$0xff]
    %v468 = vld [vmem:[%s1 + $0xdd0] sm:$0xff]
    %v469 = vld [vmem:[%s1 + $0xdd8] sm:$0xff]
    %v470 = vld [vmem:[%s1 + $0xde0] sm:$0xff]
    %v471 = vld [vmem:[%s1 + $0xde8] sm:$0xff]
    %v472 = vld [vmem:[%s1 + $0xdf0] sm:$0xff]
    %v473 = vld [vmem:[%s1 + $0xdf8] sm:$0xff]
    %v474 = vld [vmem:[%s1 + $0xe00] sm:$0xff]
    %v475 = vld [vmem:[%s1 + $0xe08] sm:$0xff]
    %v476 = vld [vmem:[%s1 + $0xe10] sm:$0xff]
    %v477 = vld [vmem:[%s1 + $0xe18] sm:$0xff]
    %v478 = vld [vmem:[%s1 + $0xe20] sm:$0xff]
    %v479 = vld [vmem:[%s1 + $0xe28] sm:$0xff]
    %v480 = vld [vmem:[%s1 + $0xe30] sm:$0xff]
    %v481 = vld [vmem:[%s1 + $0xe38] sm:$0xff]
    %v482 = vld [vmem:[%s1 + $0xe40] sm:$0xff]
    %v483 = vld [vmem:[%s1 + $0xe48] sm:$0xff]
    %v484 = vld [vmem:[%s1 + $0xe50] sm:$0xff]
    %v485 = vld [vmem:[%s1 + $0xe58] sm:$0xff]
    %v486 = vld [vmem:[%s1 + $0xe60] sm:$0xff]
    %v487 = vld [vmem:[%s1 + $0xe68] sm:$0xff]
    %v488 = vld [vmem:[%s1 + $0xe70] sm:$0xff]
    %v489 = vld [vmem:[%s1 + $0xe78] sm:$0xff]
    %v490 = vld [vmem:[%s1 + $0xe80] sm:$0xff]
    %v491 = vld [vmem:[%s1 + $0xe88] sm:$0xff]
    %v492 = vld [vmem:[%s1 + $0xe90] sm:$0xff]
    %v493 = vld [vmem:[%s1 + $0xe98] sm:$0xff]
    %v494 = vld [vmem:[%s1 + $0xea0] sm:$0xff]
    %v495 = vld [vmem:[%s1 + $0xea8] sm:$0xff]
    %v496 = vld [vmem:[%s1 + $0xeb0] sm:$0xff]
    %v497 = vld [vmem:[%s1 + $0xeb8] sm:$0xff]
    %v498 = vld [vmem:[%s1 + $0xec0] sm:$0xff]
    %v499 = vld [vmem:[%s1 + $0xec8] sm:$0xff]
    %v500 = vld [vmem:[%s1 + $0xed0] sm:$0xff]
    %v501 = vld [vmem:[%s1 + $0xed8] sm:$0xff]
    %v502 = vld [vmem:[%s1 + $0xee0] sm:$0xff]
    %v503 = vld [vmem:[%s1 + $0xee8] sm:$0xff]
    %v504 = vld [vmem:[%s1 + $0xef0] sm:$0xff]
    %v505 = vld [vmem:[%s1 + $0xef8] sm:$0xff]
    %v506 = vld [vmem:[%s1 + $0xf00] sm:$0xff]
    %v507 = vld [vmem:[%s1 + $0xf08] sm:$0xff]
    %v508 = vld [vmem:[%s1 + $0xf10] sm:$0xff]
    %v509 = vld [vmem:[%s1 + $0xf18] sm:$0xff]
    %v510 = vld [vmem:[%s1 + $0xf20] sm:$0xff]
    %v511 = vld [vmem:[%s1 + $0xf28] sm:$0xff]
    %v512 = vld [vmem:[%s1 + $0xf30] sm:$0xff]
    %v513 = vld [vmem:[%s1 + $0xf38] sm:$0xff]
    %v514 = vld [vmem:[%s1 + $0xf40] sm:$0xff]
    %v515 = vld [vmem:[%s1 + $0xf48] sm:$0xff]
    %v516 = vld [vmem:[%s1 + $0xf50] sm:$0xff]
    %v517 = vld [vmem:[%s1 + $0xf58] sm:$0xff]
    %v518 = vld [vmem:[%s1 + $0xf60] sm:$0xff]
    %v519 = vld [vmem:[%s1 + $0xf68] sm:$0xff]
    %v520 = vld [vmem:[%s1 + $0xf70] sm:$0xff]
    %v521 = vld [vmem:[%s1 + $0xf78] sm:$0xff]
    %v522 = vld [vmem:[%s1 + $0xf80] sm:$0xff]
    %v523 = vld [vmem:[%s1 + $0xf88] sm:$0xff]
    %v524 = vld [vmem:[%s1 + $0xf90] sm:$0xff]
    %v525 = vld [vmem:[%s1 + $0xf98] sm:$0xff]
    %v526 = vld [vmem:[%s1 + $0xfa0] sm:$0xff]
    %v527 = vld [vmem:[%s1 + $0xfa8] sm:$0xff]
    %v528 = vld [vmem:[%s1 + $0xfb0] sm:$0xff]
    %v529 = vld [vmem:[%s1 + $0xfb8] sm:$0xff]
    %v530 = vld [vmem:[%s1 + $0xfc0] sm:$0xff]
    %v531 = vld [vmem:[%s1 + $0xfc8] sm:$0xff]
    %v532 = vld [vmem:[%s1 + $0xfd0] sm:$0xff]
    %v533 = vld [vmem:[%s1 + $0xfd8] sm:$0xff]
    %v534 = vld [vmem:[%s1 + $0xfe0] sm:$0xff]
    %v535 = vld [vmem:[%s1 + $0xfe8] sm:$0xff]
    %v536 = vld [vmem:[%s1 + $0xff0] sm:$0xff]
    %v537 = vld [vmem:[%s1 + $0xff8] sm:$0xff]
    %v538 = vld [vmem:[%s2] sm:$0x3]
    %v540 = vlaneseq
    %v541 = vshrl.u32 %v540, 7
    %v542 = vsub.s32 0, %v541
    %v543 = vrot.slane %v538, %v542
    %v544 = vlaneseq
    %v545 = vshrl.u32 %v544, 7
    %v546 = vsub.s32 1, %v545
    %v547 = vrot.slane %v538, %v546
    %v554 = vcombine.high %v22, %v22
    %v556 = vunpack.c.l.s4 1966171168
    %v557 = vunpack.c.0.s8 %v556
    %v558 = vlaneseq
    %v559 = vshrl.u32 %v558, 7
    %v560 = vsub.s32 %v557, %v559
    %v561 = vrot.slane %v22, %v560
    %v563 = vunpack.c.l.s4 1966171168
    %v564 = vunpack.c.0.s8 %v563
    %v565 = vlaneseq
    %v566 = vshrl.u32 %v565, 7
    %v567 = vsub.s32 %v564, %v566
    %v568 = vrot.slane %v554, %v567
    %v569 = vcombine.high %v561, %v561
    %v570 = vcombine.high %v568, %v568
    %v572 = vunpack.c.l.s4 1966171168
    %v573 = vunpack.c.0.s8 %v572
    %v574 = vlaneseq
    %v575 = vshrl.u32 %v574, 7
    %v576 = vsub.s32 %v573, %v575
    %v577 = vrot.slane %v561, %v576
    %v579 = vunpack.c.l.s4 1966171168
    %v580 = vunpack.c.0.s8 %v579
    %v581 = vlaneseq
    %v582 = vshrl.u32 %v581, 7
    %v583 = vsub.s32 %v580, %v582
    %v584 = vrot.slane %v568, %v583
    %v586 = vunpack.c.l.s4 1966171168
    %v587 = vunpack.c.0.s8 %v586
    %v588 = vlaneseq
    %v589 = vshrl.u32 %v588, 7
    %v590 = vsub.s32 %v587, %v589
    %v591 = vrot.slane %v569, %v590
    %v593 = vunpack.c.l.s4 1966171168
    %v594 = vunpack.c.0.s8 %v593
    %v595 = vlaneseq
    %v596 = vshrl.u32 %v595, 7
    %v597 = vsub.s32 %v594, %v596
    %v598 = vrot.slane %v570, %v597
    %v599 = vcombine.high %v577, %v577
    %v600 = vcombine.high %v584, %v584
    %v601 = vcombine.high %v591, %v591
    %v602 = vcombine.high %v598, %v598
    %v603 = vcombine.high %v23, %v23
    %v605 = vunpack.c.l.s4 1966171168
    %v606 = vunpack.c.0.s8 %v605
    %v607 = vlaneseq
    %v608 = vshrl.u32 %v607, 7
    %v609 = vsub.s32 %v606, %v608
    %v610 = vrot.slane %v23, %v609
    %v612 = vunpack.c.l.s4 1966171168
    %v613 = vunpack.c.0.s8 %v612
    %v614 = vlaneseq
    %v615 = vshrl.u32 %v614, 7
    %v616 = vsub.s32 %v613, %v615
    %v617 = vrot.slane %v603, %v616
    %v618 = vcombine.high %v610, %v610
    %v619 = vcombine.high %v617, %v617
    %v621 = vunpack.c.l.s4 1966171168
    %v622 = vunpack.c.0.s8 %v621
    %v623 = vlaneseq
    %v624 = vshrl.u32 %v623, 7
    %v625 = vsub.s32 %v622, %v624
    %v626 = vrot.slane %v610, %v625
    %v628 = vunpack.c.l.s4 1966171168
    %v629 = vunpack.c.0.s8 %v628
    %v630 = vlaneseq
    %v631 = vshrl.u32 %v630, 7
    %v632 = vsub.s32 %v629, %v631
    %v633 = vrot.slane %v617, %v632
    %v635 = vunpack.c.l.s4 1966171168
    %v636 = vunpack.c.0.s8 %v635
    %v637 = vlaneseq
    %v638 = vshrl.u32 %v637, 7
    %v639 = vsub.s32 %v636, %v638
    %v640 = vrot.slane %v618, %v639
    %v642 = vunpack.c.l.s4 1966171168
    %v643 = vunpack.c.0.s8 %v642
    %v644 = vlaneseq
    %v645 = vshrl.u32 %v644, 7
    %v646 = vsub.s32 %v643, %v645
    %v647 = vrot.slane %v619, %v646
    %v648 = vcombine.high %v626, %v626
    %v649 = vcombine.high %v633, %v633
    %v650 = vcombine.high %v640, %v640
    %v651 = vcombine.high %v647, %v647
    %v652 = vcombine.high %v24, %v24
    %v654 = vunpack.c.l.s4 1966171168
    %v655 = vunpack.c.0.s8 %v654
    %v656 = vlaneseq
    %v657 = vshrl.u32 %v656, 7
    %v658 = vsub.s32 %v655, %v657
    %v659 = vrot.slane %v24, %v658
    %v661 = vunpack.c.l.s4 1966171168
    %v662 = vunpack.c.0.s8 %v661
    %v663 = vlaneseq
    %v664 = vshrl.u32 %v663, 7
    %v665 = vsub.s32 %v662, %v664
    %v666 = vrot.slane %v652, %v665
    %v667 = vcombine.high %v659, %v659
    %v668 = vcombine.high %v666, %v666
    %v670 = vunpack.c.l.s4 1966171168
    %v671 = vunpack.c.0.s8 %v670
    %v672 = vlaneseq
    %v673 = vshrl.u32 %v672, 7
    %v674 = vsub.s32 %v671, %v673
    %v675 = vrot.slane %v659, %v674
    %v677 = vunpack.c.l.s4 1966171168
    %v678 = vunpack.c.0.s8 %v677
    %v679 = vlaneseq
    %v680 = vshrl.u32 %v679, 7
    %v681 = vsub.s32 %v678, %v680
    %v682 = vrot.slane %v666, %v681
    %v684 = vunpack.c.l.s4 1966171168
    %v685 = vunpack.c.0.s8 %v684
    %v686 = vlaneseq
    %v687 = vshrl.u32 %v686, 7
    %v688 = vsub.s32 %v685, %v687
    %v689 = vrot.slane %v667, %v688
    %v691 = vunpack.c.l.s4 1966171168
    %v692 = vunpack.c.0.s8 %v691
    %v693 = vlaneseq
    %v694 = vshrl.u32 %v693, 7
    %v695 = vsub.s32 %v692, %v694
    %v696 = vrot.slane %v668, %v695
    %v697 = vcombine.high %v675, %v675
    %v698 = vcombine.high %v682, %v682
    %v699 = vcombine.high %v689, %v689
    %v700 = vcombine.high %v696, %v696
    %v701 = vcombine.high %v25, %v25
    %v703 = vunpack.c.l.s4 1966171168
    %v704 = vunpack.c.0.s8 %v703
    %v705 = vlaneseq
    %v706 = vshrl.u32 %v705, 7
    %v707 = vsub.s32 %v704, %v706
    %v708 = vrot.slane %v25, %v707
    %v710 = vunpack.c.l.s4 1966171168
    %v711 = vunpack.c.0.s8 %v710
    %v712 = vlaneseq
    %v713 = vshrl.u32 %v712, 7
    %v714 = vsub.s32 %v711, %v713
    %v715 = vrot.slane %v701, %v714
    %v716 = vcombine.high %v708, %v708
    %v717 = vcombine.high %v715, %v715
    %v719 = vunpack.c.l.s4 1966171168
    %v720 = vunpack.c.0.s8 %v719
    %v721 = vlaneseq
    %v722 = vshrl.u32 %v721, 7
    %v723 = vsub.s32 %v720, %v722
    %v724 = vrot.slane %v708, %v723
    %v726 = vunpack.c.l.s4 1966171168
    %v727 = vunpack.c.0.s8 %v726
    %v728 = vlaneseq
    %v729 = vshrl.u32 %v728, 7
    %v730 = vsub.s32 %v727, %v729
    %v731 = vrot.slane %v715, %v730
    %v733 = vunpack.c.l.s4 1966171168
    %v734 = vunpack.c.0.s8 %v733
    %v735 = vlaneseq
    %v736 = vshrl.u32 %v735, 7
    %v737 = vsub.s32 %v734, %v736
    %v738 = vrot.slane %v716, %v737
    %v740 = vunpack.c.l.s4 1966171168
    %v741 = vunpack.c.0.s8 %v740
    %v742 = vlaneseq
    %v743 = vshrl.u32 %v742, 7
    %v744 = vsub.s32 %v741, %v743
    %v745 = vrot.slane %v717, %v744
    %v746 = vcombine.high %v724, %v724
    %v747 = vcombine.high %v731, %v731
    %v748 = vcombine.high %v738, %v738
    %v749 = vcombine.high %v745, %v745
    %v1294 = vunpack.c.l.b16 %v26
    %v1295 = vunpack.c.h.b16 %v26
    %v1296 = vunpack.c.l.b16 %v27
    %v1297 = vunpack.c.h.b16 %v27
    %v1298 = vunpack.c.l.b16 %v28
    %v1299 = vunpack.c.h.b16 %v28
    %v1300 = vunpack.c.l.b16 %v29
    %v1301 = vunpack.c.h.b16 %v29
    %v1302 = vunpack.c.l.b16 %v30
    %v1303 = vunpack.c.h.b16 %v30
    %v1304 = vunpack.c.l.b16 %v31
    %v1305 = vunpack.c.h.b16 %v31
    %v1306 = vunpack.c.l.b16 %v32
    %v1307 = vunpack.c.h.b16 %v32
    %v1308 = vunpack.c.l.b16 %v33
    %v1309 = vunpack.c.h.b16 %v33
    %v1310 = vunpack.c.l.b16 %v34
    %v1311 = vunpack.c.h.b16 %v34
    %v1312 = vunpack.c.l.b16 %v35
    %v1313 = vunpack.c.h.b16 %v35
    %v1314 = vunpack.c.l.b16 %v36
    %v1315 = vunpack.c.h.b16 %v36
    %v1316 = vunpack.c.l.b16 %v37
    %v1317 = vunpack.c.h.b16 %v37
    %v1318 = vunpack.c.l.b16 %v38
    %v1319 = vunpack.c.h.b16 %v38
    %v1320 = vunpack.c.l.b16 %v39
    %v1321 = vunpack.c.h.b16 %v39
    %v1322 = vunpack.c.l.b16 %v40
    %v1323 = vunpack.c.h.b16 %v40
    %v1324 = vunpack.c.l.b16 %v41
    %v1325 = vunpack.c.h.b16 %v41
    %v1326 = vunpack.c.l.b16 %v42
    %v1327 = vunpack.c.h.b16 %v42
    %v1328 = vunpack.c.l.b16 %v43
    %v1329 = vunpack.c.h.b16 %v43
    %v1330 = vunpack.c.l.b16 %v44
    %v1331 = vunpack.c.h.b16 %v44
    %v1332 = vunpack.c.l.b16 %v45
    %v1333 = vunpack.c.h.b16 %v45
    %v1334 = vunpack.c.l.b16 %v46
    %v1335 = vunpack.c.h.b16 %v46
    %v1336 = vunpack.c.l.b16 %v47
    %v1337 = vunpack.c.h.b16 %v47
    %v1338 = vunpack.c.l.b16 %v48
    %v1339 = vunpack.c.h.b16 %v48
    %v1340 = vunpack.c.l.b16 %v49
    %v1341 = vunpack.c.h.b16 %v49
    %v1342 = vunpack.c.l.b16 %v50
    %v1343 = vunpack.c.h.b16 %v50
    %v1344 = vunpack.c.l.b16 %v51
    %v1345 = vunpack.c.h.b16 %v51
    %v1346 = vunpack.c.l.b16 %v52
    %v1347 = vunpack.c.h.b16 %v52
    %v1348 = vunpack.c.l.b16 %v53
    %v1349 = vunpack.c.h.b16 %v53
    %v1350 = vunpack.c.l.b16 %v54
    %v1351 = vunpack.c.h.b16 %v54
    %v1352 = vunpack.c.l.b16 %v55
    %v1353 = vunpack.c.h.b16 %v55
    %v1354 = vunpack.c.l.b16 %v56
    %v1355 = vunpack.c.h.b16 %v56
    %v1356 = vunpack.c.l.b16 %v57
    %v1357 = vunpack.c.h.b16 %v57
    %v1358 = vunpack.c.l.b16 %v58
    %v1359 = vunpack.c.h.b16 %v58
    %v1360 = vunpack.c.l.b16 %v59
    %v1361 = vunpack.c.h.b16 %v59
    %v1362 = vunpack.c.l.b16 %v60
    %v1363 = vunpack.c.h.b16 %v60
    %v1364 = vunpack.c.l.b16 %v61
    %v1365 = vunpack.c.h.b16 %v61
    %v1366 = vunpack.c.l.b16 %v62
    %v1367 = vunpack.c.h.b16 %v62
    %v1368 = vunpack.c.l.b16 %v63
    %v1369 = vunpack.c.h.b16 %v63
    %v1370 = vunpack.c.l.b16 %v64
    %v1371 = vunpack.c.h.b16 %v64
    %v1372 = vunpack.c.l.b16 %v65
    %v1373 = vunpack.c.h.b16 %v65
    %v1374 = vunpack.c.l.b16 %v66
    %v1375 = vunpack.c.h.b16 %v66
    %v1376 = vunpack.c.l.b16 %v67
    %v1377 = vunpack.c.h.b16 %v67
    %v1378 = vunpack.c.l.b16 %v68
    %v1379 = vunpack.c.h.b16 %v68
    %v1380 = vunpack.c.l.b16 %v69
    %v1381 = vunpack.c.h.b16 %v69
    %v1382 = vunpack.c.l.b16 %v70
    %v1383 = vunpack.c.h.b16 %v70
    %v1384 = vunpack.c.l.b16 %v71
    %v1385 = vunpack.c.h.b16 %v71
    %v1386 = vunpack.c.l.b16 %v72
    %v1387 = vunpack.c.h.b16 %v72
    %v1388 = vunpack.c.l.b16 %v73
    %v1389 = vunpack.c.h.b16 %v73
    %v1390 = vunpack.c.l.b16 %v74
    %v1391 = vunpack.c.h.b16 %v74
    %v1392 = vunpack.c.l.b16 %v75
    %v1393 = vunpack.c.h.b16 %v75
    %v1394 = vunpack.c.l.b16 %v76
    %v1395 = vunpack.c.h.b16 %v76
    %v1396 = vunpack.c.l.b16 %v77
    %v1397 = vunpack.c.h.b16 %v77
    %v1398 = vunpack.c.l.b16 %v78
    %v1399 = vunpack.c.h.b16 %v78
    %v1400 = vunpack.c.l.b16 %v79
    %v1401 = vunpack.c.h.b16 %v79
    %v1402 = vunpack.c.l.b16 %v80
    %v1403 = vunpack.c.h.b16 %v80
    %v1404 = vunpack.c.l.b16 %v81
    %v1405 = vunpack.c.h.b16 %v81
    %v1406 = vunpack.c.l.b16 %v82
    %v1407 = vunpack.c.h.b16 %v82
    %v1408 = vunpack.c.l.b16 %v83
    %v1409 = vunpack.c.h.b16 %v83
    %v1410 = vunpack.c.l.b16 %v84
    %v1411 = vunpack.c.h.b16 %v84
    %v1412 = vunpack.c.l.b16 %v85
    %v1413 = vunpack.c.h.b16 %v85
    %v1414 = vunpack.c.l.b16 %v86
    %v1415 = vunpack.c.h.b16 %v86
    %v1416 = vunpack.c.l.b16 %v87
    %v1417 = vunpack.c.h.b16 %v87
    %v1418 = vunpack.c.l.b16 %v88
    %v1419 = vunpack.c.h.b16 %v88
    %v1420 = vunpack.c.l.b16 %v89
    %v1421 = vunpack.c.h.b16 %v89
    %v1422 = vunpack.c.l.b16 %v90
    %v1423 = vunpack.c.h.b16 %v90
    %v1424 = vunpack.c.l.b16 %v91
    %v1425 = vunpack.c.h.b16 %v91
    %v1426 = vunpack.c.l.b16 %v92
    %v1427 = vunpack.c.h.b16 %v92
    %v1428 = vunpack.c.l.b16 %v93
    %v1429 = vunpack.c.h.b16 %v93
    %v1430 = vunpack.c.l.b16 %v94
    %v1431 = vunpack.c.h.b16 %v94
    %v1432 = vunpack.c.l.b16 %v95
    %v1433 = vunpack.c.h.b16 %v95
    %v1434 = vunpack.c.l.b16 %v96
    %v1435 = vunpack.c.h.b16 %v96
    %v1436 = vunpack.c.l.b16 %v97
    %v1437 = vunpack.c.h.b16 %v97
    %v1438 = vunpack.c.l.b16 %v98
    %v1439 = vunpack.c.h.b16 %v98
    %v1440 = vunpack.c.l.b16 %v99
    %v1441 = vunpack.c.h.b16 %v99
    %v1442 = vunpack.c.l.b16 %v100
    %v1443 = vunpack.c.h.b16 %v100
    %v1444 = vunpack.c.l.b16 %v101
    %v1445 = vunpack.c.h.b16 %v101
    %v1446 = vunpack.c.l.b16 %v102
    %v1447 = vunpack.c.h.b16 %v102
    %v1448 = vunpack.c.l.b16 %v103
    %v1449 = vunpack.c.h.b16 %v103
    %v1450 = vunpack.c.l.b16 %v104
    %v1451 = vunpack.c.h.b16 %v104
    %v1452 = vunpack.c.l.b16 %v105
    %v1453 = vunpack.c.h.b16 %v105
    %v1454 = vunpack.c.l.b16 %v106
    %v1455 = vunpack.c.h.b16 %v106
    %v1456 = vunpack.c.l.b16 %v107
    %v1457 = vunpack.c.h.b16 %v107
    %v1458 = vunpack.c.l.b16 %v108
    %v1459 = vunpack.c.h.b16 %v108
    %v1460 = vunpack.c.l.b16 %v109
    %v1461 = vunpack.c.h.b16 %v109
    %v1462 = vunpack.c.l.b16 %v110
    %v1463 = vunpack.c.h.b16 %v110
    %v1464 = vunpack.c.l.b16 %v111
    %v1465 = vunpack.c.h.b16 %v111
    %v1466 = vunpack.c.l.b16 %v112
    %v1467 = vunpack.c.h.b16 %v112
    %v1468 = vunpack.c.l.b16 %v113
    %v1469 = vunpack.c.h.b16 %v113
    %v1470 = vunpack.c.l.b16 %v114
    %v1471 = vunpack.c.h.b16 %v114
    %v1472 = vunpack.c.l.b16 %v115
    %v1473 = vunpack.c.h.b16 %v115
    %v1474 = vunpack.c.l.b16 %v116
    %v1475 = vunpack.c.h.b16 %v116
    %v1476 = vunpack.c.l.b16 %v117
    %v1477 = vunpack.c.h.b16 %v117
    %v1478 = vunpack.c.l.b16 %v118
    %v1479 = vunpack.c.h.b16 %v118
    %v1480 = vunpack.c.l.b16 %v119
    %v1481 = vunpack.c.h.b16 %v119
    %v1482 = vunpack.c.l.b16 %v120
    %v1483 = vunpack.c.h.b16 %v120
    %v1484 = vunpack.c.l.b16 %v121
    %v1485 = vunpack.c.h.b16 %v121
    %v1486 = vunpack.c.l.b16 %v122
    %v1487 = vunpack.c.h.b16 %v122
    %v1488 = vunpack.c.l.b16 %v123
    %v1489 = vunpack.c.h.b16 %v123
    %v1490 = vunpack.c.l.b16 %v124
    %v1491 = vunpack.c.h.b16 %v124
    %v1492 = vunpack.c.l.b16 %v125
    %v1493 = vunpack.c.h.b16 %v125
    %v1494 = vunpack.c.l.b16 %v126
    %v1495 = vunpack.c.h.b16 %v126
    %v1496 = vunpack.c.l.b16 %v127
    %v1497 = vunpack.c.h.b16 %v127
    %v1498 = vunpack.c.l.b16 %v128
    %v1499 = vunpack.c.h.b16 %v128
    %v1500 = vunpack.c.l.b16 %v129
    %v1501 = vunpack.c.h.b16 %v129
    %v1502 = vunpack.c.l.b16 %v130
    %v1503 = vunpack.c.h.b16 %v130
    %v1504 = vunpack.c.l.b16 %v131
    %v1505 = vunpack.c.h.b16 %v131
    %v1506 = vunpack.c.l.b16 %v132
    %v1507 = vunpack.c.h.b16 %v132
    %v1508 = vunpack.c.l.b16 %v133
    %v1509 = vunpack.c.h.b16 %v133
    %v1510 = vunpack.c.l.b16 %v134
    %v1511 = vunpack.c.h.b16 %v134
    %v1512 = vunpack.c.l.b16 %v135
    %v1513 = vunpack.c.h.b16 %v135
    %v1514 = vunpack.c.l.b16 %v136
    %v1515 = vunpack.c.h.b16 %v136
    %v1516 = vunpack.c.l.b16 %v137
    %v1517 = vunpack.c.h.b16 %v137
    %v1518 = vunpack.c.l.b16 %v138
    %v1519 = vunpack.c.h.b16 %v138
    %v1520 = vunpack.c.l.b16 %v139
    %v1521 = vunpack.c.h.b16 %v139
    %v1522 = vunpack.c.l.b16 %v140
    %v1523 = vunpack.c.h.b16 %v140
    %v1524 = vunpack.c.l.b16 %v141
    %v1525 = vunpack.c.h.b16 %v141
    %v1526 = vunpack.c.l.b16 %v142
    %v1527 = vunpack.c.h.b16 %v142
    %v1528 = vunpack.c.l.b16 %v143
    %v1529 = vunpack.c.h.b16 %v143
    %v1530 = vunpack.c.l.b16 %v144
    %v1531 = vunpack.c.h.b16 %v144
    %v1532 = vunpack.c.l.b16 %v145
    %v1533 = vunpack.c.h.b16 %v145
    %v1534 = vunpack.c.l.b16 %v146
    %v1535 = vunpack.c.h.b16 %v146
    %v1536 = vunpack.c.l.b16 %v147
    %v1537 = vunpack.c.h.b16 %v147
    %v1538 = vunpack.c.l.b16 %v148
    %v1539 = vunpack.c.h.b16 %v148
    %v1540 = vunpack.c.l.b16 %v149
    %v1541 = vunpack.c.h.b16 %v149
    %v1542 = vunpack.c.l.b16 %v150
    %v1543 = vunpack.c.h.b16 %v150
    %v1544 = vunpack.c.l.b16 %v151
    %v1545 = vunpack.c.h.b16 %v151
    %v1546 = vunpack.c.l.b16 %v152
    %v1547 = vunpack.c.h.b16 %v152
    %v1548 = vunpack.c.l.b16 %v153
    %v1549 = vunpack.c.h.b16 %v153
    %v1550 = vunpack.c.l.b16 %v154
    %v1551 = vunpack.c.h.b16 %v154
    %v1552 = vunpack.c.l.b16 %v155
    %v1553 = vunpack.c.h.b16 %v155
    %v1554 = vunpack.c.l.b16 %v156
    %v1555 = vunpack.c.h.b16 %v156
    %v1556 = vunpack.c.l.b16 %v157
    %v1557 = vunpack.c.h.b16 %v157
    %v1558 = vunpack.c.l.b16 %v158
    %v1559 = vunpack.c.h.b16 %v158
    %v1560 = vunpack.c.l.b16 %v159
    %v1561 = vunpack.c.h.b16 %v159
    %v1562 = vunpack.c.l.b16 %v160
    %v1563 = vunpack.c.h.b16 %v160
    %v1564 = vunpack.c.l.b16 %v161
    %v1565 = vunpack.c.h.b16 %v161
    %v1566 = vunpack.c.l.b16 %v162
    %v1567 = vunpack.c.h.b16 %v162
    %v1568 = vunpack.c.l.b16 %v163
    %v1569 = vunpack.c.h.b16 %v163
    %v1570 = vunpack.c.l.b16 %v164
    %v1571 = vunpack.c.h.b16 %v164
    %v1572 = vunpack.c.l.b16 %v165
    %v1573 = vunpack.c.h.b16 %v165
    %v1574 = vunpack.c.l.b16 %v166
    %v1575 = vunpack.c.h.b16 %v166
    %v1576 = vunpack.c.l.b16 %v167
    %v1577 = vunpack.c.h.b16 %v167
    %v1578 = vunpack.c.l.b16 %v168
    %v1579 = vunpack.c.h.b16 %v168
    %v1580 = vunpack.c.l.b16 %v169
    %v1581 = vunpack.c.h.b16 %v169
    %v1582 = vunpack.c.l.b16 %v170
    %v1583 = vunpack.c.h.b16 %v170
    %v1584 = vunpack.c.l.b16 %v171
    %v1585 = vunpack.c.h.b16 %v171
    %v1586 = vunpack.c.l.b16 %v172
    %v1587 = vunpack.c.h.b16 %v172
    %v1588 = vunpack.c.l.b16 %v173
    %v1589 = vunpack.c.h.b16 %v173
    %v1590 = vunpack.c.l.b16 %v174
    %v1591 = vunpack.c.h.b16 %v174
    %v1592 = vunpack.c.l.b16 %v175
    %v1593 = vunpack.c.h.b16 %v175
    %v1594 = vunpack.c.l.b16 %v176
    %v1595 = vunpack.c.h.b16 %v176
    %v1596 = vunpack.c.l.b16 %v177
    %v1597 = vunpack.c.h.b16 %v177
    %v1598 = vunpack.c.l.b16 %v178
    %v1599 = vunpack.c.h.b16 %v178
    %v1600 = vunpack.c.l.b16 %v179
    %v1601 = vunpack.c.h.b16 %v179
    %v1602 = vunpack.c.l.b16 %v180
    %v1603 = vunpack.c.h.b16 %v180
    %v1604 = vunpack.c.l.b16 %v181
    %v1605 = vunpack.c.h.b16 %v181
    %v1606 = vunpack.c.l.b16 %v182
    %v1607 = vunpack.c.h.b16 %v182
    %v1608 = vunpack.c.l.b16 %v183
    %v1609 = vunpack.c.h.b16 %v183
    %v1610 = vunpack.c.l.b16 %v184
    %v1611 = vunpack.c.h.b16 %v184
    %v1612 = vunpack.c.l.b16 %v185
    %v1613 = vunpack.c.h.b16 %v185
    %v1614 = vunpack.c.l.b16 %v186
    %v1615 = vunpack.c.h.b16 %v186
    %v1616 = vunpack.c.l.b16 %v187
    %v1617 = vunpack.c.h.b16 %v187
    %v1618 = vunpack.c.l.b16 %v188
    %v1619 = vunpack.c.h.b16 %v188
    %v1620 = vunpack.c.l.b16 %v189
    %v1621 = vunpack.c.h.b16 %v189
    %v1622 = vunpack.c.l.b16 %v190
    %v1623 = vunpack.c.h.b16 %v190
    %v1624 = vunpack.c.l.b16 %v191
    %v1625 = vunpack.c.h.b16 %v191
    %v1626 = vunpack.c.l.b16 %v192
    %v1627 = vunpack.c.h.b16 %v192
    %v1628 = vunpack.c.l.b16 %v193
    %v1629 = vunpack.c.h.b16 %v193
    %v1630 = vunpack.c.l.b16 %v194
    %v1631 = vunpack.c.h.b16 %v194
    %v1632 = vunpack.c.l.b16 %v195
    %v1633 = vunpack.c.h.b16 %v195
    %v1634 = vunpack.c.l.b16 %v196
    %v1635 = vunpack.c.h.b16 %v196
    %v1636 = vunpack.c.l.b16 %v197
    %v1637 = vunpack.c.h.b16 %v197
    %v1638 = vunpack.c.l.b16 %v198
    %v1639 = vunpack.c.h.b16 %v198
    %v1640 = vunpack.c.l.b16 %v199
    %v1641 = vunpack.c.h.b16 %v199
    %v1642 = vunpack.c.l.b16 %v200
    %v1643 = vunpack.c.h.b16 %v200
    %v1644 = vunpack.c.l.b16 %v201
    %v1645 = vunpack.c.h.b16 %v201
    %v1646 = vunpack.c.l.b16 %v202
    %v1647 = vunpack.c.h.b16 %v202
    %v1648 = vunpack.c.l.b16 %v203
    %v1649 = vunpack.c.h.b16 %v203
    %v1650 = vunpack.c.l.b16 %v204
    %v1651 = vunpack.c.h.b16 %v204
    %v1652 = vunpack.c.l.b16 %v205
    %v1653 = vunpack.c.h.b16 %v205
    %v1654 = vunpack.c.l.b16 %v206
    %v1655 = vunpack.c.h.b16 %v206
    %v1656 = vunpack.c.l.b16 %v207
    %v1657 = vunpack.c.h.b16 %v207
    %v1658 = vunpack.c.l.b16 %v208
    %v1659 = vunpack.c.h.b16 %v208
    %v1660 = vunpack.c.l.b16 %v209
    %v1661 = vunpack.c.h.b16 %v209
    %v1662 = vunpack.c.l.b16 %v210
    %v1663 = vunpack.c.h.b16 %v210
    %v1664 = vunpack.c.l.b16 %v211
    %v1665 = vunpack.c.h.b16 %v211
    %v1666 = vunpack.c.l.b16 %v212
    %v1667 = vunpack.c.h.b16 %v212
    %v1668 = vunpack.c.l.b16 %v213
    %v1669 = vunpack.c.h.b16 %v213
    %v1670 = vunpack.c.l.b16 %v214
    %v1671 = vunpack.c.h.b16 %v214
    %v1672 = vunpack.c.l.b16 %v215
    %v1673 = vunpack.c.h.b16 %v215
    %v1674 = vunpack.c.l.b16 %v216
    %v1675 = vunpack.c.h.b16 %v216
    %v1676 = vunpack.c.l.b16 %v217
    %v1677 = vunpack.c.h.b16 %v217
    %v1678 = vunpack.c.l.b16 %v218
    %v1679 = vunpack.c.h.b16 %v218
    %v1680 = vunpack.c.l.b16 %v219
    %v1681 = vunpack.c.h.b16 %v219
    %v1682 = vunpack.c.l.b16 %v220
    %v1683 = vunpack.c.h.b16 %v220
    %v1684 = vunpack.c.l.b16 %v221
    %v1685 = vunpack.c.h.b16 %v221
    %v1686 = vunpack.c.l.b16 %v222
    %v1687 = vunpack.c.h.b16 %v222
    %v1688 = vunpack.c.l.b16 %v223
    %v1689 = vunpack.c.h.b16 %v223
    %v1690 = vunpack.c.l.b16 %v224
    %v1691 = vunpack.c.h.b16 %v224
    %v1692 = vunpack.c.l.b16 %v225
    %v1693 = vunpack.c.h.b16 %v225
    %v1694 = vunpack.c.l.b16 %v226
    %v1695 = vunpack.c.h.b16 %v226
    %v1696 = vunpack.c.l.b16 %v227
    %v1697 = vunpack.c.h.b16 %v227
    %v1698 = vunpack.c.l.b16 %v228
    %v1699 = vunpack.c.h.b16 %v228
    %v1700 = vunpack.c.l.b16 %v229
    %v1701 = vunpack.c.h.b16 %v229
    %v1702 = vunpack.c.l.b16 %v230
    %v1703 = vunpack.c.h.b16 %v230
    %v1704 = vunpack.c.l.b16 %v231
    %v1705 = vunpack.c.h.b16 %v231
    %v1706 = vunpack.c.l.b16 %v232
    %v1707 = vunpack.c.h.b16 %v232
    %v1708 = vunpack.c.l.b16 %v233
    %v1709 = vunpack.c.h.b16 %v233
    %v1710 = vunpack.c.l.b16 %v234
    %v1711 = vunpack.c.h.b16 %v234
    %v1712 = vunpack.c.l.b16 %v235
    %v1713 = vunpack.c.h.b16 %v235
    %v1714 = vunpack.c.l.b16 %v236
    %v1715 = vunpack.c.h.b16 %v236
    %v1716 = vunpack.c.l.b16 %v237
    %v1717 = vunpack.c.h.b16 %v237
    %v1718 = vunpack.c.l.b16 %v238
    %v1719 = vunpack.c.h.b16 %v238
    %v1720 = vunpack.c.l.b16 %v239
    %v1721 = vunpack.c.h.b16 %v239
    %v1722 = vunpack.c.l.b16 %v240
    %v1723 = vunpack.c.h.b16 %v240
    %v1724 = vunpack.c.l.b16 %v241
    %v1725 = vunpack.c.h.b16 %v241
    %v1726 = vunpack.c.l.b16 %v242
    %v1727 = vunpack.c.h.b16 %v242
    %v1728 = vunpack.c.l.b16 %v243
    %v1729 = vunpack.c.h.b16 %v243
    %v1730 = vunpack.c.l.b16 %v244
    %v1731 = vunpack.c.h.b16 %v244
    %v1732 = vunpack.c.l.b16 %v245
    %v1733 = vunpack.c.h.b16 %v245
    %v1734 = vunpack.c.l.b16 %v246
    %v1735 = vunpack.c.h.b16 %v246
    %v1736 = vunpack.c.l.b16 %v247
    %v1737 = vunpack.c.h.b16 %v247
    %v1738 = vunpack.c.l.b16 %v248
    %v1739 = vunpack.c.h.b16 %v248
    %v1740 = vunpack.c.l.b16 %v249
    %v1741 = vunpack.c.h.b16 %v249
    %v1742 = vunpack.c.l.b16 %v250
    %v1743 = vunpack.c.h.b16 %v250
    %v1744 = vunpack.c.l.b16 %v251
    %v1745 = vunpack.c.h.b16 %v251
    %v1746 = vunpack.c.l.b16 %v252
    %v1747 = vunpack.c.h.b16 %v252
    %v1748 = vunpack.c.l.b16 %v253
    %v1749 = vunpack.c.h.b16 %v253
    %v1750 = vunpack.c.l.b16 %v254
    %v1751 = vunpack.c.h.b16 %v254
    %v1752 = vunpack.c.l.b16 %v255
    %v1753 = vunpack.c.h.b16 %v255
    %v1754 = vunpack.c.l.b16 %v256
    %v1755 = vunpack.c.h.b16 %v256
    %v1756 = vunpack.c.l.b16 %v257
    %v1757 = vunpack.c.h.b16 %v257
    %v1758 = vunpack.c.l.b16 %v258
    %v1759 = vunpack.c.h.b16 %v258
    %v1760 = vunpack.c.l.b16 %v259
    %v1761 = vunpack.c.h.b16 %v259
    %v1762 = vunpack.c.l.b16 %v260
    %v1763 = vunpack.c.h.b16 %v260
    %v1764 = vunpack.c.l.b16 %v261
    %v1765 = vunpack.c.h.b16 %v261
    %v1766 = vunpack.c.l.b16 %v262
    %v1767 = vunpack.c.h.b16 %v262
    %v1768 = vunpack.c.l.b16 %v263
    %v1769 = vunpack.c.h.b16 %v263
    %v1770 = vunpack.c.l.b16 %v264
    %v1771 = vunpack.c.h.b16 %v264
    %v1772 = vunpack.c.l.b16 %v265
    %v1773 = vunpack.c.h.b16 %v265
    %v1774 = vunpack.c.l.b16 %v266
    %v1775 = vunpack.c.h.b16 %v266
    %v1776 = vunpack.c.l.b16 %v267
    %v1777 = vunpack.c.h.b16 %v267
    %v1778 = vunpack.c.l.b16 %v268
    %v1779 = vunpack.c.h.b16 %v268
    %v1780 = vunpack.c.l.b16 %v269
    %v1781 = vunpack.c.h.b16 %v269
    %v1782 = vunpack.c.l.b16 %v270
    %v1783 = vunpack.c.h.b16 %v270
    %v1784 = vunpack.c.l.b16 %v271
    %v1785 = vunpack.c.h.b16 %v271
    %v1786 = vunpack.c.l.b16 %v272
    %v1787 = vunpack.c.h.b16 %v272
    %v1788 = vunpack.c.l.b16 %v273
    %v1789 = vunpack.c.h.b16 %v273
    %v1790 = vunpack.c.l.b16 %v274
    %v1791 = vunpack.c.h.b16 %v274
    %v1792 = vunpack.c.l.b16 %v275
    %v1793 = vunpack.c.h.b16 %v275
    %v1794 = vunpack.c.l.b16 %v276
    %v1795 = vunpack.c.h.b16 %v276
    %v1796 = vunpack.c.l.b16 %v277
    %v1797 = vunpack.c.h.b16 %v277
    %v1798 = vunpack.c.l.b16 %v278
    %v1799 = vunpack.c.h.b16 %v278
    %v1800 = vunpack.c.l.b16 %v279
    %v1801 = vunpack.c.h.b16 %v279
    %v1802 = vunpack.c.l.b16 %v280
    %v1803 = vunpack.c.h.b16 %v280
    %v1804 = vunpack.c.l.b16 %v281
    %v1805 = vunpack.c.h.b16 %v281
    %v1806 = vunpack.c.l.b16 %v282
    %v1807 = vunpack.c.h.b16 %v282
    %v1808 = vunpack.c.l.b16 %v283
    %v1809 = vunpack.c.h.b16 %v283
    %v1810 = vunpack.c.l.b16 %v284
    %v1811 = vunpack.c.h.b16 %v284
    %v1812 = vunpack.c.l.b16 %v285
    %v1813 = vunpack.c.h.b16 %v285
    %v1814 = vunpack.c.l.b16 %v286
    %v1815 = vunpack.c.h.b16 %v286
    %v1816 = vunpack.c.l.b16 %v287
    %v1817 = vunpack.c.h.b16 %v287
    %v1818 = vunpack.c.l.b16 %v288
    %v1819 = vunpack.c.h.b16 %v288
    %v1820 = vunpack.c.l.b16 %v289
    %v1821 = vunpack.c.h.b16 %v289
    %v1822 = vunpack.c.l.b16 %v290
    %v1823 = vunpack.c.h.b16 %v290
    %v1824 = vunpack.c.l.b16 %v291
    %v1825 = vunpack.c.h.b16 %v291
    %v1826 = vunpack.c.l.b16 %v292
    %v1827 = vunpack.c.h.b16 %v292
    %v1828 = vunpack.c.l.b16 %v293
    %v1829 = vunpack.c.h.b16 %v293
    %v1830 = vunpack.c.l.b16 %v294
    %v1831 = vunpack.c.h.b16 %v294
    %v1832 = vunpack.c.l.b16 %v295
    %v1833 = vunpack.c.h.b16 %v295
    %v1834 = vunpack.c.l.b16 %v296
    %v1835 = vunpack.c.h.b16 %v296
    %v1836 = vunpack.c.l.b16 %v297
    %v1837 = vunpack.c.h.b16 %v297
    %v1838 = vunpack.c.l.b16 %v298
    %v1839 = vunpack.c.h.b16 %v298
    %v1840 = vunpack.c.l.b16 %v299
    %v1841 = vunpack.c.h.b16 %v299
    %v1842 = vunpack.c.l.b16 %v300
    %v1843 = vunpack.c.h.b16 %v300
    %v1844 = vunpack.c.l.b16 %v301
    %v1845 = vunpack.c.h.b16 %v301
    %v1846 = vunpack.c.l.b16 %v302
    %v1847 = vunpack.c.h.b16 %v302
    %v1848 = vunpack.c.l.b16 %v303
    %v1849 = vunpack.c.h.b16 %v303
    %v1850 = vunpack.c.l.b16 %v304
    %v1851 = vunpack.c.h.b16 %v304
    %v1852 = vunpack.c.l.b16 %v305
    %v1853 = vunpack.c.h.b16 %v305
    %v1854 = vunpack.c.l.b16 %v306
    %v1855 = vunpack.c.h.b16 %v306
    %v1856 = vunpack.c.l.b16 %v307
    %v1857 = vunpack.c.h.b16 %v307
    %v1858 = vunpack.c.l.b16 %v308
    %v1859 = vunpack.c.h.b16 %v308
    %v1860 = vunpack.c.l.b16 %v309
    %v1861 = vunpack.c.h.b16 %v309
    %v1862 = vunpack.c.l.b16 %v310
    %v1863 = vunpack.c.h.b16 %v310
    %v1864 = vunpack.c.l.b16 %v311
    %v1865 = vunpack.c.h.b16 %v311
    %v1866 = vunpack.c.l.b16 %v312
    %v1867 = vunpack.c.h.b16 %v312
    %v1868 = vunpack.c.l.b16 %v313
    %v1869 = vunpack.c.h.b16 %v313
    %v1870 = vunpack.c.l.b16 %v314
    %v1871 = vunpack.c.h.b16 %v314
    %v1872 = vunpack.c.l.b16 %v315
    %v1873 = vunpack.c.h.b16 %v315
    %v1874 = vunpack.c.l.b16 %v316
    %v1875 = vunpack.c.h.b16 %v316
    %v1876 = vunpack.c.l.b16 %v317
    %v1877 = vunpack.c.h.b16 %v317
    %v1878 = vunpack.c.l.b16 %v318
    %v1879 = vunpack.c.h.b16 %v318
    %v1880 = vunpack.c.l.b16 %v319
    %v1881 = vunpack.c.h.b16 %v319
    %v1882 = vunpack.c.l.b16 %v320
    %v1883 = vunpack.c.h.b16 %v320
    %v1884 = vunpack.c.l.b16 %v321
    %v1885 = vunpack.c.h.b16 %v321
    %v1886 = vunpack.c.l.b16 %v322
    %v1887 = vunpack.c.h.b16 %v322
    %v1888 = vunpack.c.l.b16 %v323
    %v1889 = vunpack.c.h.b16 %v323
    %v1890 = vunpack.c.l.b16 %v324
    %v1891 = vunpack.c.h.b16 %v324
    %v1892 = vunpack.c.l.b16 %v325
    %v1893 = vunpack.c.h.b16 %v325
    %v1894 = vunpack.c.l.b16 %v326
    %v1895 = vunpack.c.h.b16 %v326
    %v1896 = vunpack.c.l.b16 %v327
    %v1897 = vunpack.c.h.b16 %v327
    %v1898 = vunpack.c.l.b16 %v328
    %v1899 = vunpack.c.h.b16 %v328
    %v1900 = vunpack.c.l.b16 %v329
    %v1901 = vunpack.c.h.b16 %v329
    %v1902 = vunpack.c.l.b16 %v330
    %v1903 = vunpack.c.h.b16 %v330
    %v1904 = vunpack.c.l.b16 %v331
    %v1905 = vunpack.c.h.b16 %v331
    %v1906 = vunpack.c.l.b16 %v332
    %v1907 = vunpack.c.h.b16 %v332
    %v1908 = vunpack.c.l.b16 %v333
    %v1909 = vunpack.c.h.b16 %v333
    %v1910 = vunpack.c.l.b16 %v334
    %v1911 = vunpack.c.h.b16 %v334
    %v1912 = vunpack.c.l.b16 %v335
    %v1913 = vunpack.c.h.b16 %v335
    %v1914 = vunpack.c.l.b16 %v336
    %v1915 = vunpack.c.h.b16 %v336
    %v1916 = vunpack.c.l.b16 %v337
    %v1917 = vunpack.c.h.b16 %v337
    %v1918 = vunpack.c.l.b16 %v338
    %v1919 = vunpack.c.h.b16 %v338
    %v1920 = vunpack.c.l.b16 %v339
    %v1921 = vunpack.c.h.b16 %v339
    %v1922 = vunpack.c.l.b16 %v340
    %v1923 = vunpack.c.h.b16 %v340
    %v1924 = vunpack.c.l.b16 %v341
    %v1925 = vunpack.c.h.b16 %v341
    %v1926 = vunpack.c.l.b16 %v342
    %v1927 = vunpack.c.h.b16 %v342
    %v1928 = vunpack.c.l.b16 %v343
    %v1929 = vunpack.c.h.b16 %v343
    %v1930 = vunpack.c.l.b16 %v344
    %v1931 = vunpack.c.h.b16 %v344
    %v1932 = vunpack.c.l.b16 %v345
    %v1933 = vunpack.c.h.b16 %v345
    %v1934 = vunpack.c.l.b16 %v346
    %v1935 = vunpack.c.h.b16 %v346
    %v1936 = vunpack.c.l.b16 %v347
    %v1937 = vunpack.c.h.b16 %v347
    %v1938 = vunpack.c.l.b16 %v348
    %v1939 = vunpack.c.h.b16 %v348
    %v1940 = vunpack.c.l.b16 %v349
    %v1941 = vunpack.c.h.b16 %v349
    %v1942 = vunpack.c.l.b16 %v350
    %v1943 = vunpack.c.h.b16 %v350
    %v1944 = vunpack.c.l.b16 %v351
    %v1945 = vunpack.c.h.b16 %v351
    %v1946 = vunpack.c.l.b16 %v352
    %v1947 = vunpack.c.h.b16 %v352
    %v1948 = vunpack.c.l.b16 %v353
    %v1949 = vunpack.c.h.b16 %v353
    %v1950 = vunpack.c.l.b16 %v354
    %v1951 = vunpack.c.h.b16 %v354
    %v1952 = vunpack.c.l.b16 %v355
    %v1953 = vunpack.c.h.b16 %v355
    %v1954 = vunpack.c.l.b16 %v356
    %v1955 = vunpack.c.h.b16 %v356
    %v1956 = vunpack.c.l.b16 %v357
    %v1957 = vunpack.c.h.b16 %v357
    %v1958 = vunpack.c.l.b16 %v358
    %v1959 = vunpack.c.h.b16 %v358
    %v1960 = vunpack.c.l.b16 %v359
    %v1961 = vunpack.c.h.b16 %v359
    %v1962 = vunpack.c.l.b16 %v360
    %v1963 = vunpack.c.h.b16 %v360
    %v1964 = vunpack.c.l.b16 %v361
    %v1965 = vunpack.c.h.b16 %v361
    %v1966 = vunpack.c.l.b16 %v362
    %v1967 = vunpack.c.h.b16 %v362
    %v1968 = vunpack.c.l.b16 %v363
    %v1969 = vunpack.c.h.b16 %v363
    %v1970 = vunpack.c.l.b16 %v364
    %v1971 = vunpack.c.h.b16 %v364
    %v1972 = vunpack.c.l.b16 %v365
    %v1973 = vunpack.c.h.b16 %v365
    %v1974 = vunpack.c.l.b16 %v366
    %v1975 = vunpack.c.h.b16 %v366
    %v1976 = vunpack.c.l.b16 %v367
    %v1977 = vunpack.c.h.b16 %v367
    %v1978 = vunpack.c.l.b16 %v368
    %v1979 = vunpack.c.h.b16 %v368
    %v1980 = vunpack.c.l.b16 %v369
    %v1981 = vunpack.c.h.b16 %v369
    %v1982 = vunpack.c.l.b16 %v370
    %v1983 = vunpack.c.h.b16 %v370
    %v1984 = vunpack.c.l.b16 %v371
    %v1985 = vunpack.c.h.b16 %v371
    %v1986 = vunpack.c.l.b16 %v372
    %v1987 = vunpack.c.h.b16 %v372
    %v1988 = vunpack.c.l.b16 %v373
    %v1989 = vunpack.c.h.b16 %v373
    %v1990 = vunpack.c.l.b16 %v374
    %v1991 = vunpack.c.h.b16 %v374
    %v1992 = vunpack.c.l.b16 %v375
    %v1993 = vunpack.c.h.b16 %v375
    %v1994 = vunpack.c.l.b16 %v376
    %v1995 = vunpack.c.h.b16 %v376
    %v1996 = vunpack.c.l.b16 %v377
    %v1997 = vunpack.c.h.b16 %v377
    %v1998 = vunpack.c.l.b16 %v378
    %v1999 = vunpack.c.h.b16 %v378
    %v2000 = vunpack.c.l.b16 %v379
    %v2001 = vunpack.c.h.b16 %v379
    %v2002 = vunpack.c.l.b16 %v380
    %v2003 = vunpack.c.h.b16 %v380
    %v2004 = vunpack.c.l.b16 %v381
    %v2005 = vunpack.c.h.b16 %v381
    %v2006 = vunpack.c.l.b16 %v382
    %v2007 = vunpack.c.h.b16 %v382
    %v2008 = vunpack.c.l.b16 %v383
    %v2009 = vunpack.c.h.b16 %v383
    %v2010 = vunpack.c.l.b16 %v384
    %v2011 = vunpack.c.h.b16 %v384
    %v2012 = vunpack.c.l.b16 %v385
    %v2013 = vunpack.c.h.b16 %v385
    %v2014 = vunpack.c.l.b16 %v386
    %v2015 = vunpack.c.h.b16 %v386
    %v2016 = vunpack.c.l.b16 %v387
    %v2017 = vunpack.c.h.b16 %v387
    %v2018 = vunpack.c.l.b16 %v388
    %v2019 = vunpack.c.h.b16 %v388
    %v2020 = vunpack.c.l.b16 %v389
    %v2021 = vunpack.c.h.b16 %v389
    %v2022 = vunpack.c.l.b16 %v390
    %v2023 = vunpack.c.h.b16 %v390
    %v2024 = vunpack.c.l.b16 %v391
    %v2025 = vunpack.c.h.b16 %v391
    %v2026 = vunpack.c.l.b16 %v392
    %v2027 = vunpack.c.h.b16 %v392
    %v2028 = vunpack.c.l.b16 %v393
    %v2029 = vunpack.c.h.b16 %v393
    %v2030 = vunpack.c.l.b16 %v394
    %v2031 = vunpack.c.h.b16 %v394
    %v2032 = vunpack.c.l.b16 %v395
    %v2033 = vunpack.c.h.b16 %v395
    %v2034 = vunpack.c.l.b16 %v396
    %v2035 = vunpack.c.h.b16 %v396
    %v2036 = vunpack.c.l.b16 %v397
    %v2037 = vunpack.c.h.b16 %v397
    %v2038 = vunpack.c.l.b16 %v398
    %v2039 = vunpack.c.h.b16 %v398
    %v2040 = vunpack.c.l.b16 %v399
    %v2041 = vunpack.c.h.b16 %v399
    %v2042 = vunpack.c.l.b16 %v400
    %v2043 = vunpack.c.h.b16 %v400
    %v2044 = vunpack.c.l.b16 %v401
    %v2045 = vunpack.c.h.b16 %v401
    %v2046 = vunpack.c.l.b16 %v402
    %v2047 = vunpack.c.h.b16 %v402
    %v2048 = vunpack.c.l.b16 %v403
    %v2049 = vunpack.c.h.b16 %v403
    %v2050 = vunpack.c.l.b16 %v404
    %v2051 = vunpack.c.h.b16 %v404
    %v2052 = vunpack.c.l.b16 %v405
    %v2053 = vunpack.c.h.b16 %v405
    %v2054 = vunpack.c.l.b16 %v406
    %v2055 = vunpack.c.h.b16 %v406
    %v2056 = vunpack.c.l.b16 %v407
    %v2057 = vunpack.c.h.b16 %v407
    %v2058 = vunpack.c.l.b16 %v408
    %v2059 = vunpack.c.h.b16 %v408
    %v2060 = vunpack.c.l.b16 %v409
    %v2061 = vunpack.c.h.b16 %v409
    %v2062 = vunpack.c.l.b16 %v410
    %v2063 = vunpack.c.h.b16 %v410
    %v2064 = vunpack.c.l.b16 %v411
    %v2065 = vunpack.c.h.b16 %v411
    %v2066 = vunpack.c.l.b16 %v412
    %v2067 = vunpack.c.h.b16 %v412
    %v2068 = vunpack.c.l.b16 %v413
    %v2069 = vunpack.c.h.b16 %v413
    %v2070 = vunpack.c.l.b16 %v414
    %v2071 = vunpack.c.h.b16 %v414
    %v2072 = vunpack.c.l.b16 %v415
    %v2073 = vunpack.c.h.b16 %v415
    %v2074 = vunpack.c.l.b16 %v416
    %v2075 = vunpack.c.h.b16 %v416
    %v2076 = vunpack.c.l.b16 %v417
    %v2077 = vunpack.c.h.b16 %v417
    %v2078 = vunpack.c.l.b16 %v418
    %v2079 = vunpack.c.h.b16 %v418
    %v2080 = vunpack.c.l.b16 %v419
    %v2081 = vunpack.c.h.b16 %v419
    %v2082 = vunpack.c.l.b16 %v420
    %v2083 = vunpack.c.h.b16 %v420
    %v2084 = vunpack.c.l.b16 %v421
    %v2085 = vunpack.c.h.b16 %v421
    %v2086 = vunpack.c.l.b16 %v422
    %v2087 = vunpack.c.h.b16 %v422
    %v2088 = vunpack.c.l.b16 %v423
    %v2089 = vunpack.c.h.b16 %v423
    %v2090 = vunpack.c.l.b16 %v424
    %v2091 = vunpack.c.h.b16 %v424
    %v2092 = vunpack.c.l.b16 %v425
    %v2093 = vunpack.c.h.b16 %v425
    %v2094 = vunpack.c.l.b16 %v426
    %v2095 = vunpack.c.h.b16 %v426
    %v2096 = vunpack.c.l.b16 %v427
    %v2097 = vunpack.c.h.b16 %v427
    %v2098 = vunpack.c.l.b16 %v428
    %v2099 = vunpack.c.h.b16 %v428
    %v2100 = vunpack.c.l.b16 %v429
    %v2101 = vunpack.c.h.b16 %v429
    %v2102 = vunpack.c.l.b16 %v430
    %v2103 = vunpack.c.h.b16 %v430
    %v2104 = vunpack.c.l.b16 %v431
    %v2105 = vunpack.c.h.b16 %v431
    %v2106 = vunpack.c.l.b16 %v432
    %v2107 = vunpack.c.h.b16 %v432
    %v2108 = vunpack.c.l.b16 %v433
    %v2109 = vunpack.c.h.b16 %v433
    %v2110 = vunpack.c.l.b16 %v434
    %v2111 = vunpack.c.h.b16 %v434
    %v2112 = vunpack.c.l.b16 %v435
    %v2113 = vunpack.c.h.b16 %v435
    %v2114 = vunpack.c.l.b16 %v436
    %v2115 = vunpack.c.h.b16 %v436
    %v2116 = vunpack.c.l.b16 %v437
    %v2117 = vunpack.c.h.b16 %v437
    %v2118 = vunpack.c.l.b16 %v438
    %v2119 = vunpack.c.h.b16 %v438
    %v2120 = vunpack.c.l.b16 %v439
    %v2121 = vunpack.c.h.b16 %v439
    %v2122 = vunpack.c.l.b16 %v440
    %v2123 = vunpack.c.h.b16 %v440
    %v2124 = vunpack.c.l.b16 %v441
    %v2125 = vunpack.c.h.b16 %v441
    %v2126 = vunpack.c.l.b16 %v442
    %v2127 = vunpack.c.h.b16 %v442
    %v2128 = vunpack.c.l.b16 %v443
    %v2129 = vunpack.c.h.b16 %v443
    %v2130 = vunpack.c.l.b16 %v444
    %v2131 = vunpack.c.h.b16 %v444
    %v2132 = vunpack.c.l.b16 %v445
    %v2133 = vunpack.c.h.b16 %v445
    %v2134 = vunpack.c.l.b16 %v446
    %v2135 = vunpack.c.h.b16 %v446
    %v2136 = vunpack.c.l.b16 %v447
    %v2137 = vunpack.c.h.b16 %v447
    %v2138 = vunpack.c.l.b16 %v448
    %v2139 = vunpack.c.h.b16 %v448
    %v2140 = vunpack.c.l.b16 %v449
    %v2141 = vunpack.c.h.b16 %v449
    %v2142 = vunpack.c.l.b16 %v450
    %v2143 = vunpack.c.h.b16 %v450
    %v2144 = vunpack.c.l.b16 %v451
    %v2145 = vunpack.c.h.b16 %v451
    %v2146 = vunpack.c.l.b16 %v452
    %v2147 = vunpack.c.h.b16 %v452
    %v2148 = vunpack.c.l.b16 %v453
    %v2149 = vunpack.c.h.b16 %v453
    %v2150 = vunpack.c.l.b16 %v454
    %v2151 = vunpack.c.h.b16 %v454
    %v2152 = vunpack.c.l.b16 %v455
    %v2153 = vunpack.c.h.b16 %v455
    %v2154 = vunpack.c.l.b16 %v456
    %v2155 = vunpack.c.h.b16 %v456
    %v2156 = vunpack.c.l.b16 %v457
    %v2157 = vunpack.c.h.b16 %v457
    %v2158 = vunpack.c.l.b16 %v458
    %v2159 = vunpack.c.h.b16 %v458
    %v2160 = vunpack.c.l.b16 %v459
    %v2161 = vunpack.c.h.b16 %v459
    %v2162 = vunpack.c.l.b16 %v460
    %v2163 = vunpack.c.h.b16 %v460
    %v2164 = vunpack.c.l.b16 %v461
    %v2165 = vunpack.c.h.b16 %v461
    %v2166 = vunpack.c.l.b16 %v462
    %v2167 = vunpack.c.h.b16 %v462
    %v2168 = vunpack.c.l.b16 %v463
    %v2169 = vunpack.c.h.b16 %v463
    %v2170 = vunpack.c.l.b16 %v464
    %v2171 = vunpack.c.h.b16 %v464
    %v2172 = vunpack.c.l.b16 %v465
    %v2173 = vunpack.c.h.b16 %v465
    %v2174 = vunpack.c.l.b16 %v466
    %v2175 = vunpack.c.h.b16 %v466
    %v2176 = vunpack.c.l.b16 %v467
    %v2177 = vunpack.c.h.b16 %v467
    %v2178 = vunpack.c.l.b16 %v468
    %v2179 = vunpack.c.h.b16 %v468
    %v2180 = vunpack.c.l.b16 %v469
    %v2181 = vunpack.c.h.b16 %v469
    %v2182 = vunpack.c.l.b16 %v470
    %v2183 = vunpack.c.h.b16 %v470
    %v2184 = vunpack.c.l.b16 %v471
    %v2185 = vunpack.c.h.b16 %v471
    %v2186 = vunpack.c.l.b16 %v472
    %v2187 = vunpack.c.h.b16 %v472
    %v2188 = vunpack.c.l.b16 %v473
    %v2189 = vunpack.c.h.b16 %v473
    %v2190 = vunpack.c.l.b16 %v474
    %v2191 = vunpack.c.h.b16 %v474
    %v2192 = vunpack.c.l.b16 %v475
    %v2193 = vunpack.c.h.b16 %v475
    %v2194 = vunpack.c.l.b16 %v476
    %v2195 = vunpack.c.h.b16 %v476
    %v2196 = vunpack.c.l.b16 %v477
    %v2197 = vunpack.c.h.b16 %v477
    %v2198 = vunpack.c.l.b16 %v478
    %v2199 = vunpack.c.h.b16 %v478
    %v2200 = vunpack.c.l.b16 %v479
    %v2201 = vunpack.c.h.b16 %v479
    %v2202 = vunpack.c.l.b16 %v480
    %v2203 = vunpack.c.h.b16 %v480
    %v2204 = vunpack.c.l.b16 %v481
    %v2205 = vunpack.c.h.b16 %v481
    %v2206 = vunpack.c.l.b16 %v482
    %v2207 = vunpack.c.h.b16 %v482
    %v2208 = vunpack.c.l.b16 %v483
    %v2209 = vunpack.c.h.b16 %v483
    %v2210 = vunpack.c.l.b16 %v484
    %v2211 = vunpack.c.h.b16 %v484
    %v2212 = vunpack.c.l.b16 %v485
    %v2213 = vunpack.c.h.b16 %v485
    %v2214 = vunpack.c.l.b16 %v486
    %v2215 = vunpack.c.h.b16 %v486
    %v2216 = vunpack.c.l.b16 %v487
    %v2217 = vunpack.c.h.b16 %v487
    %v2218 = vunpack.c.l.b16 %v488
    %v2219 = vunpack.c.h.b16 %v488
    %v2220 = vunpack.c.l.b16 %v489
    %v2221 = vunpack.c.h.b16 %v489
    %v2222 = vunpack.c.l.b16 %v490
    %v2223 = vunpack.c.h.b16 %v490
    %v2224 = vunpack.c.l.b16 %v491
    %v2225 = vunpack.c.h.b16 %v491
    %v2226 = vunpack.c.l.b16 %v492
    %v2227 = vunpack.c.h.b16 %v492
    %v2228 = vunpack.c.l.b16 %v493
    %v2229 = vunpack.c.h.b16 %v493
    %v2230 = vunpack.c.l.b16 %v494
    %v2231 = vunpack.c.h.b16 %v494
    %v2232 = vunpack.c.l.b16 %v495
    %v2233 = vunpack.c.h.b16 %v495
    %v2234 = vunpack.c.l.b16 %v496
    %v2235 = vunpack.c.h.b16 %v496
    %v2236 = vunpack.c.l.b16 %v497
    %v2237 = vunpack.c.h.b16 %v497
    %v2238 = vunpack.c.l.b16 %v498
    %v2239 = vunpack.c.h.b16 %v498
    %v2240 = vunpack.c.l.b16 %v499
    %v2241 = vunpack.c.h.b16 %v499
    %v2242 = vunpack.c.l.b16 %v500
    %v2243 = vunpack.c.h.b16 %v500
    %v2244 = vunpack.c.l.b16 %v501
    %v2245 = vunpack.c.h.b16 %v501
    %v2246 = vunpack.c.l.b16 %v502
    %v2247 = vunpack.c.h.b16 %v502
    %v2248 = vunpack.c.l.b16 %v503
    %v2249 = vunpack.c.h.b16 %v503
    %v2250 = vunpack.c.l.b16 %v504
    %v2251 = vunpack.c.h.b16 %v504
    %v2252 = vunpack.c.l.b16 %v505
    %v2253 = vunpack.c.h.b16 %v505
    %v2254 = vunpack.c.l.b16 %v506
    %v2255 = vunpack.c.h.b16 %v506
    %v2256 = vunpack.c.l.b16 %v507
    %v2257 = vunpack.c.h.b16 %v507
    %v2258 = vunpack.c.l.b16 %v508
    %v2259 = vunpack.c.h.b16 %v508
    %v2260 = vunpack.c.l.b16 %v509
    %v2261 = vunpack.c.h.b16 %v509
    %v2262 = vunpack.c.l.b16 %v510
    %v2263 = vunpack.c.h.b16 %v510
    %v2264 = vunpack.c.l.b16 %v511
    %v2265 = vunpack.c.h.b16 %v511
    %v2266 = vunpack.c.l.b16 %v512
    %v2267 = vunpack.c.h.b16 %v512
    %v2268 = vunpack.c.l.b16 %v513
    %v2269 = vunpack.c.h.b16 %v513
    %v2270 = vunpack.c.l.b16 %v514
    %v2271 = vunpack.c.h.b16 %v514
    %v2272 = vunpack.c.l.b16 %v515
    %v2273 = vunpack.c.h.b16 %v515
    %v2274 = vunpack.c.l.b16 %v516
    %v2275 = vunpack.c.h.b16 %v516
    %v2276 = vunpack.c.l.b16 %v517
    %v2277 = vunpack.c.h.b16 %v517
    %v2278 = vunpack.c.l.b16 %v518
    %v2279 = vunpack.c.h.b16 %v518
    %v2280 = vunpack.c.l.b16 %v519
    %v2281 = vunpack.c.h.b16 %v519
    %v2282 = vunpack.c.l.b16 %v520
    %v2283 = vunpack.c.h.b16 %v520
    %v2284 = vunpack.c.l.b16 %v521
    %v2285 = vunpack.c.h.b16 %v521
    %v2286 = vunpack.c.l.b16 %v522
    %v2287 = vunpack.c.h.b16 %v522
    %v2288 = vunpack.c.l.b16 %v523
    %v2289 = vunpack.c.h.b16 %v523
    %v2290 = vunpack.c.l.b16 %v524
    %v2291 = vunpack.c.h.b16 %v524
    %v2292 = vunpack.c.l.b16 %v525
    %v2293 = vunpack.c.h.b16 %v525
    %v2294 = vunpack.c.l.b16 %v526
    %v2295 = vunpack.c.h.b16 %v526
    %v2296 = vunpack.c.l.b16 %v527
    %v2297 = vunpack.c.h.b16 %v527
    %v2298 = vunpack.c.l.b16 %v528
    %v2299 = vunpack.c.h.b16 %v528
    %v2300 = vunpack.c.l.b16 %v529
    %v2301 = vunpack.c.h.b16 %v529
    %v2302 = vunpack.c.l.b16 %v530
    %v2303 = vunpack.c.h.b16 %v530
    %v2304 = vunpack.c.l.b16 %v531
    %v2305 = vunpack.c.h.b16 %v531
    %v2306 = vunpack.c.l.b16 %v532
    %v2307 = vunpack.c.h.b16 %v532
    %v2308 = vunpack.c.l.b16 %v533
    %v2309 = vunpack.c.h.b16 %v533
    %v2310 = vunpack.c.l.b16 %v534
    %v2311 = vunpack.c.h.b16 %v534
    %v2312 = vunpack.c.l.b16 %v535
    %v2313 = vunpack.c.h.b16 %v535
    %v2314 = vunpack.c.l.b16 %v536
    %v2315 = vunpack.c.h.b16 %v536
    %v2316 = vunpack.c.l.b16 %v537
    %v2317 = vunpack.c.h.b16 %v537
    %v2318 = vpack.c.b16 %v1296, %v1294
    %v2319 = vpack.c.b16 %v1297, %v1295
    %v2320 = vpack.c.b16 %v1300, %v1298
    %v2321 = vpack.c.b16 %v1301, %v1299
    %v2322 = vpack.c.b16 %v1304, %v1302
    %v2323 = vpack.c.b16 %v1305, %v1303
    %v2324 = vpack.c.b16 %v1308, %v1306
    %v2325 = vpack.c.b16 %v1309, %v1307
    %v2326 = vpack.c.b16 %v1312, %v1310
    %v2327 = vpack.c.b16 %v1313, %v1311
    %v2328 = vpack.c.b16 %v1316, %v1314
    %v2329 = vpack.c.b16 %v1317, %v1315
    %v2330 = vpack.c.b16 %v1320, %v1318
    %v2331 = vpack.c.b16 %v1321, %v1319
    %v2332 = vpack.c.b16 %v1324, %v1322
    %v2333 = vpack.c.b16 %v1325, %v1323
    %v2334 = vpack.c.b16 %v1328, %v1326
    %v2335 = vpack.c.b16 %v1329, %v1327
    %v2336 = vpack.c.b16 %v1332, %v1330
    %v2337 = vpack.c.b16 %v1333, %v1331
    %v2338 = vpack.c.b16 %v1336, %v1334
    %v2339 = vpack.c.b16 %v1337, %v1335
    %v2340 = vpack.c.b16 %v1340, %v1338
    %v2341 = vpack.c.b16 %v1341, %v1339
    %v2342 = vpack.c.b16 %v1344, %v1342
    %v2343 = vpack.c.b16 %v1345, %v1343
    %v2344 = vpack.c.b16 %v1348, %v1346
    %v2345 = vpack.c.b16 %v1349, %v1347
    %v2346 = vpack.c.b16 %v1352, %v1350
    %v2347 = vpack.c.b16 %v1353, %v1351
    %v2348 = vpack.c.b16 %v1356, %v1354
    %v2349 = vpack.c.b16 %v1357, %v1355
    %v2350 = vpack.c.b16 %v1360, %v1358
    %v2351 = vpack.c.b16 %v1361, %v1359
    %v2352 = vpack.c.b16 %v1364, %v1362
    %v2353 = vpack.c.b16 %v1365, %v1363
    %v2354 = vpack.c.b16 %v1368, %v1366
    %v2355 = vpack.c.b16 %v1369, %v1367
    %v2356 = vpack.c.b16 %v1372, %v1370
    %v2357 = vpack.c.b16 %v1373, %v1371
    %v2358 = vpack.c.b16 %v1376, %v1374
    %v2359 = vpack.c.b16 %v1377, %v1375
    %v2360 = vpack.c.b16 %v1380, %v1378
    %v2361 = vpack.c.b16 %v1381, %v1379
    %v2362 = vpack.c.b16 %v1384, %v1382
    %v2363 = vpack.c.b16 %v1385, %v1383
    %v2364 = vpack.c.b16 %v1388, %v1386
    %v2365 = vpack.c.b16 %v1389, %v1387
    %v2366 = vpack.c.b16 %v1392, %v1390
    %v2367 = vpack.c.b16 %v1393, %v1391
    %v2368 = vpack.c.b16 %v1396, %v1394
    %v2369 = vpack.c.b16 %v1397, %v1395
    %v2370 = vpack.c.b16 %v1400, %v1398
    %v2371 = vpack.c.b16 %v1401, %v1399
    %v2372 = vpack.c.b16 %v1404, %v1402
    %v2373 = vpack.c.b16 %v1405, %v1403
    %v2374 = vpack.c.b16 %v1408, %v1406
    %v2375 = vpack.c.b16 %v1409, %v1407
    %v2376 = vpack.c.b16 %v1412, %v1410
    %v2377 = vpack.c.b16 %v1413, %v1411
    %v2378 = vpack.c.b16 %v1416, %v1414
    %v2379 = vpack.c.b16 %v1417, %v1415
    %v2380 = vpack.c.b16 %v1420, %v1418
    %v2381 = vpack.c.b16 %v1421, %v1419
    %v2382 = vpack.c.b16 %v1424, %v1422
    %v2383 = vpack.c.b16 %v1425, %v1423
    %v2384 = vpack.c.b16 %v1428, %v1426
    %v2385 = vpack.c.b16 %v1429, %v1427
    %v2386 = vpack.c.b16 %v1432, %v1430
    %v2387 = vpack.c.b16 %v1433, %v1431
    %v2388 = vpack.c.b16 %v1436, %v1434
    %v2389 = vpack.c.b16 %v1437, %v1435
    %v2390 = vpack.c.b16 %v1440, %v1438
    %v2391 = vpack.c.b16 %v1441, %v1439
    %v2392 = vpack.c.b16 %v1444, %v1442
    %v2393 = vpack.c.b16 %v1445, %v1443
    %v2394 = vpack.c.b16 %v1448, %v1446
    %v2395 = vpack.c.b16 %v1449, %v1447
    %v2396 = vpack.c.b16 %v1452, %v1450
    %v2397 = vpack.c.b16 %v1453, %v1451
    %v2398 = vpack.c.b16 %v1456, %v1454
    %v2399 = vpack.c.b16 %v1457, %v1455
    %v2400 = vpack.c.b16 %v1460, %v1458
    %v2401 = vpack.c.b16 %v1461, %v1459
    %v2402 = vpack.c.b16 %v1464, %v1462
    %v2403 = vpack.c.b16 %v1465, %v1463
    %v2404 = vpack.c.b16 %v1468, %v1466
    %v2405 = vpack.c.b16 %v1469, %v1467
    %v2406 = vpack.c.b16 %v1472, %v1470
    %v2407 = vpack.c.b16 %v1473, %v1471
    %v2408 = vpack.c.b16 %v1476, %v1474
    %v2409 = vpack.c.b16 %v1477, %v1475
    %v2410 = vpack.c.b16 %v1480, %v1478
    %v2411 = vpack.c.b16 %v1481, %v1479
    %v2412 = vpack.c.b16 %v1484, %v1482
    %v2413 = vpack.c.b16 %v1485, %v1483
    %v2414 = vpack.c.b16 %v1488, %v1486
    %v2415 = vpack.c.b16 %v1489, %v1487
    %v2416 = vpack.c.b16 %v1492, %v1490
    %v2417 = vpack.c.b16 %v1493, %v1491
    %v2418 = vpack.c.b16 %v1496, %v1494
    %v2419 = vpack.c.b16 %v1497, %v1495
    %v2420 = vpack.c.b16 %v1500, %v1498
    %v2421 = vpack.c.b16 %v1501, %v1499
    %v2422 = vpack.c.b16 %v1504, %v1502
    %v2423 = vpack.c.b16 %v1505, %v1503
    %v2424 = vpack.c.b16 %v1508, %v1506
    %v2425 = vpack.c.b16 %v1509, %v1507
    %v2426 = vpack.c.b16 %v1512, %v1510
    %v2427 = vpack.c.b16 %v1513, %v1511
    %v2428 = vpack.c.b16 %v1516, %v1514
    %v2429 = vpack.c.b16 %v1517, %v1515
    %v2430 = vpack.c.b16 %v1520, %v1518
    %v2431 = vpack.c.b16 %v1521, %v1519
    %v2432 = vpack.c.b16 %v1524, %v1522
    %v2433 = vpack.c.b16 %v1525, %v1523
    %v2434 = vpack.c.b16 %v1528, %v1526
    %v2435 = vpack.c.b16 %v1529, %v1527
    %v2436 = vpack.c.b16 %v1532, %v1530
    %v2437 = vpack.c.b16 %v1533, %v1531
    %v2438 = vpack.c.b16 %v1536, %v1534
    %v2439 = vpack.c.b16 %v1537, %v1535
    %v2440 = vpack.c.b16 %v1540, %v1538
    %v2441 = vpack.c.b16 %v1541, %v1539
    %v2442 = vpack.c.b16 %v1544, %v1542
    %v2443 = vpack.c.b16 %v1545, %v1543
    %v2444 = vpack.c.b16 %v1548, %v1546
    %v2445 = vpack.c.b16 %v1549, %v1547
    %v2446 = vpack.c.b16 %v1552, %v1550
    %v2447 = vpack.c.b16 %v1553, %v1551
    %v2448 = vpack.c.b16 %v1556, %v1554
    %v2449 = vpack.c.b16 %v1557, %v1555
    %v2450 = vpack.c.b16 %v1560, %v1558
    %v2451 = vpack.c.b16 %v1561, %v1559
    %v2452 = vpack.c.b16 %v1564, %v1562
    %v2453 = vpack.c.b16 %v1565, %v1563
    %v2454 = vpack.c.b16 %v1568, %v1566
    %v2455 = vpack.c.b16 %v1569, %v1567
    %v2456 = vpack.c.b16 %v1572, %v1570
    %v2457 = vpack.c.b16 %v1573, %v1571
    %v2458 = vpack.c.b16 %v1576, %v1574
    %v2459 = vpack.c.b16 %v1577, %v1575
    %v2460 = vpack.c.b16 %v1580, %v1578
    %v2461 = vpack.c.b16 %v1581, %v1579
    %v2462 = vpack.c.b16 %v1584, %v1582
    %v2463 = vpack.c.b16 %v1585, %v1583
    %v2464 = vpack.c.b16 %v1588, %v1586
    %v2465 = vpack.c.b16 %v1589, %v1587
    %v2466 = vpack.c.b16 %v1592, %v1590
    %v2467 = vpack.c.b16 %v1593, %v1591
    %v2468 = vpack.c.b16 %v1596, %v1594
    %v2469 = vpack.c.b16 %v1597, %v1595
    %v2470 = vpack.c.b16 %v1600, %v1598
    %v2471 = vpack.c.b16 %v1601, %v1599
    %v2472 = vpack.c.b16 %v1604, %v1602
    %v2473 = vpack.c.b16 %v1605, %v1603
    %v2474 = vpack.c.b16 %v1608, %v1606
    %v2475 = vpack.c.b16 %v1609, %v1607
    %v2476 = vpack.c.b16 %v1612, %v1610
    %v2477 = vpack.c.b16 %v1613, %v1611
    %v2478 = vpack.c.b16 %v1616, %v1614
    %v2479 = vpack.c.b16 %v1617, %v1615
    %v2480 = vpack.c.b16 %v1620, %v1618
    %v2481 = vpack.c.b16 %v1621, %v1619
    %v2482 = vpack.c.b16 %v1624, %v1622
    %v2483 = vpack.c.b16 %v1625, %v1623
    %v2484 = vpack.c.b16 %v1628, %v1626
    %v2485 = vpack.c.b16 %v1629, %v1627
    %v2486 = vpack.c.b16 %v1632, %v1630
    %v2487 = vpack.c.b16 %v1633, %v1631
    %v2488 = vpack.c.b16 %v1636, %v1634
    %v2489 = vpack.c.b16 %v1637, %v1635
    %v2490 = vpack.c.b16 %v1640, %v1638
    %v2491 = vpack.c.b16 %v1641, %v1639
    %v2492 = vpack.c.b16 %v1644, %v1642
    %v2493 = vpack.c.b16 %v1645, %v1643
    %v2494 = vpack.c.b16 %v1648, %v1646
    %v2495 = vpack.c.b16 %v1649, %v1647
    %v2496 = vpack.c.b16 %v1652, %v1650
    %v2497 = vpack.c.b16 %v1653, %v1651
    %v2498 = vpack.c.b16 %v1656, %v1654
    %v2499 = vpack.c.b16 %v1657, %v1655
    %v2500 = vpack.c.b16 %v1660, %v1658
    %v2501 = vpack.c.b16 %v1661, %v1659
    %v2502 = vpack.c.b16 %v1664, %v1662
    %v2503 = vpack.c.b16 %v1665, %v1663
    %v2504 = vpack.c.b16 %v1668, %v1666
    %v2505 = vpack.c.b16 %v1669, %v1667
    %v2506 = vpack.c.b16 %v1672, %v1670
    %v2507 = vpack.c.b16 %v1673, %v1671
    %v2508 = vpack.c.b16 %v1676, %v1674
    %v2509 = vpack.c.b16 %v1677, %v1675
    %v2510 = vpack.c.b16 %v1680, %v1678
    %v2511 = vpack.c.b16 %v1681, %v1679
    %v2512 = vpack.c.b16 %v1684, %v1682
    %v2513 = vpack.c.b16 %v1685, %v1683
    %v2514 = vpack.c.b16 %v1688, %v1686
    %v2515 = vpack.c.b16 %v1689, %v1687
    %v2516 = vpack.c.b16 %v1692, %v1690
    %v2517 = vpack.c.b16 %v1693, %v1691
    %v2518 = vpack.c.b16 %v1696, %v1694
    %v2519 = vpack.c.b16 %v1697, %v1695
    %v2520 = vpack.c.b16 %v1700, %v1698
    %v2521 = vpack.c.b16 %v1701, %v1699
    %v2522 = vpack.c.b16 %v1704, %v1702
    %v2523 = vpack.c.b16 %v1705, %v1703
    %v2524 = vpack.c.b16 %v1708, %v1706
    %v2525 = vpack.c.b16 %v1709, %v1707
    %v2526 = vpack.c.b16 %v1712, %v1710
    %v2527 = vpack.c.b16 %v1713, %v1711
    %v2528 = vpack.c.b16 %v1716, %v1714
    %v2529 = vpack.c.b16 %v1717, %v1715
    %v2530 = vpack.c.b16 %v1720, %v1718
    %v2531 = vpack.c.b16 %v1721, %v1719
    %v2532 = vpack.c.b16 %v1724, %v1722
    %v2533 = vpack.c.b16 %v1725, %v1723
    %v2534 = vpack.c.b16 %v1728, %v1726
    %v2535 = vpack.c.b16 %v1729, %v1727
    %v2536 = vpack.c.b16 %v1732, %v1730
    %v2537 = vpack.c.b16 %v1733, %v1731
    %v2538 = vpack.c.b16 %v1736, %v1734
    %v2539 = vpack.c.b16 %v1737, %v1735
    %v2540 = vpack.c.b16 %v1740, %v1738
    %v2541 = vpack.c.b16 %v1741, %v1739
    %v2542 = vpack.c.b16 %v1744, %v1742
    %v2543 = vpack.c.b16 %v1745, %v1743
    %v2544 = vpack.c.b16 %v1748, %v1746
    %v2545 = vpack.c.b16 %v1749, %v1747
    %v2546 = vpack.c.b16 %v1752, %v1750
    %v2547 = vpack.c.b16 %v1753, %v1751
    %v2548 = vpack.c.b16 %v1756, %v1754
    %v2549 = vpack.c.b16 %v1757, %v1755
    %v2550 = vpack.c.b16 %v1760, %v1758
    %v2551 = vpack.c.b16 %v1761, %v1759
    %v2552 = vpack.c.b16 %v1764, %v1762
    %v2553 = vpack.c.b16 %v1765, %v1763
    %v2554 = vpack.c.b16 %v1768, %v1766
    %v2555 = vpack.c.b16 %v1769, %v1767
    %v2556 = vpack.c.b16 %v1772, %v1770
    %v2557 = vpack.c.b16 %v1773, %v1771
    %v2558 = vpack.c.b16 %v1776, %v1774
    %v2559 = vpack.c.b16 %v1777, %v1775
    %v2560 = vpack.c.b16 %v1780, %v1778
    %v2561 = vpack.c.b16 %v1781, %v1779
    %v2562 = vpack.c.b16 %v1784, %v1782
    %v2563 = vpack.c.b16 %v1785, %v1783
    %v2564 = vpack.c.b16 %v1788, %v1786
    %v2565 = vpack.c.b16 %v1789, %v1787
    %v2566 = vpack.c.b16 %v1792, %v1790
    %v2567 = vpack.c.b16 %v1793, %v1791
    %v2568 = vpack.c.b16 %v1796, %v1794
    %v2569 = vpack.c.b16 %v1797, %v1795
    %v2570 = vpack.c.b16 %v1800, %v1798
    %v2571 = vpack.c.b16 %v1801, %v1799
    %v2572 = vpack.c.b16 %v1804, %v1802
    %v2573 = vpack.c.b16 %v1805, %v1803
    %v2574 = vpack.c.b16 %v1808, %v1806
    %v2575 = vpack.c.b16 %v1809, %v1807
    %v2576 = vpack.c.b16 %v1812, %v1810
    %v2577 = vpack.c.b16 %v1813, %v1811
    %v2578 = vpack.c.b16 %v1816, %v1814
    %v2579 = vpack.c.b16 %v1817, %v1815
    %v2580 = vpack.c.b16 %v1820, %v1818
    %v2581 = vpack.c.b16 %v1821, %v1819
    %v2582 = vpack.c.b16 %v1824, %v1822
    %v2583 = vpack.c.b16 %v1825, %v1823
    %v2584 = vpack.c.b16 %v1828, %v1826
    %v2585 = vpack.c.b16 %v1829, %v1827
    %v2586 = vpack.c.b16 %v1832, %v1830
    %v2587 = vpack.c.b16 %v1833, %v1831
    %v2588 = vpack.c.b16 %v1836, %v1834
    %v2589 = vpack.c.b16 %v1837, %v1835
    %v2590 = vpack.c.b16 %v1840, %v1838
    %v2591 = vpack.c.b16 %v1841, %v1839
    %v2592 = vpack.c.b16 %v1844, %v1842
    %v2593 = vpack.c.b16 %v1845, %v1843
    %v2594 = vpack.c.b16 %v1848, %v1846
    %v2595 = vpack.c.b16 %v1849, %v1847
    %v2596 = vpack.c.b16 %v1852, %v1850
    %v2597 = vpack.c.b16 %v1853, %v1851
    %v2598 = vpack.c.b16 %v1856, %v1854
    %v2599 = vpack.c.b16 %v1857, %v1855
    %v2600 = vpack.c.b16 %v1860, %v1858
    %v2601 = vpack.c.b16 %v1861, %v1859
    %v2602 = vpack.c.b16 %v1864, %v1862
    %v2603 = vpack.c.b16 %v1865, %v1863
    %v2604 = vpack.c.b16 %v1868, %v1866
    %v2605 = vpack.c.b16 %v1869, %v1867
    %v2606 = vpack.c.b16 %v1872, %v1870
    %v2607 = vpack.c.b16 %v1873, %v1871
    %v2608 = vpack.c.b16 %v1876, %v1874
    %v2609 = vpack.c.b16 %v1877, %v1875
    %v2610 = vpack.c.b16 %v1880, %v1878
    %v2611 = vpack.c.b16 %v1881, %v1879
    %v2612 = vpack.c.b16 %v1884, %v1882
    %v2613 = vpack.c.b16 %v1885, %v1883
    %v2614 = vpack.c.b16 %v1888, %v1886
    %v2615 = vpack.c.b16 %v1889, %v1887
    %v2616 = vpack.c.b16 %v1892, %v1890
    %v2617 = vpack.c.b16 %v1893, %v1891
    %v2618 = vpack.c.b16 %v1896, %v1894
    %v2619 = vpack.c.b16 %v1897, %v1895
    %v2620 = vpack.c.b16 %v1900, %v1898
    %v2621 = vpack.c.b16 %v1901, %v1899
    %v2622 = vpack.c.b16 %v1904, %v1902
    %v2623 = vpack.c.b16 %v1905, %v1903
    %v2624 = vpack.c.b16 %v1908, %v1906
    %v2625 = vpack.c.b16 %v1909, %v1907
    %v2626 = vpack.c.b16 %v1912, %v1910
    %v2627 = vpack.c.b16 %v1913, %v1911
    %v2628 = vpack.c.b16 %v1916, %v1914
    %v2629 = vpack.c.b16 %v1917, %v1915
    %v2630 = vpack.c.b16 %v1920, %v1918
    %v2631 = vpack.c.b16 %v1921, %v1919
    %v2632 = vpack.c.b16 %v1924, %v1922
    %v2633 = vpack.c.b16 %v1925, %v1923
    %v2634 = vpack.c.b16 %v1928, %v1926
    %v2635 = vpack.c.b16 %v1929, %v1927
    %v2636 = vpack.c.b16 %v1932, %v1930
    %v2637 = vpack.c.b16 %v1933, %v1931
    %v2638 = vpack.c.b16 %v1936, %v1934
    %v2639 = vpack.c.b16 %v1937, %v1935
    %v2640 = vpack.c.b16 %v1940, %v1938
    %v2641 = vpack.c.b16 %v1941, %v1939
    %v2642 = vpack.c.b16 %v1944, %v1942
    %v2643 = vpack.c.b16 %v1945, %v1943
    %v2644 = vpack.c.b16 %v1948, %v1946
    %v2645 = vpack.c.b16 %v1949, %v1947
    %v2646 = vpack.c.b16 %v1952, %v1950
    %v2647 = vpack.c.b16 %v1953, %v1951
    %v2648 = vpack.c.b16 %v1956, %v1954
    %v2649 = vpack.c.b16 %v1957, %v1955
    %v2650 = vpack.c.b16 %v1960, %v1958
    %v2651 = vpack.c.b16 %v1961, %v1959
    %v2652 = vpack.c.b16 %v1964, %v1962
    %v2653 = vpack.c.b16 %v1965, %v1963
    %v2654 = vpack.c.b16 %v1968, %v1966
    %v2655 = vpack.c.b16 %v1969, %v1967
    %v2656 = vpack.c.b16 %v1972, %v1970
    %v2657 = vpack.c.b16 %v1973, %v1971
    %v2658 = vpack.c.b16 %v1976, %v1974
    %v2659 = vpack.c.b16 %v1977, %v1975
    %v2660 = vpack.c.b16 %v1980, %v1978
    %v2661 = vpack.c.b16 %v1981, %v1979
    %v2662 = vpack.c.b16 %v1984, %v1982
    %v2663 = vpack.c.b16 %v1985, %v1983
    %v2664 = vpack.c.b16 %v1988, %v1986
    %v2665 = vpack.c.b16 %v1989, %v1987
    %v2666 = vpack.c.b16 %v1992, %v1990
    %v2667 = vpack.c.b16 %v1993, %v1991
    %v2668 = vpack.c.b16 %v1996, %v1994
    %v2669 = vpack.c.b16 %v1997, %v1995
    %v2670 = vpack.c.b16 %v2000, %v1998
    %v2671 = vpack.c.b16 %v2001, %v1999
    %v2672 = vpack.c.b16 %v2004, %v2002
    %v2673 = vpack.c.b16 %v2005, %v2003
    %v2674 = vpack.c.b16 %v2008, %v2006
    %v2675 = vpack.c.b16 %v2009, %v2007
    %v2676 = vpack.c.b16 %v2012, %v2010
    %v2677 = vpack.c.b16 %v2013, %v2011
    %v2678 = vpack.c.b16 %v2016, %v2014
    %v2679 = vpack.c.b16 %v2017, %v2015
    %v2680 = vpack.c.b16 %v2020, %v2018
    %v2681 = vpack.c.b16 %v2021, %v2019
    %v2682 = vpack.c.b16 %v2024, %v2022
    %v2683 = vpack.c.b16 %v2025, %v2023
    %v2684 = vpack.c.b16 %v2028, %v2026
    %v2685 = vpack.c.b16 %v2029, %v2027
    %v2686 = vpack.c.b16 %v2032, %v2030
    %v2687 = vpack.c.b16 %v2033, %v2031
    %v2688 = vpack.c.b16 %v2036, %v2034
    %v2689 = vpack.c.b16 %v2037, %v2035
    %v2690 = vpack.c.b16 %v2040, %v2038
    %v2691 = vpack.c.b16 %v2041, %v2039
    %v2692 = vpack.c.b16 %v2044, %v2042
    %v2693 = vpack.c.b16 %v2045, %v2043
    %v2694 = vpack.c.b16 %v2048, %v2046
    %v2695 = vpack.c.b16 %v2049, %v2047
    %v2696 = vpack.c.b16 %v2052, %v2050
    %v2697 = vpack.c.b16 %v2053, %v2051
    %v2698 = vpack.c.b16 %v2056, %v2054
    %v2699 = vpack.c.b16 %v2057, %v2055
    %v2700 = vpack.c.b16 %v2060, %v2058
    %v2701 = vpack.c.b16 %v2061, %v2059
    %v2702 = vpack.c.b16 %v2064, %v2062
    %v2703 = vpack.c.b16 %v2065, %v2063
    %v2704 = vpack.c.b16 %v2068, %v2066
    %v2705 = vpack.c.b16 %v2069, %v2067
    %v2706 = vpack.c.b16 %v2072, %v2070
    %v2707 = vpack.c.b16 %v2073, %v2071
    %v2708 = vpack.c.b16 %v2076, %v2074
    %v2709 = vpack.c.b16 %v2077, %v2075
    %v2710 = vpack.c.b16 %v2080, %v2078
    %v2711 = vpack.c.b16 %v2081, %v2079
    %v2712 = vpack.c.b16 %v2084, %v2082
    %v2713 = vpack.c.b16 %v2085, %v2083
    %v2714 = vpack.c.b16 %v2088, %v2086
    %v2715 = vpack.c.b16 %v2089, %v2087
    %v2716 = vpack.c.b16 %v2092, %v2090
    %v2717 = vpack.c.b16 %v2093, %v2091
    %v2718 = vpack.c.b16 %v2096, %v2094
    %v2719 = vpack.c.b16 %v2097, %v2095
    %v2720 = vpack.c.b16 %v2100, %v2098
    %v2721 = vpack.c.b16 %v2101, %v2099
    %v2722 = vpack.c.b16 %v2104, %v2102
    %v2723 = vpack.c.b16 %v2105, %v2103
    %v2724 = vpack.c.b16 %v2108, %v2106
    %v2725 = vpack.c.b16 %v2109, %v2107
    %v2726 = vpack.c.b16 %v2112, %v2110
    %v2727 = vpack.c.b16 %v2113, %v2111
    %v2728 = vpack.c.b16 %v2116, %v2114
    %v2729 = vpack.c.b16 %v2117, %v2115
    %v2730 = vpack.c.b16 %v2120, %v2118
    %v2731 = vpack.c.b16 %v2121, %v2119
    %v2732 = vpack.c.b16 %v2124, %v2122
    %v2733 = vpack.c.b16 %v2125, %v2123
    %v2734 = vpack.c.b16 %v2128, %v2126
    %v2735 = vpack.c.b16 %v2129, %v2127
    %v2736 = vpack.c.b16 %v2132, %v2130
    %v2737 = vpack.c.b16 %v2133, %v2131
    %v2738 = vpack.c.b16 %v2136, %v2134
    %v2739 = vpack.c.b16 %v2137, %v2135
    %v2740 = vpack.c.b16 %v2140, %v2138
    %v2741 = vpack.c.b16 %v2141, %v2139
    %v2742 = vpack.c.b16 %v2144, %v2142
    %v2743 = vpack.c.b16 %v2145, %v2143
    %v2744 = vpack.c.b16 %v2148, %v2146
    %v2745 = vpack.c.b16 %v2149, %v2147
    %v2746 = vpack.c.b16 %v2152, %v2150
    %v2747 = vpack.c.b16 %v2153, %v2151
    %v2748 = vpack.c.b16 %v2156, %v2154
    %v2749 = vpack.c.b16 %v2157, %v2155
    %v2750 = vpack.c.b16 %v2160, %v2158
    %v2751 = vpack.c.b16 %v2161, %v2159
    %v2752 = vpack.c.b16 %v2164, %v2162
    %v2753 = vpack.c.b16 %v2165, %v2163
    %v2754 = vpack.c.b16 %v2168, %v2166
    %v2755 = vpack.c.b16 %v2169, %v2167
    %v2756 = vpack.c.b16 %v2172, %v2170
    %v2757 = vpack.c.b16 %v2173, %v2171
    %v2758 = vpack.c.b16 %v2176, %v2174
    %v2759 = vpack.c.b16 %v2177, %v2175
    %v2760 = vpack.c.b16 %v2180, %v2178
    %v2761 = vpack.c.b16 %v2181, %v2179
    %v2762 = vpack.c.b16 %v2184, %v2182
    %v2763 = vpack.c.b16 %v2185, %v2183
    %v2764 = vpack.c.b16 %v2188, %v2186
    %v2765 = vpack.c.b16 %v2189, %v2187
    %v2766 = vpack.c.b16 %v2192, %v2190
    %v2767 = vpack.c.b16 %v2193, %v2191
    %v2768 = vpack.c.b16 %v2196, %v2194
    %v2769 = vpack.c.b16 %v2197, %v2195
    %v2770 = vpack.c.b16 %v2200, %v2198
    %v2771 = vpack.c.b16 %v2201, %v2199
    %v2772 = vpack.c.b16 %v2204, %v2202
    %v2773 = vpack.c.b16 %v2205, %v2203
    %v2774 = vpack.c.b16 %v2208, %v2206
    %v2775 = vpack.c.b16 %v2209, %v2207
    %v2776 = vpack.c.b16 %v2212, %v2210
    %v2777 = vpack.c.b16 %v2213, %v2211
    %v2778 = vpack.c.b16 %v2216, %v2214
    %v2779 = vpack.c.b16 %v2217, %v2215
    %v2780 = vpack.c.b16 %v2220, %v2218
    %v2781 = vpack.c.b16 %v2221, %v2219
    %v2782 = vpack.c.b16 %v2224, %v2222
    %v2783 = vpack.c.b16 %v2225, %v2223
    %v2784 = vpack.c.b16 %v2228, %v2226
    %v2785 = vpack.c.b16 %v2229, %v2227
    %v2786 = vpack.c.b16 %v2232, %v2230
    %v2787 = vpack.c.b16 %v2233, %v2231
    %v2788 = vpack.c.b16 %v2236, %v2234
    %v2789 = vpack.c.b16 %v2237, %v2235
    %v2790 = vpack.c.b16 %v2240, %v2238
    %v2791 = vpack.c.b16 %v2241, %v2239
    %v2792 = vpack.c.b16 %v2244, %v2242
    %v2793 = vpack.c.b16 %v2245, %v2243
    %v2794 = vpack.c.b16 %v2248, %v2246
    %v2795 = vpack.c.b16 %v2249, %v2247
    %v2796 = vpack.c.b16 %v2252, %v2250
    %v2797 = vpack.c.b16 %v2253, %v2251
    %v2798 = vpack.c.b16 %v2256, %v2254
    %v2799 = vpack.c.b16 %v2257, %v2255
    %v2800 = vpack.c.b16 %v2260, %v2258
    %v2801 = vpack.c.b16 %v2261, %v2259
    %v2802 = vpack.c.b16 %v2264, %v2262
    %v2803 = vpack.c.b16 %v2265, %v2263
    %v2804 = vpack.c.b16 %v2268, %v2266
    %v2805 = vpack.c.b16 %v2269, %v2267
    %v2806 = vpack.c.b16 %v2272, %v2270
    %v2807 = vpack.c.b16 %v2273, %v2271
    %v2808 = vpack.c.b16 %v2276, %v2274
    %v2809 = vpack.c.b16 %v2277, %v2275
    %v2810 = vpack.c.b16 %v2280, %v2278
    %v2811 = vpack.c.b16 %v2281, %v2279
    %v2812 = vpack.c.b16 %v2284, %v2282
    %v2813 = vpack.c.b16 %v2285, %v2283
    %v2814 = vpack.c.b16 %v2288, %v2286
    %v2815 = vpack.c.b16 %v2289, %v2287
    %v2816 = vpack.c.b16 %v2292, %v2290
    %v2817 = vpack.c.b16 %v2293, %v2291
    %v2818 = vpack.c.b16 %v2296, %v2294
    %v2819 = vpack.c.b16 %v2297, %v2295
    %v2820 = vpack.c.b16 %v2300, %v2298
    %v2821 = vpack.c.b16 %v2301, %v2299
    %v2822 = vpack.c.b16 %v2304, %v2302
    %v2823 = vpack.c.b16 %v2305, %v2303
    %v2824 = vpack.c.b16 %v2308, %v2306
    %v2825 = vpack.c.b16 %v2309, %v2307
    %v2826 = vpack.c.b16 %v2312, %v2310
    %v2827 = vpack.c.b16 %v2313, %v2311
    %v2828 = vpack.c.b16 %v2316, %v2314
    %v2829 = vpack.c.b16 %v2317, %v2315
    %3342 = vmatprep.subr.bf16.mxu0 %v2319
    %3343 = vmatpush1.bf16.msra.mxu0 %v2318
    %3344 = vmatprep.subr.bf16.mxu0 %v2321
    %3345 = vmatpush1.bf16.msra.mxu0 %v2320
    %3346 = vmatprep.subr.bf16.mxu0 %v2323
    %3347 = vmatpush1.bf16.msra.mxu0 %v2322
    %3348 = vmatprep.subr.bf16.mxu0 %v2325
    %3349 = vmatpush1.bf16.msra.mxu0 %v2324
    %3350 = vmatprep.subr.bf16.mxu0 %v2327
    %3351 = vmatpush1.bf16.msra.mxu0 %v2326
    %3352 = vmatprep.subr.bf16.mxu0 %v2329
    %3353 = vmatpush1.bf16.msra.mxu0 %v2328
    %3354 = vmatprep.subr.bf16.mxu0 %v2331
    %3355 = vmatpush1.bf16.msra.mxu0 %v2330
    %3356 = vmatprep.subr.bf16.mxu0 %v2333
    %3357 = vmatpush1.bf16.msra.mxu0 %v2332
    %3358 = vmatprep.subr.bf16.mxu0 %v2335
    %3359 = vmatpush1.bf16.msra.mxu0 %v2334
    %3360 = vmatprep.subr.bf16.mxu0 %v2337
    %3361 = vmatpush1.bf16.msra.mxu0 %v2336
    %3362 = vmatprep.subr.bf16.mxu0 %v2339
    %3363 = vmatpush1.bf16.msra.mxu0 %v2338
    %3364 = vmatprep.subr.bf16.mxu0 %v2341
    %3365 = vmatpush1.bf16.msra.mxu0 %v2340
    %3366 = vmatprep.subr.bf16.mxu0 %v2343
    %3367 = vmatpush1.bf16.msra.mxu0 %v2342
    %3368 = vmatprep.subr.bf16.mxu0 %v2345
    %3369 = vmatpush1.bf16.msra.mxu0 %v2344
    %3370 = vmatprep.subr.bf16.mxu0 %v2347
    %3371 = vmatpush1.bf16.msra.mxu0 %v2346
    %3372 = vmatprep.subr.bf16.mxu0 %v2349
    %3373 = vmatpush1.bf16.msra.mxu0 %v2348
    %3374 = vmatprep.mubr.bf16.mxu0 %v591
    %3375 = vmatmul.mubr.bf16.gmra.mrb[0].mxu0 %v577
    %v3376 = vpop.f32.mrb[0].mxu0
    %v3377 = vadd.f32 %v543, %v3376
    %v3378 = vpop.f32.mrb[0].mxu0
    %v3379 = vadd.f32 %v547, %v3378
    %v3380 = vpop.f32.mrb[0].mxu0
    %v3381 = vpop.f32.mrb[0].mxu0
    %3382 = vdwg.mxu0
    %3383 = vmatprep.subr.bf16.mxu0 %v2351
    %3384 = vmatpush1.bf16.msra.mxu0 %v2350
    %3385 = vmatprep.subr.bf16.mxu0 %v2353
    %3386 = vmatpush1.bf16.msra.mxu0 %v2352
    %3387 = vmatprep.subr.bf16.mxu0 %v2355
    %3388 = vmatpush1.bf16.msra.mxu0 %v2354
    %3389 = vmatprep.subr.bf16.mxu0 %v2357
    %3390 = vmatpush1.bf16.msra.mxu0 %v2356
    %3391 = vmatprep.subr.bf16.mxu0 %v2359
    %3392 = vmatpush1.bf16.msra.mxu0 %v2358
    %3393 = vmatprep.subr.bf16.mxu0 %v2361
    %3394 = vmatpush1.bf16.msra.mxu0 %v2360
    %3395 = vmatprep.subr.bf16.mxu0 %v2363
    %3396 = vmatpush1.bf16.msra.mxu0 %v2362
    %3397 = vmatprep.subr.bf16.mxu0 %v2365
    %3398 = vmatpush1.bf16.msra.mxu0 %v2364
    %3399 = vmatprep.subr.bf16.mxu0 %v2367
    %3400 = vmatpush1.bf16.msra.mxu0 %v2366
    %3401 = vmatprep.subr.bf16.mxu0 %v2369
    %3402 = vmatpush1.bf16.msra.mxu0 %v2368
    %3403 = vmatprep.subr.bf16.mxu0 %v2371
    %3404 = vmatpush1.bf16.msra.mxu0 %v2370
    %3405 = vmatprep.subr.bf16.mxu0 %v2373
    %3406 = vmatpush1.bf16.msra.mxu0 %v2372
    %3407 = vmatprep.subr.bf16.mxu0 %v2375
    %3408 = vmatpush1.bf16.msra.mxu0 %v2374
    %3409 = vmatprep.subr.bf16.mxu0 %v2377
    %3410 = vmatpush1.bf16.msra.mxu0 %v2376
    %3411 = vmatprep.subr.bf16.mxu0 %v2379
    %3412 = vmatpush1.bf16.msra.mxu0 %v2378
    %3413 = vmatprep.subr.bf16.mxu0 %v2381
    %3414 = vmatpush1.bf16.msra.mxu0 %v2380
    %3415 = vmatprep.mubr.bf16.mxu0 %v601
    %3416 = vmatmul.mubr.bf16.gmra.mrb[0].mxu0 %v599
    %v3417 = vpop.f32.mrb[0].mxu0
    %v3418 = vadd.f32 %v3377, %v3417
    %v3419 = vpop.f32.mrb[0].mxu0
    %v3420 = vadd.f32 %v3379, %v3419
    %v3421 = vpop.f32.mrb[0].mxu0
    %v3422 = vpop.f32.mrb[0].mxu0
    %3423 = vdwg.mxu0
    %3424 = vmatprep.subr.bf16.mxu0 %v2383
    %3425 = vmatpush1.bf16.msra.mxu0 %v2382
    %3426 = vmatprep.subr.bf16.mxu0 %v2385
    %3427 = vmatpush1.bf16.msra.mxu0 %v2384
    %3428 = vmatprep.subr.bf16.mxu0 %v2387
    %3429 = vmatpush1.bf16.msra.mxu0 %v2386
    %3430 = vmatprep.subr.bf16.mxu0 %v2389
    %3431 = vmatpush1.bf16.msra.mxu0 %v2388
    %3432 = vmatprep.subr.bf16.mxu0 %v2391
    %3433 = vmatpush1.bf16.msra.mxu0 %v2390
    %3434 = vmatprep.subr.bf16.mxu0 %v2393
    %3435 = vmatpush1.bf16.msra.mxu0 %v2392
    %3436 = vmatprep.subr.bf16.mxu0 %v2395
    %3437 = vmatpush1.bf16.msra.mxu0 %v2394
    %3438 = vmatprep.subr.bf16.mxu0 %v2397
    %3439 = vmatpush1.bf16.msra.mxu0 %v2396
    %3440 = vmatprep.subr.bf16.mxu0 %v2399
    %3441 = vmatpush1.bf16.msra.mxu0 %v2398
    %3442 = vmatprep.subr.bf16.mxu0 %v2401
    %3443 = vmatpush1.bf16.msra.mxu0 %v2400
    %3444 = vmatprep.subr.bf16.mxu0 %v2403
    %3445 = vmatpush1.bf16.msra.mxu0 %v2402
    %3446 = vmatprep.subr.bf16.mxu0 %v2405
    %3447 = vmatpush1.bf16.msra.mxu0 %v2404
    %3448 = vmatprep.subr.bf16.mxu0 %v2407
    %3449 = vmatpush1.bf16.msra.mxu0 %v2406
    %3450 = vmatprep.subr.bf16.mxu0 %v2409
    %3451 = vmatpush1.bf16.msra.mxu0 %v2408
    %3452 = vmatprep.subr.bf16.mxu0 %v2411
    %3453 = vmatpush1.bf16.msra.mxu0 %v2410
    %3454 = vmatprep.subr.bf16.mxu0 %v2413
    %3455 = vmatpush1.bf16.msra.mxu0 %v2412
    %3456 = vmatprep.mubr.bf16.mxu0 %v598
    %3457 = vmatmul.mubr.bf16.gmra.mrb[0].mxu0 %v584
    %v3458 = vpop.f32.mrb[0].mxu0
    %v3459 = vadd.f32 %v3418, %v3458
    %v3460 = vpop.f32.mrb[0].mxu0
    %v3461 = vadd.f32 %v3420, %v3460
    %v3462 = vpop.f32.mrb[0].mxu0
    %v3463 = vpop.f32.mrb[0].mxu0
    %3464 = vdwg.mxu0
    %3465 = vmatprep.subr.bf16.mxu0 %v2415
    %3466 = vmatpush1.bf16.msra.mxu0 %v2414
    %3467 = vmatprep.subr.bf16.mxu0 %v2417
    %3468 = vmatpush1.bf16.msra.mxu0 %v2416
    %3469 = vmatprep.subr.bf16.mxu0 %v2419
    %3470 = vmatpush1.bf16.msra.mxu0 %v2418
    %3471 = vmatprep.subr.bf16.mxu0 %v2421
    %3472 = vmatpush1.bf16.msra.mxu0 %v2420
    %3473 = vmatprep.subr.bf16.mxu0 %v2423
    %3474 = vmatpush1.bf16.msra.mxu0 %v2422
    %3475 = vmatprep.subr.bf16.mxu0 %v2425
    %3476 = vmatpush1.bf16.msra.mxu0 %v2424
    %3477 = vmatprep.subr.bf16.mxu0 %v2427
    %3478 = vmatpush1.bf16.msra.mxu0 %v2426
    %3479 = vmatprep.subr.bf16.mxu0 %v2429
    %3480 = vmatpush1.bf16.msra.mxu0 %v2428
    %3481 = vmatprep.subr.bf16.mxu0 %v2431
    %3482 = vmatpush1.bf16.msra.mxu0 %v2430
    %3483 = vmatprep.subr.bf16.mxu0 %v2433
    %3484 = vmatpush1.bf16.msra.mxu0 %v2432
    %3485 = vmatprep.subr.bf16.mxu0 %v2435
    %3486 = vmatpush1.bf16.msra.mxu0 %v2434
    %3487 = vmatprep.subr.bf16.mxu0 %v2437
    %3488 = vmatpush1.bf16.msra.mxu0 %v2436
    %3489 = vmatprep.subr.bf16.mxu0 %v2439
    %3490 = vmatpush1.bf16.msra.mxu0 %v2438
    %3491 = vmatprep.subr.bf16.mxu0 %v2441
    %3492 = vmatpush1.bf16.msra.mxu0 %v2440
    %3493 = vmatprep.subr.bf16.mxu0 %v2443
    %3494 = vmatpush1.bf16.msra.mxu0 %v2442
    %3495 = vmatprep.subr.bf16.mxu0 %v2445
    %3496 = vmatpush1.bf16.msra.mxu0 %v2444
    %3497 = vmatprep.mubr.bf16.mxu0 %v602
    %3498 = vmatmul.mubr.bf16.gmra.mrb[0].mxu0 %v600
    %v3499 = vpop.f32.mrb[0].mxu0
    %v3500 = vadd.f32 %v3459, %v3499
    %v3501 = vpop.f32.mrb[0].mxu0
    %v3502 = vadd.f32 %v3461, %v3501
    %v3503 = vpop.f32.mrb[0].mxu0
    %v3504 = vpop.f32.mrb[0].mxu0
    %3505 = vdwg.mxu0
    %3506 = vmatprep.subr.bf16.mxu0 %v2447
    %3507 = vmatpush1.bf16.msra.mxu0 %v2446
    %3508 = vmatprep.subr.bf16.mxu0 %v2449
    %3509 = vmatpush1.bf16.msra.mxu0 %v2448
    %3510 = vmatprep.subr.bf16.mxu0 %v2451
    %3511 = vmatpush1.bf16.msra.mxu0 %v2450
    %3512 = vmatprep.subr.bf16.mxu0 %v2453
    %3513 = vmatpush1.bf16.msra.mxu0 %v2452
    %3514 = vmatprep.subr.bf16.mxu0 %v2455
    %3515 = vmatpush1.bf16.msra.mxu0 %v2454
    %3516 = vmatprep.subr.bf16.mxu0 %v2457
    %3517 = vmatpush1.bf16.msra.mxu0 %v2456
    %3518 = vmatprep.subr.bf16.mxu0 %v2459
    %3519 = vmatpush1.bf16.msra.mxu0 %v2458
    %3520 = vmatprep.subr.bf16.mxu0 %v2461
    %3521 = vmatpush1.bf16.msra.mxu0 %v2460
    %3522 = vmatprep.subr.bf16.mxu0 %v2463
    %3523 = vmatpush1.bf16.msra.mxu0 %v2462
    %3524 = vmatprep.subr.bf16.mxu0 %v2465
    %3525 = vmatpush1.bf16.msra.mxu0 %v2464
    %3526 = vmatprep.subr.bf16.mxu0 %v2467
    %3527 = vmatpush1.bf16.msra.mxu0 %v2466
    %3528 = vmatprep.subr.bf16.mxu0 %v2469
    %3529 = vmatpush1.bf16.msra.mxu0 %v2468
    %3530 = vmatprep.subr.bf16.mxu0 %v2471
    %3531 = vmatpush1.bf16.msra.mxu0 %v2470
    %3532 = vmatprep.subr.bf16.mxu0 %v2473
    %3533 = vmatpush1.bf16.msra.mxu0 %v2472
    %3534 = vmatprep.subr.bf16.mxu0 %v2475
    %3535 = vmatpush1.bf16.msra.mxu0 %v2474
    %3536 = vmatprep.subr.bf16.mxu0 %v2477
    %3537 = vmatpush1.bf16.msra.mxu0 %v2476
    %3538 = vmatprep.mubr.bf16.mxu0 %v640
    %3539 = vmatmul.mubr.bf16.gmra.mrb[0].mxu0 %v626
    %v3540 = vpop.f32.mrb[0].mxu0
    %v3541 = vadd.f32 %v3500, %v3540
    %v3542 = vpop.f32.mrb[0].mxu0
    %v3543 = vadd.f32 %v3502, %v3542
    %v3544 = vpop.f32.mrb[0].mxu0
    %v3545 = vpop.f32.mrb[0].mxu0
    %3546 = vdwg.mxu0
    %3547 = vmatprep.subr.bf16.mxu0 %v2479
    %3548 = vmatpush1.bf16.msra.mxu0 %v2478
    %3549 = vmatprep.subr.bf16.mxu0 %v2481
    %3550 = vmatpush1.bf16.msra.mxu0 %v2480
    %3551 = vmatprep.subr.bf16.mxu0 %v2483
    %3552 = vmatpush1.bf16.msra.mxu0 %v2482
    %3553 = vmatprep.subr.bf16.mxu0 %v2485
    %3554 = vmatpush1.bf16.msra.mxu0 %v2484
    %3555 = vmatprep.subr.bf16.mxu0 %v2487
    %3556 = vmatpush1.bf16.msra.mxu0 %v2486
    %3557 = vmatprep.subr.bf16.mxu0 %v2489
    %3558 = vmatpush1.bf16.msra.mxu0 %v2488
    %3559 = vmatprep.subr.bf16.mxu0 %v2491
    %3560 = vmatpush1.bf16.msra.mxu0 %v2490
    %3561 = vmatprep.subr.bf16.mxu0 %v2493
    %3562 = vmatpush1.bf16.msra.mxu0 %v2492
    %3563 = vmatprep.subr.bf16.mxu0 %v2495
    %3564 = vmatpush1.bf16.msra.mxu0 %v2494
    %3565 = vmatprep.subr.bf16.mxu0 %v2497
    %3566 = vmatpush1.bf16.msra.mxu0 %v2496
    %3567 = vmatprep.subr.bf16.mxu0 %v2499
    %3568 = vmatpush1.bf16.msra.mxu0 %v2498
    %3569 = vmatprep.subr.bf16.mxu0 %v2501
    %3570 = vmatpush1.bf16.msra.mxu0 %v2500
    %3571 = vmatprep.subr.bf16.mxu0 %v2503
    %3572 = vmatpush1.bf16.msra.mxu0 %v2502
    %3573 = vmatprep.subr.bf16.mxu0 %v2505
    %3574 = vmatpush1.bf16.msra.mxu0 %v2504
    %3575 = vmatprep.subr.bf16.mxu0 %v2507
    %3576 = vmatpush1.bf16.msra.mxu0 %v2506
    %3577 = vmatprep.subr.bf16.mxu0 %v2509
    %3578 = vmatpush1.bf16.msra.mxu0 %v2508
    %3579 = vmatprep.mubr.bf16.mxu0 %v650
    %3580 = vmatmul.mubr.bf16.gmra.mrb[0].mxu0 %v648
    %v3581 = vpop.f32.mrb[0].mxu0
    %v3582 = vadd.f32 %v3541, %v3581
    %v3583 = vpop.f32.mrb[0].mxu0
    %v3584 = vadd.f32 %v3543, %v3583
    %v3585 = vpop.f32.mrb[0].mxu0
    %v3586 = vpop.f32.mrb[0].mxu0
    %3587 = vdwg.mxu0
    %3588 = vmatprep.subr.bf16.mxu0 %v2511
    %3589 = vmatpush1.bf16.msra.mxu0 %v2510
    %3590 = vmatprep.subr.bf16.mxu0 %v2513
    %3591 = vmatpush1.bf16.msra.mxu0 %v2512
    %3592 = vmatprep.subr.bf16.mxu0 %v2515
    %3593 = vmatpush1.bf16.msra.mxu0 %v2514
    %3594 = vmatprep.subr.bf16.mxu0 %v2517
    %3595 = vmatpush1.bf16.msra.mxu0 %v2516
    %3596 = vmatprep.subr.bf16.mxu0 %v2519
    %3597 = vmatpush1.bf16.msra.mxu0 %v2518
    %3598 = vmatprep.subr.bf16.mxu0 %v2521
    %3599 = vmatpush1.bf16.msra.mxu0 %v2520
    %3600 = vmatprep.subr.bf16.mxu0 %v2523
    %3601 = vmatpush1.bf16.msra.mxu0 %v2522
    %3602 = vmatprep.subr.bf16.mxu0 %v2525
    %3603 = vmatpush1.bf16.msra.mxu0 %v2524
    %3604 = vmatprep.subr.bf16.mxu0 %v2527
    %3605 = vmatpush1.bf16.msra.mxu0 %v2526
    %3606 = vmatprep.subr.bf16.mxu0 %v2529
    %3607 = vmatpush1.bf16.msra.mxu0 %v2528
    %3608 = vmatprep.subr.bf16.mxu0 %v2531
    %3609 = vmatpush1.bf16.msra.mxu0 %v2530
    %3610 = vmatprep.subr.bf16.mxu0 %v2533
    %3611 = vmatpush1.bf16.msra.mxu0 %v2532
    %3612 = vmatprep.subr.bf16.mxu0 %v2535
    %3613 = vmatpush1.bf16.msra.mxu0 %v2534
    %3614 = vmatprep.subr.bf16.mxu0 %v2537
    %3615 = vmatpush1.bf16.msra.mxu0 %v2536
    %3616 = vmatprep.subr.bf16.mxu0 %v2539
    %3617 = vmatpush1.bf16.msra.mxu0 %v2538
    %3618 = vmatprep.subr.bf16.mxu0 %v2541
    %3619 = vmatpush1.bf16.msra.mxu0 %v2540
    %3620 = vmatprep.mubr.bf16.mxu0 %v647
    %3621 = vmatmul.mubr.bf16.gmra.mrb[0].mxu0 %v633
    %v3622 = vpop.f32.mrb[0].mxu0
    %v3623 = vadd.f32 %v3582, %v3622
    %v3624 = vpop.f32.mrb[0].mxu0
    %v3625 = vadd.f32 %v3584, %v3624
    %v3626 = vpop.f32.mrb[0].mxu0
    %v3627 = vpop.f32.mrb[0].mxu0
    %3628 = vdwg.mxu0
    %3629 = vmatprep.subr.bf16.mxu0 %v2543
    %3630 = vmatpush1.bf16.msra.mxu0 %v2542
    %3631 = vmatprep.subr.bf16.mxu0 %v2545
    %3632 = vmatpush1.bf16.msra.mxu0 %v2544
    %3633 = vmatprep.subr.bf16.mxu0 %v2547
    %3634 = vmatpush1.bf16.msra.mxu0 %v2546
    %3635 = vmatprep.subr.bf16.mxu0 %v2549
    %3636 = vmatpush1.bf16.msra.mxu0 %v2548
    %3637 = vmatprep.subr.bf16.mxu0 %v2551
    %3638 = vmatpush1.bf16.msra.mxu0 %v2550
    %3639 = vmatprep.subr.bf16.mxu0 %v2553
    %3640 = vmatpush1.bf16.msra.mxu0 %v2552
    %3641 = vmatprep.subr.bf16.mxu0 %v2555
    %3642 = vmatpush1.bf16.msra.mxu0 %v2554
    %3643 = vmatprep.subr.bf16.mxu0 %v2557
    %3644 = vmatpush1.bf16.msra.mxu0 %v2556
    %3645 = vmatprep.subr.bf16.mxu0 %v2559
    %3646 = vmatpush1.bf16.msra.mxu0 %v2558
    %3647 = vmatprep.subr.bf16.mxu0 %v2561
    %3648 = vmatpush1.bf16.msra.mxu0 %v2560
    %3649 = vmatprep.subr.bf16.mxu0 %v2563
    %3650 = vmatpush1.bf16.msra.mxu0 %v2562
    %3651 = vmatprep.subr.bf16.mxu0 %v2565
    %3652 = vmatpush1.bf16.msra.mxu0 %v2564
    %3653 = vmatprep.subr.bf16.mxu0 %v2567
    %3654 = vmatpush1.bf16.msra.mxu0 %v2566
    %3655 = vmatprep.subr.bf16.mxu0 %v2569
    %3656 = vmatpush1.bf16.msra.mxu0 %v2568
    %3657 = vmatprep.subr.bf16.mxu0 %v2571
    %3658 = vmatpush1.bf16.msra.mxu0 %v2570
    %3659 = vmatprep.subr.bf16.mxu0 %v2573
    %3660 = vmatpush1.bf16.msra.mxu0 %v2572
    %3661 = vmatprep.mubr.bf16.mxu0 %v651
    %3662 = vmatmul.mubr.bf16.gmra.mrb[0].mxu0 %v649
    %v3663 = vpop.f32.mrb[0].mxu0
    %v3664 = vadd.f32 %v3623, %v3663
    %v3665 = vpop.f32.mrb[0].mxu0
    %v3666 = vadd.f32 %v3625, %v3665
    %v3667 = vpop.f32.mrb[0].mxu0
    %v3668 = vpop.f32.mrb[0].mxu0
    %3669 = vdwg.mxu0
    %3670 = vmatprep.subr.bf16.mxu0 %v2575
    %3671 = vmatpush1.bf16.msra.mxu0 %v2574
    %3672 = vmatprep.subr.bf16.mxu0 %v2577
    %3673 = vmatpush1.bf16.msra.mxu0 %v2576
    %3674 = vmatprep.subr.bf16.mxu0 %v2579
    %3675 = vmatpush1.bf16.msra.mxu0 %v2578
    %3676 = vmatprep.subr.bf16.mxu0 %v2581
    %3677 = vmatpush1.bf16.msra.mxu0 %v2580
    %3678 = vmatprep.subr.bf16.mxu0 %v2583
    %3679 = vmatpush1.bf16.msra.mxu0 %v2582
    %3680 = vmatprep.subr.bf16.mxu0 %v2585
    %3681 = vmatpush1.bf16.msra.mxu0 %v2584
    %3682 = vmatprep.subr.bf16.mxu0 %v2587
    %3683 = vmatpush1.bf16.msra.mxu0 %v2586
    %3684 = vmatprep.subr.bf16.mxu0 %v2589
    %3685 = vmatpush1.bf16.msra.mxu0 %v2588
    %3686 = vmatprep.subr.bf16.mxu0 %v2591
    %3687 = vmatpush1.bf16.msra.mxu0 %v2590
    %3688 = vmatprep.subr.bf16.mxu0 %v2593
    %3689 = vmatpush1.bf16.msra.mxu0 %v2592
    %3690 = vmatprep.subr.bf16.mxu0 %v2595
    %3691 = vmatpush1.bf16.msra.mxu0 %v2594
    %3692 = vmatprep.subr.bf16.mxu0 %v2597
    %3693 = vmatpush1.bf16.msra.mxu0 %v2596
    %3694 = vmatprep.subr.bf16.mxu0 %v2599
    %3695 = vmatpush1.bf16.msra.mxu0 %v2598
    %3696 = vmatprep.subr.bf16.mxu0 %v2601
    %3697 = vmatpush1.bf16.msra.mxu0 %v2600
    %3698 = vmatprep.subr.bf16.mxu0 %v2603
    %3699 = vmatpush1.bf16.msra.mxu0 %v2602
    %3700 = vmatprep.subr.bf16.mxu0 %v2605
    %3701 = vmatpush1.bf16.msra.mxu0 %v2604
    %3702 = vmatprep.mubr.bf16.mxu0 %v689
    %3703 = vmatmul.mubr.bf16.gmra.mrb[0].mxu0 %v675
    %v3704 = vpop.f32.mrb[0].mxu0
    %v3705 = vadd.f32 %v3664, %v3704
    %v3706 = vpop.f32.mrb[0].mxu0
    %v3707 = vadd.f32 %v3666, %v3706
    %v3708 = vpop.f32.mrb[0].mxu0
    %v3709 = vpop.f32.mrb[0].mxu0
    %3710 = vdwg.mxu0
    %3711 = vmatprep.subr.bf16.mxu0 %v2607
    %3712 = vmatpush1.bf16.msra.mxu0 %v2606
    %3713 = vmatprep.subr.bf16.mxu0 %v2609
    %3714 = vmatpush1.bf16.msra.mxu0 %v2608
    %3715 = vmatprep.subr.bf16.mxu0 %v2611
    %3716 = vmatpush1.bf16.msra.mxu0 %v2610
    %3717 = vmatprep.subr.bf16.mxu0 %v2613
    %3718 = vmatpush1.bf16.msra.mxu0 %v2612
    %3719 = vmatprep.subr.bf16.mxu0 %v2615
    %3720 = vmatpush1.bf16.msra.mxu0 %v2614
    %3721 = vmatprep.subr.bf16.mxu0 %v2617
    %3722 = vmatpush1.bf16.msra.mxu0 %v2616
    %3723 = vmatprep.subr.bf16.mxu0 %v2619
    %3724 = vmatpush1.bf16.msra.mxu0 %v2618
    %3725 = vmatprep.subr.bf16.mxu0 %v2621
    %3726 = vmatpush1.bf16.msra.mxu0 %v2620
    %3727 = vmatprep.subr.bf16.mxu0 %v2623
    %3728 = vmatpush1.bf16.msra.mxu0 %v2622
    %3729 = vmatprep.subr.bf16.mxu0 %v2625
    %3730 = vmatpush1.bf16.msra.mxu0 %v2624
    %3731 = vmatprep.subr.bf16.mxu0 %v2627
    %3732 = vmatpush1.bf16.msra.mxu0 %v2626
    %3733 = vmatprep.subr.bf16.mxu0 %v2629
    %3734 = vmatpush1.bf16.msra.mxu0 %v2628
    %3735 = vmatprep.subr.bf16.mxu0 %v2631
    %3736 = vmatpush1.bf16.msra.mxu0 %v2630
    %3737 = vmatprep.subr.bf16.mxu0 %v2633
    %3738 = vmatpush1.bf16.msra.mxu0 %v2632
    %3739 = vmatprep.subr.bf16.mxu0 %v2635
    %3740 = vmatpush1.bf16.msra.mxu0 %v2634
    %3741 = vmatprep.subr.bf16.mxu0 %v2637
    %3742 = vmatpush1.bf16.msra.mxu0 %v2636
    %3743 = vmatprep.mubr.bf16.mxu0 %v699
    %3744 = vmatmul.mubr.bf16.gmra.mrb[0].mxu0 %v697
    %v3745 = vpop.f32.mrb[0].mxu0
    %v3746 = vadd.f32 %v3705, %v3745
    %v3747 = vpop.f32.mrb[0].mxu0
    %v3748 = vadd.f32 %v3707, %v3747
    %v3749 = vpop.f32.mrb[0].mxu0
    %v3750 = vpop.f32.mrb[0].mxu0
    %3751 = vdwg.mxu0
    %3752 = vmatprep.subr.bf16.mxu0 %v2639
    %3753 = vmatpush1.bf16.msra.mxu0 %v2638
    %3754 = vmatprep.subr.bf16.mxu0 %v2641
    %3755 = vmatpush1.bf16.msra.mxu0 %v2640
    %3756 = vmatprep.subr.bf16.mxu0 %v2643
    %3757 = vmatpush1.bf16.msra.mxu0 %v2642
    %3758 = vmatprep.subr.bf16.mxu0 %v2645
    %3759 = vmatpush1.bf16.msra.mxu0 %v2644
    %3760 = vmatprep.subr.bf16.mxu0 %v2647
    %3761 = vmatpush1.bf16.msra.mxu0 %v2646
    %3762 = vmatprep.subr.bf16.mxu0 %v2649
    %3763 = vmatpush1.bf16.msra.mxu0 %v2648
    %3764 = vmatprep.subr.bf16.mxu0 %v2651
    %3765 = vmatpush1.bf16.msra.mxu0 %v2650
    %3766 = vmatprep.subr.bf16.mxu0 %v2653
    %3767 = vmatpush1.bf16.msra.mxu0 %v2652
    %3768 = vmatprep.subr.bf16.mxu0 %v2655
    %3769 = vmatpush1.bf16.msra.mxu0 %v2654
    %3770 = vmatprep.subr.bf16.mxu0 %v2657
    %3771 = vmatpush1.bf16.msra.mxu0 %v2656
    %3772 = vmatprep.subr.bf16.mxu0 %v2659
    %3773 = vmatpush1.bf16.msra.mxu0 %v2658
    %3774 = vmatprep.subr.bf16.mxu0 %v2661
    %3775 = vmatpush1.bf16.msra.mxu0 %v2660
    %3776 = vmatprep.subr.bf16.mxu0 %v2663
    %3777 = vmatpush1.bf16.msra.mxu0 %v2662
    %3778 = vmatprep.subr.bf16.mxu0 %v2665
    %3779 = vmatpush1.bf16.msra.mxu0 %v2664
    %3780 = vmatprep.subr.bf16.mxu0 %v2667
    %3781 = vmatpush1.bf16.msra.mxu0 %v2666
    %3782 = vmatprep.subr.bf16.mxu0 %v2669
    %3783 = vmatpush1.bf16.msra.mxu0 %v2668
    %3784 = vmatprep.mubr.bf16.mxu0 %v696
    %3785 = vmatmul.mubr.bf16.gmra.mrb[0].mxu0 %v682
    %v3786 = vpop.f32.mrb[0].mxu0
    %v3787 = vadd.f32 %v3746, %v3786
    %v3788 = vpop.f32.mrb[0].mxu0
    %v3789 = vadd.f32 %v3748, %v3788
    %v3790 = vpop.f32.mrb[0].mxu0
    %v3791 = vpop.f32.mrb[0].mxu0
    %3792 = vdwg.mxu0
    %3793 = vmatprep.subr.bf16.mxu0 %v2671
    %3794 = vmatpush1.bf16.msra.mxu0 %v2670
    %3795 = vmatprep.subr.bf16.mxu0 %v2673
    %3796 = vmatpush1.bf16.msra.mxu0 %v2672
    %3797 = vmatprep.subr.bf16.mxu0 %v2675
    %3798 = vmatpush1.bf16.msra.mxu0 %v2674
    %3799 = vmatprep.subr.bf16.mxu0 %v2677
    %3800 = vmatpush1.bf16.msra.mxu0 %v2676
    %3801 = vmatprep.subr.bf16.mxu0 %v2679
    %3802 = vmatpush1.bf16.msra.mxu0 %v2678
    %3803 = vmatprep.subr.bf16.mxu0 %v2681
    %3804 = vmatpush1.bf16.msra.mxu0 %v2680
    %3805 = vmatprep.subr.bf16.mxu0 %v2683
    %3806 = vmatpush1.bf16.msra.mxu0 %v2682
    %3807 = vmatprep.subr.bf16.mxu0 %v2685
    %3808 = vmatpush1.bf16.msra.mxu0 %v2684
    %3809 = vmatprep.subr.bf16.mxu0 %v2687
    %3810 = vmatpush1.bf16.msra.mxu0 %v2686
    %3811 = vmatprep.subr.bf16.mxu0 %v2689
    %3812 = vmatpush1.bf16.msra.mxu0 %v2688
    %3813 = vmatprep.subr.bf16.mxu0 %v2691
    %3814 = vmatpush1.bf16.msra.mxu0 %v2690
    %3815 = vmatprep.subr.bf16.mxu0 %v2693
    %3816 = vmatpush1.bf16.msra.mxu0 %v2692
    %3817 = vmatprep.subr.bf16.mxu0 %v2695
    %3818 = vmatpush1.bf16.msra.mxu0 %v2694
    %3819 = vmatprep.subr.bf16.mxu0 %v2697
    %3820 = vmatpush1.bf16.msra.mxu0 %v2696
    %3821 = vmatprep.subr.bf16.mxu0 %v2699
    %3822 = vmatpush1.bf16.msra.mxu0 %v2698
    %3823 = vmatprep.subr.bf16.mxu0 %v2701
    %3824 = vmatpush1.bf16.msra.mxu0 %v2700
    %3825 = vmatprep.mubr.bf16.mxu0 %v700
    %3826 = vmatmul.mubr.bf16.gmra.mrb[0].mxu0 %v698
    %v3827 = vpop.f32.mrb[0].mxu0
    %v3828 = vadd.f32 %v3787, %v3827
    %v3829 = vpop.f32.mrb[0].mxu0
    %v3830 = vadd.f32 %v3789, %v3829
    %v3831 = vpop.f32.mrb[0].mxu0
    %v3832 = vpop.f32.mrb[0].mxu0
    %3833 = vdwg.mxu0
    %3834 = vmatprep.subr.bf16.mxu0 %v2703
    %3835 = vmatpush1.bf16.msra.mxu0 %v2702
    %3836 = vmatprep.subr.bf16.mxu0 %v2705
    %3837 = vmatpush1.bf16.msra.mxu0 %v2704
    %3838 = vmatprep.subr.bf16.mxu0 %v2707
    %3839 = vmatpush1.bf16.msra.mxu0 %v2706
    %3840 = vmatprep.subr.bf16.mxu0 %v2709
    %3841 = vmatpush1.bf16.msra.mxu0 %v2708
    %3842 = vmatprep.subr.bf16.mxu0 %v2711
    %3843 = vmatpush1.bf16.msra.mxu0 %v2710
    %3844 = vmatprep.subr.bf16.mxu0 %v2713
    %3845 = vmatpush1.bf16.msra.mxu0 %v2712
    %3846 = vmatprep.subr.bf16.mxu0 %v2715
    %3847 = vmatpush1.bf16.msra.mxu0 %v2714
    %3848 = vmatprep.subr.bf16.mxu0 %v2717
    %3849 = vmatpush1.bf16.msra.mxu0 %v2716
    %3850 = vmatprep.subr.bf16.mxu0 %v2719
    %3851 = vmatpush1.bf16.msra.mxu0 %v2718
    %3852 = vmatprep.subr.bf16.mxu0 %v2721
    %3853 = vmatpush1.bf16.msra.mxu0 %v2720
    %3854 = vmatprep.subr.bf16.mxu0 %v2723
    %3855 = vmatpush1.bf16.msra.mxu0 %v2722
    %3856 = vmatprep.subr.bf16.mxu0 %v2725
    %3857 = vmatpush1.bf16.msra.mxu0 %v2724
    %3858 = vmatprep.subr.bf16.mxu0 %v2727
    %3859 = vmatpush1.bf16.msra.mxu0 %v2726
    %3860 = vmatprep.subr.bf16.mxu0 %v2729
    %3861 = vmatpush1.bf16.msra.mxu0 %v2728
    %3862 = vmatprep.subr.bf16.mxu0 %v2731
    %3863 = vmatpush1.bf16.msra.mxu0 %v2730
    %3864 = vmatprep.subr.bf16.mxu0 %v2733
    %3865 = vmatpush1.bf16.msra.mxu0 %v2732
    %3866 = vmatprep.mubr.bf16.mxu0 %v738
    %3867 = vmatmul.mubr.bf16.gmra.mrb[0].mxu0 %v724
    %v3868 = vpop.f32.mrb[0].mxu0
    %v3869 = vadd.f32 %v3828, %v3868
    %v3870 = vpop.f32.mrb[0].mxu0
    %v3871 = vadd.f32 %v3830, %v3870
    %v3872 = vpop.f32.mrb[0].mxu0
    %v3873 = vpop.f32.mrb[0].mxu0
    %3874 = vdwg.mxu0
    %3875 = vmatprep.subr.bf16.mxu0 %v2735
    %3876 = vmatpush1.bf16.msra.mxu0 %v2734
    %3877 = vmatprep.subr.bf16.mxu0 %v2737
    %3878 = vmatpush1.bf16.msra.mxu0 %v2736
    %3879 = vmatprep.subr.bf16.mxu0 %v2739
    %3880 = vmatpush1.bf16.msra.mxu0 %v2738
    %3881 = vmatprep.subr.bf16.mxu0 %v2741
    %3882 = vmatpush1.bf16.msra.mxu0 %v2740
    %3883 = vmatprep.subr.bf16.mxu0 %v2743
    %3884 = vmatpush1.bf16.msra.mxu0 %v2742
    %3885 = vmatprep.subr.bf16.mxu0 %v2745
    %3886 = vmatpush1.bf16.msra.mxu0 %v2744
    %3887 = vmatprep.subr.bf16.mxu0 %v2747
    %3888 = vmatpush1.bf16.msra.mxu0 %v2746
    %3889 = vmatprep.subr.bf16.mxu0 %v2749
    %3890 = vmatpush1.bf16.msra.mxu0 %v2748
    %3891 = vmatprep.subr.bf16.mxu0 %v2751
    %3892 = vmatpush1.bf16.msra.mxu0 %v2750
    %3893 = vmatprep.subr.bf16.mxu0 %v2753
    %3894 = vmatpush1.bf16.msra.mxu0 %v2752
    %3895 = vmatprep.subr.bf16.mxu0 %v2755
    %3896 = vmatpush1.bf16.msra.mxu0 %v2754
    %3897 = vmatprep.subr.bf16.mxu0 %v2757
    %3898 = vmatpush1.bf16.msra.mxu0 %v2756
    %3899 = vmatprep.subr.bf16.mxu0 %v2759
    %3900 = vmatpush1.bf16.msra.mxu0 %v2758
    %3901 = vmatprep.subr.bf16.mxu0 %v2761
    %3902 = vmatpush1.bf16.msra.mxu0 %v2760
    %3903 = vmatprep.subr.bf16.mxu0 %v2763
    %3904 = vmatpush1.bf16.msra.mxu0 %v2762
    %3905 = vmatprep.subr.bf16.mxu0 %v2765
    %3906 = vmatpush1.bf16.msra.mxu0 %v2764
    %3907 = vmatprep.mubr.bf16.mxu0 %v748
    %3908 = vmatmul.mubr.bf16.gmra.mrb[0].mxu0 %v746
    %v3909 = vpop.f32.mrb[0].mxu0
    %v3910 = vadd.f32 %v3869, %v3909
    %v3911 = vpop.f32.mrb[0].mxu0
    %v3912 = vadd.f32 %v3871, %v3911
    %v3913 = vpop.f32.mrb[0].mxu0
    %v3914 = vpop.f32.mrb[0].mxu0
    %3915 = vdwg.mxu0
    %3916 = vmatprep.subr.bf16.mxu0 %v2767
    %3917 = vmatpush1.bf16.msra.mxu0 %v2766
    %3918 = vmatprep.subr.bf16.mxu0 %v2769
    %3919 = vmatpush1.bf16.msra.mxu0 %v2768
    %3920 = vmatprep.subr.bf16.mxu0 %v2771
    %3921 = vmatpush1.bf16.msra.mxu0 %v2770
    %3922 = vmatprep.subr.bf16.mxu0 %v2773
    %3923 = vmatpush1.bf16.msra.mxu0 %v2772
    %3924 = vmatprep.subr.bf16.mxu0 %v2775
    %3925 = vmatpush1.bf16.msra.mxu0 %v2774
    %3926 = vmatprep.subr.bf16.mxu0 %v2777
    %3927 = vmatpush1.bf16.msra.mxu0 %v2776
    %3928 = vmatprep.subr.bf16.mxu0 %v2779
    %3929 = vmatpush1.bf16.msra.mxu0 %v2778
    %3930 = vmatprep.subr.bf16.mxu0 %v2781
    %3931 = vmatpush1.bf16.msra.mxu0 %v2780
    %3932 = vmatprep.subr.bf16.mxu0 %v2783
    %3933 = vmatpush1.bf16.msra.mxu0 %v2782
    %3934 = vmatprep.subr.bf16.mxu0 %v2785
    %3935 = vmatpush1.bf16.msra.mxu0 %v2784
    %3936 = vmatprep.subr.bf16.mxu0 %v2787
    %3937 = vmatpush1.bf16.msra.mxu0 %v2786
    %3938 = vmatprep.subr.bf16.mxu0 %v2789
    %3939 = vmatpush1.bf16.msra.mxu0 %v2788
    %3940 = vmatprep.subr.bf16.mxu0 %v2791
    %3941 = vmatpush1.bf16.msra.mxu0 %v2790
    %3942 = vmatprep.subr.bf16.mxu0 %v2793
    %3943 = vmatpush1.bf16.msra.mxu0 %v2792
    %3944 = vmatprep.subr.bf16.mxu0 %v2795
    %3945 = vmatpush1.bf16.msra.mxu0 %v2794
    %3946 = vmatprep.subr.bf16.mxu0 %v2797
    %3947 = vmatpush1.bf16.msra.mxu0 %v2796
    %3948 = vmatprep.mubr.bf16.mxu0 %v745
    %3949 = vmatmul.mubr.bf16.gmra.mrb[0].mxu0 %v731
    %v3950 = vpop.f32.mrb[0].mxu0
    %v3951 = vadd.f32 %v3910, %v3950
    %v3952 = vpop.f32.mrb[0].mxu0
    %v3953 = vadd.f32 %v3912, %v3952
    %v3954 = vpop.f32.mrb[0].mxu0
    %v3955 = vpop.f32.mrb[0].mxu0
    %3956 = vdwg.mxu0
    %3957 = vmatprep.subr.bf16.mxu0 %v2799
    %3958 = vmatpush1.bf16.msra.mxu0 %v2798
    %3959 = vmatprep.subr.bf16.mxu0 %v2801
    %3960 = vmatpush1.bf16.msra.mxu0 %v2800
    %3961 = vmatprep.subr.bf16.mxu0 %v2803
    %3962 = vmatpush1.bf16.msra.mxu0 %v2802
    %3963 = vmatprep.subr.bf16.mxu0 %v2805
    %3964 = vmatpush1.bf16.msra.mxu0 %v2804
    %3965 = vmatprep.subr.bf16.mxu0 %v2807
    %3966 = vmatpush1.bf16.msra.mxu0 %v2806
    %3967 = vmatprep.subr.bf16.mxu0 %v2809
    %3968 = vmatpush1.bf16.msra.mxu0 %v2808
    %3969 = vmatprep.subr.bf16.mxu0 %v2811
    %3970 = vmatpush1.bf16.msra.mxu0 %v2810
    %3971 = vmatprep.subr.bf16.mxu0 %v2813
    %3972 = vmatpush1.bf16.msra.mxu0 %v2812
    %3973 = vmatprep.subr.bf16.mxu0 %v2815
    %3974 = vmatpush1.bf16.msra.mxu0 %v2814
    %3975 = vmatprep.subr.bf16.mxu0 %v2817
    %3976 = vmatpush1.bf16.msra.mxu0 %v2816
    %3977 = vmatprep.subr.bf16.mxu0 %v2819
    %3978 = vmatpush1.bf16.msra.mxu0 %v2818
    %3979 = vmatprep.subr.bf16.mxu0 %v2821
    %3980 = vmatpush1.bf16.msra.mxu0 %v2820
    %3981 = vmatprep.subr.bf16.mxu0 %v2823
    %3982 = vmatpush1.bf16.msra.mxu0 %v2822
    %3983 = vmatprep.subr.bf16.mxu0 %v2825
    %3984 = vmatpush1.bf16.msra.mxu0 %v2824
    %3985 = vmatprep.subr.bf16.mxu0 %v2827
    %3986 = vmatpush1.bf16.msra.mxu0 %v2826
    %3987 = vmatprep.subr.bf16.mxu0 %v2829
    %3988 = vmatpush1.bf16.msra.mxu0 %v2828
    %3989 = vmatprep.mubr.bf16.mxu0 %v749
    %3990 = vmatmul.mubr.bf16.gmra.mrb[0].mxu0 %v747
    %v3991 = vpop.f32.mrb[0].mxu0
    %v3992 = vadd.f32 %v3951, %v3991
    %v3993 = vpop.f32.mrb[0].mxu0
    %v3994 = vadd.f32 %v3953, %v3993
    %v3995 = vpop.f32.mrb[0].mxu0
    %v3996 = vpop.f32.mrb[0].mxu0
    %3997 = vdwg.mxu0
    %v3998 = vmax.f32 %v3992, 0.0
    %v3999 = vmax.f32 %v3994, 0.0
    %v4000 = vpack.c.bf16 %v3998, %v3998
    %v4001 = vpack.c.bf16 %v3999, %v3999
    %v4002 = vld [vmem:[%s3] sm:$0xf]
    %v4003 = vld [vmem:[%s3 + $0x4] sm:$0xf]
    %v4004 = vld [vmem:[%s3 + $0x8] sm:$0xf]
    %v4005 = vld [vmem:[%s3 + $0xc] sm:$0xf]
    %v4006 = vld [vmem:[%s3 + $0x10] sm:$0xf]
    %v4007 = vld [vmem:[%s3 + $0x14] sm:$0xf]
    %v4008 = vld [vmem:[%s3 + $0x18] sm:$0xf]
    %v4009 = vld [vmem:[%s3 + $0x1c] sm:$0xf]
    %v4010 = vld [vmem:[%s3 + $0x20] sm:$0xf]
    %v4011 = vld [vmem:[%s3 + $0x24] sm:$0xf]
    %v4012 = vld [vmem:[%s3 + $0x28] sm:$0xf]
    %v4013 = vld [vmem:[%s3 + $0x2c] sm:$0xf]
    %v4014 = vld [vmem:[%s3 + $0x30] sm:$0xf]
    %v4015 = vld [vmem:[%s3 + $0x34] sm:$0xf]
    %v4016 = vld [vmem:[%s3 + $0x38] sm:$0xf]
    %v4017 = vld [vmem:[%s3 + $0x3c] sm:$0xf]
    %v4018 = vld [vmem:[%s3 + $0x40] sm:$0xf]
    %v4019 = vld [vmem:[%s3 + $0x44] sm:$0xf]
    %v4020 = vld [vmem:[%s3 + $0x48] sm:$0xf]
    %v4021 = vld [vmem:[%s3 + $0x4c] sm:$0xf]
    %v4022 = vld [vmem:[%s3 + $0x50] sm:$0xf]
    %v4023 = vld [vmem:[%s3 + $0x54] sm:$0xf]
    %v4024 = vld [vmem:[%s3 + $0x58] sm:$0xf]
    %v4025 = vld [vmem:[%s3 + $0x5c] sm:$0xf]
    %v4026 = vld [vmem:[%s3 + $0x60] sm:$0xf]
    %v4027 = vld [vmem:[%s3 + $0x64] sm:$0xf]
    %v4028 = vld [vmem:[%s3 + $0x68] sm:$0xf]
    %v4029 = vld [vmem:[%s3 + $0x6c] sm:$0xf]
    %v4030 = vld [vmem:[%s3 + $0x70] sm:$0xf]
    %v4031 = vld [vmem:[%s3 + $0x74] sm:$0xf]
    %v4032 = vld [vmem:[%s3 + $0x78] sm:$0xf]
    %v4033 = vld [vmem:[%s3 + $0x7c] sm:$0xf]
    %v4034 = vld [vmem:[%s4] sm:$0x1]
    %v4036 = vlaneseq
    %v4037 = vshrl.u32 %v4036, 7
    %v4038 = vsub.s32 0, %v4037
    %v4039 = vrot.slane %v4034, %v4038
    %v4073 = vunpack.c.l.b16 %v4002
    %v4074 = vunpack.c.l.b16 %v4003
    %v4075 = vunpack.c.l.b16 %v4004
    %v4076 = vunpack.c.l.b16 %v4005
    %v4077 = vunpack.c.l.b16 %v4006
    %v4078 = vunpack.c.l.b16 %v4007
    %v4079 = vunpack.c.l.b16 %v4008
    %v4080 = vunpack.c.l.b16 %v4009
    %v4081 = vunpack.c.l.b16 %v4010
    %v4082 = vunpack.c.l.b16 %v4011
    %v4083 = vunpack.c.l.b16 %v4012
    %v4084 = vunpack.c.l.b16 %v4013
    %v4085 = vunpack.c.l.b16 %v4014
    %v4086 = vunpack.c.l.b16 %v4015
    %v4087 = vunpack.c.l.b16 %v4016
    %v4088 = vunpack.c.l.b16 %v4017
    %v4089 = vunpack.c.l.b16 %v4018
    %v4090 = vunpack.c.l.b16 %v4019
    %v4091 = vunpack.c.l.b16 %v4020
    %v4092 = vunpack.c.l.b16 %v4021
    %v4093 = vunpack.c.l.b16 %v4022
    %v4094 = vunpack.c.l.b16 %v4023
    %v4095 = vunpack.c.l.b16 %v4024
    %v4096 = vunpack.c.l.b16 %v4025
    %v4097 = vunpack.c.l.b16 %v4026
    %v4098 = vunpack.c.l.b16 %v4027
    %v4099 = vunpack.c.l.b16 %v4028
    %v4100 = vunpack.c.l.b16 %v4029
    %v4101 = vunpack.c.l.b16 %v4030
    %v4102 = vunpack.c.l.b16 %v4031
    %v4103 = vunpack.c.l.b16 %v4032
    %v4104 = vunpack.c.l.b16 %v4033
    %v4105 = vpack.c.b16 %v4074, %v4073
    %v4106 = vpack.c.b16 %v4076, %v4075
    %v4107 = vpack.c.b16 %v4078, %v4077
    %v4108 = vpack.c.b16 %v4080, %v4079
    %v4109 = vpack.c.b16 %v4082, %v4081
    %v4110 = vpack.c.b16 %v4084, %v4083
    %v4111 = vpack.c.b16 %v4086, %v4085
    %v4112 = vpack.c.b16 %v4088, %v4087
    %v4113 = vpack.c.b16 %v4090, %v4089
    %v4114 = vpack.c.b16 %v4092, %v4091
    %v4115 = vpack.c.b16 %v4094, %v4093
    %v4116 = vpack.c.b16 %v4096, %v4095
    %v4117 = vpack.c.b16 %v4098, %v4097
    %v4118 = vpack.c.b16 %v4100, %v4099
    %v4119 = vpack.c.b16 %v4102, %v4101
    %v4120 = vpack.c.b16 %v4104, %v4103
    %4137 = vmatprep.subr.bf16.mxu0 0
    %4138 = vmatpush1.bf16.msra.mxu0 %v4105
    %4139 = vmatprep.subr.bf16.mxu0 0
    %4140 = vmatpush1.bf16.msra.mxu0 %v4106
    %4141 = vmatprep.subr.bf16.mxu0 0
    %4142 = vmatpush1.bf16.msra.mxu0 %v4107
    %4143 = vmatprep.subr.bf16.mxu0 0
    %4144 = vmatpush1.bf16.msra.mxu0 %v4108
    %4145 = vmatprep.subr.bf16.mxu0 0
    %4146 = vmatpush1.bf16.msra.mxu0 %v4109
    %4147 = vmatprep.subr.bf16.mxu0 0
    %4148 = vmatpush1.bf16.msra.mxu0 %v4110
    %4149 = vmatprep.subr.bf16.mxu0 0
    %4150 = vmatpush1.bf16.msra.mxu0 %v4111
    %4151 = vmatprep.subr.bf16.mxu0 0
    %4152 = vmatpush1.bf16.msra.mxu0 %v4112
    %4153 = vmatprep.subr.bf16.mxu0 0
    %4154 = vmatpush1.bf16.msra.mxu0 %v4113
    %4155 = vmatprep.subr.bf16.mxu0 0
    %4156 = vmatpush1.bf16.msra.mxu0 %v4114
    %4157 = vmatprep.subr.bf16.mxu0 0
    %4158 = vmatpush1.bf16.msra.mxu0 %v4115
    %4159 = vmatprep.subr.bf16.mxu0 0
    %4160 = vmatpush1.bf16.msra.mxu0 %v4116
    %4161 = vmatprep.subr.bf16.mxu0 0
    %4162 = vmatpush1.bf16.msra.mxu0 %v4117
    %4163 = vmatprep.subr.bf16.mxu0 0
    %4164 = vmatpush1.bf16.msra.mxu0 %v4118
    %4165 = vmatprep.subr.bf16.mxu0 0
    %4166 = vmatpush1.bf16.msra.mxu0 %v4119
    %4167 = vmatprep.subr.bf16.mxu0 0
    %4168 = vmatpush1.bf16.msra.mxu0 %v4120
    %4169 = vmatprep.mubr.bf16.mxu0 %v4001
    %4170 = vmatmul.mubr.bf16.gmra.mrb[0].mxu0 %v4000
    %v4171 = vpop.f32.mrb[0].mxu0
    %v4172 = vadd.f32 %v4039, %v4171
    %v4173 = vpop.f32.mrb[0].mxu0
    %v4174 = vpop.f32.mrb[0].mxu0
    %v4175 = vpop.f32.mrb[0].mxu0
    %4176 = vdwg.mxu0
    %vm4177 = vcmask 74752
    %4178 = vst.msk [vmem:[#allocation2] sm:$0x3] %vm4177, %v4172
    // Predicated region
    $region22: #{simple_cnn_forward.5} parent=1 // pred_check
      _
    $region23: #{simple_cnn_forward.5} parent=1 // pred_check_branch
      %4180 = sbr.rel (0) target = $region25
    $region24: #{simple_cnn_forward.5} parent=1 // pred_region
      %s4182 = ssub.s32 32, 32
      %4183 = vsyncadd [#allocation3], %s4182
      %s4185 = sshll.u32 [#allocation2], 4
      %s4186 = int_to_ptr.vmem [resolvable:$true] %s4185
      %4188 = dma.vmem_to_hbm [thread:$0]  %s4186, 32, %s5, [#allocation3]
    $region25: #{simple_cnn_forward.5} parent=1 // pred_fallthru
      _
    // Predicated region
    $region26: #{simple_cnn_forward.5} parent=1 // pred_check
      _
    $region27: #{simple_cnn_forward.5} parent=1 // pred_check_branch
      %4190 = sbr.rel (0) target = $region29
    $region28: #{simple_cnn_forward.5} parent=1 // pred_region
      %4191 = dma.done [#allocation3], 32
    $region29: #{simple_cnn_forward.5} parent=1 // pred_fallthru
      _
    %4192 = vsyncpa [#allocation3], 1

</llo_original>
